<compile_context>
chip_gen: v5e
topology: v5e:2x2
jax: 0.10.0
libtpu: 0.0.40
codegen_flags: <defaults>
</compile_context>

<pallas_src>
import math

import numpy as np

import jax
import jax.numpy as jnp
from jax import lax
from jax.experimental import pallas as pl
from jax.experimental.pallas import tpu as pltpu


# ----------------------------------------------------------------------------
# Static (numpy) helpers, evaluated once at model-build time
# ----------------------------------------------------------------------------

def _conv_masks(h, w):
    """(9, 1, h*w) validity masks of the 3x3 taps (zero padding)."""
    yy, xx = np.meshgrid(np.arange(h), np.arange(w), indexing="ij")
    m = np.zeros((9, 1, h * w), np.float32)
    k = 0
    for dy in (-1, 0, 1):
        for dx in (-1, 0, 1):
            valid = (yy + dy >= 0) & (yy + dy < h) & (xx + dx >= 0) & (xx + dx < w)
            m[k, 0, :] = valid.reshape(-1).astype(np.float32)
            k += 1
    return jnp.asarray(m)


def _up1d(n):
    """(2n, n) bilinear x2 upsample matrix, align_corners=False (PyTorch)."""
    u = np.zeros((2 * n, n), np.float64)
    for o in range(2 * n):
        src = (o + 0.5) / 2.0 - 0.5
        i0 = int(np.floor(src))
        f = src - i0
        u[o, min(max(i0, 0), n - 1)] += 1.0 - f
        u[o, min(max(i0 + 1, 0), n - 1)] += f
    return u


def _up_matrix_t(side):
    """(side^2, 4*side^2): transposed 2-D bilinear x2 upsample matrix."""
    u1 = _up1d(side)
    u = np.kron(u1, u1)                     # (4*side^2, side^2), row-major (y, x)
    return jnp.asarray(u.T, jnp.float32)


def _tap_stack(w):
    """Torch conv weight (Cout, Cin, 3, 3) -> (Cout, 9*Cin), tap-major."""
    o, i, kh, kw = w.shape
    return jnp.transpose(w, (0, 2, 3, 1)).reshape(o, kh * kw * i)


# ----------------------------------------------------------------------------
# Build-time probe: does pltpu.roll lower for bf16 lane rotation here, and does
# it match jnp.roll semantics (out[i] = x[(i - shift) % n])?
# ----------------------------------------------------------------------------

def _probe_lane_roll():
    try:
        def k(x_ref, o_ref):
            o_ref[...] = pltpu.roll(x_ref[...], shift=253, axis=1)

        x = (jnp.arange(24 * 256, dtype=jnp.float32) % 251.0)
        x = x.reshape(24, 256).astype(jnp.bfloat16)
        out = pl.pallas_call(
            k, out_shape=jax.ShapeDtypeStruct((24, 256), jnp.bfloat16))(x)
        want = jnp.roll(x, 253, axis=1)
        return bool(jnp.array_equal(out, want))
    except Exception:
        return False


# ----------------------------------------------------------------------------
# The fused Pallas kernel (per batch element; grid=(B,), "parallel")
# ----------------------------------------------------------------------------

def make_head_kernel(cfg):
    L = cfg["num_blocks"]
    blocks = cfg["blocks"]
    pd = cfg["plane_dim"]
    n_dens = cfg["n_density_layers"]
    n_col = cfg["n_color_layers"]
    dens_out = cfg["dens_out"]
    col_out = cfg["col_out"]
    out_rows = cfg["out_rows"]
    use_roll = cfg["use_roll"]
    bf16 = jnp.bfloat16

    def leaky(x, slope):
        return jnp.where(x >= 0.0, x, slope * x)

    def conv3x3(x, w_tap, w_sp, mask9):
        # x: (Cin, HW) bf16; w_tap: (Cout, 9*Cin) bf16; mask9: (9, 1, HW) bf16.
        # Builds the 9 taps in VMEM and does ONE deep-K bf16 MXU matmul.
        hw = x.shape[-1]
        if use_roll and hw % 128 == 0:
            # tap[i] = x[(i + s) % hw]  ==  jnp.roll(x, -s); XLU lane rotate.
            def tap(s):
                return x if s == 0 else pltpu.roll(x, shift=(-s) % hw, axis=1)
        else:
            # HW < 128 lanes: one lane-slice per tap from a zero-padded row
            # (wrapped/garbage lanes are zeroed by mask9 either way).
            p = w_sp + 1
            zpad = jnp.zeros((x.shape[0], p), x.dtype)
            xp = jnp.concatenate([zpad, x, zpad], axis=1)

            def tap(s):
                return x if s == 0 else xp[:, p + s:p + s + hw]

        taps = []
        k = 0
        for dy in (-1, 0, 1):
            for dx in (-1, 0, 1):
                t = tap(dy * w_sp + dx)
                if not (dy == 0 and dx == 0):
                    t = t * mask9[k]
                taps.append(t)
                k += 1
        tap_mat = jnp.concatenate(taps, axis=0)          # (9*Cin, HW) bf16
        return jnp.dot(w_tap, tap_mat, preferred_element_type=jnp.float32)

    def kernel(*refs):
        out_ref = refs[-1]
        it = iter(refs[:-1])

        x0 = next(it)[0]          # (C0, 16)       bf16 ConvTranspose output (4x4)
        emb = next(it)[0]         # (E, N)         bf16 view-direction embedding
        s_t = next(it)[0]         # (3*res^2, N)   bf16 fused tri-plane sampling mat
        wf = [(next(it)[0], next(it)[0]) for _ in range(L)]   # folded mod-conv weights

        masks = [next(it)[...] for _ in range(L)]
        ups = [next(it)[...] for _ in range(L - 1)]
        wi_tap = next(it)[...]
        bi = next(it)[...]
        dens_w = [(next(it)[...], next(it)[...]) for _ in range(n_dens)]
        wc_feat = next(it)[...]
        wc_emb = next(it)[...]
        bc0 = next(it)[...]
        col_w = [(next(it)[...], next(it)[...]) for _ in range(n_col - 1)]
        assert not list(it)

        # --- Generator: initial 3x3 conv (bias, no activation) ---
        x = conv3x3(x0, wi_tap, blocks[0]["W"], masks[0]) + bi
        x = x.astype(bf16)

        # --- Generator blocks; style/demod already folded into per-batch weights:
        #     [upsample] -> conv3x3(w1') -> lrelu -> conv3x3(w2') -> lrelu ---
        for j in range(L):
            w1, w2 = wf[j]
            w_sp = blocks[j]["W"]
            if j > 0:
                # bilinear x2 upsample as a matmul against the precomputed matrix
                x = jnp.dot(x, ups[j - 1],
                            preferred_element_type=jnp.float32).astype(bf16)
            x = leaky(conv3x3(x, w1, w_sp, masks[j]), 0.2).astype(bf16)
            x = leaky(conv3x3(x, w2, w_sp, masks[j]), 0.2).astype(bf16)

        # --- tri-plane grid_sample + plane sum fused into ONE deep-K matmul ---
        xcat = jnp.concatenate([x[0 * pd:1 * pd],
                                x[1 * pd:2 * pd],
                                x[2 * pd:3 * pd]], axis=1)           # (pd, 3*HW)
        feat = jnp.dot(xcat, s_t, preferred_element_type=jnp.float32)  # (pd, N) f32
        feat_bf = feat.astype(bf16)

        # --- density MLP ---
        h = feat_bf
        dens = None
        for li, (wl, bl) in enumerate(dens_w):
            z = jnp.dot(wl, h, preferred_element_type=jnp.float32) + bl
            if li < n_dens - 1:
                h = leaky(z, 0.01).astype(bf16)
            else:
                dens = z

        # --- color MLP (first layer split over [feature | view embedding]) ---
        z = (jnp.dot(wc_feat, feat_bf, preferred_element_type=jnp.float32)
             + jnp.dot(wc_emb, emb, preferred_element_type=jnp.float32) + bc0)
        if n_col > 1:
            z = leaky(z, 0.01)
        h = z.astype(bf16)
        col = z
        for li, (wl, bl) in enumerate(col_w):
            z = jnp.dot(wl, h, preferred_element_type=jnp.float32) + bl
            if li < n_col - 2:
                h = leaky(z, 0.01).astype(bf16)
            col = z

        # --- single lane-dense, 8-sublane-aligned output store ---
        n_lanes = dens.shape[-1]
        parts = [dens, col]
        pad_rows = out_rows - dens_out - col_out
        if pad_rows > 0:
            parts.append(jnp.zeros((pad_rows, n_lanes), jnp.float32))
        out_ref[0] = jnp.concatenate(parts, axis=0)

    return kernel


# ----------------------------------------------------------------------------
# Parameter packing and the (thin) JAX wrapper
# ----------------------------------------------------------------------------

def pack_model(opt, params, use_roll):
    latent = opt["exp_dim_3d"]
    res = opt["triplane_res"]
    pd = opt["triplane_dim"]
    nc = pd * 3 // 2
    L = int(math.log2(res) - 1)
    filters = [min(nc * 2 ** (i + 1), 256) for i in range(L)][::-1]
    filters = [filters[0]] + filters
    assert filters[-1] == 3 * pd, "triplane channels must equal 3 * triplane_dim"
    spatial = [4 * 2 ** j for j in range(L)]
    assert spatial[-1] == res

    freqs = [float(f) for f in
             2.0 ** np.linspace(0.0, opt["view_freq"] - 1, opt["view_freq"])]
    emb_dim = 3 * (1 + 2 * len(freqs))
    assert opt["density_mlp"][0] == pd
    assert opt["color_mlp"][0] == pd + emb_dim

    bf16 = jnp.bfloat16
    f32 = jnp.float32

    # Static weights resident in VMEM (matmul operands in bf16, biases in f32).
    weights = []
    weights += [_conv_masks(s, s).astype(bf16) for s in spatial]                # L
    weights += [_up_matrix_t(spatial[j - 1]).astype(bf16) for j in range(1, L)]  # L-1
    weights += [_tap_stack(params["initial_conv"]["w"]).astype(bf16),
                params["initial_conv"]["b"].reshape(-1, 1).astype(f32)]
    for layer in params["density_mlp"]:
        weights += [layer["w"].astype(bf16), layer["b"].reshape(-1, 1).astype(f32)]
    c0 = params["color_mlp"][0]
    weights += [c0["w"][:, :pd].astype(bf16), c0["w"][:, pd:].astype(bf16),
                c0["b"].reshape(-1, 1).astype(f32)]
    for layer in params["color_mlp"][1:]:
        weights += [layer["w"].astype(bf16), layer["b"].reshape(-1, 1).astype(f32)]

    # Style / conv weights kept in f32 on the host side; they are folded into
    # per-batch modulated+demodulated conv weights per call in the wrapper.
    style = [dict(a1=params["blocks"][j]["to_style1"]["w"],
                  b1=params["blocks"][j]["to_style1"]["b"],
                  w1=params["blocks"][j]["conv1"]["w"],
                  a2=params["blocks"][j]["to_style2"]["w"],
                  b2=params["blocks"][j]["to_style2"]["b"],
                  w2=params["blocks"][j]["conv2"]["w"]) for j in range(L)]

    dens_out = opt["density_mlp"][-1]
    col_out = opt["color_mlp"][-1]
    out_rows = ((dens_out + col_out + 7) // 8) * 8

    cfg = dict(
        latent=latent, res=res, plane_dim=pd, num_blocks=L,
        init_ch=filters[0], init_hw=spatial[0] * spatial[0],
        blocks=[dict(W=spatial[j], cin=filters[j], cout=filters[j + 1])
                for j in range(L)],
        n_density_layers=len(params["density_mlp"]),
        n_color_layers=len(params["color_mlp"]),
        view_freqs=freqs,
        dens_out=dens_out, col_out=col_out, out_rows=out_rows,
        bbox=np.asarray(opt["bbox"], np.float32),
        use_roll=use_roll,
    )
    return {"convT": params["to_initial"], "weights": weights, "style": style}, cfg


def _batch_spec(shape):
    nd = len(shape)
    return pl.BlockSpec((1,) + tuple(shape[1:]),
                        lambda b, _n=nd: (b,) + (0,) * (_n - 1))


def _resident_spec(arr):
    nd = arr.ndim
    return pl.BlockSpec(arr.shape, lambda b, _n=nd: (0,) * _n)


def _sample_matrix_t(gx, gy, res):
    """Transposed bilinear sampling matrix matching F.grid_sample(align_corners=True,
    padding_mode='zeros').  gx, gy: (B, N) -> (B, res*res, N)."""
    px = (gx + 1.0) * 0.5 * (res - 1)
    py = (gy + 1.0) * 0.5 * (res - 1)
    x0 = jnp.floor(px)
    y0 = jnp.floor(py)
    fx = (px - x0)[..., None]
    fy = (py - y0)[..., None]
    x0 = x0.astype(jnp.int32)[..., None]
    y0 = y0.astype(jnp.int32)[..., None]
    cols = jnp.arange(res, dtype=jnp.int32)
    wx = (1.0 - fx) * (cols == x0) + fx * (cols == x0 + 1)    # (B, N, res)
    wy = (1.0 - fy) * (cols == y0) + fy * (cols == y0 + 1)    # (B, N, res)
    s = wy[:, :, :, None] * wx[:, :, None, :]                 # (B, N, res_y, res_x)
    s = s.reshape(gx.shape[0], gx.shape[1], res * res)
    return jnp.transpose(s, (0, 2, 1))


def build_head_forward(opt, params):
    use_roll = _probe_lane_roll()
    packed, cfg = pack_model(opt, params, use_roll)
    kernel = make_head_kernel(cfg)

    res = cfg["res"]
    c0 = cfg["init_ch"]
    init_hw = cfg["init_hw"]
    freqs = cfg["view_freqs"]
    bbox = jnp.asarray(cfg["bbox"])
    dens_out = cfg["dens_out"]
    col_out = cfg["col_out"]
    out_rows = cfg["out_rows"]
    L = cfg["num_blocks"]
    bf16 = jnp.bfloat16

    def _fold(code, a, b, w):
        """Fold StyleGAN2 modulation + demodulation into per-batch conv weights
        (f32 math, cast to bf16 at the end)."""
        m = code @ a.T + b[None] + 1.0                             # (B, cin)
        wm = w[None] * m[:, None, :, None, None]                   # (B, co, ci, 3, 3)
        d = lax.rsqrt(jnp.sum(wm * wm, axis=(2, 3, 4), keepdims=True) + 1e-8)
        wf = wm * d
        wf = jnp.transpose(wf, (0, 1, 3, 4, 2)).reshape(code.shape[0], w.shape[0], -1)
        return wf.astype(bf16)                                     # (B, co, 9*ci)

    def forward(weights, style, conv_t_w, query_pts, query_viewdirs, exp_code):
        # TODO(synk): 'pose' (so3_exponential_map) pre-transform and train-time
        # density noise are not implemented (eval path without a 'pose' key).
        B = query_pts.shape[0]
        N = query_pts.shape[2]

        # ---- light XLA glue (style folding, embeddings, sampling matrices);
        #      all heavy per-pixel / per-point compute runs in ONE Pallas kernel ----
        x0 = jnp.einsum("bc,coij->boij", exp_code, conv_t_w).reshape(B, c0, init_hw)

        emb_parts = [query_viewdirs]
        for f in freqs:
            emb_parts.append(jnp.sin(query_viewdirs * f))
            emb_parts.append(jnp.cos(query_viewdirs * f))
        emb = jnp.concatenate(emb_parts, axis=1)                    # (B, E, N)

        ctr = 0.5 * (bbox[:, 0] + bbox[:, 1])
        half = 0.5 * (bbox[:, 1] - bbox[:, 0])
        q = (query_pts - ctr[None, :, None]) / half[None, :, None]
        u, v, w = q[:, 0], q[:, 1], q[:, 2]
        # Fused (3*res^2, N) sampling matrix: three grid_samples + plane sum
        # become ONE deep-K MXU matmul inside the kernel.
        s_t = jnp.concatenate([_sample_matrix_t(v, w, res),   # plane_x @ (x=v, y=w)
                               _sample_matrix_t(u, w, res),   # plane_y @ (x=u, y=w)
                               _sample_matrix_t(u, v, res)],  # plane_z @ (x=u, y=v)
                              axis=1)

        folded = []
        for j in range(L):
            blk = style[j]
            folded.append(_fold(exp_code, blk["a1"], blk["b1"], blk["w1"]))
            folded.append(_fold(exp_code, blk["a2"], blk["b2"], blk["w2"]))

        data_inputs = [x0.astype(bf16), emb.astype(bf16), s_t.astype(bf16)] + folded
        inputs = data_inputs + list(weights)
        in_specs = ([_batch_spec(a.shape) for a in data_inputs]
                    + [_resident_spec(a) for a in weights])

        out = pl.pallas_call(
            kernel,
            out_shape=jax.ShapeDtypeStruct((B, out_rows, N), jnp.float32),
            grid=(B,),
            in_specs=in_specs,
            out_specs=_batch_spec((B, out_rows, N)),
            compiler_params=pltpu.CompilerParams(
                dimension_semantics=("parallel",),   # one batch element per v7x TC
            ),
        )(*inputs)

        density = out[:, :dens_out]
        color = out[:, dens_out:dens_out + col_out]
        return density, color

    return jax.jit(forward), packed


# ----------------------------------------------------------------------------
# Deterministic synthetic parameters (shapes follow the module __init__)
# ----------------------------------------------------------------------------

def init_params(key, opt):
    latent = opt["exp_dim_3d"]
    res = opt["triplane_res"]
    nc = opt["triplane_dim"] * 3 // 2
    L = int(math.log2(res) - 1)
    filters = [min(nc * 2 ** (i + 1), 256) for i in range(L)][::-1]
    filters = [filters[0]] + filters

    keys = iter(jax.random.split(key, 128))

    def nrm(shape, scale):
        return jax.random.normal(next(keys), shape, jnp.float32) * scale

    def lin(din, dout):
        return {"w": nrm((dout, din), 1.0 / math.sqrt(din)), "b": nrm((dout,), 0.01)}

    def conv(cin, cout, bias=True):
        p = {"w": nrm((cout, cin, 3, 3), 1.0 / math.sqrt(cin * 9))}
        if bias:
            p["b"] = nrm((cout,), 0.01)
        return p

    params = {
        "to_initial": nrm((latent, filters[0], 4, 4), 1.0 / math.sqrt(latent)),
        "initial_conv": conv(filters[0], filters[0]),
        "blocks": [],
        "density_mlp": [lin(opt["density_mlp"][i], opt["density_mlp"][i + 1])
                        for i in range(len(opt["density_mlp"]) - 1)],
        "color_mlp": [lin(opt["color_mlp"][i], opt["color_mlp"][i + 1])
                      for i in range(len(opt["color_mlp"]) - 1)],
    }
    for j in range(L):
        cin, cout = filters[j], filters[j + 1]
        params["blocks"].append({
            "to_style1": lin(latent, cin),
            "conv1": conv(cin, cout, bias=False),
            "to_style2": lin(latent, cout),
            "conv2": conv(cout, cout, bias=False),
        })
    return params


# ----------------------------------------------------------------------------
# Main
# ----------------------------------------------------------------------------

if __name__ == "__main__":
    view_freq = 2
    opt = {
        "triplane_res": 16,
        "triplane_dim": 8,
        "exp_dim_3d": 16,
        "pos_freq": 4,          # pos_embedding is created but unused in HeadModule.forward
        "view_freq": view_freq,
        "density_mlp": [8, 64, 1],                        # len < 5 -> no-skip MLP
        "color_mlp": [8 + 3 * (1 + 2 * view_freq), 64, 3],
        "noise": 0.0,
        "bbox": [[-1.0, 1.0], [-1.0, 1.0], [-1.0, 1.0]],
    }
    # TODO(synk): MLP skip-connection branch (len(dims) >= 5) is not instantiated here.

    key = jax.random.PRNGKey(0)
    pkey, k1, k2, k3 = jax.random.split(key, 4)
    params = init_params(pkey, opt)
    forward_fn, packed = build_head_forward(opt, params)

    B, N = 2, 128
    query_pts = jax.random.uniform(k1, (B, 3, N), jnp.float32, -0.9, 0.9)
    dirs = jax.random.normal(k2, (B, 3, N), jnp.float32)
    query_viewdirs = dirs / jnp.linalg.norm(dirs, axis=1, keepdims=True)
    exp_code_3d = jax.random.normal(k3, (B, opt["exp_dim_3d"]), jnp.float32)

    density, color = forward_fn(packed["weights"], packed["style"], packed["convT"],
                                query_pts, query_viewdirs, exp_code_3d)
    jax.block_until_ready((density, color))

    assert density.shape == (B, opt["density_mlp"][-1], N)
    assert color.shape == (B, opt["color_mlp"][-1], N)
    assert bool(jnp.all(jnp.isfinite(density)))
    assert bool(jnp.all(jnp.isfinite(color)))

    print("KERNEL_OK")
</pallas_src>

<mosaic_0001>
module attributes {stable_mosaic.version = 11 : i64} {
  func.func @k(%arg0: memref<24x256xbf16, #tpu.memory_space<vmem>>, %arg1: memref<24x256xbf16, #tpu.memory_space<vmem>>) attributes {dimension_semantics = [], scalar_prefetch = 0 : i64, scratch_operands = 0 : i64, tpu.core_type = #tpu.core_type<tc>} {
    %c0 = arith.constant 0 : index
    %c0_0 = arith.constant 0 : index
    %0 = vector.load %arg0[%c0, %c0_0] : memref<24x256xbf16, #tpu.memory_space<vmem>>, vector<24x256xbf16>
    %c253_i32 = arith.constant 253 : i32
    %1 = tpu.dynamic_rotate %0 by %c253_i32 dim 1 : vector<24x256xbf16>, i32 -> vector<24x256xbf16>
    %c0_1 = arith.constant 0 : index
    %c0_2 = arith.constant 0 : index
    %2 = vector.load %arg1[%c0_1, %c0_2] : memref<24x256xbf16, #tpu.memory_space<vmem>>, vector<24x256xbf16>
    tpu.vector_store %arg1[%c0_1, %c0_2], %1 {strides = array<i32>} : memref<24x256xbf16, #tpu.memory_space<vmem>>, vector<24x256xbf16>,
    return
  }
}

module attributes {stable_mosaic.version = 11 : i64} {
  func.func @kernel(%arg0: i32, %arg1: memref<1x96x16xbf16, #tpu.memory_space<vmem>>, %arg2: memref<1x15x128xbf16, #tpu.memory_space<vmem>>, %arg3: memref<1x768x128xbf16, #tpu.memory_space<vmem>>, %arg4: memref<1x96x864xbf16, #tpu.memory_space<vmem>>, %arg5: memref<1x96x864xbf16, #tpu.memory_space<vmem>>, %arg6: memref<1x48x864xbf16, #tpu.memory_space<vmem>>, %arg7: memref<1x48x432xbf16, #tpu.memory_space<vmem>>, %arg8: memref<1x24x432xbf16, #tpu.memory_space<vmem>>, %arg9: memref<1x24x216xbf16, #tpu.memory_space<vmem>>, %arg10: memref<9x1x16xbf16, #tpu.memory_space<vmem>>, %arg11: memref<9x1x64xbf16, #tpu.memory_space<vmem>>, %arg12: memref<9x1x256xbf16, #tpu.memory_space<vmem>>, %arg13: memref<16x64xbf16, #tpu.memory_space<vmem>>, %arg14: memref<64x256xbf16, #tpu.memory_space<vmem>>, %arg15: memref<96x864xbf16, #tpu.memory_space<vmem>>, %arg16: memref<96x1xf32, #tpu.memory_space<vmem>>, %arg17: memref<64x8xbf16, #tpu.memory_space<vmem>>, %arg18: memref<64x1xf32, #tpu.memory_space<vmem>>, %arg19: memref<1x64xbf16, #tpu.memory_space<vmem>>, %arg20: memref<1x1xf32, #tpu.memory_space<vmem>>, %arg21: memref<64x8xbf16, #tpu.memory_space<vmem>>, %arg22: memref<64x15xbf16, #tpu.memory_space<vmem>>, %arg23: memref<64x1xf32, #tpu.memory_space<vmem>>, %arg24: memref<3x64xbf16, #tpu.memory_space<vmem>>, %arg25: memref<3x1xf32, #tpu.memory_space<vmem>>, %arg26: memref<1x8x128xf32, #tpu.memory_space<vmem>>) attributes {dimension_semantics = [#tpu.dimension_semantics<parallel>], iteration_bounds = array<i64: 2>, scalar_prefetch = 0 : i64, scratch_operands = 0 : i64, tpu.core_type = #tpu.core_type<tc>, window_params = [{transform_indices = @transform_0, window_bounds = array<i64: 1, 96, 16>}, {transform_indices = @transform_1, window_bounds = array<i64: 1, 15, 128>}, {transform_indices = @transform_2, window_bounds = array<i64: 1, 768, 128>}, {transform_indices = @transform_3, window_bounds = array<i64: 1, 96, 864>}, {transform_indices = @transform_4, window_bounds = array<i64: 1, 96, 864>}, {transform_indices = @transform_5, window_bounds = array<i64: 1, 48, 864>}, {transform_indices = @transform_6, window_bounds = array<i64: 1, 48, 432>}, {transform_indices = @transform_7, window_bounds = array<i64: 1, 24, 432>}, {transform_indices = @transform_8, window_bounds = array<i64: 1, 24, 216>}, {pipeline_mode = #tpu.pipeline_mode<synchronous>, transform_indices = @transform_9, window_bounds = array<i64: 9, 1, 16>}, {pipeline_mode = #tpu.pipeline_mode<synchronous>, transform_indices = @transform_10, window_bounds = array<i64: 9, 1, 64>}, {pipeline_mode = #tpu.pipeline_mode<synchronous>, transform_indices = @transform_11, window_bounds = array<i64: 9, 1, 256>}, {pipeline_mode = #tpu.pipeline_mode<synchronous>, transform_indices = @transform_12, window_bounds = array<i64: 16, 64>}, {pipeline_mode = #tpu.pipeline_mode<synchronous>, transform_indices = @transform_13, window_bounds = array<i64: 64, 256>}, {pipeline_mode = #tpu.pipeline_mode<synchronous>, transform_indices = @transform_14, window_bounds = array<i64: 96, 864>}, {pipeline_mode = #tpu.pipeline_mode<synchronous>, transform_indices = @transform_15, window_bounds = array<i64: 96, 1>}, {pipeline_mode = #tpu.pipeline_mode<synchronous>, transform_indices = @transform_16, window_bounds = array<i64: 64, 8>}, {pipeline_mode = #tpu.pipeline_mode<synchronous>, transform_indices = @transform_17, window_bounds = array<i64: 64, 1>}, {pipeline_mode = #tpu.pipeline_mode<synchronous>, transform_indices = @transform_18, window_bounds = array<i64: 1, 64>}, {pipeline_mode = #tpu.pipeline_mode<synchronous>, transform_indices = @transform_19, window_bounds = array<i64: 1, 1>}, {pipeline_mode = #tpu.pipeline_mode<synchronous>, transform_indices = @transform_20, window_bounds = array<i64: 64, 8>}, {pipeline_mode = #tpu.pipeline_mode<synchronous>, transform_indices = @transform_21, window_bounds = array<i64: 64, 15>}, {pipeline_mode = #tpu.pipeline_mode<synchronous>, transform_indices = @transform_22, window_bounds = array<i64: 64, 1>}, {pipeline_mode = #tpu.pipeline_mode<synchronous>, transform_indices = @transform_23, window_bounds = array<i64: 3, 64>}, {pipeline_mode = #tpu.pipeline_mode<synchronous>, transform_indices = @transform_24, window_bounds = array<i64: 3, 1>}, {transform_indices = @transform_25, window_bounds = array<i64: 1, 8, 128>}]} {
    %c0 = arith.constant 0 : index
    %c0_0 = arith.constant 0 : index
    %c0_1 = arith.constant 0 : index
    %0 = vector.load %arg1[%c0, %c0_0, %c0_1] : memref<1x96x16xbf16, #tpu.memory_space<vmem>>, vector<1x96x16xbf16>
    %1 = vector.shape_cast %0 : vector<1x96x16xbf16> to vector<96x16xbf16>
    %c0_2 = arith.constant 0 : index
    %c0_3 = arith.constant 0 : index
    %c0_4 = arith.constant 0 : index
    %2 = vector.load %arg2[%c0_2, %c0_3, %c0_4] : memref<1x15x128xbf16, #tpu.memory_space<vmem>>, vector<1x15x128xbf16>
    %3 = vector.shape_cast %2 : vector<1x15x128xbf16> to vector<15x128xbf16>
    %c0_5 = arith.constant 0 : index
    %c0_6 = arith.constant 0 : index
    %c0_7 = arith.constant 0 : index
    %4 = vector.load %arg3[%c0_5, %c0_6, %c0_7] : memref<1x768x128xbf16, #tpu.memory_space<vmem>>, vector<1x768x128xbf16>
    %5 = vector.shape_cast %4 : vector<1x768x128xbf16> to vector<768x128xbf16>
    %c0_8 = arith.constant 0 : index
    %c0_9 = arith.constant 0 : index
    %c0_10 = arith.constant 0 : index
    %6 = vector.load %arg4[%c0_8, %c0_9, %c0_10] : memref<1x96x864xbf16, #tpu.memory_space<vmem>>, vector<1x96x864xbf16>
    %7 = vector.shape_cast %6 : vector<1x96x864xbf16> to vector<96x864xbf16>
    %c0_11 = arith.constant 0 : index
    %c0_12 = arith.constant 0 : index
    %c0_13 = arith.constant 0 : index
    %8 = vector.load %arg5[%c0_11, %c0_12, %c0_13] : memref<1x96x864xbf16, #tpu.memory_space<vmem>>, vector<1x96x864xbf16>
    %9 = vector.shape_cast %8 : vector<1x96x864xbf16> to vector<96x864xbf16>
    %c0_14 = arith.constant 0 : index
    %c0_15 = arith.constant 0 : index
    %c0_16 = arith.constant 0 : index
    %10 = vector.load %arg6[%c0_14, %c0_15, %c0_16] : memref<1x48x864xbf16, #tpu.memory_space<vmem>>, vector<1x48x864xbf16>
    %11 = vector.shape_cast %10 : vector<1x48x864xbf16> to vector<48x864xbf16>
    %c0_17 = arith.constant 0 : index
    %c0_18 = arith.constant 0 : index
    %c0_19 = arith.constant 0 : index
    %12 = vector.load %arg7[%c0_17, %c0_18, %c0_19] : memref<1x48x432xbf16, #tpu.memory_space<vmem>>, vector<1x48x432xbf16>
    %13 = vector.shape_cast %12 : vector<1x48x432xbf16> to vector<48x432xbf16>
    %c0_20 = arith.constant 0 : index
    %c0_21 = arith.constant 0 : index
    %c0_22 = arith.constant 0 : index
    %14 = vector.load %arg8[%c0_20, %c0_21, %c0_22] : memref<1x24x432xbf16, #tpu.memory_space<vmem>>, vector<1x24x432xbf16>
    %15 = vector.shape_cast %14 : vector<1x24x432xbf16> to vector<24x432xbf16>
    %c0_23 = arith.constant 0 : index
    %c0_24 = arith.constant 0 : index
    %c0_25 = arith.constant 0 : index
    %16 = vector.load %arg9[%c0_23, %c0_24, %c0_25] : memref<1x24x216xbf16, #tpu.memory_space<vmem>>, vector<1x24x216xbf16>
    %17 = vector.shape_cast %16 : vector<1x24x216xbf16> to vector<24x216xbf16>
    %c0_26 = arith.constant 0 : index
    %c0_27 = arith.constant 0 : index
    %c0_28 = arith.constant 0 : index
    %18 = vector.load %arg10[%c0_26, %c0_27, %c0_28] : memref<9x1x16xbf16, #tpu.memory_space<vmem>>, vector<9x1x16xbf16>
    %c0_29 = arith.constant 0 : index
    %c0_30 = arith.constant 0 : index
    %c0_31 = arith.constant 0 : index
    %19 = vector.load %arg11[%c0_29, %c0_30, %c0_31] : memref<9x1x64xbf16, #tpu.memory_space<vmem>>, vector<9x1x64xbf16>
    %c0_32 = arith.constant 0 : index
    %c0_33 = arith.constant 0 : index
    %c0_34 = arith.constant 0 : index
    %20 = vector.load %arg12[%c0_32, %c0_33, %c0_34] : memref<9x1x256xbf16, #tpu.memory_space<vmem>>, vector<9x1x256xbf16>
    %c0_35 = arith.constant 0 : index
    %c0_36 = arith.constant 0 : index
    %21 = vector.load %arg13[%c0_35, %c0_36] : memref<16x64xbf16, #tpu.memory_space<vmem>>, vector<16x64xbf16>
    %c0_37 = arith.constant 0 : index
    %c0_38 = arith.constant 0 : index
    %22 = vector.load %arg14[%c0_37, %c0_38] : memref<64x256xbf16, #tpu.memory_space<vmem>>, vector<64x256xbf16>
    %c0_39 = arith.constant 0 : index
    %c0_40 = arith.constant 0 : index
    %23 = vector.load %arg15[%c0_39, %c0_40] : memref<96x864xbf16, #tpu.memory_space<vmem>>, vector<96x864xbf16>
    %c0_41 = arith.constant 0 : index
    %c0_42 = arith.constant 0 : index
    %24 = vector.load %arg16[%c0_41, %c0_42] : memref<96x1xf32, #tpu.memory_space<vmem>>, vector<96x1xf32>
    %c0_43 = arith.constant 0 : index
    %c0_44 = arith.constant 0 : index
    %25 = vector.load %arg17[%c0_43, %c0_44] : memref<64x8xbf16, #tpu.memory_space<vmem>>, vector<64x8xbf16>
    %c0_45 = arith.constant 0 : index
    %c0_46 = arith.constant 0 : index
    %26 = vector.load %arg18[%c0_45, %c0_46] : memref<64x1xf32, #tpu.memory_space<vmem>>, vector<64x1xf32>
    %c0_47 = arith.constant 0 : index
    %c0_48 = arith.constant 0 : index
    %27 = vector.load %arg19[%c0_47, %c0_48] : memref<1x64xbf16, #tpu.memory_space<vmem>>, vector<1x64xbf16>
    %c0_49 = arith.constant 0 : index
    %c0_50 = arith.constant 0 : index
    %28 = vector.load %arg20[%c0_49, %c0_50] : memref<1x1xf32, #tpu.memory_space<vmem>>, vector<1x1xf32>
    %c0_51 = arith.constant 0 : index
    %c0_52 = arith.constant 0 : index
    %29 = vector.load %arg21[%c0_51, %c0_52] : memref<64x8xbf16, #tpu.memory_space<vmem>>, vector<64x8xbf16>
    %c0_53 = arith.constant 0 : index
    %c0_54 = arith.constant 0 : index
    %30 = vector.load %arg22[%c0_53, %c0_54] : memref<64x15xbf16, #tpu.memory_space<vmem>>, vector<64x15xbf16>
    %c0_55 = arith.constant 0 : index
    %c0_56 = arith.constant 0 : index
    %31 = vector.load %arg23[%c0_55, %c0_56] : memref<64x1xf32, #tpu.memory_space<vmem>>, vector<64x1xf32>
    %c0_57 = arith.constant 0 : index
    %c0_58 = arith.constant 0 : index
    %32 = vector.load %arg24[%c0_57, %c0_58] : memref<3x64xbf16, #tpu.memory_space<vmem>>, vector<3x64xbf16>
    %c0_59 = arith.constant 0 : index
    %c0_60 = arith.constant 0 : index
    %33 = vector.load %arg25[%c0_59, %c0_60] : memref<3x1xf32, #tpu.memory_space<vmem>>, vector<3x1xf32>
    %cst = arith.constant 0.000000e+00 : bf16
    %34 = vector.broadcast %cst : bf16 to vector<96x5xbf16>
    %35 = tpu.concatenate %34, %1, %34 in 1 : vector<96x5xbf16>, vector<96x16xbf16>, vector<96x5xbf16> -> vector<96x26xbf16>
    %36 = vector.extract_strided_slice %35 {offsets = [0, 0], sizes = [96, 16], strides = [1, 1]} : vector<96x26xbf16> to vector<96x16xbf16>
    %37 = vector.extract_strided_slice %18 {offsets = [0, 0, 0], sizes = [1, 1, 16], strides = [1, 1, 1]} : vector<9x1x16xbf16> to vector<1x1x16xbf16>
    %38 = vector.shape_cast %37 : vector<1x1x16xbf16> to vector<1x16xbf16>
    %39 = vector.broadcast %38 : vector<1x16xbf16> to vector<96x16xbf16>
    %40 = arith.mulf %36, %39 : vector<96x16xbf16>
    %41 = vector.extract_strided_slice %35 {offsets = [0, 1], sizes = [96, 16], strides = [1, 1]} : vector<96x26xbf16> to vector<96x16xbf16>
    %42 = vector.extract_strided_slice %18 {offsets = [1, 0, 0], sizes = [1, 1, 16], strides = [1, 1, 1]} : vector<9x1x16xbf16> to vector<1x1x16xbf16>
    %43 = vector.shape_cast %42 : vector<1x1x16xbf16> to vector<1x16xbf16>
    %44 = vector.broadcast %43 : vector<1x16xbf16> to vector<96x16xbf16>
    %45 = arith.mulf %41, %44 : vector<96x16xbf16>
    %46 = vector.extract_strided_slice %35 {offsets = [0, 2], sizes = [96, 16], strides = [1, 1]} : vector<96x26xbf16> to vector<96x16xbf16>
    %47 = vector.extract_strided_slice %18 {offsets = [2, 0, 0], sizes = [1, 1, 16], strides = [1, 1, 1]} : vector<9x1x16xbf16> to vector<1x1x16xbf16>
    %48 = vector.shape_cast %47 : vector<1x1x16xbf16> to vector<1x16xbf16>
    %49 = vector.broadcast %48 : vector<1x16xbf16> to vector<96x16xbf16>
    %50 = arith.mulf %46, %49 : vector<96x16xbf16>
    %51 = vector.extract_strided_slice %35 {offsets = [0, 4], sizes = [96, 16], strides = [1, 1]} : vector<96x26xbf16> to vector<96x16xbf16>
    %52 = vector.extract_strided_slice %18 {offsets = [3, 0, 0], sizes = [1, 1, 16], strides = [1, 1, 1]} : vector<9x1x16xbf16> to vector<1x1x16xbf16>
    %53 = vector.shape_cast %52 : vector<1x1x16xbf16> to vector<1x16xbf16>
    %54 = vector.broadcast %53 : vector<1x16xbf16> to vector<96x16xbf16>
    %55 = arith.mulf %51, %54 : vector<96x16xbf16>
    %56 = vector.extract_strided_slice %35 {offsets = [0, 6], sizes = [96, 16], strides = [1, 1]} : vector<96x26xbf16> to vector<96x16xbf16>
    %57 = vector.extract_strided_slice %18 {offsets = [5, 0, 0], sizes = [1, 1, 16], strides = [1, 1, 1]} : vector<9x1x16xbf16> to vector<1x1x16xbf16>
    %58 = vector.shape_cast %57 : vector<1x1x16xbf16> to vector<1x16xbf16>
    %59 = vector.broadcast %58 : vector<1x16xbf16> to vector<96x16xbf16>
    %60 = arith.mulf %56, %59 : vector<96x16xbf16>
    %61 = vector.extract_strided_slice %35 {offsets = [0, 8], sizes = [96, 16], strides = [1, 1]} : vector<96x26xbf16> to vector<96x16xbf16>
    %62 = vector.extract_strided_slice %18 {offsets = [6, 0, 0], sizes = [1, 1, 16], strides = [1, 1, 1]} : vector<9x1x16xbf16> to vector<1x1x16xbf16>
    %63 = vector.shape_cast %62 : vector<1x1x16xbf16> to vector<1x16xbf16>
    %64 = vector.broadcast %63 : vector<1x16xbf16> to vector<96x16xbf16>
    %65 = arith.mulf %61, %64 : vector<96x16xbf16>
    %66 = vector.extract_strided_slice %35 {offsets = [0, 9], sizes = [96, 16], strides = [1, 1]} : vector<96x26xbf16> to vector<96x16xbf16>
    %67 = vector.extract_strided_slice %18 {offsets = [7, 0, 0], sizes = [1, 1, 16], strides = [1, 1, 1]} : vector<9x1x16xbf16> to vector<1x1x16xbf16>
    %68 = vector.shape_cast %67 : vector<1x1x16xbf16> to vector<1x16xbf16>
    %69 = vector.broadcast %68 : vector<1x16xbf16> to vector<96x16xbf16>
    %70 = arith.mulf %66, %69 : vector<96x16xbf16>
    %71 = vector.extract_strided_slice %35 {offsets = [0, 10], sizes = [96, 16], strides = [1, 1]} : vector<96x26xbf16> to vector<96x16xbf16>
    %72 = vector.extract_strided_slice %18 {offsets = [8, 0, 0], sizes = [1, 1, 16], strides = [1, 1, 1]} : vector<9x1x16xbf16> to vector<1x1x16xbf16>
    %73 = vector.shape_cast %72 : vector<1x1x16xbf16> to vector<1x16xbf16>
    %74 = vector.broadcast %73 : vector<1x16xbf16> to vector<96x16xbf16>
    %75 = arith.mulf %71, %74 : vector<96x16xbf16>
    %76 = tpu.concatenate %40, %45, %50, %55, %1, %60, %65, %70, %75 in 0 : vector<96x16xbf16>, vector<96x16xbf16>, vector<96x16xbf16>, vector<96x16xbf16>, vector<96x16xbf16>, vector<96x16xbf16>, vector<96x16xbf16>, vector<96x16xbf16>, vector<96x16xbf16> -> vector<864x16xbf16>
    %cst_61 = arith.constant dense<0.000000e+00> : vector<96x16xf32>
    %77 = tpu.matmul %23, %76, %cst_61 {dimension_numbers = #tpu.dot_dimension_numbers<[1], [0], [0], [1], [0, 0, 1, 1], [], []>} : vector<96x864xbf16>, vector<864x16xbf16>, vector<96x16xf32> -> vector<96x16xf32>
    %78 = vector.broadcast %24 : vector<96x1xf32> to vector<96x16xf32>
    %79 = arith.addf %77, %78 : vector<96x16xf32>
    %80 = arith.truncf %79 : vector<96x16xf32> to vector<96x16xbf16>
    %cst_62 = arith.constant 0.000000e+00 : bf16
    %81 = vector.broadcast %cst_62 : bf16 to vector<96x5xbf16>
    %82 = tpu.concatenate %81, %80, %81 in 1 : vector<96x5xbf16>, vector<96x16xbf16>, vector<96x5xbf16> -> vector<96x26xbf16>
    %83 = vector.extract_strided_slice %82 {offsets = [0, 0], sizes = [96, 16], strides = [1, 1]} : vector<96x26xbf16> to vector<96x16xbf16>
    %84 = vector.extract_strided_slice %18 {offsets = [0, 0, 0], sizes = [1, 1, 16], strides = [1, 1, 1]} : vector<9x1x16xbf16> to vector<1x1x16xbf16>
    %85 = vector.shape_cast %84 : vector<1x1x16xbf16> to vector<1x16xbf16>
    %86 = vector.broadcast %85 : vector<1x16xbf16> to vector<96x16xbf16>
    %87 = arith.mulf %83, %86 : vector<96x16xbf16>
    %88 = vector.extract_strided_slice %82 {offsets = [0, 1], sizes = [96, 16], strides = [1, 1]} : vector<96x26xbf16> to vector<96x16xbf16>
    %89 = vector.extract_strided_slice %18 {offsets = [1, 0, 0], sizes = [1, 1, 16], strides = [1, 1, 1]} : vector<9x1x16xbf16> to vector<1x1x16xbf16>
    %90 = vector.shape_cast %89 : vector<1x1x16xbf16> to vector<1x16xbf16>
    %91 = vector.broadcast %90 : vector<1x16xbf16> to vector<96x16xbf16>
    %92 = arith.mulf %88, %91 : vector<96x16xbf16>
    %93 = vector.extract_strided_slice %82 {offsets = [0, 2], sizes = [96, 16], strides = [1, 1]} : vector<96x26xbf16> to vector<96x16xbf16>
    %94 = vector.extract_strided_slice %18 {offsets = [2, 0, 0], sizes = [1, 1, 16], strides = [1, 1, 1]} : vector<9x1x16xbf16> to vector<1x1x16xbf16>
    %95 = vector.shape_cast %94 : vector<1x1x16xbf16> to vector<1x16xbf16>
    %96 = vector.broadcast %95 : vector<1x16xbf16> to vector<96x16xbf16>
    %97 = arith.mulf %93, %96 : vector<96x16xbf16>
    %98 = vector.extract_strided_slice %82 {offsets = [0, 4], sizes = [96, 16], strides = [1, 1]} : vector<96x26xbf16> to vector<96x16xbf16>
    %99 = vector.extract_strided_slice %18 {offsets = [3, 0, 0], sizes = [1, 1, 16], strides = [1, 1, 1]} : vector<9x1x16xbf16> to vector<1x1x16xbf16>
    %100 = vector.shape_cast %99 : vector<1x1x16xbf16> to vector<1x16xbf16>
    %101 = vector.broadcast %100 : vector<1x16xbf16> to vector<96x16xbf16>
    %102 = arith.mulf %98, %101 : vector<96x16xbf16>
    %103 = vector.extract_strided_slice %82 {offsets = [0, 6], sizes = [96, 16], strides = [1, 1]} : vector<96x26xbf16> to vector<96x16xbf16>
    %104 = vector.extract_strided_slice %18 {offsets = [5, 0, 0], sizes = [1, 1, 16], strides = [1, 1, 1]} : vector<9x1x16xbf16> to vector<1x1x16xbf16>
    %105 = vector.shape_cast %104 : vector<1x1x16xbf16> to vector<1x16xbf16>
    %106 = vector.broadcast %105 : vector<1x16xbf16> to vector<96x16xbf16>
    %107 = arith.mulf %103, %106 : vector<96x16xbf16>
    %108 = vector.extract_strided_slice %82 {offsets = [0, 8], sizes = [96, 16], strides = [1, 1]} : vector<96x26xbf16> to vector<96x16xbf16>
    %109 = vector.extract_strided_slice %18 {offsets = [6, 0, 0], sizes = [1, 1, 16], strides = [1, 1, 1]} : vector<9x1x16xbf16> to vector<1x1x16xbf16>
    %110 = vector.shape_cast %109 : vector<1x1x16xbf16> to vector<1x16xbf16>
    %111 = vector.broadcast %110 : vector<1x16xbf16> to vector<96x16xbf16>
    %112 = arith.mulf %108, %111 : vector<96x16xbf16>
    %113 = vector.extract_strided_slice %82 {offsets = [0, 9], sizes = [96, 16], strides = [1, 1]} : vector<96x26xbf16> to vector<96x16xbf16>
    %114 = vector.extract_strided_slice %18 {offsets = [7, 0, 0], sizes = [1, 1, 16], strides = [1, 1, 1]} : vector<9x1x16xbf16> to vector<1x1x16xbf16>
    %115 = vector.shape_cast %114 : vector<1x1x16xbf16> to vector<1x16xbf16>
    %116 = vector.broadcast %115 : vector<1x16xbf16> to vector<96x16xbf16>
    %117 = arith.mulf %113, %116 : vector<96x16xbf16>
    %118 = vector.extract_strided_slice %82 {offsets = [0, 10], sizes = [96, 16], strides = [1, 1]} : vector<96x26xbf16> to vector<96x16xbf16>
    %119 = vector.extract_strided_slice %18 {offsets = [8, 0, 0], sizes = [1, 1, 16], strides = [1, 1, 1]} : vector<9x1x16xbf16> to vector<1x1x16xbf16>
    %120 = vector.shape_cast %119 : vector<1x1x16xbf16> to vector<1x16xbf16>
    %121 = vector.broadcast %120 : vector<1x16xbf16> to vector<96x16xbf16>
    %122 = arith.mulf %118, %121 : vector<96x16xbf16>
    %123 = tpu.concatenate %87, %92, %97, %102, %80, %107, %112, %117, %122 in 0 : vector<96x16xbf16>, vector<96x16xbf16>, vector<96x16xbf16>, vector<96x16xbf16>, vector<96x16xbf16>, vector<96x16xbf16>, vector<96x16xbf16>, vector<96x16xbf16>, vector<96x16xbf16> -> vector<864x16xbf16>
    %cst_63 = arith.constant dense<0.000000e+00> : vector<96x16xf32>
    %124 = tpu.matmul %7, %123, %cst_63 {dimension_numbers = #tpu.dot_dimension_numbers<[1], [0], [0], [1], [0, 0, 1, 1], [], []>} : vector<96x864xbf16>, vector<864x16xbf16>, vector<96x16xf32> -> vector<96x16xf32>
    %cst_64 = arith.constant 0.000000e+00 : f32
    %125 = vector.broadcast %cst_64 : f32 to vector<96x16xf32>
    %126 = arith.cmpf oge, %124, %125 : vector<96x16xf32>
    %cst_65 = arith.constant 2.000000e-01 : f32
    %127 = vector.broadcast %cst_65 : f32 to vector<96x16xf32>
    %128 = arith.mulf %127, %124 : vector<96x16xf32>
    %129 = arith.select %126, %124, %128 : vector<96x16xi1>, vector<96x16xf32>
    %130 = arith.truncf %129 : vector<96x16xf32> to vector<96x16xbf16>
    %cst_66 = arith.constant 0.000000e+00 : bf16
    %131 = vector.broadcast %cst_66 : bf16 to vector<96x5xbf16>
    %132 = tpu.concatenate %131, %130, %131 in 1 : vector<96x5xbf16>, vector<96x16xbf16>, vector<96x5xbf16> -> vector<96x26xbf16>
    %133 = vector.extract_strided_slice %132 {offsets = [0, 0], sizes = [96, 16], strides = [1, 1]} : vector<96x26xbf16> to vector<96x16xbf16>
    %134 = vector.extract_strided_slice %18 {offsets = [0, 0, 0], sizes = [1, 1, 16], strides = [1, 1, 1]} : vector<9x1x16xbf16> to vector<1x1x16xbf16>
    %135 = vector.shape_cast %134 : vector<1x1x16xbf16> to vector<1x16xbf16>
    %136 = vector.broadcast %135 : vector<1x16xbf16> to vector<96x16xbf16>
    %137 = arith.mulf %133, %136 : vector<96x16xbf16>
    %138 = vector.extract_strided_slice %132 {offsets = [0, 1], sizes = [96, 16], strides = [1, 1]} : vector<96x26xbf16> to vector<96x16xbf16>
    %139 = vector.extract_strided_slice %18 {offsets = [1, 0, 0], sizes = [1, 1, 16], strides = [1, 1, 1]} : vector<9x1x16xbf16> to vector<1x1x16xbf16>
    %140 = vector.shape_cast %139 : vector<1x1x16xbf16> to vector<1x16xbf16>
    %141 = vector.broadcast %140 : vector<1x16xbf16> to vector<96x16xbf16>
    %142 = arith.mulf %138, %141 : vector<96x16xbf16>
    %143 = vector.extract_strided_slice %132 {offsets = [0, 2], sizes = [96, 16], strides = [1, 1]} : vector<96x26xbf16> to vector<96x16xbf16>
    %144 = vector.extract_strided_slice %18 {offsets = [2, 0, 0], sizes = [1, 1, 16], strides = [1, 1, 1]} : vector<9x1x16xbf16> to vector<1x1x16xbf16>
    %145 = vector.shape_cast %144 : vector<1x1x16xbf16> to vector<1x16xbf16>
    %146 = vector.broadcast %145 : vector<1x16xbf16> to vector<96x16xbf16>
    %147 = arith.mulf %143, %146 : vector<96x16xbf16>
    %148 = vector.extract_strided_slice %132 {offsets = [0, 4], sizes = [96, 16], strides = [1, 1]} : vector<96x26xbf16> to vector<96x16xbf16>
    %149 = vector.extract_strided_slice %18 {offsets = [3, 0, 0], sizes = [1, 1, 16], strides = [1, 1, 1]} : vector<9x1x16xbf16> to vector<1x1x16xbf16>
    %150 = vector.shape_cast %149 : vector<1x1x16xbf16> to vector<1x16xbf16>
    %151 = vector.broadcast %150 : vector<1x16xbf16> to vector<96x16xbf16>
    %152 = arith.mulf %148, %151 : vector<96x16xbf16>
    %153 = vector.extract_strided_slice %132 {offsets = [0, 6], sizes = [96, 16], strides = [1, 1]} : vector<96x26xbf16> to vector<96x16xbf16>
    %154 = vector.extract_strided_slice %18 {offsets = [5, 0, 0], sizes = [1, 1, 16], strides = [1, 1, 1]} : vector<9x1x16xbf16> to vector<1x1x16xbf16>
    %155 = vector.shape_cast %154 : vector<1x1x16xbf16> to vector<1x16xbf16>
    %156 = vector.broadcast %155 : vector<1x16xbf16> to vector<96x16xbf16>
    %157 = arith.mulf %153, %156 : vector<96x16xbf16>
    %158 = vector.extract_strided_slice %132 {offsets = [0, 8], sizes = [96, 16], strides = [1, 1]} : vector<96x26xbf16> to vector<96x16xbf16>
    %159 = vector.extract_strided_slice %18 {offsets = [6, 0, 0], sizes = [1, 1, 16], strides = [1, 1, 1]} : vector<9x1x16xbf16> to vector<1x1x16xbf16>
    %160 = vector.shape_cast %159 : vector<1x1x16xbf16> to vector<1x16xbf16>
    %161 = vector.broadcast %160 : vector<1x16xbf16> to vector<96x16xbf16>
    %162 = arith.mulf %158, %161 : vector<96x16xbf16>
    %163 = vector.extract_strided_slice %132 {offsets = [0, 9], sizes = [96, 16], strides = [1, 1]} : vector<96x26xbf16> to vector<96x16xbf16>
    %164 = vector.extract_strided_slice %18 {offsets = [7, 0, 0], sizes = [1, 1, 16], strides = [1, 1, 1]} : vector<9x1x16xbf16> to vector<1x1x16xbf16>
    %165 = vector.shape_cast %164 : vector<1x1x16xbf16> to vector<1x16xbf16>
    %166 = vector.broadcast %165 : vector<1x16xbf16> to vector<96x16xbf16>
    %167 = arith.mulf %163, %166 : vector<96x16xbf16>
    %168 = vector.extract_strided_slice %132 {offsets = [0, 10], sizes = [96, 16], strides = [1, 1]} : vector<96x26xbf16> to vector<96x16xbf16>
    %169 = vector.extract_strided_slice %18 {offsets = [8, 0, 0], sizes = [1, 1, 16], strides = [1, 1, 1]} : vector<9x1x16xbf16> to vector<1x1x16xbf16>
    %170 = vector.shape_cast %169 : vector<1x1x16xbf16> to vector<1x16xbf16>
    %171 = vector.broadcast %170 : vector<1x16xbf16> to vector<96x16xbf16>
    %172 = arith.mulf %168, %171 : vector<96x16xbf16>
    %173 = tpu.concatenate %137, %142, %147, %152, %130, %157, %162, %167, %172 in 0 : vector<96x16xbf16>, vector<96x16xbf16>, vector<96x16xbf16>, vector<96x16xbf16>, vector<96x16xbf16>, vector<96x16xbf16>, vector<96x16xbf16>, vector<96x16xbf16>, vector<96x16xbf16> -> vector<864x16xbf16>
    %cst_67 = arith.constant dense<0.000000e+00> : vector<96x16xf32>
    %174 = tpu.matmul %9, %173, %cst_67 {dimension_numbers = #tpu.dot_dimension_numbers<[1], [0], [0], [1], [0, 0, 1, 1], [], []>} : vector<96x864xbf16>, vector<864x16xbf16>, vector<96x16xf32> -> vector<96x16xf32>
    %cst_68 = arith.constant 0.000000e+00 : f32
    %175 = vector.broadcast %cst_68 : f32 to vector<96x16xf32>
    %176 = arith.cmpf oge, %174, %175 : vector<96x16xf32>
    %cst_69 = arith.constant 2.000000e-01 : f32
    %177 = vector.broadcast %cst_69 : f32 to vector<96x16xf32>
    %178 = arith.mulf %177, %174 : vector<96x16xf32>
    %179 = arith.select %176, %174, %178 : vector<96x16xi1>, vector<96x16xf32>
    %180 = arith.truncf %179 : vector<96x16xf32> to vector<96x16xbf16>
    %cst_70 = arith.constant dense<0.000000e+00> : vector<96x64xf32>
    %181 = tpu.matmul %180, %21, %cst_70 {dimension_numbers = #tpu.dot_dimension_numbers<[1], [0], [0], [1], [0, 0, 1, 1], [], []>} : vector<96x16xbf16>, vector<16x64xbf16>, vector<96x64xf32> -> vector<96x64xf32>
    %182 = arith.truncf %181 : vector<96x64xf32> to vector<96x64xbf16>
    %cst_71 = arith.constant 0.000000e+00 : bf16
    %183 = vector.broadcast %cst_71 : bf16 to vector<96x9xbf16>
    %184 = tpu.concatenate %183, %182, %183 in 1 : vector<96x9xbf16>, vector<96x64xbf16>, vector<96x9xbf16> -> vector<96x82xbf16>
    %185 = vector.extract_strided_slice %184 {offsets = [0, 0], sizes = [96, 64], strides = [1, 1]} : vector<96x82xbf16> to vector<96x64xbf16>
    %186 = vector.extract_strided_slice %19 {offsets = [0, 0, 0], sizes = [1, 1, 64], strides = [1, 1, 1]} : vector<9x1x64xbf16> to vector<1x1x64xbf16>
    %187 = vector.shape_cast %186 : vector<1x1x64xbf16> to vector<1x64xbf16>
    %188 = vector.broadcast %187 : vector<1x64xbf16> to vector<96x64xbf16>
    %189 = arith.mulf %185, %188 : vector<96x64xbf16>
    %190 = vector.extract_strided_slice %184 {offsets = [0, 1], sizes = [96, 64], strides = [1, 1]} : vector<96x82xbf16> to vector<96x64xbf16>
    %191 = vector.extract_strided_slice %19 {offsets = [1, 0, 0], sizes = [1, 1, 64], strides = [1, 1, 1]} : vector<9x1x64xbf16> to vector<1x1x64xbf16>
    %192 = vector.shape_cast %191 : vector<1x1x64xbf16> to vector<1x64xbf16>
    %193 = vector.broadcast %192 : vector<1x64xbf16> to vector<96x64xbf16>
    %194 = arith.mulf %190, %193 : vector<96x64xbf16>
    %195 = vector.extract_strided_slice %184 {offsets = [0, 2], sizes = [96, 64], strides = [1, 1]} : vector<96x82xbf16> to vector<96x64xbf16>
    %196 = vector.extract_strided_slice %19 {offsets = [2, 0, 0], sizes = [1, 1, 64], strides = [1, 1, 1]} : vector<9x1x64xbf16> to vector<1x1x64xbf16>
    %197 = vector.shape_cast %196 : vector<1x1x64xbf16> to vector<1x64xbf16>
    %198 = vector.broadcast %197 : vector<1x64xbf16> to vector<96x64xbf16>
    %199 = arith.mulf %195, %198 : vector<96x64xbf16>
    %200 = vector.extract_strided_slice %184 {offsets = [0, 8], sizes = [96, 64], strides = [1, 1]} : vector<96x82xbf16> to vector<96x64xbf16>
    %201 = vector.extract_strided_slice %19 {offsets = [3, 0, 0], sizes = [1, 1, 64], strides = [1, 1, 1]} : vector<9x1x64xbf16> to vector<1x1x64xbf16>
    %202 = vector.shape_cast %201 : vector<1x1x64xbf16> to vector<1x64xbf16>
    %203 = vector.broadcast %202 : vector<1x64xbf16> to vector<96x64xbf16>
    %204 = arith.mulf %200, %203 : vector<96x64xbf16>
    %205 = vector.extract_strided_slice %184 {offsets = [0, 10], sizes = [96, 64], strides = [1, 1]} : vector<96x82xbf16> to vector<96x64xbf16>
    %206 = vector.extract_strided_slice %19 {offsets = [5, 0, 0], sizes = [1, 1, 64], strides = [1, 1, 1]} : vector<9x1x64xbf16> to vector<1x1x64xbf16>
    %207 = vector.shape_cast %206 : vector<1x1x64xbf16> to vector<1x64xbf16>
    %208 = vector.broadcast %207 : vector<1x64xbf16> to vector<96x64xbf16>
    %209 = arith.mulf %205, %208 : vector<96x64xbf16>
    %210 = vector.extract_strided_slice %184 {offsets = [0, 16], sizes = [96, 64], strides = [1, 1]} : vector<96x82xbf16> to vector<96x64xbf16>
    %211 = vector.extract_strided_slice %19 {offsets = [6, 0, 0], sizes = [1, 1, 64], strides = [1, 1, 1]} : vector<9x1x64xbf16> to vector<1x1x64xbf16>
    %212 = vector.shape_cast %211 : vector<1x1x64xbf16> to vector<1x64xbf16>
    %213 = vector.broadcast %212 : vector<1x64xbf16> to vector<96x64xbf16>
    %214 = arith.mulf %210, %213 : vector<96x64xbf16>
    %215 = vector.extract_strided_slice %184 {offsets = [0, 17], sizes = [96, 64], strides = [1, 1]} : vector<96x82xbf16> to vector<96x64xbf16>
    %216 = vector.extract_strided_slice %19 {offsets = [7, 0, 0], sizes = [1, 1, 64], strides = [1, 1, 1]} : vector<9x1x64xbf16> to vector<1x1x64xbf16>
    %217 = vector.shape_cast %216 : vector<1x1x64xbf16> to vector<1x64xbf16>
    %218 = vector.broadcast %217 : vector<1x64xbf16> to vector<96x64xbf16>
    %219 = arith.mulf %215, %218 : vector<96x64xbf16>
    %220 = vector.extract_strided_slice %184 {offsets = [0, 18], sizes = [96, 64], strides = [1, 1]} : vector<96x82xbf16> to vector<96x64xbf16>
    %221 = vector.extract_strided_slice %19 {offsets = [8, 0, 0], sizes = [1, 1, 64], strides = [1, 1, 1]} : vector<9x1x64xbf16> to vector<1x1x64xbf16>
    %222 = vector.shape_cast %221 : vector<1x1x64xbf16> to vector<1x64xbf16>
    %223 = vector.broadcast %222 : vector<1x64xbf16> to vector<96x64xbf16>
    %224 = arith.mulf %220, %223 : vector<96x64xbf16>
    %225 = tpu.concatenate %189, %194, %199, %204, %182, %209, %214, %219, %224 in 0 : vector<96x64xbf16>, vector<96x64xbf16>, vector<96x64xbf16>, vector<96x64xbf16>, vector<96x64xbf16>, vector<96x64xbf16>, vector<96x64xbf16>, vector<96x64xbf16>, vector<96x64xbf16> -> vector<864x64xbf16>
    %cst_72 = arith.constant dense<0.000000e+00> : vector<48x64xf32>
    %226 = tpu.matmul %11, %225, %cst_72 {dimension_numbers = #tpu.dot_dimension_numbers<[1], [0], [0], [1], [0, 0, 1, 1], [], []>} : vector<48x864xbf16>, vector<864x64xbf16>, vector<48x64xf32> -> vector<48x64xf32>
    %cst_73 = arith.constant 0.000000e+00 : f32
    %227 = vector.broadcast %cst_73 : f32 to vector<48x64xf32>
    %228 = arith.cmpf oge, %226, %227 : vector<48x64xf32>
    %cst_74 = arith.constant 2.000000e-01 : f32
    %229 = vector.broadcast %cst_74 : f32 to vector<48x64xf32>
    %230 = arith.mulf %229, %226 : vector<48x64xf32>
    %231 = arith.select %228, %226, %230 : vector<48x64xi1>, vector<48x64xf32>
    %232 = arith.truncf %231 : vector<48x64xf32> to vector<48x64xbf16>
    %cst_75 = arith.constant 0.000000e+00 : bf16
    %233 = vector.broadcast %cst_75 : bf16 to vector<48x9xbf16>
    %234 = tpu.concatenate %233, %232, %233 in 1 : vector<48x9xbf16>, vector<48x64xbf16>, vector<48x9xbf16> -> vector<48x82xbf16>
    %235 = vector.extract_strided_slice %234 {offsets = [0, 0], sizes = [48, 64], strides = [1, 1]} : vector<48x82xbf16> to vector<48x64xbf16>
    %236 = vector.extract_strided_slice %19 {offsets = [0, 0, 0], sizes = [1, 1, 64], strides = [1, 1, 1]} : vector<9x1x64xbf16> to vector<1x1x64xbf16>
    %237 = vector.shape_cast %236 : vector<1x1x64xbf16> to vector<1x64xbf16>
    %238 = vector.broadcast %237 : vector<1x64xbf16> to vector<48x64xbf16>
    %239 = arith.mulf %235, %238 : vector<48x64xbf16>
    %240 = vector.extract_strided_slice %234 {offsets = [0, 1], sizes = [48, 64], strides = [1, 1]} : vector<48x82xbf16> to vector<48x64xbf16>
    %241 = vector.extract_strided_slice %19 {offsets = [1, 0, 0], sizes = [1, 1, 64], strides = [1, 1, 1]} : vector<9x1x64xbf16> to vector<1x1x64xbf16>
    %242 = vector.shape_cast %241 : vector<1x1x64xbf16> to vector<1x64xbf16>
    %243 = vector.broadcast %242 : vector<1x64xbf16> to vector<48x64xbf16>
    %244 = arith.mulf %240, %243 : vector<48x64xbf16>
    %245 = vector.extract_strided_slice %234 {offsets = [0, 2], sizes = [48, 64], strides = [1, 1]} : vector<48x82xbf16> to vector<48x64xbf16>
    %246 = vector.extract_strided_slice %19 {offsets = [2, 0, 0], sizes = [1, 1, 64], strides = [1, 1, 1]} : vector<9x1x64xbf16> to vector<1x1x64xbf16>
    %247 = vector.shape_cast %246 : vector<1x1x64xbf16> to vector<1x64xbf16>
    %248 = vector.broadcast %247 : vector<1x64xbf16> to vector<48x64xbf16>
    %249 = arith.mulf %245, %248 : vector<48x64xbf16>
    %250 = vector.extract_strided_slice %234 {offsets = [0, 8], sizes = [48, 64], strides = [1, 1]} : vector<48x82xbf16> to vector<48x64xbf16>
    %251 = vector.extract_strided_slice %19 {offsets = [3, 0, 0], sizes = [1, 1, 64], strides = [1, 1, 1]} : vector<9x1x64xbf16> to vector<1x1x64xbf16>
    %252 = vector.shape_cast %251 : vector<1x1x64xbf16> to vector<1x64xbf16>
    %253 = vector.broadcast %252 : vector<1x64xbf16> to vector<48x64xbf16>
    %254 = arith.mulf %250, %253 : vector<48x64xbf16>
    %255 = vector.extract_strided_slice %234 {offsets = [0, 10], sizes = [48, 64], strides = [1, 1]} : vector<48x82xbf16> to vector<48x64xbf16>
    %256 = vector.extract_strided_slice %19 {offsets = [5, 0, 0], sizes = [1, 1, 64], strides = [1, 1, 1]} : vector<9x1x64xbf16> to vector<1x1x64xbf16>
    %257 = vector.shape_cast %256 : vector<1x1x64xbf16> to vector<1x64xbf16>
    %258 = vector.broadcast %257 : vector<1x64xbf16> to vector<48x64xbf16>
    %259 = arith.mulf %255, %258 : vector<48x64xbf16>
    %260 = vector.extract_strided_slice %234 {offsets = [0, 16], sizes = [48, 64], strides = [1, 1]} : vector<48x82xbf16> to vector<48x64xbf16>
    %261 = vector.extract_strided_slice %19 {offsets = [6, 0, 0], sizes = [1, 1, 64], strides = [1, 1, 1]} : vector<9x1x64xbf16> to vector<1x1x64xbf16>
    %262 = vector.shape_cast %261 : vector<1x1x64xbf16> to vector<1x64xbf16>
    %263 = vector.broadcast %262 : vector<1x64xbf16> to vector<48x64xbf16>
    %264 = arith.mulf %260, %263 : vector<48x64xbf16>
    %265 = vector.extract_strided_slice %234 {offsets = [0, 17], sizes = [48, 64], strides = [1, 1]} : vector<48x82xbf16> to vector<48x64xbf16>
    %266 = vector.extract_strided_slice %19 {offsets = [7, 0, 0], sizes = [1, 1, 64], strides = [1, 1, 1]} : vector<9x1x64xbf16> to vector<1x1x64xbf16>
    %267 = vector.shape_cast %266 : vector<1x1x64xbf16> to vector<1x64xbf16>
    %268 = vector.broadcast %267 : vector<1x64xbf16> to vector<48x64xbf16>
    %269 = arith.mulf %265, %268 : vector<48x64xbf16>
    %270 = vector.extract_strided_slice %234 {offsets = [0, 18], sizes = [48, 64], strides = [1, 1]} : vector<48x82xbf16> to vector<48x64xbf16>
    %271 = vector.extract_strided_slice %19 {offsets = [8, 0, 0], sizes = [1, 1, 64], strides = [1, 1, 1]} : vector<9x1x64xbf16> to vector<1x1x64xbf16>
    %272 = vector.shape_cast %271 : vector<1x1x64xbf16> to vector<1x64xbf16>
    %273 = vector.broadcast %272 : vector<1x64xbf16> to vector<48x64xbf16>
    %274 = arith.mulf %270, %273 : vector<48x64xbf16>
    %275 = tpu.concatenate %239, %244, %249, %254, %232, %259, %264, %269, %274 in 0 : vector<48x64xbf16>, vector<48x64xbf16>, vector<48x64xbf16>, vector<48x64xbf16>, vector<48x64xbf16>, vector<48x64xbf16>, vector<48x64xbf16>, vector<48x64xbf16>, vector<48x64xbf16> -> vector<432x64xbf16>
    %cst_76 = arith.constant dense<0.000000e+00> : vector<48x64xf32>
    %276 = tpu.matmul %13, %275, %cst_76 {dimension_numbers = #tpu.dot_dimension_numbers<[1], [0], [0], [1], [0, 0, 1, 1], [], []>} : vector<48x432xbf16>, vector<432x64xbf16>, vector<48x64xf32> -> vector<48x64xf32>
    %cst_77 = arith.constant 0.000000e+00 : f32
    %277 = vector.broadcast %cst_77 : f32 to vector<48x64xf32>
    %278 = arith.cmpf oge, %276, %277 : vector<48x64xf32>
    %cst_78 = arith.constant 2.000000e-01 : f32
    %279 = vector.broadcast %cst_78 : f32 to vector<48x64xf32>
    %280 = arith.mulf %279, %276 : vector<48x64xf32>
    %281 = arith.select %278, %276, %280 : vector<48x64xi1>, vector<48x64xf32>
    %282 = arith.truncf %281 : vector<48x64xf32> to vector<48x64xbf16>
    %cst_79 = arith.constant dense<0.000000e+00> : vector<48x256xf32>
    %283 = tpu.matmul %282, %22, %cst_79 {dimension_numbers = #tpu.dot_dimension_numbers<[1], [0], [0], [1], [0, 0, 1, 1], [], []>} : vector<48x64xbf16>, vector<64x256xbf16>, vector<48x256xf32> -> vector<48x256xf32>
    %284 = arith.truncf %283 : vector<48x256xf32> to vector<48x256xbf16>
    %cst_80 = arith.constant 0.000000e+00 : bf16
    %285 = vector.broadcast %cst_80 : bf16 to vector<48x17xbf16>
    %286 = tpu.concatenate %285, %284, %285 in 1 : vector<48x17xbf16>, vector<48x256xbf16>, vector<48x17xbf16> -> vector<48x290xbf16>
    %287 = vector.extract_strided_slice %286 {offsets = [0, 0], sizes = [48, 256], strides = [1, 1]} : vector<48x290xbf16> to vector<48x256xbf16>
    %288 = vector.extract_strided_slice %20 {offsets = [0, 0, 0], sizes = [1, 1, 256], strides = [1, 1, 1]} : vector<9x1x256xbf16> to vector<1x1x256xbf16>
    %289 = vector.shape_cast %288 : vector<1x1x256xbf16> to vector<1x256xbf16>
    %290 = vector.broadcast %289 : vector<1x256xbf16> to vector<48x256xbf16>
    %291 = arith.mulf %287, %290 : vector<48x256xbf16>
    %292 = vector.extract_strided_slice %286 {offsets = [0, 1], sizes = [48, 256], strides = [1, 1]} : vector<48x290xbf16> to vector<48x256xbf16>
    %293 = vector.extract_strided_slice %20 {offsets = [1, 0, 0], sizes = [1, 1, 256], strides = [1, 1, 1]} : vector<9x1x256xbf16> to vector<1x1x256xbf16>
    %294 = vector.shape_cast %293 : vector<1x1x256xbf16> to vector<1x256xbf16>
    %295 = vector.broadcast %294 : vector<1x256xbf16> to vector<48x256xbf16>
    %296 = arith.mulf %292, %295 : vector<48x256xbf16>
    %297 = vector.extract_strided_slice %286 {offsets = [0, 2], sizes = [48, 256], strides = [1, 1]} : vector<48x290xbf16> to vector<48x256xbf16>
    %298 = vector.extract_strided_slice %20 {offsets = [2, 0, 0], sizes = [1, 1, 256], strides = [1, 1, 1]} : vector<9x1x256xbf16> to vector<1x1x256xbf16>
    %299 = vector.shape_cast %298 : vector<1x1x256xbf16> to vector<1x256xbf16>
    %300 = vector.broadcast %299 : vector<1x256xbf16> to vector<48x256xbf16>
    %301 = arith.mulf %297, %300 : vector<48x256xbf16>
    %302 = vector.extract_strided_slice %286 {offsets = [0, 16], sizes = [48, 256], strides = [1, 1]} : vector<48x290xbf16> to vector<48x256xbf16>
    %303 = vector.extract_strided_slice %20 {offsets = [3, 0, 0], sizes = [1, 1, 256], strides = [1, 1, 1]} : vector<9x1x256xbf16> to vector<1x1x256xbf16>
    %304 = vector.shape_cast %303 : vector<1x1x256xbf16> to vector<1x256xbf16>
    %305 = vector.broadcast %304 : vector<1x256xbf16> to vector<48x256xbf16>
    %306 = arith.mulf %302, %305 : vector<48x256xbf16>
    %307 = vector.extract_strided_slice %286 {offsets = [0, 18], sizes = [48, 256], strides = [1, 1]} : vector<48x290xbf16> to vector<48x256xbf16>
    %308 = vector.extract_strided_slice %20 {offsets = [5, 0, 0], sizes = [1, 1, 256], strides = [1, 1, 1]} : vector<9x1x256xbf16> to vector<1x1x256xbf16>
    %309 = vector.shape_cast %308 : vector<1x1x256xbf16> to vector<1x256xbf16>
    %310 = vector.broadcast %309 : vector<1x256xbf16> to vector<48x256xbf16>
    %311 = arith.mulf %307, %310 : vector<48x256xbf16>
    %312 = vector.extract_strided_slice %286 {offsets = [0, 32], sizes = [48, 256], strides = [1, 1]} : vector<48x290xbf16> to vector<48x256xbf16>
    %313 = vector.extract_strided_slice %20 {offsets = [6, 0, 0], sizes = [1, 1, 256], strides = [1, 1, 1]} : vector<9x1x256xbf16> to vector<1x1x256xbf16>
    %314 = vector.shape_cast %313 : vector<1x1x256xbf16> to vector<1x256xbf16>
    %315 = vector.broadcast %314 : vector<1x256xbf16> to vector<48x256xbf16>
    %316 = arith.mulf %312, %315 : vector<48x256xbf16>
    %317 = vector.extract_strided_slice %286 {offsets = [0, 33], sizes = [48, 256], strides = [1, 1]} : vector<48x290xbf16> to vector<48x256xbf16>
    %318 = vector.extract_strided_slice %20 {offsets = [7, 0, 0], sizes = [1, 1, 256], strides = [1, 1, 1]} : vector<9x1x256xbf16> to vector<1x1x256xbf16>
    %319 = vector.shape_cast %318 : vector<1x1x256xbf16> to vector<1x256xbf16>
    %320 = vector.broadcast %319 : vector<1x256xbf16> to vector<48x256xbf16>
    %321 = arith.mulf %317, %320 : vector<48x256xbf16>
    %322 = vector.extract_strided_slice %286 {offsets = [0, 34], sizes = [48, 256], strides = [1, 1]} : vector<48x290xbf16> to vector<48x256xbf16>
    %323 = vector.extract_strided_slice %20 {offsets = [8, 0, 0], sizes = [1, 1, 256], strides = [1, 1, 1]} : vector<9x1x256xbf16> to vector<1x1x256xbf16>
    %324 = vector.shape_cast %323 : vector<1x1x256xbf16> to vector<1x256xbf16>
    %325 = vector.broadcast %324 : vector<1x256xbf16> to vector<48x256xbf16>
    %326 = arith.mulf %322, %325 : vector<48x256xbf16>
    %327 = tpu.concatenate %291, %296, %301, %306, %284, %311, %316, %321, %326 in 0 : vector<48x256xbf16>, vector<48x256xbf16>, vector<48x256xbf16>, vector<48x256xbf16>, vector<48x256xbf16>, vector<48x256xbf16>, vector<48x256xbf16>, vector<48x256xbf16>, vector<48x256xbf16> -> vector<432x256xbf16>
    %cst_81 = arith.constant dense<0.000000e+00> : vector<24x256xf32>
    %328 = tpu.matmul %15, %327, %cst_81 {dimension_numbers = #tpu.dot_dimension_numbers<[1], [0], [0], [1], [0, 0, 1, 1], [], []>} : vector<24x432xbf16>, vector<432x256xbf16>, vector<24x256xf32> -> vector<24x256xf32>
    %cst_82 = arith.constant 0.000000e+00 : f32
    %329 = vector.broadcast %cst_82 : f32 to vector<24x256xf32>
    %330 = arith.cmpf oge, %328, %329 : vector<24x256xf32>
    %cst_83 = arith.constant 2.000000e-01 : f32
    %331 = vector.broadcast %cst_83 : f32 to vector<24x256xf32>
    %332 = arith.mulf %331, %328 : vector<24x256xf32>
    %333 = arith.select %330, %328, %332 : vector<24x256xi1>, vector<24x256xf32>
    %334 = arith.truncf %333 : vector<24x256xf32> to vector<24x256xbf16>
    %cst_84 = arith.constant 0.000000e+00 : bf16
    %335 = vector.broadcast %cst_84 : bf16 to vector<24x17xbf16>
    %336 = tpu.concatenate %335, %334, %335 in 1 : vector<24x17xbf16>, vector<24x256xbf16>, vector<24x17xbf16> -> vector<24x290xbf16>
    %337 = vector.extract_strided_slice %336 {offsets = [0, 0], sizes = [24, 256], strides = [1, 1]} : vector<24x290xbf16> to vector<24x256xbf16>
    %338 = vector.extract_strided_slice %20 {offsets = [0, 0, 0], sizes = [1, 1, 256], strides = [1, 1, 1]} : vector<9x1x256xbf16> to vector<1x1x256xbf16>
    %339 = vector.shape_cast %338 : vector<1x1x256xbf16> to vector<1x256xbf16>
    %340 = vector.broadcast %339 : vector<1x256xbf16> to vector<24x256xbf16>
    %341 = arith.mulf %337, %340 : vector<24x256xbf16>
    %342 = vector.extract_strided_slice %336 {offsets = [0, 1], sizes = [24, 256], strides = [1, 1]} : vector<24x290xbf16> to vector<24x256xbf16>
    %343 = vector.extract_strided_slice %20 {offsets = [1, 0, 0], sizes = [1, 1, 256], strides = [1, 1, 1]} : vector<9x1x256xbf16> to vector<1x1x256xbf16>
    %344 = vector.shape_cast %343 : vector<1x1x256xbf16> to vector<1x256xbf16>
    %345 = vector.broadcast %344 : vector<1x256xbf16> to vector<24x256xbf16>
    %346 = arith.mulf %342, %345 : vector<24x256xbf16>
    %347 = vector.extract_strided_slice %336 {offsets = [0, 2], sizes = [24, 256], strides = [1, 1]} : vector<24x290xbf16> to vector<24x256xbf16>
    %348 = vector.extract_strided_slice %20 {offsets = [2, 0, 0], sizes = [1, 1, 256], strides = [1, 1, 1]} : vector<9x1x256xbf16> to vector<1x1x256xbf16>
    %349 = vector.shape_cast %348 : vector<1x1x256xbf16> to vector<1x256xbf16>
    %350 = vector.broadcast %349 : vector<1x256xbf16> to vector<24x256xbf16>
    %351 = arith.mulf %347, %350 : vector<24x256xbf16>
    %352 = vector.extract_strided_slice %336 {offsets = [0, 16], sizes = [24, 256], strides = [1, 1]} : vector<24x290xbf16> to vector<24x256xbf16>
    %353 = vector.extract_strided_slice %20 {offsets = [3, 0, 0], sizes = [1, 1, 256], strides = [1, 1, 1]} : vector<9x1x256xbf16> to vector<1x1x256xbf16>
    %354 = vector.shape_cast %353 : vector<1x1x256xbf16> to vector<1x256xbf16>
    %355 = vector.broadcast %354 : vector<1x256xbf16> to vector<24x256xbf16>
    %356 = arith.mulf %352, %355 : vector<24x256xbf16>
    %357 = vector.extract_strided_slice %336 {offsets = [0, 18], sizes = [24, 256], strides = [1, 1]} : vector<24x290xbf16> to vector<24x256xbf16>
    %358 = vector.extract_strided_slice %20 {offsets = [5, 0, 0], sizes = [1, 1, 256], strides = [1, 1, 1]} : vector<9x1x256xbf16> to vector<1x1x256xbf16>
    %359 = vector.shape_cast %358 : vector<1x1x256xbf16> to vector<1x256xbf16>
    %360 = vector.broadcast %359 : vector<1x256xbf16> to vector<24x256xbf16>
    %361 = arith.mulf %357, %360 : vector<24x256xbf16>
    %362 = vector.extract_strided_slice %336 {offsets = [0, 32], sizes = [24, 256], strides = [1, 1]} : vector<24x290xbf16> to vector<24x256xbf16>
    %363 = vector.extract_strided_slice %20 {offsets = [6, 0, 0], sizes = [1, 1, 256], strides = [1, 1, 1]} : vector<9x1x256xbf16> to vector<1x1x256xbf16>
    %364 = vector.shape_cast %363 : vector<1x1x256xbf16> to vector<1x256xbf16>
    %365 = vector.broadcast %364 : vector<1x256xbf16> to vector<24x256xbf16>
    %366 = arith.mulf %362, %365 : vector<24x256xbf16>
    %367 = vector.extract_strided_slice %336 {offsets = [0, 33], sizes = [24, 256], strides = [1, 1]} : vector<24x290xbf16> to vector<24x256xbf16>
    %368 = vector.extract_strided_slice %20 {offsets = [7, 0, 0], sizes = [1, 1, 256], strides = [1, 1, 1]} : vector<9x1x256xbf16> to vector<1x1x256xbf16>
    %369 = vector.shape_cast %368 : vector<1x1x256xbf16> to vector<1x256xbf16>
    %370 = vector.broadcast %369 : vector<1x256xbf16> to vector<24x256xbf16>
    %371 = arith.mulf %367, %370 : vector<24x256xbf16>
    %372 = vector.extract_strided_slice %336 {offsets = [0, 34], sizes = [24, 256], strides = [1, 1]} : vector<24x290xbf16> to vector<24x256xbf16>
    %373 = vector.extract_strided_slice %20 {offsets = [8, 0, 0], sizes = [1, 1, 256], strides = [1, 1, 1]} : vector<9x1x256xbf16> to vector<1x1x256xbf16>
    %374 = vector.shape_cast %373 : vector<1x1x256xbf16> to vector<1x256xbf16>
    %375 = vector.broadcast %374 : vector<1x256xbf16> to vector<24x256xbf16>
    %376 = arith.mulf %372, %375 : vector<24x256xbf16>
    %377 = tpu.concatenate %341, %346, %351, %356, %334, %361, %366, %371, %376 in 0 : vector<24x256xbf16>, vector<24x256xbf16>, vector<24x256xbf16>, vector<24x256xbf16>, vector<24x256xbf16>, vector<24x256xbf16>, vector<24x256xbf16>, vector<24x256xbf16>, vector<24x256xbf16> -> vector<216x256xbf16>
    %cst_85 = arith.constant dense<0.000000e+00> : vector<24x256xf32>
    %378 = tpu.matmul %17, %377, %cst_85 {dimension_numbers = #tpu.dot_dimension_numbers<[1], [0], [0], [1], [0, 0, 1, 1], [], []>} : vector<24x216xbf16>, vector<216x256xbf16>, vector<24x256xf32> -> vector<24x256xf32>
    %cst_86 = arith.constant 0.000000e+00 : f32
    %379 = vector.broadcast %cst_86 : f32 to vector<24x256xf32>
    %380 = arith.cmpf oge, %378, %379 : vector<24x256xf32>
    %cst_87 = arith.constant 2.000000e-01 : f32
    %381 = vector.broadcast %cst_87 : f32 to vector<24x256xf32>
    %382 = arith.mulf %381, %378 : vector<24x256xf32>
    %383 = arith.select %380, %378, %382 : vector<24x256xi1>, vector<24x256xf32>
    %384 = arith.truncf %383 : vector<24x256xf32> to vector<24x256xbf16>
    %385 = vector.extract_strided_slice %384 {offsets = [0, 0], sizes = [8, 256], strides = [1, 1]} : vector<24x256xbf16> to vector<8x256xbf16>
    %386 = vector.extract_strided_slice %384 {offsets = [8, 0], sizes = [8, 256], strides = [1, 1]} : vector<24x256xbf16> to vector<8x256xbf16>
    %387 = vector.extract_strided_slice %384 {offsets = [16, 0], sizes = [8, 256], strides = [1, 1]} : vector<24x256xbf16> to vector<8x256xbf16>
    %388 = tpu.concatenate %385, %386, %387 in 1 : vector<8x256xbf16>, vector<8x256xbf16>, vector<8x256xbf16> -> vector<8x768xbf16>
    %cst_88 = arith.constant dense<0.000000e+00> : vector<8x128xf32>
    %389 = tpu.matmul %388, %5, %cst_88 {dimension_numbers = #tpu.dot_dimension_numbers<[1], [0], [0], [1], [0, 0, 1, 1], [], []>} : vector<8x768xbf16>, vector<768x128xbf16>, vector<8x128xf32> -> vector<8x128xf32>
    %390 = arith.truncf %389 : vector<8x128xf32> to vector<8x128xbf16>
    %cst_89 = arith.constant dense<0.000000e+00> : vector<64x128xf32>
    %391 = tpu.matmul %25, %390, %cst_89 {dimension_numbers = #tpu.dot_dimension_numbers<[1], [0], [0], [1], [0, 0, 1, 1], [], []>} : vector<64x8xbf16>, vector<8x128xbf16>, vector<64x128xf32> -> vector<64x128xf32>
    %392 = vector.broadcast %26 : vector<64x1xf32> to vector<64x128xf32>
    %393 = arith.addf %391, %392 : vector<64x128xf32>
    %cst_90 = arith.constant 0.000000e+00 : f32
    %394 = vector.broadcast %cst_90 : f32 to vector<64x128xf32>
    %395 = arith.cmpf oge, %393, %394 : vector<64x128xf32>
    %cst_91 = arith.constant 0.00999999977 : f32
    %396 = vector.broadcast %cst_91 : f32 to vector<64x128xf32>
    %397 = arith.mulf %396, %393 : vector<64x128xf32>
    %398 = arith.select %395, %393, %397 : vector<64x128xi1>, vector<64x128xf32>
    %399 = arith.truncf %398 : vector<64x128xf32> to vector<64x128xbf16>
    %cst_92 = arith.constant dense<0.000000e+00> : vector<1x128xf32>
    %400 = tpu.matmul %27, %399, %cst_92 {dimension_numbers = #tpu.dot_dimension_numbers<[1], [0], [0], [1], [0, 0, 1, 1], [], []>} : vector<1x64xbf16>, vector<64x128xbf16>, vector<1x128xf32> -> vector<1x128xf32>
    %401 = vector.broadcast %28 : vector<1x1xf32> to vector<1x128xf32>
    %402 = arith.addf %400, %401 : vector<1x128xf32>
    %cst_93 = arith.constant dense<0.000000e+00> : vector<64x128xf32>
    %403 = tpu.matmul %29, %390, %cst_93 {dimension_numbers = #tpu.dot_dimension_numbers<[1], [0], [0], [1], [0, 0, 1, 1], [], []>} : vector<64x8xbf16>, vector<8x128xbf16>, vector<64x128xf32> -> vector<64x128xf32>
    %cst_94 = arith.constant dense<0.000000e+00> : vector<64x128xf32>
    %404 = tpu.matmul %30, %3, %cst_94 {dimension_numbers = #tpu.dot_dimension_numbers<[1], [0], [0], [1], [0, 0, 1, 1], [], []>} : vector<64x15xbf16>, vector<15x128xbf16>, vector<64x128xf32> -> vector<64x128xf32>
    %405 = arith.addf %403, %404 : vector<64x128xf32>
    %406 = vector.broadcast %31 : vector<64x1xf32> to vector<64x128xf32>
    %407 = arith.addf %405, %406 : vector<64x128xf32>
    %cst_95 = arith.constant 0.000000e+00 : f32
    %408 = vector.broadcast %cst_95 : f32 to vector<64x128xf32>
    %409 = arith.cmpf oge, %407, %408 : vector<64x128xf32>
    %cst_96 = arith.constant 0.00999999977 : f32
    %410 = vector.broadcast %cst_96 : f32 to vector<64x128xf32>
    %411 = arith.mulf %410, %407 : vector<64x128xf32>
    %412 = arith.select %409, %407, %411 : vector<64x128xi1>, vector<64x128xf32>
    %413 = arith.truncf %412 : vector<64x128xf32> to vector<64x128xbf16>
    %cst_97 = arith.constant dense<0.000000e+00> : vector<3x128xf32>
    %414 = tpu.matmul %32, %413, %cst_97 {dimension_numbers = #tpu.dot_dimension_numbers<[1], [0], [0], [1], [0, 0, 1, 1], [], []>} : vector<3x64xbf16>, vector<64x128xbf16>, vector<3x128xf32> -> vector<3x128xf32>
    %415 = vector.broadcast %33 : vector<3x1xf32> to vector<3x128xf32>
    %416 = arith.addf %414, %415 : vector<3x128xf32>
    %cst_98 = arith.constant 0.000000e+00 : f32
    %417 = vector.broadcast %cst_98 : f32 to vector<4x128xf32>
    %418 = tpu.concatenate %402, %416, %417 in 0 : vector<1x128xf32>, vector<3x128xf32>, vector<4x128xf32> -> vector<8x128xf32>
    %c0_99 = arith.constant 0 : index
    %c0_100 = arith.constant 0 : index
    %c0_101 = arith.constant 0 : index
    %419 = vector.load %arg26[%c0_99, %c0_100, %c0_101] : memref<1x8x128xf32, #tpu.memory_space<vmem>>, vector<1x8x128xf32>
    %420 = vector.shape_cast %419 : vector<1x8x128xf32> to vector<8x128xf32>
    %421 = vector.shape_cast %418 : vector<8x128xf32> to vector<1x8x128xf32>
    tpu.vector_store %arg26[%c0_99, %c0_100, %c0_101], %421 {strides = array<i32>} : memref<1x8x128xf32, #tpu.memory_space<vmem>>, vector<1x8x128xf32>,
    return
  }
  func.func @transform_0(%arg0: i32) -> (i32, i32, i32) {
    %c0_i32 = arith.constant 0 : i32
    %c0_i32_0 = arith.constant 0 : i32
    %c0_i32_1 = arith.constant 0 : i32
    return %arg0, %c0_i32, %c0_i32_0 : i32, i32, i32
  }
  func.func @transform_1(%arg0: i32) -> (i32, i32, i32) {
    %c0_i32 = arith.constant 0 : i32
    %c0_i32_0 = arith.constant 0 : i32
    %c0_i32_1 = arith.constant 0 : i32
    return %arg0, %c0_i32, %c0_i32_0 : i32, i32, i32
  }
  func.func @transform_2(%arg0: i32) -> (i32, i32, i32) {
    %c0_i32 = arith.constant 0 : i32
    %c0_i32_0 = arith.constant 0 : i32
    %c0_i32_1 = arith.constant 0 : i32
    return %arg0, %c0_i32, %c0_i32_0 : i32, i32, i32
  }
  func.func @transform_3(%arg0: i32) -> (i32, i32, i32) {
    %c0_i32 = arith.constant 0 : i32
    %c0_i32_0 = arith.constant 0 : i32
    %c0_i32_1 = arith.constant 0 : i32
    return %arg0, %c0_i32, %c0_i32_0 : i32, i32, i32
  }
  func.func @transform_4(%arg0: i32) -> (i32, i32, i32) {
    %c0_i32 = arith.constant 0 : i32
    %c0_i32_0 = arith.constant 0 : i32
    %c0_i32_1 = arith.constant 0 : i32
    return %arg0, %c0_i32, %c0_i32_0 : i32, i32, i32
  }
  func.func @transform_5(%arg0: i32) -> (i32, i32, i32) {
    %c0_i32 = arith.constant 0 : i32
    %c0_i32_0 = arith.constant 0 : i32
    %c0_i32_1 = arith.constant 0 : i32
    return %arg0, %c0_i32, %c0_i32_0 : i32, i32, i32
  }
  func.func @transform_6(%arg0: i32) -> (i32, i32, i32) {
    %c0_i32 = arith.constant 0 : i32
    %c0_i32_0 = arith.constant 0 : i32
    %c0_i32_1 = arith.constant 0 : i32
    return %arg0, %c0_i32, %c0_i32_0 : i32, i32, i32
  }
  func.func @transform_7(%arg0: i32) -> (i32, i32, i32) {
    %c0_i32 = arith.constant 0 : i32
    %c0_i32_0 = arith.constant 0 : i32
    %c0_i32_1 = arith.constant 0 : i32
    return %arg0, %c0_i32, %c0_i32_0 : i32, i32, i32
  }
  func.func @transform_8(%arg0: i32) -> (i32, i32, i32) {
    %c0_i32 = arith.constant 0 : i32
    %c0_i32_0 = arith.constant 0 : i32
    %c0_i32_1 = arith.constant 0 : i32
    return %arg0, %c0_i32, %c0_i32_0 : i32, i32, i32
  }
  func.func @transform_9(%arg0: i32) -> (i32, i32, i32) {
    %c0_i32 = arith.constant 0 : i32
    %c0_i32_0 = arith.constant 0 : i32
    %c0_i32_1 = arith.constant 0 : i32
    %c0_i32_2 = arith.constant 0 : i32
    return %c0_i32, %c0_i32_0, %c0_i32_1 : i32, i32, i32
  }
  func.func @transform_10(%arg0: i32) -> (i32, i32, i32) {
    %c0_i32 = arith.constant 0 : i32
    %c0_i32_0 = arith.constant 0 : i32
    %c0_i32_1 = arith.constant 0 : i32
    %c0_i32_2 = arith.constant 0 : i32
    return %c0_i32, %c0_i32_0, %c0_i32_1 : i32, i32, i32
  }
  func.func @transform_11(%arg0: i32) -> (i32, i32, i32) {
    %c0_i32 = arith.constant 0 : i32
    %c0_i32_0 = arith.constant 0 : i32
    %c0_i32_1 = arith.constant 0 : i32
    %c0_i32_2 = arith.constant 0 : i32
    return %c0_i32, %c0_i32_0, %c0_i32_1 : i32, i32, i32
  }
  func.func @transform_12(%arg0: i32) -> (i32, i32) {
    %c0_i32 = arith.constant 0 : i32
    %c0_i32_0 = arith.constant 0 : i32
    %c0_i32_1 = arith.constant 0 : i32
    return %c0_i32, %c0_i32_0 : i32, i32
  }
  func.func @transform_13(%arg0: i32) -> (i32, i32) {
    %c0_i32 = arith.constant 0 : i32
    %c0_i32_0 = arith.constant 0 : i32
    %c0_i32_1 = arith.constant 0 : i32
    return %c0_i32, %c0_i32_0 : i32, i32
  }
  func.func @transform_14(%arg0: i32) -> (i32, i32) {
    %c0_i32 = arith.constant 0 : i32
    %c0_i32_0 = arith.constant 0 : i32
    %c0_i32_1 = arith.constant 0 : i32
    return %c0_i32, %c0_i32_0 : i32, i32
  }
  func.func @transform_15(%arg0: i32) -> (i32, i32) {
    %c0_i32 = arith.constant 0 : i32
    %c0_i32_0 = arith.constant 0 : i32
    %c0_i32_1 = arith.constant 0 : i32
    return %c0_i32, %c0_i32_0 : i32, i32
  }
  func.func @transform_16(%arg0: i32) -> (i32, i32) {
    %c0_i32 = arith.constant 0 : i32
    %c0_i32_0 = arith.constant 0 : i32
    %c0_i32_1 = arith.constant 0 : i32
    return %c0_i32, %c0_i32_0 : i32, i32
  }
  func.func @transform_17(%arg0: i32) -> (i32, i32) {
    %c0_i32 = arith.constant 0 : i32
    %c0_i32_0 = arith.constant 0 : i32
    %c0_i32_1 = arith.constant 0 : i32
    return %c0_i32, %c0_i32_0 : i32, i32
  }
  func.func @transform_18(%arg0: i32) -> (i32, i32) {
    %c0_i32 = arith.constant 0 : i32
    %c0_i32_0 = arith.constant 0 : i32
    %c0_i32_1 = arith.constant 0 : i32
    return %c0_i32, %c0_i32_0 : i32, i32
  }
  func.func @transform_19(%arg0: i32) -> (i32, i32) {
    %c0_i32 = arith.constant 0 : i32
    %c0_i32_0 = arith.constant 0 : i32
    %c0_i32_1 = arith.constant 0 : i32
    return %c0_i32, %c0_i32_0 : i32, i32
  }
  func.func @transform_20(%arg0: i32) -> (i32, i32) {
    %c0_i32 = arith.constant 0 : i32
    %c0_i32_0 = arith.constant 0 : i32
    %c0_i32_1 = arith.constant 0 : i32
    return %c0_i32, %c0_i32_0 : i32, i32
  }
  func.func @transform_21(%arg0: i32) -> (i32, i32) {
    %c0_i32 = arith.constant 0 : i32
    %c0_i32_0 = arith.constant 0 : i32
    %c0_i32_1 = arith.constant 0 : i32
    return %c0_i32, %c0_i32_0 : i32, i32
  }
  func.func @transform_22(%arg0: i32) -> (i32, i32) {
    %c0_i32 = arith.constant 0 : i32
    %c0_i32_0 = arith.constant 0 : i32
    %c0_i32_1 = arith.constant 0 : i32
    return %c0_i32, %c0_i32_0 : i32, i32
  }
  func.func @transform_23(%arg0: i32) -> (i32, i32) {
    %c0_i32 = arith.constant 0 : i32
    %c0_i32_0 = arith.constant 0 : i32
    %c0_i32_1 = arith.constant 0 : i32
    return %c0_i32, %c0_i32_0 : i32, i32
  }
  func.func @transform_24(%arg0: i32) -> (i32, i32) {
    %c0_i32 = arith.constant 0 : i32
    %c0_i32_0 = arith.constant 0 : i32
    %c0_i32_1 = arith.constant 0 : i32
    return %c0_i32, %c0_i32_0 : i32, i32
  }
  func.func @transform_25(%arg0: i32) -> (i32, i32, i32) {
    %c0_i32 = arith.constant 0 : i32
    %c0_i32_0 = arith.constant 0 : i32
    %c0_i32_1 = arith.constant 0 : i32
    return %arg0, %c0_i32, %c0_i32_0 : i32, i32, i32
  }
}

</mosaic_0001>

<llo_original>
// kernel: forward.1
$region0: #{forward.1}
  #allocation0 [shape = 'u32[]', space=smem, size = 0x4, offset = 0x4, fixed_abs, tag = 'smem constant byte address 0x4 - core index']
  #allocation1 [shape = 'u32[72,128]{1,0:T(1,128)}', space=vmem, size = 0x9000, scoped, tag = 'internal scratch']
  #allocation2 [shape = 'f32[1,1]{1,0:T(1,128)S(1)}', space=vmem, size = 0x200, scoped, tag = 'scoped memory for forward.1']
  %s0 = inlined_call_operand.vmem [shape: bf16[2,96,16], index: 0, kind: input, shape index: {}]
  %s1 = inlined_call_operand.vmem [shape: bf16[2,15,128], index: 1, kind: input, shape index: {}]
  %s2 = inlined_call_operand.vmem [shape: bf16[2,768,128], index: 2, kind: input, shape index: {}]
  %s3 = inlined_call_operand.vmem [shape: bf16[2,96,864], index: 3, kind: input, shape index: {}]
  %s4 = inlined_call_operand.vmem [shape: bf16[2,96,864], index: 4, kind: input, shape index: {}]
  %s5 = inlined_call_operand.vmem [shape: bf16[2,48,864], index: 5, kind: input, shape index: {}]
  %s6 = inlined_call_operand.vmem [shape: bf16[2,48,432], index: 6, kind: input, shape index: {}]
  %s7 = inlined_call_operand.vmem [shape: bf16[2,24,432], index: 7, kind: input, shape index: {}]
  %s8 = inlined_call_operand.vmem [shape: bf16[2,24,216], index: 8, kind: input, shape index: {}]
  %s9 = inlined_call_operand.vmem [shape: bf16[9,1,16], index: 9, kind: input, shape index: {}]
  %s10 = inlined_call_operand.vmem [shape: bf16[9,1,64], index: 10, kind: input, shape index: {}]
  %s11 = inlined_call_operand.vmem [shape: bf16[9,1,256], index: 11, kind: input, shape index: {}]
  %s12 = inlined_call_operand.vmem [shape: bf16[16,64], index: 12, kind: input, shape index: {}]
  %s13 = inlined_call_operand.vmem [shape: bf16[64,256], index: 13, kind: input, shape index: {}]
  %s14 = inlined_call_operand.vmem [shape: bf16[96,864], index: 14, kind: input, shape index: {}]
  %s15 = inlined_call_operand.vmem [shape: f32[96,1], index: 15, kind: input, shape index: {}]
  %s16 = inlined_call_operand.vmem [shape: bf16[64,8], index: 16, kind: input, shape index: {}]
  %s17 = inlined_call_operand.vmem [shape: f32[64,1], index: 17, kind: input, shape index: {}]
  %s18 = inlined_call_operand.vmem [shape: bf16[1,64], index: 18, kind: input, shape index: {}]
  %s19 = inlined_call_operand.<no memory space> [shape: f32[1,1], index: 19, kind: input, shape index: {}]
  %s20 = inlined_call_operand.vmem [shape: bf16[64,8], index: 20, kind: input, shape index: {}]
  %s21 = inlined_call_operand.vmem [shape: bf16[64,15], index: 21, kind: input, shape index: {}]
  %s22 = inlined_call_operand.vmem [shape: f32[64,1], index: 22, kind: input, shape index: {}]
  %s23 = inlined_call_operand.vmem [shape: bf16[3,64], index: 23, kind: input, shape index: {}]
  %s24 = inlined_call_operand.vmem [shape: f32[3,1], index: 24, kind: input, shape index: {}]
  %s25 = inlined_call_operand.vmem [shape: f32[2,8,128], index: 25, kind: output, shape index: {}]
  %s26 = sld [smem:[#allocation0]]
  $region133: #{forward.1} parent=0
    _
  %s28 = ssub.s32 1, %s26
  %s29 = scalar_select 0, %s28, %s26
  %v30 = vstv %s19
  %31 = vst [vmem:[#allocation2] sm:$0x1] %v30
  loop: start=0, step=1, limit=4
  $region2: #{forward.1} parent=0 // loop_pre_header
    _
  $region3: #{forward.1} parent=0 // loop_header
    %s33 = sphi 0, %s37
    %p34 = scmp.ge.s32.totalorder %s33, 4
    %s43 = sphi 0, %s45
    %s46 = sphi 0, %s43
    %s47 = sphi 0, %s46
    %s63 = sphi 0, %s47
    %s69 = sphi 0, %s71
    %s72 = sphi 0, %s69
    %s73 = sphi 0, %s72
    %s89 = sphi 0, %s73
    %s95 = sphi 0, %s97
    %s98 = sphi 0, %s95
    %s99 = sphi 0, %s98
    %s115 = sphi 0, %s99
    %s121 = sphi 0, %s123
    %s124 = sphi 0, %s121
    %s125 = sphi 0, %s124
    %s141 = sphi 0, %s125
    %s147 = sphi 0, %s149
    %s150 = sphi 0, %s147
    %s151 = sphi 0, %s150
    %s167 = sphi 0, %s151
    %s173 = sphi 0, %s175
    %s176 = sphi 0, %s173
    %s177 = sphi 0, %s176
    %s193 = sphi 0, %s177
    %s199 = sphi 0, %s201
    %s202 = sphi 0, %s199
    %s203 = sphi 0, %s202
    %s219 = sphi 0, %s203
    %s225 = sphi 0, %s227
    %s228 = sphi 0, %s225
    %s229 = sphi 0, %s228
    %s245 = sphi 0, %s229
    %s251 = sphi 0, %s253
    %s254 = sphi 0, %s251
    %s255 = sphi 0, %s254
    %s271 = sphi 0, %s255
    %s275 = sphi 0, %s275
    %s277 = sphi 0, %s275
    %s278 = sphi 0, %s277
    %s292 = sphi 0, %s278
    %s296 = sphi 0, %s296
    %s298 = sphi 0, %s296
    %s299 = sphi 0, %s298
    %s313 = sphi 0, %s299
    %s317 = sphi 0, %s317
    %s319 = sphi 0, %s317
    %s320 = sphi 0, %s319
    %s334 = sphi 0, %s320
    %s338 = sphi 0, %s338
    %s340 = sphi 0, %s338
    %s341 = sphi 0, %s340
    %s355 = sphi 0, %s341
    %s359 = sphi 0, %s359
    %s361 = sphi 0, %s359
    %s362 = sphi 0, %s361
    %s376 = sphi 0, %s362
    %s380 = sphi 0, %s380
    %s382 = sphi 0, %s380
    %s383 = sphi 0, %s382
    %s397 = sphi 0, %s383
    %s401 = sphi 0, %s401
    %s403 = sphi 0, %s401
    %s404 = sphi 0, %s403
    %s418 = sphi 0, %s404
    %s422 = sphi 0, %s422
    %s424 = sphi 0, %s422
    %s425 = sphi 0, %s424
    %s439 = sphi 0, %s425
    %s443 = sphi 0, %s443
    %s445 = sphi 0, %s443
    %s446 = sphi 0, %s445
    %s460 = sphi 0, %s446
    %s464 = sphi 0, %s464
    %s466 = sphi 0, %s464
    %s467 = sphi 0, %s466
    %s481 = sphi 0, %s467
    %s485 = sphi 0, %s485
    %s487 = sphi 0, %s485
    %s488 = sphi 0, %s487
    %s502 = sphi 0, %s488
    %s506 = sphi 0, %s506
    %s508 = sphi 0, %s506
    %s509 = sphi 0, %s508
    %s523 = sphi 0, %s509
    %s527 = sphi 0, %s527
    %s529 = sphi 0, %s527
    %s530 = sphi 0, %s529
    %s544 = sphi 0, %s530
    %s548 = sphi 0, %s548
    %s550 = sphi 0, %s548
    %s551 = sphi 0, %s550
    %s565 = sphi 0, %s551
    %s569 = sphi 0, %s569
    %s571 = sphi 0, %s569
    %s572 = sphi 0, %s571
    %s586 = sphi 0, %s572
    %s590 = sphi 0, %s590
    %s592 = sphi 0, %s590
    %s593 = sphi 0, %s592
    %s607 = sphi 0, %s593
    %s613 = sphi 0, %s615
    %s616 = sphi 0, %s613
    %s617 = sphi 0, %s616
    %s633 = sphi 0, %s617
  $region4: #{forward.1} parent=0 // loop_header_branch
    %36 = sbr.rel (%p34) target = $region8
  $region5: #{forward.1} parent=0 // loop_body
    %s38 = ssub.s32 %s33, 1
    %s39 = ssub.s32 %s33, 2
    %s40 = sadd.s32 %s33, 1
    %s41 = ssub.s32 %s33, %s40
    %p42 = scmp.eq.s32.totalorder %s41, 0
    %s44 = sadd.s32 %s43, 1
    %s45 = scalar_select %p42, %s43, %s44
    %p48 = pneg %p42
    %p49 = scmp.eq.s32.totalorder %s33, 1
    %p50 = por %p48, %p49
    %p51 = scmp.ne.s32.totalorder %s43, %s46
    %p52 = scmp.eq.s32.totalorder %s33, 0
    %p53 = por %p51, %p52
    %p54 = scmp.ne.s32.totalorder %s43, %s46
    %p55 = scmp.eq.s32.totalorder %s38, 1
    %p56 = por %p54, %p55
    %p57 = scmp.ne.s32.totalorder %s46, %s47
    %p58 = scmp.eq.s32.totalorder %s38, 0
    %p59 = por %p57, %p58
    %p60 = scmp.ne.s32.totalorder %s46, %s47
    %p61 = scmp.eq.s32.totalorder %s39, 1
    %p62 = por %p60, %p61
    %p64 = scmp.ne.s32.totalorder %s47, %s63
    %p65 = scmp.eq.s32.totalorder %s39, 0
    %p66 = por %p64, %p65
    %s67 = ssub.s32 %s33, %s40
    %p68 = scmp.eq.s32.totalorder %s67, 0
    %s70 = sadd.s32 %s69, 1
    %s71 = scalar_select %p68, %s69, %s70
    %p74 = pneg %p68
    %p75 = scmp.eq.s32.totalorder %s33, 1
    %p76 = por %p74, %p75
    %p77 = scmp.ne.s32.totalorder %s69, %s72
    %p78 = scmp.eq.s32.totalorder %s33, 0
    %p79 = por %p77, %p78
    %p80 = scmp.ne.s32.totalorder %s69, %s72
    %p81 = scmp.eq.s32.totalorder %s38, 1
    %p82 = por %p80, %p81
    %p83 = scmp.ne.s32.totalorder %s72, %s73
    %p84 = scmp.eq.s32.totalorder %s38, 0
    %p85 = por %p83, %p84
    %p86 = scmp.ne.s32.totalorder %s72, %s73
    %p87 = scmp.eq.s32.totalorder %s39, 1
    %p88 = por %p86, %p87
    %p90 = scmp.ne.s32.totalorder %s73, %s89
    %p91 = scmp.eq.s32.totalorder %s39, 0
    %p92 = por %p90, %p91
    %s93 = ssub.s32 %s33, %s40
    %p94 = scmp.eq.s32.totalorder %s93, 0
    %s96 = sadd.s32 %s95, 1
    %s97 = scalar_select %p94, %s95, %s96
    %p100 = pneg %p94
    %p101 = scmp.eq.s32.totalorder %s33, 1
    %p102 = por %p100, %p101
    %p103 = scmp.ne.s32.totalorder %s95, %s98
    %p104 = scmp.eq.s32.totalorder %s33, 0
    %p105 = por %p103, %p104
    %p106 = scmp.ne.s32.totalorder %s95, %s98
    %p107 = scmp.eq.s32.totalorder %s38, 1
    %p108 = por %p106, %p107
    %p109 = scmp.ne.s32.totalorder %s98, %s99
    %p110 = scmp.eq.s32.totalorder %s38, 0
    %p111 = por %p109, %p110
    %p112 = scmp.ne.s32.totalorder %s98, %s99
    %p113 = scmp.eq.s32.totalorder %s39, 1
    %p114 = por %p112, %p113
    %p116 = scmp.ne.s32.totalorder %s99, %s115
    %p117 = scmp.eq.s32.totalorder %s39, 0
    %p118 = por %p116, %p117
    %s119 = ssub.s32 %s33, %s40
    %p120 = scmp.eq.s32.totalorder %s119, 0
    %s122 = sadd.s32 %s121, 1
    %s123 = scalar_select %p120, %s121, %s122
    %p126 = pneg %p120
    %p127 = scmp.eq.s32.totalorder %s33, 1
    %p128 = por %p126, %p127
    %p129 = scmp.ne.s32.totalorder %s121, %s124
    %p130 = scmp.eq.s32.totalorder %s33, 0
    %p131 = por %p129, %p130
    %p132 = scmp.ne.s32.totalorder %s121, %s124
    %p133 = scmp.eq.s32.totalorder %s38, 1
    %p134 = por %p132, %p133
    %p135 = scmp.ne.s32.totalorder %s124, %s125
    %p136 = scmp.eq.s32.totalorder %s38, 0
    %p137 = por %p135, %p136
    %p138 = scmp.ne.s32.totalorder %s124, %s125
    %p139 = scmp.eq.s32.totalorder %s39, 1
    %p140 = por %p138, %p139
    %p142 = scmp.ne.s32.totalorder %s125, %s141
    %p143 = scmp.eq.s32.totalorder %s39, 0
    %p144 = por %p142, %p143
    %s145 = ssub.s32 %s33, %s40
    %p146 = scmp.eq.s32.totalorder %s145, 0
    %s148 = sadd.s32 %s147, 1
    %s149 = scalar_select %p146, %s147, %s148
    %p152 = pneg %p146
    %p153 = scmp.eq.s32.totalorder %s33, 1
    %p154 = por %p152, %p153
    %p155 = scmp.ne.s32.totalorder %s147, %s150
    %p156 = scmp.eq.s32.totalorder %s33, 0
    %p157 = por %p155, %p156
    %p158 = scmp.ne.s32.totalorder %s147, %s150
    %p159 = scmp.eq.s32.totalorder %s38, 1
    %p160 = por %p158, %p159
    %p161 = scmp.ne.s32.totalorder %s150, %s151
    %p162 = scmp.eq.s32.totalorder %s38, 0
    %p163 = por %p161, %p162
    %p164 = scmp.ne.s32.totalorder %s150, %s151
    %p165 = scmp.eq.s32.totalorder %s39, 1
    %p166 = por %p164, %p165
    %p168 = scmp.ne.s32.totalorder %s151, %s167
    %p169 = scmp.eq.s32.totalorder %s39, 0
    %p170 = por %p168, %p169
    %s171 = ssub.s32 %s33, %s40
    %p172 = scmp.eq.s32.totalorder %s171, 0
    %s174 = sadd.s32 %s173, 1
    %s175 = scalar_select %p172, %s173, %s174
    %p178 = pneg %p172
    %p179 = scmp.eq.s32.totalorder %s33, 1
    %p180 = por %p178, %p179
    %p181 = scmp.ne.s32.totalorder %s173, %s176
    %p182 = scmp.eq.s32.totalorder %s33, 0
    %p183 = por %p181, %p182
    %p184 = scmp.ne.s32.totalorder %s173, %s176
    %p185 = scmp.eq.s32.totalorder %s38, 1
    %p186 = por %p184, %p185
    %p187 = scmp.ne.s32.totalorder %s176, %s177
    %p188 = scmp.eq.s32.totalorder %s38, 0
    %p189 = por %p187, %p188
    %p190 = scmp.ne.s32.totalorder %s176, %s177
    %p191 = scmp.eq.s32.totalorder %s39, 1
    %p192 = por %p190, %p191
    %p194 = scmp.ne.s32.totalorder %s177, %s193
    %p195 = scmp.eq.s32.totalorder %s39, 0
    %p196 = por %p194, %p195
    %s197 = ssub.s32 %s33, %s40
    %p198 = scmp.eq.s32.totalorder %s197, 0
    %s200 = sadd.s32 %s199, 1
    %s201 = scalar_select %p198, %s199, %s200
    %p204 = pneg %p198
    %p205 = scmp.eq.s32.totalorder %s33, 1
    %p206 = por %p204, %p205
    %p207 = scmp.ne.s32.totalorder %s199, %s202
    %p208 = scmp.eq.s32.totalorder %s33, 0
    %p209 = por %p207, %p208
    %p210 = scmp.ne.s32.totalorder %s199, %s202
    %p211 = scmp.eq.s32.totalorder %s38, 1
    %p212 = por %p210, %p211
    %p213 = scmp.ne.s32.totalorder %s202, %s203
    %p214 = scmp.eq.s32.totalorder %s38, 0
    %p215 = por %p213, %p214
    %p216 = scmp.ne.s32.totalorder %s202, %s203
    %p217 = scmp.eq.s32.totalorder %s39, 1
    %p218 = por %p216, %p217
    %p220 = scmp.ne.s32.totalorder %s203, %s219
    %p221 = scmp.eq.s32.totalorder %s39, 0
    %p222 = por %p220, %p221
    %s223 = ssub.s32 %s33, %s40
    %p224 = scmp.eq.s32.totalorder %s223, 0
    %s226 = sadd.s32 %s225, 1
    %s227 = scalar_select %p224, %s225, %s226
    %p230 = pneg %p224
    %p231 = scmp.eq.s32.totalorder %s33, 1
    %p232 = por %p230, %p231
    %p233 = scmp.ne.s32.totalorder %s225, %s228
    %p234 = scmp.eq.s32.totalorder %s33, 0
    %p235 = por %p233, %p234
    %p236 = scmp.ne.s32.totalorder %s225, %s228
    %p237 = scmp.eq.s32.totalorder %s38, 1
    %p238 = por %p236, %p237
    %p239 = scmp.ne.s32.totalorder %s228, %s229
    %p240 = scmp.eq.s32.totalorder %s38, 0
    %p241 = por %p239, %p240
    %p242 = scmp.ne.s32.totalorder %s228, %s229
    %p243 = scmp.eq.s32.totalorder %s39, 1
    %p244 = por %p242, %p243
    %p246 = scmp.ne.s32.totalorder %s229, %s245
    %p247 = scmp.eq.s32.totalorder %s39, 0
    %p248 = por %p246, %p247
    %s249 = ssub.s32 %s33, %s40
    %p250 = scmp.eq.s32.totalorder %s249, 0
    %s252 = sadd.s32 %s251, 1
    %s253 = scalar_select %p250, %s251, %s252
    %p256 = pneg %p250
    %p257 = scmp.eq.s32.totalorder %s33, 1
    %p258 = por %p256, %p257
    %p259 = scmp.ne.s32.totalorder %s251, %s254
    %p260 = scmp.eq.s32.totalorder %s33, 0
    %p261 = por %p259, %p260
    %p262 = scmp.ne.s32.totalorder %s251, %s254
    %p263 = scmp.eq.s32.totalorder %s38, 1
    %p264 = por %p262, %p263
    %p265 = scmp.ne.s32.totalorder %s254, %s255
    %p266 = scmp.eq.s32.totalorder %s38, 0
    %p267 = por %p265, %p266
    %p268 = scmp.ne.s32.totalorder %s254, %s255
    %p269 = scmp.eq.s32.totalorder %s39, 1
    %p270 = por %p268, %p269
    %p272 = scmp.ne.s32.totalorder %s255, %s271
    %p273 = scmp.eq.s32.totalorder %s39, 0
    %p274 = por %p272, %p273
    %s276 = sadd.s32 %s275, 1
    %p279 = scmp.eq.s32.totalorder %s33, 1
    %p280 = scmp.ne.s32.totalorder %s275, %s277
    %p281 = scmp.eq.s32.totalorder %s33, 0
    %p282 = por %p280, %p281
    %p283 = scmp.ne.s32.totalorder %s275, %s277
    %p284 = scmp.eq.s32.totalorder %s38, 1
    %p285 = por %p283, %p284
    %p286 = scmp.ne.s32.totalorder %s277, %s278
    %p287 = scmp.eq.s32.totalorder %s38, 0
    %p288 = por %p286, %p287
    %p289 = scmp.ne.s32.totalorder %s277, %s278
    %p290 = scmp.eq.s32.totalorder %s39, 1
    %p291 = por %p289, %p290
    %p293 = scmp.ne.s32.totalorder %s278, %s292
    %p294 = scmp.eq.s32.totalorder %s39, 0
    %p295 = por %p293, %p294
    %s297 = sadd.s32 %s296, 1
    %p300 = scmp.eq.s32.totalorder %s33, 1
    %p301 = scmp.ne.s32.totalorder %s296, %s298
    %p302 = scmp.eq.s32.totalorder %s33, 0
    %p303 = por %p301, %p302
    %p304 = scmp.ne.s32.totalorder %s296, %s298
    %p305 = scmp.eq.s32.totalorder %s38, 1
    %p306 = por %p304, %p305
    %p307 = scmp.ne.s32.totalorder %s298, %s299
    %p308 = scmp.eq.s32.totalorder %s38, 0
    %p309 = por %p307, %p308
    %p310 = scmp.ne.s32.totalorder %s298, %s299
    %p311 = scmp.eq.s32.totalorder %s39, 1
    %p312 = por %p310, %p311
    %p314 = scmp.ne.s32.totalorder %s299, %s313
    %p315 = scmp.eq.s32.totalorder %s39, 0
    %p316 = por %p314, %p315
    %s318 = sadd.s32 %s317, 1
    %p321 = scmp.eq.s32.totalorder %s33, 1
    %p322 = scmp.ne.s32.totalorder %s317, %s319
    %p323 = scmp.eq.s32.totalorder %s33, 0
    %p324 = por %p322, %p323
    %p325 = scmp.ne.s32.totalorder %s317, %s319
    %p326 = scmp.eq.s32.totalorder %s38, 1
    %p327 = por %p325, %p326
    %p328 = scmp.ne.s32.totalorder %s319, %s320
    %p329 = scmp.eq.s32.totalorder %s38, 0
    %p330 = por %p328, %p329
    %p331 = scmp.ne.s32.totalorder %s319, %s320
    %p332 = scmp.eq.s32.totalorder %s39, 1
    %p333 = por %p331, %p332
    %p335 = scmp.ne.s32.totalorder %s320, %s334
    %p336 = scmp.eq.s32.totalorder %s39, 0
    %p337 = por %p335, %p336
    %s339 = sadd.s32 %s338, 1
    %p342 = scmp.eq.s32.totalorder %s33, 1
    %p343 = scmp.ne.s32.totalorder %s338, %s340
    %p344 = scmp.eq.s32.totalorder %s33, 0
    %p345 = por %p343, %p344
    %p346 = scmp.ne.s32.totalorder %s338, %s340
    %p347 = scmp.eq.s32.totalorder %s38, 1
    %p348 = por %p346, %p347
    %p349 = scmp.ne.s32.totalorder %s340, %s341
    %p350 = scmp.eq.s32.totalorder %s38, 0
    %p351 = por %p349, %p350
    %p352 = scmp.ne.s32.totalorder %s340, %s341
    %p353 = scmp.eq.s32.totalorder %s39, 1
    %p354 = por %p352, %p353
    %p356 = scmp.ne.s32.totalorder %s341, %s355
    %p357 = scmp.eq.s32.totalorder %s39, 0
    %p358 = por %p356, %p357
    %s360 = sadd.s32 %s359, 1
    %p363 = scmp.eq.s32.totalorder %s33, 1
    %p364 = scmp.ne.s32.totalorder %s359, %s361
    %p365 = scmp.eq.s32.totalorder %s33, 0
    %p366 = por %p364, %p365
    %p367 = scmp.ne.s32.totalorder %s359, %s361
    %p368 = scmp.eq.s32.totalorder %s38, 1
    %p369 = por %p367, %p368
    %p370 = scmp.ne.s32.totalorder %s361, %s362
    %p371 = scmp.eq.s32.totalorder %s38, 0
    %p372 = por %p370, %p371
    %p373 = scmp.ne.s32.totalorder %s361, %s362
    %p374 = scmp.eq.s32.totalorder %s39, 1
    %p375 = por %p373, %p374
    %p377 = scmp.ne.s32.totalorder %s362, %s376
    %p378 = scmp.eq.s32.totalorder %s39, 0
    %p379 = por %p377, %p378
    %s381 = sadd.s32 %s380, 1
    %p384 = scmp.eq.s32.totalorder %s33, 1
    %p385 = scmp.ne.s32.totalorder %s380, %s382
    %p386 = scmp.eq.s32.totalorder %s33, 0
    %p387 = por %p385, %p386
    %p388 = scmp.ne.s32.totalorder %s380, %s382
    %p389 = scmp.eq.s32.totalorder %s38, 1
    %p390 = por %p388, %p389
    %p391 = scmp.ne.s32.totalorder %s382, %s383
    %p392 = scmp.eq.s32.totalorder %s38, 0
    %p393 = por %p391, %p392
    %p394 = scmp.ne.s32.totalorder %s382, %s383
    %p395 = scmp.eq.s32.totalorder %s39, 1
    %p396 = por %p394, %p395
    %p398 = scmp.ne.s32.totalorder %s383, %s397
    %p399 = scmp.eq.s32.totalorder %s39, 0
    %p400 = por %p398, %p399
    %s402 = sadd.s32 %s401, 1
    %p405 = scmp.eq.s32.totalorder %s33, 1
    %p406 = scmp.ne.s32.totalorder %s401, %s403
    %p407 = scmp.eq.s32.totalorder %s33, 0
    %p408 = por %p406, %p407
    %p409 = scmp.ne.s32.totalorder %s401, %s403
    %p410 = scmp.eq.s32.totalorder %s38, 1
    %p411 = por %p409, %p410
    %p412 = scmp.ne.s32.totalorder %s403, %s404
    %p413 = scmp.eq.s32.totalorder %s38, 0
    %p414 = por %p412, %p413
    %p415 = scmp.ne.s32.totalorder %s403, %s404
    %p416 = scmp.eq.s32.totalorder %s39, 1
    %p417 = por %p415, %p416
    %p419 = scmp.ne.s32.totalorder %s404, %s418
    %p420 = scmp.eq.s32.totalorder %s39, 0
    %p421 = por %p419, %p420
    %s423 = sadd.s32 %s422, 1
    %p426 = scmp.eq.s32.totalorder %s33, 1
    %p427 = scmp.ne.s32.totalorder %s422, %s424
    %p428 = scmp.eq.s32.totalorder %s33, 0
    %p429 = por %p427, %p428
    %p430 = scmp.ne.s32.totalorder %s422, %s424
    %p431 = scmp.eq.s32.totalorder %s38, 1
    %p432 = por %p430, %p431
    %p433 = scmp.ne.s32.totalorder %s424, %s425
    %p434 = scmp.eq.s32.totalorder %s38, 0
    %p435 = por %p433, %p434
    %p436 = scmp.ne.s32.totalorder %s424, %s425
    %p437 = scmp.eq.s32.totalorder %s39, 1
    %p438 = por %p436, %p437
    %p440 = scmp.ne.s32.totalorder %s425, %s439
    %p441 = scmp.eq.s32.totalorder %s39, 0
    %p442 = por %p440, %p441
    %s444 = sadd.s32 %s443, 1
    %p447 = scmp.eq.s32.totalorder %s33, 1
    %p448 = scmp.ne.s32.totalorder %s443, %s445
    %p449 = scmp.eq.s32.totalorder %s33, 0
    %p450 = por %p448, %p449
    %p451 = scmp.ne.s32.totalorder %s443, %s445
    %p452 = scmp.eq.s32.totalorder %s38, 1
    %p453 = por %p451, %p452
    %p454 = scmp.ne.s32.totalorder %s445, %s446
    %p455 = scmp.eq.s32.totalorder %s38, 0
    %p456 = por %p454, %p455
    %p457 = scmp.ne.s32.totalorder %s445, %s446
    %p458 = scmp.eq.s32.totalorder %s39, 1
    %p459 = por %p457, %p458
    %p461 = scmp.ne.s32.totalorder %s446, %s460
    %p462 = scmp.eq.s32.totalorder %s39, 0
    %p463 = por %p461, %p462
    %s465 = sadd.s32 %s464, 1
    %p468 = scmp.eq.s32.totalorder %s33, 1
    %p469 = scmp.ne.s32.totalorder %s464, %s466
    %p470 = scmp.eq.s32.totalorder %s33, 0
    %p471 = por %p469, %p470
    %p472 = scmp.ne.s32.totalorder %s464, %s466
    %p473 = scmp.eq.s32.totalorder %s38, 1
    %p474 = por %p472, %p473
    %p475 = scmp.ne.s32.totalorder %s466, %s467
    %p476 = scmp.eq.s32.totalorder %s38, 0
    %p477 = por %p475, %p476
    %p478 = scmp.ne.s32.totalorder %s466, %s467
    %p479 = scmp.eq.s32.totalorder %s39, 1
    %p480 = por %p478, %p479
    %p482 = scmp.ne.s32.totalorder %s467, %s481
    %p483 = scmp.eq.s32.totalorder %s39, 0
    %p484 = por %p482, %p483
    %s486 = sadd.s32 %s485, 1
    %p489 = scmp.eq.s32.totalorder %s33, 1
    %p490 = scmp.ne.s32.totalorder %s485, %s487
    %p491 = scmp.eq.s32.totalorder %s33, 0
    %p492 = por %p490, %p491
    %p493 = scmp.ne.s32.totalorder %s485, %s487
    %p494 = scmp.eq.s32.totalorder %s38, 1
    %p495 = por %p493, %p494
    %p496 = scmp.ne.s32.totalorder %s487, %s488
    %p497 = scmp.eq.s32.totalorder %s38, 0
    %p498 = por %p496, %p497
    %p499 = scmp.ne.s32.totalorder %s487, %s488
    %p500 = scmp.eq.s32.totalorder %s39, 1
    %p501 = por %p499, %p500
    %p503 = scmp.ne.s32.totalorder %s488, %s502
    %p504 = scmp.eq.s32.totalorder %s39, 0
    %p505 = por %p503, %p504
    %s507 = sadd.s32 %s506, 1
    %p510 = scmp.eq.s32.totalorder %s33, 1
    %p511 = scmp.ne.s32.totalorder %s506, %s508
    %p512 = scmp.eq.s32.totalorder %s33, 0
    %p513 = por %p511, %p512
    %p514 = scmp.ne.s32.totalorder %s506, %s508
    %p515 = scmp.eq.s32.totalorder %s38, 1
    %p516 = por %p514, %p515
    %p517 = scmp.ne.s32.totalorder %s508, %s509
    %p518 = scmp.eq.s32.totalorder %s38, 0
    %p519 = por %p517, %p518
    %p520 = scmp.ne.s32.totalorder %s508, %s509
    %p521 = scmp.eq.s32.totalorder %s39, 1
    %p522 = por %p520, %p521
    %p524 = scmp.ne.s32.totalorder %s509, %s523
    %p525 = scmp.eq.s32.totalorder %s39, 0
    %p526 = por %p524, %p525
    %s528 = sadd.s32 %s527, 1
    %p531 = scmp.eq.s32.totalorder %s33, 1
    %p532 = scmp.ne.s32.totalorder %s527, %s529
    %p533 = scmp.eq.s32.totalorder %s33, 0
    %p534 = por %p532, %p533
    %p535 = scmp.ne.s32.totalorder %s527, %s529
    %p536 = scmp.eq.s32.totalorder %s38, 1
    %p537 = por %p535, %p536
    %p538 = scmp.ne.s32.totalorder %s529, %s530
    %p539 = scmp.eq.s32.totalorder %s38, 0
    %p540 = por %p538, %p539
    %p541 = scmp.ne.s32.totalorder %s529, %s530
    %p542 = scmp.eq.s32.totalorder %s39, 1
    %p543 = por %p541, %p542
    %p545 = scmp.ne.s32.totalorder %s530, %s544
    %p546 = scmp.eq.s32.totalorder %s39, 0
    %p547 = por %p545, %p546
    %s549 = sadd.s32 %s548, 1
    %p552 = scmp.eq.s32.totalorder %s33, 1
    %p553 = scmp.ne.s32.totalorder %s548, %s550
    %p554 = scmp.eq.s32.totalorder %s33, 0
    %p555 = por %p553, %p554
    %p556 = scmp.ne.s32.totalorder %s548, %s550
    %p557 = scmp.eq.s32.totalorder %s38, 1
    %p558 = por %p556, %p557
    %p559 = scmp.ne.s32.totalorder %s550, %s551
    %p560 = scmp.eq.s32.totalorder %s38, 0
    %p561 = por %p559, %p560
    %p562 = scmp.ne.s32.totalorder %s550, %s551
    %p563 = scmp.eq.s32.totalorder %s39, 1
    %p564 = por %p562, %p563
    %p566 = scmp.ne.s32.totalorder %s551, %s565
    %p567 = scmp.eq.s32.totalorder %s39, 0
    %p568 = por %p566, %p567
    %s570 = sadd.s32 %s569, 1
    %p573 = scmp.eq.s32.totalorder %s33, 1
    %p574 = scmp.ne.s32.totalorder %s569, %s571
    %p575 = scmp.eq.s32.totalorder %s33, 0
    %p576 = por %p574, %p575
    %p577 = scmp.ne.s32.totalorder %s569, %s571
    %p578 = scmp.eq.s32.totalorder %s38, 1
    %p579 = por %p577, %p578
    %p580 = scmp.ne.s32.totalorder %s571, %s572
    %p581 = scmp.eq.s32.totalorder %s38, 0
    %p582 = por %p580, %p581
    %p583 = scmp.ne.s32.totalorder %s571, %s572
    %p584 = scmp.eq.s32.totalorder %s39, 1
    %p585 = por %p583, %p584
    %p587 = scmp.ne.s32.totalorder %s572, %s586
    %p588 = scmp.eq.s32.totalorder %s39, 0
    %p589 = por %p587, %p588
    %s591 = sadd.s32 %s590, 1
    %p594 = scmp.eq.s32.totalorder %s33, 1
    %p595 = scmp.ne.s32.totalorder %s590, %s592
    %p596 = scmp.eq.s32.totalorder %s33, 0
    %p597 = por %p595, %p596
    %p598 = scmp.ne.s32.totalorder %s590, %s592
    %p599 = scmp.eq.s32.totalorder %s38, 1
    %p600 = por %p598, %p599
    %p601 = scmp.ne.s32.totalorder %s592, %s593
    %p602 = scmp.eq.s32.totalorder %s38, 0
    %p603 = por %p601, %p602
    %p604 = scmp.ne.s32.totalorder %s592, %s593
    %p605 = scmp.eq.s32.totalorder %s39, 1
    %p606 = por %p604, %p605
    %p608 = scmp.ne.s32.totalorder %s593, %s607
    %p609 = scmp.eq.s32.totalorder %s39, 0
    %p610 = por %p608, %p609
    %s611 = ssub.s32 %s33, %s40
    %p612 = scmp.eq.s32.totalorder %s611, 0
    %s614 = sadd.s32 %s613, 1
    %s615 = scalar_select %p612, %s613, %s614
    %p618 = pneg %p612
    %p619 = scmp.eq.s32.totalorder %s33, 1
    %p620 = por %p618, %p619
    %p621 = scmp.ne.s32.totalorder %s613, %s616
    %p622 = scmp.eq.s32.totalorder %s33, 0
    %p623 = por %p621, %p622
    %p624 = scmp.ne.s32.totalorder %s613, %s616
    %p625 = scmp.eq.s32.totalorder %s38, 1
    %p626 = por %p624, %p625
    %p627 = scmp.ne.s32.totalorder %s616, %s617
    %p628 = scmp.eq.s32.totalorder %s38, 0
    %p629 = por %p627, %p628
    %p630 = scmp.ne.s32.totalorder %s616, %s617
    %p631 = scmp.eq.s32.totalorder %s39, 1
    %p632 = por %p630, %p631
    %p634 = scmp.ne.s32.totalorder %s617, %s633
    %p635 = scmp.eq.s32.totalorder %s39, 0
    %p636 = por %p634, %p635
    %p637 = scmp.le.s32.totalorder 1, %s33
    %p638 = scmp.lt.s32.totalorder %s33, 3
    %p639 = pnand %p637, %p638
    %p640 = pneg %p639
    // Predicated region
    $region9: #{forward.1} parent=5 // pred_check
      _
    $region10: #{forward.1} parent=5 // pred_check_branch
      %642 = sbr.rel (%p639) target = $region12
    $region11: #{forward.1} parent=5 // pred_region
      %s643 = ssub.s32 %s33, 1
      // Predicated region
      $region13: #{forward.1} parent=11 // pred_check
        %p644 = pneg %p288
      $region14: #{forward.1} parent=11 // pred_check_branch
        %646 = sbr.rel (%p644) target = $region16
      $region15: #{forward.1} parent=11 // pred_region
        _
      $region16: #{forward.1} parent=11 // pred_fallthru
        _
      // Predicated region
      $region17: #{forward.1} parent=11 // pred_check
        %p647 = pneg %p309
      $region18: #{forward.1} parent=11 // pred_check_branch
        %649 = sbr.rel (%p647) target = $region20
      $region19: #{forward.1} parent=11 // pred_region
        _
      $region20: #{forward.1} parent=11 // pred_fallthru
        _
      // Predicated region
      $region21: #{forward.1} parent=11 // pred_check
        %p650 = pneg %p330
      $region22: #{forward.1} parent=11 // pred_check_branch
        %652 = sbr.rel (%p650) target = $region24
      $region23: #{forward.1} parent=11 // pred_region
        _
      $region24: #{forward.1} parent=11 // pred_fallthru
        _
      // Predicated region
      $region25: #{forward.1} parent=11 // pred_check
        %p653 = pneg %p351
      $region26: #{forward.1} parent=11 // pred_check_branch
        %655 = sbr.rel (%p653) target = $region28
      $region27: #{forward.1} parent=11 // pred_region
        _
      $region28: #{forward.1} parent=11 // pred_fallthru
        _
      // Predicated region
      $region29: #{forward.1} parent=11 // pred_check
        %p656 = pneg %p372
      $region30: #{forward.1} parent=11 // pred_check_branch
        %658 = sbr.rel (%p656) target = $region32
      $region31: #{forward.1} parent=11 // pred_region
        _
      $region32: #{forward.1} parent=11 // pred_fallthru
        _
      // Predicated region
      $region33: #{forward.1} parent=11 // pred_check
        %p659 = pneg %p393
      $region34: #{forward.1} parent=11 // pred_check_branch
        %661 = sbr.rel (%p659) target = $region36
      $region35: #{forward.1} parent=11 // pred_region
        _
      $region36: #{forward.1} parent=11 // pred_fallthru
        _
      // Predicated region
      $region37: #{forward.1} parent=11 // pred_check
        %p662 = pneg %p414
      $region38: #{forward.1} parent=11 // pred_check_branch
        %664 = sbr.rel (%p662) target = $region40
      $region39: #{forward.1} parent=11 // pred_region
        _
      $region40: #{forward.1} parent=11 // pred_fallthru
        _
      // Predicated region
      $region41: #{forward.1} parent=11 // pred_check
        %p665 = pneg %p435
      $region42: #{forward.1} parent=11 // pred_check_branch
        %667 = sbr.rel (%p665) target = $region44
      $region43: #{forward.1} parent=11 // pred_region
        _
      $region44: #{forward.1} parent=11 // pred_fallthru
        _
      // Predicated region
      $region45: #{forward.1} parent=11 // pred_check
        %p668 = pneg %p456
      $region46: #{forward.1} parent=11 // pred_check_branch
        %670 = sbr.rel (%p668) target = $region48
      $region47: #{forward.1} parent=11 // pred_region
        _
      $region48: #{forward.1} parent=11 // pred_fallthru
        _
      // Predicated region
      $region49: #{forward.1} parent=11 // pred_check
        %p671 = pneg %p477
      $region50: #{forward.1} parent=11 // pred_check_branch
        %673 = sbr.rel (%p671) target = $region52
      $region51: #{forward.1} parent=11 // pred_region
        _
      $region52: #{forward.1} parent=11 // pred_fallthru
        _
      // Predicated region
      $region53: #{forward.1} parent=11 // pred_check
        %p674 = pneg %p498
      $region54: #{forward.1} parent=11 // pred_check_branch
        %676 = sbr.rel (%p674) target = $region56
      $region55: #{forward.1} parent=11 // pred_region
        _
      $region56: #{forward.1} parent=11 // pred_fallthru
        _
      // Predicated region
      $region57: #{forward.1} parent=11 // pred_check
        %p677 = pneg %p519
      $region58: #{forward.1} parent=11 // pred_check_branch
        %679 = sbr.rel (%p677) target = $region60
      $region59: #{forward.1} parent=11 // pred_region
        _
      $region60: #{forward.1} parent=11 // pred_fallthru
        _
      // Predicated region
      $region61: #{forward.1} parent=11 // pred_check
        %p680 = pneg %p540
      $region62: #{forward.1} parent=11 // pred_check_branch
        %682 = sbr.rel (%p680) target = $region64
      $region63: #{forward.1} parent=11 // pred_region
        _
      $region64: #{forward.1} parent=11 // pred_fallthru
        _
      // Predicated region
      $region65: #{forward.1} parent=11 // pred_check
        %p683 = pneg %p561
      $region66: #{forward.1} parent=11 // pred_check_branch
        %685 = sbr.rel (%p683) target = $region68
      $region67: #{forward.1} parent=11 // pred_region
        _
      $region68: #{forward.1} parent=11 // pred_fallthru
        _
      // Predicated region
      $region69: #{forward.1} parent=11 // pred_check
        %p686 = pneg %p582
      $region70: #{forward.1} parent=11 // pred_check_branch
        %688 = sbr.rel (%p686) target = $region72
      $region71: #{forward.1} parent=11 // pred_region
        _
      $region72: #{forward.1} parent=11 // pred_fallthru
        _
      // Predicated region
      $region73: #{forward.1} parent=11 // pred_check
        %p689 = pneg %p603
      $region74: #{forward.1} parent=11 // pred_check_branch
        %691 = sbr.rel (%p689) target = $region76
      $region75: #{forward.1} parent=11 // pred_region
        _
      $region76: #{forward.1} parent=11 // pred_fallthru
        _
    $region12: #{forward.1} parent=5 // pred_fallthru
      _
    %p692 = scmp.lt.s32.totalorder %s33, 2
    // Predicated region
    $region77: #{forward.1} parent=5 // pred_check
      %p693 = pneg %p692
    $region78: #{forward.1} parent=5 // pred_check_branch
      %695 = sbr.rel (%p693) target = $region80
    $region79: #{forward.1} parent=5 // pred_region
      // Predicated region
      $region81: #{forward.1} parent=79 // pred_check
        %p696 = pneg %p53
      $region82: #{forward.1} parent=79 // pred_check_branch
        %698 = sbr.rel (%p696) target = $region84
      $region83: #{forward.1} parent=79 // pred_region
        %p699 = scmp.lt.s32.totalorder %s33, 1
        %s700 = scalar_select %p699, %s33, 1
        %s701 = smul.addr %s700, 12
        %s702 = smul.addr %s701, 4
        %s703 = scalar_lea.vmem %s0, %s702
      $region84: #{forward.1} parent=79 // pred_fallthru
        _
      // Predicated region
      $region85: #{forward.1} parent=79 // pred_check
        %p704 = pneg %p79
      $region86: #{forward.1} parent=79 // pred_check_branch
        %706 = sbr.rel (%p704) target = $region88
      $region87: #{forward.1} parent=79 // pred_region
        %p707 = scmp.lt.s32.totalorder %s33, 1
        %s708 = scalar_select %p707, %s33, 1
        %s709 = smul.addr %s708, 2
        %s710 = smul.addr %s709, 4
        %s711 = scalar_lea.vmem %s1, %s710
      $region88: #{forward.1} parent=79 // pred_fallthru
        _
      // Predicated region
      $region89: #{forward.1} parent=79 // pred_check
        %p712 = pneg %p105
      $region90: #{forward.1} parent=79 // pred_check_branch
        %714 = sbr.rel (%p712) target = $region92
      $region91: #{forward.1} parent=79 // pred_region
        %p715 = scmp.lt.s32.totalorder %s33, 1
        %s716 = scalar_select %p715, %s33, 1
        %s717 = smul.addr %s716, 96
        %s718 = smul.addr %s717, 4
        %s719 = scalar_lea.vmem %s2, %s718
      $region92: #{forward.1} parent=79 // pred_fallthru
        _
      // Predicated region
      $region93: #{forward.1} parent=79 // pred_check
        %p720 = pneg %p131
      $region94: #{forward.1} parent=79 // pred_check_branch
        %722 = sbr.rel (%p720) target = $region96
      $region95: #{forward.1} parent=79 // pred_region
        %p723 = scmp.lt.s32.totalorder %s33, 1
        %s724 = scalar_select %p723, %s33, 1
        %s725 = smul.addr %s724, 84
        %s726 = smul.addr %s725, 4
        %s727 = scalar_lea.vmem %s3, %s726
      $region96: #{forward.1} parent=79 // pred_fallthru
        _
      // Predicated region
      $region97: #{forward.1} parent=79 // pred_check
        %p728 = pneg %p157
      $region98: #{forward.1} parent=79 // pred_check_branch
        %730 = sbr.rel (%p728) target = $region100
      $region99: #{forward.1} parent=79 // pred_region
        %p731 = scmp.lt.s32.totalorder %s33, 1
        %s732 = scalar_select %p731, %s33, 1
        %s733 = smul.addr %s732, 84
        %s734 = smul.addr %s733, 4
        %s735 = scalar_lea.vmem %s4, %s734
      $region100: #{forward.1} parent=79 // pred_fallthru
        _
      // Predicated region
      $region101: #{forward.1} parent=79 // pred_check
        %p736 = pneg %p183
      $region102: #{forward.1} parent=79 // pred_check_branch
        %738 = sbr.rel (%p736) target = $region104
      $region103: #{forward.1} parent=79 // pred_region
        %p739 = scmp.lt.s32.totalorder %s33, 1
        %s740 = scalar_select %p739, %s33, 1
        %s741 = smul.addr %s740, 42
        %s742 = smul.addr %s741, 4
        %s743 = scalar_lea.vmem %s5, %s742
      $region104: #{forward.1} parent=79 // pred_fallthru
        _
      // Predicated region
      $region105: #{forward.1} parent=79 // pred_check
        %p744 = pneg %p209
      $region106: #{forward.1} parent=79 // pred_check_branch
        %746 = sbr.rel (%p744) target = $region108
      $region107: #{forward.1} parent=79 // pred_region
        %p747 = scmp.lt.s32.totalorder %s33, 1
        %s748 = scalar_select %p747, %s33, 1
        %s749 = smul.addr %s748, 24
        %s750 = smul.addr %s749, 4
        %s751 = scalar_lea.vmem %s6, %s750
      $region108: #{forward.1} parent=79 // pred_fallthru
        _
      // Predicated region
      $region109: #{forward.1} parent=79 // pred_check
        %p752 = pneg %p235
      $region110: #{forward.1} parent=79 // pred_check_branch
        %754 = sbr.rel (%p752) target = $region112
      $region111: #{forward.1} parent=79 // pred_region
        %p755 = scmp.lt.s32.totalorder %s33, 1
        %s756 = scalar_select %p755, %s33, 1
        %s757 = smul.addr %s756, 12
        %s758 = smul.addr %s757, 4
        %s759 = scalar_lea.vmem %s7, %s758
      $region112: #{forward.1} parent=79 // pred_fallthru
        _
      // Predicated region
      $region113: #{forward.1} parent=79 // pred_check
        %p760 = pneg %p261
      $region114: #{forward.1} parent=79 // pred_check_branch
        %762 = sbr.rel (%p760) target = $region116
      $region115: #{forward.1} parent=79 // pred_region
        %p763 = scmp.lt.s32.totalorder %s33, 1
        %s764 = scalar_select %p763, %s33, 1
        %s765 = smul.addr %s764, 6
        %s766 = smul.addr %s765, 4
        %s767 = scalar_lea.vmem %s8, %s766
      $region116: #{forward.1} parent=79 // pred_fallthru
        _
    $region80: #{forward.1} parent=5 // pred_fallthru
      _
    %p768 = scmp.le.s32.totalorder 1, %s33
    %p769 = scmp.lt.s32.totalorder %s33, 3
    %p770 = pnand %p768, %p769
    %p771 = pneg %p770
    // Predicated region
    $region117: #{forward.1} parent=5 // pred_check
      _
    $region118: #{forward.1} parent=5 // pred_check_branch
      %773 = sbr.rel (%p770) target = $region120
    $region119: #{forward.1} parent=5 // pred_region
      %s774 = ssub.s32 %s33, 1
      %p775 = scmp.lt.s32.totalorder %s38, 1
      %s776 = scalar_select %p775, %s38, 1
      %s777 = smul.addr %s776, 12
      %s778 = smul.addr %s777, 4
      %s779 = scalar_lea.vmem %s0, %s778
      %p780 = pneg %p59
      %p781 = pneg %p56
      %p782 = scmp.lt.s32.totalorder %s38, 1
      %s783 = scalar_select %p782, %s38, 1
      %s784 = smul.addr %s783, 2
      %s785 = smul.addr %s784, 4
      %s786 = scalar_lea.vmem %s1, %s785
      %p787 = pneg %p85
      %p788 = pneg %p82
      %p789 = scmp.lt.s32.totalorder %s38, 1
      %s790 = scalar_select %p789, %s38, 1
      %s791 = smul.addr %s790, 96
      %s792 = smul.addr %s791, 4
      %s793 = scalar_lea.vmem %s2, %s792
      %p794 = pneg %p111
      %p795 = pneg %p108
      %p796 = scmp.lt.s32.totalorder %s38, 1
      %s797 = scalar_select %p796, %s38, 1
      %s798 = smul.addr %s797, 84
      %s799 = smul.addr %s798, 4
      %s800 = scalar_lea.vmem %s3, %s799
      %p801 = pneg %p137
      %p802 = pneg %p134
      %p803 = scmp.lt.s32.totalorder %s38, 1
      %s804 = scalar_select %p803, %s38, 1
      %s805 = smul.addr %s804, 84
      %s806 = smul.addr %s805, 4
      %s807 = scalar_lea.vmem %s4, %s806
      %p808 = pneg %p163
      %p809 = pneg %p160
      %p810 = scmp.lt.s32.totalorder %s38, 1
      %s811 = scalar_select %p810, %s38, 1
      %s812 = smul.addr %s811, 42
      %s813 = smul.addr %s812, 4
      %s814 = scalar_lea.vmem %s5, %s813
      %p815 = pneg %p189
      %p816 = pneg %p186
      %p817 = scmp.lt.s32.totalorder %s38, 1
      %s818 = scalar_select %p817, %s38, 1
      %s819 = smul.addr %s818, 24
      %s820 = smul.addr %s819, 4
      %s821 = scalar_lea.vmem %s6, %s820
      %p822 = pneg %p215
      %p823 = pneg %p212
      %p824 = scmp.lt.s32.totalorder %s38, 1
      %s825 = scalar_select %p824, %s38, 1
      %s826 = smul.addr %s825, 12
      %s827 = smul.addr %s826, 4
      %s828 = scalar_lea.vmem %s7, %s827
      %p829 = pneg %p241
      %p830 = pneg %p238
      %p831 = scmp.lt.s32.totalorder %s38, 1
      %s832 = scalar_select %p831, %s38, 1
      %s833 = smul.addr %s832, 6
      %s834 = smul.addr %s833, 4
      %s835 = scalar_lea.vmem %s8, %s834
      %p836 = pneg %p267
      %p837 = pneg %p264
      %p838 = pneg %p288
      %p839 = pneg %p285
      %p840 = pneg %p309
      %p841 = pneg %p306
      %p842 = pneg %p330
      %p843 = pneg %p327
      %p844 = pneg %p351
      %p845 = pneg %p348
      %p846 = pneg %p372
      %p847 = pneg %p369
      %p848 = pneg %p393
      %p849 = pneg %p390
      %p850 = pneg %p414
      %p851 = pneg %p411
      %p852 = pneg %p435
      %p853 = pneg %p432
      %p854 = pneg %p456
      %p855 = pneg %p453
      %p856 = pneg %p477
      %p857 = pneg %p474
      %p858 = pneg %p498
      %p859 = pneg %p495
      %p860 = pneg %p519
      %p861 = pneg %p516
      %p862 = pneg %p540
      %p863 = pneg %p537
      %p864 = pneg %p561
      %p865 = pneg %p558
      %p866 = pneg %p582
      %p867 = pneg %p579
      %p868 = pneg %p603
      %p869 = pneg %p600
      %p870 = pneg %p629
      %p871 = pneg %p626
      %p872 = scmp.lt.s32.totalorder %s38, 1
      %s873 = scalar_select %p872, %s38, 1
      %s874 = smul.addr %s873, 8
      %s875 = scalar_lea.vmem %s25, %s874
      %p876 = scmp.lt.s32.totalorder %s38, 1
      %s877 = scalar_select %p876, %s38, 1
      %s878 = smul.addr %s877, 12
      %s879 = smul.addr %s878, 4
      %s880 = scalar_lea.vmem %s0, %s879
      %p881 = scmp.lt.s32.totalorder %s38, 1
      %s882 = scalar_select %p881, %s38, 1
      %s883 = smul.addr %s882, 2
      %s884 = smul.addr %s883, 4
      %s885 = scalar_lea.vmem %s1, %s884
      %p886 = scmp.lt.s32.totalorder %s38, 1
      %s887 = scalar_select %p886, %s38, 1
      %s888 = smul.addr %s887, 96
      %s889 = smul.addr %s888, 4
      %s890 = scalar_lea.vmem %s2, %s889
      %p891 = scmp.lt.s32.totalorder %s38, 1
      %s892 = scalar_select %p891, %s38, 1
      %s893 = smul.addr %s892, 84
      %s894 = smul.addr %s893, 4
      %s895 = scalar_lea.vmem %s3, %s894
      %p896 = scmp.lt.s32.totalorder %s38, 1
      %s897 = scalar_select %p896, %s38, 1
      %s898 = smul.addr %s897, 84
      %s899 = smul.addr %s898, 4
      %s900 = scalar_lea.vmem %s4, %s899
      %p901 = scmp.lt.s32.totalorder %s38, 1
      %s902 = scalar_select %p901, %s38, 1
      %s903 = smul.addr %s902, 42
      %s904 = smul.addr %s903, 4
      %s905 = scalar_lea.vmem %s5, %s904
      %p906 = scmp.lt.s32.totalorder %s38, 1
      %s907 = scalar_select %p906, %s38, 1
      %s908 = smul.addr %s907, 24
      %s909 = smul.addr %s908, 4
      %s910 = scalar_lea.vmem %s6, %s909
      %p911 = scmp.lt.s32.totalorder %s38, 1
      %s912 = scalar_select %p911, %s38, 1
      %s913 = smul.addr %s912, 12
      %s914 = smul.addr %s913, 4
      %s915 = scalar_lea.vmem %s7, %s914
      %p916 = scmp.lt.s32.totalorder %s38, 1
      %s917 = scalar_select %p916, %s38, 1
      %s918 = smul.addr %s917, 6
      %s919 = smul.addr %s918, 4
      %s920 = scalar_lea.vmem %s8, %s919
      %p921 = scmp.lt.s32.totalorder %s38, 1
      %s922 = scalar_select %p921, %s38, 1
      %s923 = smul.addr %s922, 8
      %s924 = scalar_lea.vmem %s25, %s923
      %v926 = vld [vmem:[%s880] sm:$0xf]
      %v927 = vld [vmem:[%s880 + $0x4] sm:$0xf]
      %v928 = vld [vmem:[%s880 + $0x8] sm:$0xf]
      %v929 = vld [vmem:[%s880 + $0xc] sm:$0xf]
      %v930 = vld [vmem:[%s880 + $0x10] sm:$0xf]
      %v931 = vld [vmem:[%s880 + $0x14] sm:$0xf]
      %v932 = vld [vmem:[%s880 + $0x18] sm:$0xf]
      %v933 = vld [vmem:[%s880 + $0x1c] sm:$0xf]
      %v934 = vld [vmem:[%s880 + $0x20] sm:$0xf]
      %v935 = vld [vmem:[%s880 + $0x24] sm:$0xf]
      %v936 = vld [vmem:[%s880 + $0x28] sm:$0xf]
      %v937 = vld [vmem:[%s880 + $0x2c] sm:$0xf]
      %v938 = vld [vmem:[%s885] sm:$0xf]
      %v939 = vld [vmem:[%s885 + $0x4] sm:$0xf]
      %v940 = vld [vmem:[%s890] sm:$0xf]
      %v941 = vld [vmem:[%s890 + $0x4] sm:$0xf]
      %v942 = vld [vmem:[%s890 + $0x8] sm:$0xf]
      %v943 = vld [vmem:[%s890 + $0xc] sm:$0xf]
      %v944 = vld [vmem:[%s890 + $0x10] sm:$0xf]
      %v945 = vld [vmem:[%s890 + $0x14] sm:$0xf]
      %v946 = vld [vmem:[%s890 + $0x18] sm:$0xf]
      %v947 = vld [vmem:[%s890 + $0x1c] sm:$0xf]
      %v948 = vld [vmem:[%s890 + $0x20] sm:$0xf]
      %v949 = vld [vmem:[%s890 + $0x24] sm:$0xf]
      %v950 = vld [vmem:[%s890 + $0x28] sm:$0xf]
      %v951 = vld [vmem:[%s890 + $0x2c] sm:$0xf]
      %v952 = vld [vmem:[%s890 + $0x30] sm:$0xf]
      %v953 = vld [vmem:[%s890 + $0x34] sm:$0xf]
      %v954 = vld [vmem:[%s890 + $0x38] sm:$0xf]
      %v955 = vld [vmem:[%s890 + $0x3c] sm:$0xf]
      %v956 = vld [vmem:[%s890 + $0x40] sm:$0xf]
      %v957 = vld [vmem:[%s890 + $0x44] sm:$0xf]
      %v958 = vld [vmem:[%s890 + $0x48] sm:$0xf]
      %v959 = vld [vmem:[%s890 + $0x4c] sm:$0xf]
      %v960 = vld [vmem:[%s890 + $0x50] sm:$0xf]
      %v961 = vld [vmem:[%s890 + $0x54] sm:$0xf]
      %v962 = vld [vmem:[%s890 + $0x58] sm:$0xf]
      %v963 = vld [vmem:[%s890 + $0x5c] sm:$0xf]
      %v964 = vld [vmem:[%s890 + $0x60] sm:$0xf]
      %v965 = vld [vmem:[%s890 + $0x64] sm:$0xf]
      %v966 = vld [vmem:[%s890 + $0x68] sm:$0xf]
      %v967 = vld [vmem:[%s890 + $0x6c] sm:$0xf]
      %v968 = vld [vmem:[%s890 + $0x70] sm:$0xf]
      %v969 = vld [vmem:[%s890 + $0x74] sm:$0xf]
      %v970 = vld [vmem:[%s890 + $0x78] sm:$0xf]
      %v971 = vld [vmem:[%s890 + $0x7c] sm:$0xf]
      %v972 = vld [vmem:[%s890 + $0x80] sm:$0xf]
      %v973 = vld [vmem:[%s890 + $0x84] sm:$0xf]
      %v974 = vld [vmem:[%s890 + $0x88] sm:$0xf]
      %v975 = vld [vmem:[%s890 + $0x8c] sm:$0xf]
      %v976 = vld [vmem:[%s890 + $0x90] sm:$0xf]
      %v977 = vld [vmem:[%s890 + $0x94] sm:$0xf]
      %v978 = vld [vmem:[%s890 + $0x98] sm:$0xf]
      %v979 = vld [vmem:[%s890 + $0x9c] sm:$0xf]
      %v980 = vld [vmem:[%s890 + $0xa0] sm:$0xf]
      %v981 = vld [vmem:[%s890 + $0xa4] sm:$0xf]
      %v982 = vld [vmem:[%s890 + $0xa8] sm:$0xf]
      %v983 = vld [vmem:[%s890 + $0xac] sm:$0xf]
      %v984 = vld [vmem:[%s890 + $0xb0] sm:$0xf]
      %v985 = vld [vmem:[%s890 + $0xb4] sm:$0xf]
      %v986 = vld [vmem:[%s890 + $0xb8] sm:$0xf]
      %v987 = vld [vmem:[%s890 + $0xbc] sm:$0xf]
      %v988 = vld [vmem:[%s890 + $0xc0] sm:$0xf]
      %v989 = vld [vmem:[%s890 + $0xc4] sm:$0xf]
      %v990 = vld [vmem:[%s890 + $0xc8] sm:$0xf]
      %v991 = vld [vmem:[%s890 + $0xcc] sm:$0xf]
      %v992 = vld [vmem:[%s890 + $0xd0] sm:$0xf]
      %v993 = vld [vmem:[%s890 + $0xd4] sm:$0xf]
      %v994 = vld [vmem:[%s890 + $0xd8] sm:$0xf]
      %v995 = vld [vmem:[%s890 + $0xdc] sm:$0xf]
      %v996 = vld [vmem:[%s890 + $0xe0] sm:$0xf]
      %v997 = vld [vmem:[%s890 + $0xe4] sm:$0xf]
      %v998 = vld [vmem:[%s890 + $0xe8] sm:$0xf]
      %v999 = vld [vmem:[%s890 + $0xec] sm:$0xf]
      %v1000 = vld [vmem:[%s890 + $0xf0] sm:$0xf]
      %v1001 = vld [vmem:[%s890 + $0xf4] sm:$0xf]
      %v1002 = vld [vmem:[%s890 + $0xf8] sm:$0xf]
      %v1003 = vld [vmem:[%s890 + $0xfc] sm:$0xf]
      %v1004 = vld [vmem:[%s890 + $0x100] sm:$0xf]
      %v1005 = vld [vmem:[%s890 + $0x104] sm:$0xf]
      %v1006 = vld [vmem:[%s890 + $0x108] sm:$0xf]
      %v1007 = vld [vmem:[%s890 + $0x10c] sm:$0xf]
      %v1008 = vld [vmem:[%s890 + $0x110] sm:$0xf]
      %v1009 = vld [vmem:[%s890 + $0x114] sm:$0xf]
      %v1010 = vld [vmem:[%s890 + $0x118] sm:$0xf]
      %v1011 = vld [vmem:[%s890 + $0x11c] sm:$0xf]
      %v1012 = vld [vmem:[%s890 + $0x120] sm:$0xf]
      %v1013 = vld [vmem:[%s890 + $0x124] sm:$0xf]
      %v1014 = vld [vmem:[%s890 + $0x128] sm:$0xf]
      %v1015 = vld [vmem:[%s890 + $0x12c] sm:$0xf]
      %v1016 = vld [vmem:[%s890 + $0x130] sm:$0xf]
      %v1017 = vld [vmem:[%s890 + $0x134] sm:$0xf]
      %v1018 = vld [vmem:[%s890 + $0x138] sm:$0xf]
      %v1019 = vld [vmem:[%s890 + $0x13c] sm:$0xf]
      %v1020 = vld [vmem:[%s890 + $0x140] sm:$0xf]
      %v1021 = vld [vmem:[%s890 + $0x144] sm:$0xf]
      %v1022 = vld [vmem:[%s890 + $0x148] sm:$0xf]
      %v1023 = vld [vmem:[%s890 + $0x14c] sm:$0xf]
      %v1024 = vld [vmem:[%s890 + $0x150] sm:$0xf]
      %v1025 = vld [vmem:[%s890 + $0x154] sm:$0xf]
      %v1026 = vld [vmem:[%s890 + $0x158] sm:$0xf]
      %v1027 = vld [vmem:[%s890 + $0x15c] sm:$0xf]
      %v1028 = vld [vmem:[%s890 + $0x160] sm:$0xf]
      %v1029 = vld [vmem:[%s890 + $0x164] sm:$0xf]
      %v1030 = vld [vmem:[%s890 + $0x168] sm:$0xf]
      %v1031 = vld [vmem:[%s890 + $0x16c] sm:$0xf]
      %v1032 = vld [vmem:[%s890 + $0x170] sm:$0xf]
      %v1033 = vld [vmem:[%s890 + $0x174] sm:$0xf]
      %v1034 = vld [vmem:[%s890 + $0x178] sm:$0xf]
      %v1035 = vld [vmem:[%s890 + $0x17c] sm:$0xf]
      %v1036 = vld [vmem:[%s895] sm:$0xff]
      %v1037 = vld [vmem:[%s895 + $0x8] sm:$0xff]
      %v1038 = vld [vmem:[%s895 + $0x10] sm:$0xff]
      %v1039 = vld [vmem:[%s895 + $0x18] sm:$0xf]
      %v1040 = vld [vmem:[%s895 + $0x1c] sm:$0xff]
      %v1041 = vld [vmem:[%s895 + $0x24] sm:$0xff]
      %v1042 = vld [vmem:[%s895 + $0x2c] sm:$0xff]
      %v1043 = vld [vmem:[%s895 + $0x34] sm:$0xf]
      %v1044 = vld [vmem:[%s895 + $0x38] sm:$0xff]
      %v1045 = vld [vmem:[%s895 + $0x40] sm:$0xff]
      %v1046 = vld [vmem:[%s895 + $0x48] sm:$0xff]
      %v1047 = vld [vmem:[%s895 + $0x50] sm:$0xf]
      %v1048 = vld [vmem:[%s895 + $0x54] sm:$0xff]
      %v1049 = vld [vmem:[%s895 + $0x5c] sm:$0xff]
      %v1050 = vld [vmem:[%s895 + $0x64] sm:$0xff]
      %v1051 = vld [vmem:[%s895 + $0x6c] sm:$0xf]
      %v1052 = vld [vmem:[%s895 + $0x70] sm:$0xff]
      %v1053 = vld [vmem:[%s895 + $0x78] sm:$0xff]
      %v1054 = vld [vmem:[%s895 + $0x80] sm:$0xff]
      %v1055 = vld [vmem:[%s895 + $0x88] sm:$0xf]
      %v1056 = vld [vmem:[%s895 + $0x8c] sm:$0xff]
      %v1057 = vld [vmem:[%s895 + $0x94] sm:$0xff]
      %v1058 = vld [vmem:[%s895 + $0x9c] sm:$0xff]
      %v1059 = vld [vmem:[%s895 + $0xa4] sm:$0xf]
      %v1060 = vld [vmem:[%s895 + $0xa8] sm:$0xff]
      %v1061 = vld [vmem:[%s895 + $0xb0] sm:$0xff]
      %v1062 = vld [vmem:[%s895 + $0xb8] sm:$0xff]
      %v1063 = vld [vmem:[%s895 + $0xc0] sm:$0xf]
      %v1064 = vld [vmem:[%s895 + $0xc4] sm:$0xff]
      %v1065 = vld [vmem:[%s895 + $0xcc] sm:$0xff]
      %v1066 = vld [vmem:[%s895 + $0xd4] sm:$0xff]
      %v1067 = vld [vmem:[%s895 + $0xdc] sm:$0xf]
      %v1068 = vld [vmem:[%s895 + $0xe0] sm:$0xff]
      %v1069 = vld [vmem:[%s895 + $0xe8] sm:$0xff]
      %v1070 = vld [vmem:[%s895 + $0xf0] sm:$0xff]
      %v1071 = vld [vmem:[%s895 + $0xf8] sm:$0xf]
      %v1072 = vld [vmem:[%s895 + $0xfc] sm:$0xff]
      %v1073 = vld [vmem:[%s895 + $0x104] sm:$0xff]
      %v1074 = vld [vmem:[%s895 + $0x10c] sm:$0xff]
      %v1075 = vld [vmem:[%s895 + $0x114] sm:$0xf]
      %v1076 = vld [vmem:[%s895 + $0x118] sm:$0xff]
      %v1077 = vld [vmem:[%s895 + $0x120] sm:$0xff]
      %v1078 = vld [vmem:[%s895 + $0x128] sm:$0xff]
      %v1079 = vld [vmem:[%s895 + $0x130] sm:$0xf]
      %v1080 = vld [vmem:[%s895 + $0x134] sm:$0xff]
      %v1081 = vld [vmem:[%s895 + $0x13c] sm:$0xff]
      %v1082 = vld [vmem:[%s895 + $0x144] sm:$0xff]
      %v1083 = vld [vmem:[%s895 + $0x14c] sm:$0xf]
      %v1084 = vld [vmem:[%s900] sm:$0xff]
      %v1085 = vld [vmem:[%s900 + $0x8] sm:$0xff]
      %v1086 = vld [vmem:[%s900 + $0x10] sm:$0xff]
      %v1087 = vld [vmem:[%s900 + $0x18] sm:$0xf]
      %v1088 = vld [vmem:[%s900 + $0x1c] sm:$0xff]
      %v1089 = vld [vmem:[%s900 + $0x24] sm:$0xff]
      %v1090 = vld [vmem:[%s900 + $0x2c] sm:$0xff]
      %v1091 = vld [vmem:[%s900 + $0x34] sm:$0xf]
      %v1092 = vld [vmem:[%s900 + $0x38] sm:$0xff]
      %v1093 = vld [vmem:[%s900 + $0x40] sm:$0xff]
      %v1094 = vld [vmem:[%s900 + $0x48] sm:$0xff]
      %v1095 = vld [vmem:[%s900 + $0x50] sm:$0xf]
      %v1096 = vld [vmem:[%s900 + $0x54] sm:$0xff]
      %v1097 = vld [vmem:[%s900 + $0x5c] sm:$0xff]
      %v1098 = vld [vmem:[%s900 + $0x64] sm:$0xff]
      %v1099 = vld [vmem:[%s900 + $0x6c] sm:$0xf]
      %v1100 = vld [vmem:[%s900 + $0x70] sm:$0xff]
      %v1101 = vld [vmem:[%s900 + $0x78] sm:$0xff]
      %v1102 = vld [vmem:[%s900 + $0x80] sm:$0xff]
      %v1103 = vld [vmem:[%s900 + $0x88] sm:$0xf]
      %v1104 = vld [vmem:[%s900 + $0x8c] sm:$0xff]
      %v1105 = vld [vmem:[%s900 + $0x94] sm:$0xff]
      %v1106 = vld [vmem:[%s900 + $0x9c] sm:$0xff]
      %v1107 = vld [vmem:[%s900 + $0xa4] sm:$0xf]
      %v1108 = vld [vmem:[%s900 + $0xa8] sm:$0xff]
      %v1109 = vld [vmem:[%s900 + $0xb0] sm:$0xff]
      %v1110 = vld [vmem:[%s900 + $0xb8] sm:$0xff]
      %v1111 = vld [vmem:[%s900 + $0xc0] sm:$0xf]
      %v1112 = vld [vmem:[%s900 + $0xc4] sm:$0xff]
      %v1113 = vld [vmem:[%s900 + $0xcc] sm:$0xff]
      %v1114 = vld [vmem:[%s900 + $0xd4] sm:$0xff]
      %v1115 = vld [vmem:[%s900 + $0xdc] sm:$0xf]
      %v1116 = vld [vmem:[%s900 + $0xe0] sm:$0xff]
      %v1117 = vld [vmem:[%s900 + $0xe8] sm:$0xff]
      %v1118 = vld [vmem:[%s900 + $0xf0] sm:$0xff]
      %v1119 = vld [vmem:[%s900 + $0xf8] sm:$0xf]
      %v1120 = vld [vmem:[%s900 + $0xfc] sm:$0xff]
      %v1121 = vld [vmem:[%s900 + $0x104] sm:$0xff]
      %v1122 = vld [vmem:[%s900 + $0x10c] sm:$0xff]
      %v1123 = vld [vmem:[%s900 + $0x114] sm:$0xf]
      %v1124 = vld [vmem:[%s900 + $0x118] sm:$0xff]
      %v1125 = vld [vmem:[%s900 + $0x120] sm:$0xff]
      %v1126 = vld [vmem:[%s900 + $0x128] sm:$0xff]
      %v1127 = vld [vmem:[%s900 + $0x130] sm:$0xf]
      %v1128 = vld [vmem:[%s900 + $0x134] sm:$0xff]
      %v1129 = vld [vmem:[%s900 + $0x13c] sm:$0xff]
      %v1130 = vld [vmem:[%s900 + $0x144] sm:$0xff]
      %v1131 = vld [vmem:[%s900 + $0x14c] sm:$0xf]
      %v1132 = vld [vmem:[%s905] sm:$0xff]
      %v1133 = vld [vmem:[%s905 + $0x8] sm:$0xff]
      %v1134 = vld [vmem:[%s905 + $0x10] sm:$0xff]
      %v1135 = vld [vmem:[%s905 + $0x18] sm:$0xf]
      %v1136 = vld [vmem:[%s905 + $0x1c] sm:$0xff]
      %v1137 = vld [vmem:[%s905 + $0x24] sm:$0xff]
      %v1138 = vld [vmem:[%s905 + $0x2c] sm:$0xff]
      %v1139 = vld [vmem:[%s905 + $0x34] sm:$0xf]
      %v1140 = vld [vmem:[%s905 + $0x38] sm:$0xff]
      %v1141 = vld [vmem:[%s905 + $0x40] sm:$0xff]
      %v1142 = vld [vmem:[%s905 + $0x48] sm:$0xff]
      %v1143 = vld [vmem:[%s905 + $0x50] sm:$0xf]
      %v1144 = vld [vmem:[%s905 + $0x54] sm:$0xff]
      %v1145 = vld [vmem:[%s905 + $0x5c] sm:$0xff]
      %v1146 = vld [vmem:[%s905 + $0x64] sm:$0xff]
      %v1147 = vld [vmem:[%s905 + $0x6c] sm:$0xf]
      %v1148 = vld [vmem:[%s905 + $0x70] sm:$0xff]
      %v1149 = vld [vmem:[%s905 + $0x78] sm:$0xff]
      %v1150 = vld [vmem:[%s905 + $0x80] sm:$0xff]
      %v1151 = vld [vmem:[%s905 + $0x88] sm:$0xf]
      %v1152 = vld [vmem:[%s905 + $0x8c] sm:$0xff]
      %v1153 = vld [vmem:[%s905 + $0x94] sm:$0xff]
      %v1154 = vld [vmem:[%s905 + $0x9c] sm:$0xff]
      %v1155 = vld [vmem:[%s905 + $0xa4] sm:$0xf]
      %v1156 = vld [vmem:[%s910] sm:$0xff]
      %v1157 = vld [vmem:[%s910 + $0x8] sm:$0xff]
      %v1158 = vld [vmem:[%s910 + $0x10] sm:$0xff]
      %v1159 = vld [vmem:[%s910 + $0x18] sm:$0xff]
      %v1160 = vld [vmem:[%s910 + $0x20] sm:$0xff]
      %v1161 = vld [vmem:[%s910 + $0x28] sm:$0xff]
      %v1162 = vld [vmem:[%s910 + $0x30] sm:$0xff]
      %v1163 = vld [vmem:[%s910 + $0x38] sm:$0xff]
      %v1164 = vld [vmem:[%s910 + $0x40] sm:$0xff]
      %v1165 = vld [vmem:[%s910 + $0x48] sm:$0xff]
      %v1166 = vld [vmem:[%s910 + $0x50] sm:$0xff]
      %v1167 = vld [vmem:[%s910 + $0x58] sm:$0xff]
      %v1168 = vld [vmem:[%s915] sm:$0xff]
      %v1169 = vld [vmem:[%s915 + $0x8] sm:$0xff]
      %v1170 = vld [vmem:[%s915 + $0x10] sm:$0xff]
      %v1171 = vld [vmem:[%s915 + $0x18] sm:$0xff]
      %v1172 = vld [vmem:[%s915 + $0x20] sm:$0xff]
      %v1173 = vld [vmem:[%s915 + $0x28] sm:$0xff]
      %v1174 = vld [vmem:[%s920] sm:$0xff]
      %v1175 = vld [vmem:[%s920 + $0x8] sm:$0xff]
      %v1176 = vld [vmem:[%s920 + $0x10] sm:$0xff]
      %v1177 = vld [vmem:[%s9] sm:$0x1]
      %v1178 = vld [vmem:[%s9 + $0x1] sm:$0x1]
      %v1179 = vld [vmem:[%s9 + $0x2] sm:$0x1]
      %v1180 = vld [vmem:[%s9 + $0x3] sm:$0x1]
      %v1181 = vld [vmem:[%s9 + $0x5] sm:$0x1]
      %v1182 = vld [vmem:[%s9 + $0x6] sm:$0x1]
      %v1183 = vld [vmem:[%s9 + $0x7] sm:$0x1]
      %v1184 = vld [vmem:[%s9 + $0x8] sm:$0x1]
      %v1185 = vld [vmem:[%s10] sm:$0x1]
      %v1186 = vld [vmem:[%s10 + $0x1] sm:$0x1]
      %v1187 = vld [vmem:[%s10 + $0x2] sm:$0x1]
      %v1188 = vld [vmem:[%s10 + $0x3] sm:$0x1]
      %v1189 = vld [vmem:[%s10 + $0x5] sm:$0x1]
      %v1190 = vld [vmem:[%s10 + $0x6] sm:$0x1]
      %v1191 = vld [vmem:[%s10 + $0x7] sm:$0x1]
      %v1192 = vld [vmem:[%s10 + $0x8] sm:$0x1]
      %v1193 = vld [vmem:[%s11] sm:$0x3]
      %v1194 = vld [vmem:[%s11 + $0x2] sm:$0x3]
      %v1195 = vld [vmem:[%s11 + $0x4] sm:$0x3]
      %v1196 = vld [vmem:[%s11 + $0x6] sm:$0x3]
      %v1197 = vld [vmem:[%s11 + $0xa] sm:$0x3]
      %v1198 = vld [vmem:[%s11 + $0xc] sm:$0x3]
      %v1199 = vld [vmem:[%s11 + $0xe] sm:$0x3]
      %v1200 = vld [vmem:[%s11 + $0x10] sm:$0x3]
      %v1201 = vld [vmem:[%s12] sm:$0xf]
      %v1202 = vld [vmem:[%s12 + $0x4] sm:$0xf]
      %v1203 = vld [vmem:[%s13] sm:$0xff]
      %v1204 = vld [vmem:[%s13 + $0x8] sm:$0xff]
      %v1205 = vld [vmem:[%s13 + $0x10] sm:$0xff]
      %v1206 = vld [vmem:[%s13 + $0x18] sm:$0xff]
      %v1207 = vld [vmem:[%s13 + $0x20] sm:$0xff]
      %v1208 = vld [vmem:[%s13 + $0x28] sm:$0xff]
      %v1209 = vld [vmem:[%s13 + $0x30] sm:$0xff]
      %v1210 = vld [vmem:[%s13 + $0x38] sm:$0xff]
      %v1211 = vld [vmem:[%s14] sm:$0xff]
      %v1212 = vld [vmem:[%s14 + $0x8] sm:$0xff]
      %v1213 = vld [vmem:[%s14 + $0x10] sm:$0xff]
      %v1214 = vld [vmem:[%s14 + $0x18] sm:$0xf]
      %v1215 = vld [vmem:[%s14 + $0x1c] sm:$0xff]
      %v1216 = vld [vmem:[%s14 + $0x24] sm:$0xff]
      %v1217 = vld [vmem:[%s14 + $0x2c] sm:$0xff]
      %v1218 = vld [vmem:[%s14 + $0x34] sm:$0xf]
      %v1219 = vld [vmem:[%s14 + $0x38] sm:$0xff]
      %v1220 = vld [vmem:[%s14 + $0x40] sm:$0xff]
      %v1221 = vld [vmem:[%s14 + $0x48] sm:$0xff]
      %v1222 = vld [vmem:[%s14 + $0x50] sm:$0xf]
      %v1223 = vld [vmem:[%s14 + $0x54] sm:$0xff]
      %v1224 = vld [vmem:[%s14 + $0x5c] sm:$0xff]
      %v1225 = vld [vmem:[%s14 + $0x64] sm:$0xff]
      %v1226 = vld [vmem:[%s14 + $0x6c] sm:$0xf]
      %v1227 = vld [vmem:[%s14 + $0x70] sm:$0xff]
      %v1228 = vld [vmem:[%s14 + $0x78] sm:$0xff]
      %v1229 = vld [vmem:[%s14 + $0x80] sm:$0xff]
      %v1230 = vld [vmem:[%s14 + $0x88] sm:$0xf]
      %v1231 = vld [vmem:[%s14 + $0x8c] sm:$0xff]
      %v1232 = vld [vmem:[%s14 + $0x94] sm:$0xff]
      %v1233 = vld [vmem:[%s14 + $0x9c] sm:$0xff]
      %v1234 = vld [vmem:[%s14 + $0xa4] sm:$0xf]
      %v1235 = vld [vmem:[%s14 + $0xa8] sm:$0xff]
      %v1236 = vld [vmem:[%s14 + $0xb0] sm:$0xff]
      %v1237 = vld [vmem:[%s14 + $0xb8] sm:$0xff]
      %v1238 = vld [vmem:[%s14 + $0xc0] sm:$0xf]
      %v1239 = vld [vmem:[%s14 + $0xc4] sm:$0xff]
      %v1240 = vld [vmem:[%s14 + $0xcc] sm:$0xff]
      %v1241 = vld [vmem:[%s14 + $0xd4] sm:$0xff]
      %v1242 = vld [vmem:[%s14 + $0xdc] sm:$0xf]
      %v1243 = vld [vmem:[%s14 + $0xe0] sm:$0xff]
      %v1244 = vld [vmem:[%s14 + $0xe8] sm:$0xff]
      %v1245 = vld [vmem:[%s14 + $0xf0] sm:$0xff]
      %v1246 = vld [vmem:[%s14 + $0xf8] sm:$0xf]
      %v1247 = vld [vmem:[%s14 + $0xfc] sm:$0xff]
      %v1248 = vld [vmem:[%s14 + $0x104] sm:$0xff]
      %v1249 = vld [vmem:[%s14 + $0x10c] sm:$0xff]
      %v1250 = vld [vmem:[%s14 + $0x114] sm:$0xf]
      %v1251 = vld [vmem:[%s14 + $0x118] sm:$0xff]
      %v1252 = vld [vmem:[%s14 + $0x120] sm:$0xff]
      %v1253 = vld [vmem:[%s14 + $0x128] sm:$0xff]
      %v1254 = vld [vmem:[%s14 + $0x130] sm:$0xf]
      %v1255 = vld [vmem:[%s14 + $0x134] sm:$0xff]
      %v1256 = vld [vmem:[%s14 + $0x13c] sm:$0xff]
      %v1257 = vld [vmem:[%s14 + $0x144] sm:$0xff]
      %v1258 = vld [vmem:[%s14 + $0x14c] sm:$0xf]
      %v1259 = vld [vmem:[%s15] sm:$0xff]
      %v1260 = vld [vmem:[%s15 + $0x8] sm:$0xff]
      %v1261 = vld [vmem:[%s15 + $0x10] sm:$0xff]
      %v1262 = vld [vmem:[%s15 + $0x18] sm:$0xff]
      %v1263 = vld [vmem:[%s15 + $0x20] sm:$0xff]
      %v1264 = vld [vmem:[%s15 + $0x28] sm:$0xff]
      %v1265 = vld [vmem:[%s15 + $0x30] sm:$0xff]
      %v1266 = vld [vmem:[%s15 + $0x38] sm:$0xff]
      %v1267 = vld [vmem:[%s15 + $0x40] sm:$0xff]
      %v1268 = vld [vmem:[%s15 + $0x48] sm:$0xff]
      %v1269 = vld [vmem:[%s15 + $0x50] sm:$0xff]
      %v1270 = vld [vmem:[%s15 + $0x58] sm:$0xff]
      %v1271 = vld [vmem:[%s16] sm:$0xf]
      %v1272 = vld [vmem:[%s16 + $0x4] sm:$0xf]
      %v1273 = vld [vmem:[%s16 + $0x8] sm:$0xf]
      %v1274 = vld [vmem:[%s16 + $0xc] sm:$0xf]
      %v1275 = vld [vmem:[%s16 + $0x10] sm:$0xf]
      %v1276 = vld [vmem:[%s16 + $0x14] sm:$0xf]
      %v1277 = vld [vmem:[%s16 + $0x18] sm:$0xf]
      %v1278 = vld [vmem:[%s16 + $0x1c] sm:$0xf]
      %v1279 = vld [vmem:[%s17] sm:$0xff]
      %v1280 = vld [vmem:[%s17 + $0x8] sm:$0xff]
      %v1281 = vld [vmem:[%s17 + $0x10] sm:$0xff]
      %v1282 = vld [vmem:[%s17 + $0x18] sm:$0xff]
      %v1283 = vld [vmem:[%s17 + $0x20] sm:$0xff]
      %v1284 = vld [vmem:[%s17 + $0x28] sm:$0xff]
      %v1285 = vld [vmem:[%s17 + $0x30] sm:$0xff]
      %v1286 = vld [vmem:[%s17 + $0x38] sm:$0xff]
      %v1287 = vld [vmem:[%s18] sm:$0x1]
      %v1288 = vld [vmem:[#allocation2] sm:$0x1]
      %v1289 = vld [vmem:[%s20] sm:$0xf]
      %v1290 = vld [vmem:[%s20 + $0x4] sm:$0xf]
      %v1291 = vld [vmem:[%s20 + $0x8] sm:$0xf]
      %v1292 = vld [vmem:[%s20 + $0xc] sm:$0xf]
      %v1293 = vld [vmem:[%s20 + $0x10] sm:$0xf]
      %v1294 = vld [vmem:[%s20 + $0x14] sm:$0xf]
      %v1295 = vld [vmem:[%s20 + $0x18] sm:$0xf]
      %v1296 = vld [vmem:[%s20 + $0x1c] sm:$0xf]
      %v1297 = vld [vmem:[%s21] sm:$0xf]
      %v1298 = vld [vmem:[%s21 + $0x4] sm:$0xf]
      %v1299 = vld [vmem:[%s21 + $0x8] sm:$0xf]
      %v1300 = vld [vmem:[%s21 + $0xc] sm:$0xf]
      %v1301 = vld [vmem:[%s21 + $0x10] sm:$0xf]
      %v1302 = vld [vmem:[%s21 + $0x14] sm:$0xf]
      %v1303 = vld [vmem:[%s21 + $0x18] sm:$0xf]
      %v1304 = vld [vmem:[%s21 + $0x1c] sm:$0xf]
      %v1305 = vld [vmem:[%s22] sm:$0xff]
      %v1306 = vld [vmem:[%s22 + $0x8] sm:$0xff]
      %v1307 = vld [vmem:[%s22 + $0x10] sm:$0xff]
      %v1308 = vld [vmem:[%s22 + $0x18] sm:$0xff]
      %v1309 = vld [vmem:[%s22 + $0x20] sm:$0xff]
      %v1310 = vld [vmem:[%s22 + $0x28] sm:$0xff]
      %v1311 = vld [vmem:[%s22 + $0x30] sm:$0xff]
      %v1312 = vld [vmem:[%s22 + $0x38] sm:$0xff]
      %v1313 = vld [vmem:[%s23] sm:$0x3]
      %v1314 = vld [vmem:[%s24] sm:$0x7]
      %v1327 = vunpack.c.l.b16 %v926
      %v1328 = vunpack.c.l.b16 %v927
      %v1329 = vunpack.c.l.b16 %v928
      %v1330 = vunpack.c.l.b16 %v929
      %v1331 = vunpack.c.l.b16 %v930
      %v1332 = vunpack.c.l.b16 %v931
      %v1333 = vunpack.c.l.b16 %v932
      %v1334 = vunpack.c.l.b16 %v933
      %v1335 = vunpack.c.l.b16 %v934
      %v1336 = vunpack.c.l.b16 %v935
      %v1337 = vunpack.c.l.b16 %v936
      %v1338 = vunpack.c.l.b16 %v937
      %v1339 = vpack.c.b16 %v1328, %v1327
      %v1340 = vpack.c.b16 %v1330, %v1329
      %v1341 = vpack.c.b16 %v1332, %v1331
      %v1342 = vpack.c.b16 %v1334, %v1333
      %v1343 = vpack.c.b16 %v1336, %v1335
      %v1344 = vpack.c.b16 %v1338, %v1337
      %1345 = vrot.lane.b32.xlu0 %v1339, 5
      %v1346 = vpop.permute.xlu0 %1345
      %1347 = vrot.lane.b32.xlu0 %v1340, 5
      %v1348 = vpop.permute.xlu0 %1347
      %1349 = vrot.lane.b32.xlu0 %v1341, 5
      %v1350 = vpop.permute.xlu0 %1349
      %1351 = vrot.lane.b32.xlu0 %v1342, 5
      %v1352 = vpop.permute.xlu0 %1351
      %1353 = vrot.lane.b32.xlu0 %v1343, 5
      %v1354 = vpop.permute.xlu0 %1353
      %1355 = vrot.lane.b32.xlu0 %v1344, 5
      %v1356 = vpop.permute.xlu0 %1355
      %vm1357 = vcmask 39936
      %v1360 = vsel %vm1357, 0, %v1346
      %v1362 = vsel %vm1357, 0, %v1348
      %v1364 = vsel %vm1357, 0, %v1350
      %v1366 = vsel %vm1357, 0, %v1352
      %v1368 = vsel %vm1357, 0, %v1354
      %v1370 = vsel %vm1357, 0, %v1356
      %vm1371 = vcmask 171008
      %v1372 = vsel %vm1371, %v1360, 0
      %v1374 = vsel %vm1371, %v1362, 0
      %v1376 = vsel %vm1371, %v1364, 0
      %v1378 = vsel %vm1371, %v1366, 0
      %v1380 = vsel %vm1371, %v1368, 0
      %v1382 = vsel %vm1371, %v1370, 0
      %v1385 = vpack.i.b16 %v1177, %v1177
      %v1387 = vperm.slane %v1385, 0
      %v1388 = vunpack.c.l.bf16 %v1372
      %v1389 = vunpack.c.h.bf16 %v1372
      %v1390 = vunpack.c.l.bf16 %v1374
      %v1391 = vunpack.c.h.bf16 %v1374
      %v1392 = vunpack.c.l.bf16 %v1376
      %v1393 = vunpack.c.h.bf16 %v1376
      %v1394 = vunpack.c.l.bf16 %v1378
      %v1395 = vunpack.c.h.bf16 %v1378
      %v1396 = vunpack.c.l.bf16 %v1380
      %v1397 = vunpack.c.h.bf16 %v1380
      %v1398 = vunpack.c.l.bf16 %v1382
      %v1399 = vunpack.c.h.bf16 %v1382
      %v1400 = vunpack.c.l.bf16 %v1387
      %v1401 = vmul.f32 %v1388, %v1400
      %v1402 = vmul.f32 %v1389, %v1400
      %v1403 = vmul.f32 %v1390, %v1400
      %v1404 = vmul.f32 %v1391, %v1400
      %v1405 = vmul.f32 %v1392, %v1400
      %v1406 = vmul.f32 %v1393, %v1400
      %v1407 = vmul.f32 %v1394, %v1400
      %v1408 = vmul.f32 %v1395, %v1400
      %v1409 = vmul.f32 %v1396, %v1400
      %v1410 = vmul.f32 %v1397, %v1400
      %v1411 = vmul.f32 %v1398, %v1400
      %v1412 = vmul.f32 %v1399, %v1400
      %v1413 = vpack.c.bf16 %v1401, %v1401
      %v1414 = vpack.c.bf16 %v1402, %v1402
      %v1415 = vpack.c.bf16 %v1403, %v1403
      %v1416 = vpack.c.bf16 %v1404, %v1404
      %v1417 = vpack.c.bf16 %v1405, %v1405
      %v1418 = vpack.c.bf16 %v1406, %v1406
      %v1419 = vpack.c.bf16 %v1407, %v1407
      %v1420 = vpack.c.bf16 %v1408, %v1408
      %v1421 = vpack.c.bf16 %v1409, %v1409
      %v1422 = vpack.c.bf16 %v1410, %v1410
      %v1423 = vpack.c.bf16 %v1411, %v1411
      %v1424 = vpack.c.bf16 %v1412, %v1412
      %v1426 = vpack.i.b16 %v1178, %v1178
      %v1428 = vperm.slane %v1426, 0
      %v1429 = vunpack.c.l.bf16 %v1428
      %1431 = vrot.lane.b32.xlu0 %v1429, 1
      %v1432 = vpop.permute.xlu0 %1431
      %v1434 = vmul.f32 %v1388, %v1432
      %v1435 = vmul.f32 %v1389, %v1432
      %v1436 = vmul.f32 %v1390, %v1432
      %v1437 = vmul.f32 %v1391, %v1432
      %v1438 = vmul.f32 %v1392, %v1432
      %v1439 = vmul.f32 %v1393, %v1432
      %v1440 = vmul.f32 %v1394, %v1432
      %v1441 = vmul.f32 %v1395, %v1432
      %v1442 = vmul.f32 %v1396, %v1432
      %v1443 = vmul.f32 %v1397, %v1432
      %v1444 = vmul.f32 %v1398, %v1432
      %v1445 = vmul.f32 %v1399, %v1432
      %v1446 = vpack.c.bf16 %v1434, %v1434
      %v1447 = vpack.c.bf16 %v1435, %v1435
      %v1448 = vpack.c.bf16 %v1436, %v1436
      %v1449 = vpack.c.bf16 %v1437, %v1437
      %v1450 = vpack.c.bf16 %v1438, %v1438
      %v1451 = vpack.c.bf16 %v1439, %v1439
      %v1452 = vpack.c.bf16 %v1440, %v1440
      %v1453 = vpack.c.bf16 %v1441, %v1441
      %v1454 = vpack.c.bf16 %v1442, %v1442
      %v1455 = vpack.c.bf16 %v1443, %v1443
      %v1456 = vpack.c.bf16 %v1444, %v1444
      %v1457 = vpack.c.bf16 %v1445, %v1445
      %v1459 = vpack.i.b16 %v1179, %v1179
      %v1461 = vperm.slane %v1459, 0
      %v1462 = vunpack.c.l.bf16 %v1461
      %1464 = vrot.lane.b32.xlu0 %v1462, 2
      %v1465 = vpop.permute.xlu0 %1464
      %v1467 = vmul.f32 %v1388, %v1465
      %v1468 = vmul.f32 %v1389, %v1465
      %v1469 = vmul.f32 %v1390, %v1465
      %v1470 = vmul.f32 %v1391, %v1465
      %v1471 = vmul.f32 %v1392, %v1465
      %v1472 = vmul.f32 %v1393, %v1465
      %v1473 = vmul.f32 %v1394, %v1465
      %v1474 = vmul.f32 %v1395, %v1465
      %v1475 = vmul.f32 %v1396, %v1465
      %v1476 = vmul.f32 %v1397, %v1465
      %v1477 = vmul.f32 %v1398, %v1465
      %v1478 = vmul.f32 %v1399, %v1465
      %v1479 = vpack.c.bf16 %v1467, %v1467
      %v1480 = vpack.c.bf16 %v1468, %v1468
      %v1481 = vpack.c.bf16 %v1469, %v1469
      %v1482 = vpack.c.bf16 %v1470, %v1470
      %v1483 = vpack.c.bf16 %v1471, %v1471
      %v1484 = vpack.c.bf16 %v1472, %v1472
      %v1485 = vpack.c.bf16 %v1473, %v1473
      %v1486 = vpack.c.bf16 %v1474, %v1474
      %v1487 = vpack.c.bf16 %v1475, %v1475
      %v1488 = vpack.c.bf16 %v1476, %v1476
      %v1489 = vpack.c.bf16 %v1477, %v1477
      %v1490 = vpack.c.bf16 %v1478, %v1478
      %v1492 = vpack.i.b16 %v1180, %v1180
      %v1494 = vperm.slane %v1492, 0
      %v1495 = vunpack.c.l.bf16 %v1494
      %1497 = vrot.lane.b32.xlu0 %v1495, 4
      %v1498 = vpop.permute.xlu0 %1497
      %v1500 = vmul.f32 %v1388, %v1498
      %v1501 = vmul.f32 %v1389, %v1498
      %v1502 = vmul.f32 %v1390, %v1498
      %v1503 = vmul.f32 %v1391, %v1498
      %v1504 = vmul.f32 %v1392, %v1498
      %v1505 = vmul.f32 %v1393, %v1498
      %v1506 = vmul.f32 %v1394, %v1498
      %v1507 = vmul.f32 %v1395, %v1498
      %v1508 = vmul.f32 %v1396, %v1498
      %v1509 = vmul.f32 %v1397, %v1498
      %v1510 = vmul.f32 %v1398, %v1498
      %v1511 = vmul.f32 %v1399, %v1498
      %v1512 = vpack.c.bf16 %v1500, %v1500
      %v1513 = vpack.c.bf16 %v1501, %v1501
      %v1514 = vpack.c.bf16 %v1502, %v1502
      %v1515 = vpack.c.bf16 %v1503, %v1503
      %v1516 = vpack.c.bf16 %v1504, %v1504
      %v1517 = vpack.c.bf16 %v1505, %v1505
      %v1518 = vpack.c.bf16 %v1506, %v1506
      %v1519 = vpack.c.bf16 %v1507, %v1507
      %v1520 = vpack.c.bf16 %v1508, %v1508
      %v1521 = vpack.c.bf16 %v1509, %v1509
      %v1522 = vpack.c.bf16 %v1510, %v1510
      %v1523 = vpack.c.bf16 %v1511, %v1511
      %v1525 = vpack.i.b16 %v1181, %v1181
      %v1527 = vperm.slane %v1525, 0
      %v1528 = vunpack.c.l.bf16 %v1527
      %1530 = vrot.lane.b32.xlu0 %v1528, 6
      %v1531 = vpop.permute.xlu0 %1530
      %v1533 = vmul.f32 %v1388, %v1531
      %v1534 = vmul.f32 %v1389, %v1531
      %v1535 = vmul.f32 %v1390, %v1531
      %v1536 = vmul.f32 %v1391, %v1531
      %v1537 = vmul.f32 %v1392, %v1531
      %v1538 = vmul.f32 %v1393, %v1531
      %v1539 = vmul.f32 %v1394, %v1531
      %v1540 = vmul.f32 %v1395, %v1531
      %v1541 = vmul.f32 %v1396, %v1531
      %v1542 = vmul.f32 %v1397, %v1531
      %v1543 = vmul.f32 %v1398, %v1531
      %v1544 = vmul.f32 %v1399, %v1531
      %v1545 = vpack.c.bf16 %v1533, %v1533
      %v1546 = vpack.c.bf16 %v1534, %v1534
      %v1547 = vpack.c.bf16 %v1535, %v1535
      %v1548 = vpack.c.bf16 %v1536, %v1536
      %v1549 = vpack.c.bf16 %v1537, %v1537
      %v1550 = vpack.c.bf16 %v1538, %v1538
      %v1551 = vpack.c.bf16 %v1539, %v1539
      %v1552 = vpack.c.bf16 %v1540, %v1540
      %v1553 = vpack.c.bf16 %v1541, %v1541
      %v1554 = vpack.c.bf16 %v1542, %v1542
      %v1555 = vpack.c.bf16 %v1543, %v1543
      %v1556 = vpack.c.bf16 %v1544, %v1544
      %v1558 = vpack.i.b16 %v1182, %v1182
      %v1560 = vperm.slane %v1558, 0
      %v1561 = vunpack.c.l.bf16 %v1560
      %1563 = vrot.lane.b32.xlu0 %v1561, 8
      %v1564 = vpop.permute.xlu0 %1563
      %v1566 = vmul.f32 %v1388, %v1564
      %v1567 = vmul.f32 %v1389, %v1564
      %v1568 = vmul.f32 %v1390, %v1564
      %v1569 = vmul.f32 %v1391, %v1564
      %v1570 = vmul.f32 %v1392, %v1564
      %v1571 = vmul.f32 %v1393, %v1564
      %v1572 = vmul.f32 %v1394, %v1564
      %v1573 = vmul.f32 %v1395, %v1564
      %v1574 = vmul.f32 %v1396, %v1564
      %v1575 = vmul.f32 %v1397, %v1564
      %v1576 = vmul.f32 %v1398, %v1564
      %v1577 = vmul.f32 %v1399, %v1564
      %v1578 = vpack.c.bf16 %v1566, %v1566
      %v1579 = vpack.c.bf16 %v1567, %v1567
      %v1580 = vpack.c.bf16 %v1568, %v1568
      %v1581 = vpack.c.bf16 %v1569, %v1569
      %v1582 = vpack.c.bf16 %v1570, %v1570
      %v1583 = vpack.c.bf16 %v1571, %v1571
      %v1584 = vpack.c.bf16 %v1572, %v1572
      %v1585 = vpack.c.bf16 %v1573, %v1573
      %v1586 = vpack.c.bf16 %v1574, %v1574
      %v1587 = vpack.c.bf16 %v1575, %v1575
      %v1588 = vpack.c.bf16 %v1576, %v1576
      %v1589 = vpack.c.bf16 %v1577, %v1577
      %v1591 = vpack.i.b16 %v1183, %v1183
      %v1593 = vperm.slane %v1591, 0
      %v1594 = vunpack.c.l.bf16 %v1593
      %1596 = vrot.lane.b32.xlu0 %v1594, 9
      %v1597 = vpop.permute.xlu0 %1596
      %v1599 = vmul.f32 %v1388, %v1597
      %v1600 = vmul.f32 %v1389, %v1597
      %v1601 = vmul.f32 %v1390, %v1597
      %v1602 = vmul.f32 %v1391, %v1597
      %v1603 = vmul.f32 %v1392, %v1597
      %v1604 = vmul.f32 %v1393, %v1597
      %v1605 = vmul.f32 %v1394, %v1597
      %v1606 = vmul.f32 %v1395, %v1597
      %v1607 = vmul.f32 %v1396, %v1597
      %v1608 = vmul.f32 %v1397, %v1597
      %v1609 = vmul.f32 %v1398, %v1597
      %v1610 = vmul.f32 %v1399, %v1597
      %v1611 = vpack.c.bf16 %v1599, %v1599
      %v1612 = vpack.c.bf16 %v1600, %v1600
      %v1613 = vpack.c.bf16 %v1601, %v1601
      %v1614 = vpack.c.bf16 %v1602, %v1602
      %v1615 = vpack.c.bf16 %v1603, %v1603
      %v1616 = vpack.c.bf16 %v1604, %v1604
      %v1617 = vpack.c.bf16 %v1605, %v1605
      %v1618 = vpack.c.bf16 %v1606, %v1606
      %v1619 = vpack.c.bf16 %v1607, %v1607
      %v1620 = vpack.c.bf16 %v1608, %v1608
      %v1621 = vpack.c.bf16 %v1609, %v1609
      %v1622 = vpack.c.bf16 %v1610, %v1610
      %v1624 = vpack.i.b16 %v1184, %v1184
      %v1626 = vperm.slane %v1624, 0
      %v1627 = vunpack.c.l.bf16 %v1626
      %1629 = vrot.lane.b32.xlu0 %v1627, 10
      %v1630 = vpop.permute.xlu0 %1629
      %v1632 = vmul.f32 %v1388, %v1630
      %v1633 = vmul.f32 %v1389, %v1630
      %v1634 = vmul.f32 %v1390, %v1630
      %v1635 = vmul.f32 %v1391, %v1630
      %v1636 = vmul.f32 %v1392, %v1630
      %v1637 = vmul.f32 %v1393, %v1630
      %v1638 = vmul.f32 %v1394, %v1630
      %v1639 = vmul.f32 %v1395, %v1630
      %v1640 = vmul.f32 %v1396, %v1630
      %v1641 = vmul.f32 %v1397, %v1630
      %v1642 = vmul.f32 %v1398, %v1630
      %v1643 = vmul.f32 %v1399, %v1630
      %v1644 = vpack.c.bf16 %v1632, %v1632
      %v1645 = vpack.c.bf16 %v1633, %v1633
      %v1646 = vpack.c.bf16 %v1634, %v1634
      %v1647 = vpack.c.bf16 %v1635, %v1635
      %v1648 = vpack.c.bf16 %v1636, %v1636
      %v1649 = vpack.c.bf16 %v1637, %v1637
      %v1650 = vpack.c.bf16 %v1638, %v1638
      %v1651 = vpack.c.bf16 %v1639, %v1639
      %v1652 = vpack.c.bf16 %v1640, %v1640
      %v1653 = vpack.c.bf16 %v1641, %v1641
      %v1654 = vpack.c.bf16 %v1642, %v1642
      %v1655 = vpack.c.bf16 %v1643, %v1643
      %v1668 = vunpack.c.l.b16 %v1413
      %v1669 = vunpack.c.l.b16 %v1414
      %v1670 = vunpack.c.l.b16 %v1415
      %v1671 = vunpack.c.l.b16 %v1416
      %v1672 = vunpack.c.l.b16 %v1417
      %v1673 = vunpack.c.l.b16 %v1418
      %v1674 = vunpack.c.l.b16 %v1419
      %v1675 = vunpack.c.l.b16 %v1420
      %v1676 = vunpack.c.l.b16 %v1421
      %v1677 = vunpack.c.l.b16 %v1422
      %v1678 = vunpack.c.l.b16 %v1423
      %v1679 = vunpack.c.l.b16 %v1424
      %v1680 = vpack.c.b16 %v1669, %v1668
      %v1681 = vpack.c.b16 %v1671, %v1670
      %v1682 = vpack.c.b16 %v1673, %v1672
      %v1683 = vpack.c.b16 %v1675, %v1674
      %v1684 = vpack.c.b16 %v1677, %v1676
      %v1685 = vpack.c.b16 %v1679, %v1678
      %v1704 = vunpack.c.l.b16 %v1446
      %v1705 = vunpack.c.l.b16 %v1447
      %v1706 = vunpack.c.l.b16 %v1448
      %v1707 = vunpack.c.l.b16 %v1449
      %v1708 = vunpack.c.l.b16 %v1450
      %v1709 = vunpack.c.l.b16 %v1451
      %v1710 = vunpack.c.l.b16 %v1452
      %v1711 = vunpack.c.l.b16 %v1453
      %v1712 = vunpack.c.l.b16 %v1454
      %v1713 = vunpack.c.l.b16 %v1455
      %v1714 = vunpack.c.l.b16 %v1456
      %v1715 = vunpack.c.l.b16 %v1457
      %v1716 = vpack.c.b16 %v1705, %v1704
      %v1717 = vpack.c.b16 %v1707, %v1706
      %v1718 = vpack.c.b16 %v1709, %v1708
      %v1719 = vpack.c.b16 %v1711, %v1710
      %v1720 = vpack.c.b16 %v1713, %v1712
      %v1721 = vpack.c.b16 %v1715, %v1714
      %1722 = vrot.lane.b32.xlu0 %v1716, 127
      %v1723 = vpop.permute.xlu0 %1722
      %1724 = vrot.lane.b32.xlu0 %v1717, 127
      %v1725 = vpop.permute.xlu0 %1724
      %1726 = vrot.lane.b32.xlu0 %v1718, 127
      %v1727 = vpop.permute.xlu0 %1726
      %1728 = vrot.lane.b32.xlu0 %v1719, 127
      %v1729 = vpop.permute.xlu0 %1728
      %1730 = vrot.lane.b32.xlu0 %v1720, 127
      %v1731 = vpop.permute.xlu0 %1730
      %1732 = vrot.lane.b32.xlu0 %v1721, 127
      %v1733 = vpop.permute.xlu0 %1732
      %v1752 = vunpack.c.l.b16 %v1479
      %v1753 = vunpack.c.l.b16 %v1480
      %v1754 = vunpack.c.l.b16 %v1481
      %v1755 = vunpack.c.l.b16 %v1482
      %v1756 = vunpack.c.l.b16 %v1483
      %v1757 = vunpack.c.l.b16 %v1484
      %v1758 = vunpack.c.l.b16 %v1485
      %v1759 = vunpack.c.l.b16 %v1486
      %v1760 = vunpack.c.l.b16 %v1487
      %v1761 = vunpack.c.l.b16 %v1488
      %v1762 = vunpack.c.l.b16 %v1489
      %v1763 = vunpack.c.l.b16 %v1490
      %v1764 = vpack.c.b16 %v1753, %v1752
      %v1765 = vpack.c.b16 %v1755, %v1754
      %v1766 = vpack.c.b16 %v1757, %v1756
      %v1767 = vpack.c.b16 %v1759, %v1758
      %v1768 = vpack.c.b16 %v1761, %v1760
      %v1769 = vpack.c.b16 %v1763, %v1762
      %1770 = vrot.lane.b32.xlu0 %v1764, 126
      %v1771 = vpop.permute.xlu0 %1770
      %1772 = vrot.lane.b32.xlu0 %v1765, 126
      %v1773 = vpop.permute.xlu0 %1772
      %1774 = vrot.lane.b32.xlu0 %v1766, 126
      %v1775 = vpop.permute.xlu0 %1774
      %1776 = vrot.lane.b32.xlu0 %v1767, 126
      %v1777 = vpop.permute.xlu0 %1776
      %1778 = vrot.lane.b32.xlu0 %v1768, 126
      %v1779 = vpop.permute.xlu0 %1778
      %1780 = vrot.lane.b32.xlu0 %v1769, 126
      %v1781 = vpop.permute.xlu0 %1780
      %v1800 = vunpack.c.l.b16 %v1512
      %v1801 = vunpack.c.l.b16 %v1513
      %v1802 = vunpack.c.l.b16 %v1514
      %v1803 = vunpack.c.l.b16 %v1515
      %v1804 = vunpack.c.l.b16 %v1516
      %v1805 = vunpack.c.l.b16 %v1517
      %v1806 = vunpack.c.l.b16 %v1518
      %v1807 = vunpack.c.l.b16 %v1519
      %v1808 = vunpack.c.l.b16 %v1520
      %v1809 = vunpack.c.l.b16 %v1521
      %v1810 = vunpack.c.l.b16 %v1522
      %v1811 = vunpack.c.l.b16 %v1523
      %v1812 = vpack.c.b16 %v1801, %v1800
      %v1813 = vpack.c.b16 %v1803, %v1802
      %v1814 = vpack.c.b16 %v1805, %v1804
      %v1815 = vpack.c.b16 %v1807, %v1806
      %v1816 = vpack.c.b16 %v1809, %v1808
      %v1817 = vpack.c.b16 %v1811, %v1810
      %1818 = vrot.lane.b32.xlu0 %v1812, 124
      %v1819 = vpop.permute.xlu0 %1818
      %1820 = vrot.lane.b32.xlu0 %v1813, 124
      %v1821 = vpop.permute.xlu0 %1820
      %1822 = vrot.lane.b32.xlu0 %v1814, 124
      %v1823 = vpop.permute.xlu0 %1822
      %1824 = vrot.lane.b32.xlu0 %v1815, 124
      %v1825 = vpop.permute.xlu0 %1824
      %1826 = vrot.lane.b32.xlu0 %v1816, 124
      %v1827 = vpop.permute.xlu0 %1826
      %1828 = vrot.lane.b32.xlu0 %v1817, 124
      %v1829 = vpop.permute.xlu0 %1828
      %v1854 = vunpack.c.l.b16 %v1545
      %v1855 = vunpack.c.l.b16 %v1546
      %v1856 = vunpack.c.l.b16 %v1547
      %v1857 = vunpack.c.l.b16 %v1548
      %v1858 = vunpack.c.l.b16 %v1549
      %v1859 = vunpack.c.l.b16 %v1550
      %v1860 = vunpack.c.l.b16 %v1551
      %v1861 = vunpack.c.l.b16 %v1552
      %v1862 = vunpack.c.l.b16 %v1553
      %v1863 = vunpack.c.l.b16 %v1554
      %v1864 = vunpack.c.l.b16 %v1555
      %v1865 = vunpack.c.l.b16 %v1556
      %v1866 = vpack.c.b16 %v1855, %v1854
      %v1867 = vpack.c.b16 %v1857, %v1856
      %v1868 = vpack.c.b16 %v1859, %v1858
      %v1869 = vpack.c.b16 %v1861, %v1860
      %v1870 = vpack.c.b16 %v1863, %v1862
      %v1871 = vpack.c.b16 %v1865, %v1864
      %1872 = vrot.lane.b32.xlu0 %v1866, 122
      %v1873 = vpop.permute.xlu0 %1872
      %1874 = vrot.lane.b32.xlu0 %v1867, 122
      %v1875 = vpop.permute.xlu0 %1874
      %1876 = vrot.lane.b32.xlu0 %v1868, 122
      %v1877 = vpop.permute.xlu0 %1876
      %1878 = vrot.lane.b32.xlu0 %v1869, 122
      %v1879 = vpop.permute.xlu0 %1878
      %1880 = vrot.lane.b32.xlu0 %v1870, 122
      %v1881 = vpop.permute.xlu0 %1880
      %1882 = vrot.lane.b32.xlu0 %v1871, 122
      %v1883 = vpop.permute.xlu0 %1882
      %v1902 = vunpack.c.l.b16 %v1578
      %v1903 = vunpack.c.l.b16 %v1579
      %v1904 = vunpack.c.l.b16 %v1580
      %v1905 = vunpack.c.l.b16 %v1581
      %v1906 = vunpack.c.l.b16 %v1582
      %v1907 = vunpack.c.l.b16 %v1583
      %v1908 = vunpack.c.l.b16 %v1584
      %v1909 = vunpack.c.l.b16 %v1585
      %v1910 = vunpack.c.l.b16 %v1586
      %v1911 = vunpack.c.l.b16 %v1587
      %v1912 = vunpack.c.l.b16 %v1588
      %v1913 = vunpack.c.l.b16 %v1589
      %v1914 = vpack.c.b16 %v1903, %v1902
      %v1915 = vpack.c.b16 %v1905, %v1904
      %v1916 = vpack.c.b16 %v1907, %v1906
      %v1917 = vpack.c.b16 %v1909, %v1908
      %v1918 = vpack.c.b16 %v1911, %v1910
      %v1919 = vpack.c.b16 %v1913, %v1912
      %1920 = vrot.lane.b32.xlu0 %v1914, 120
      %v1921 = vpop.permute.xlu0 %1920
      %1922 = vrot.lane.b32.xlu0 %v1915, 120
      %v1923 = vpop.permute.xlu0 %1922
      %1924 = vrot.lane.b32.xlu0 %v1916, 120
      %v1925 = vpop.permute.xlu0 %1924
      %1926 = vrot.lane.b32.xlu0 %v1917, 120
      %v1927 = vpop.permute.xlu0 %1926
      %1928 = vrot.lane.b32.xlu0 %v1918, 120
      %v1929 = vpop.permute.xlu0 %1928
      %1930 = vrot.lane.b32.xlu0 %v1919, 120
      %v1931 = vpop.permute.xlu0 %1930
      %v1950 = vunpack.c.l.b16 %v1611
      %v1951 = vunpack.c.l.b16 %v1612
      %v1952 = vunpack.c.l.b16 %v1613
      %v1953 = vunpack.c.l.b16 %v1614
      %v1954 = vunpack.c.l.b16 %v1615
      %v1955 = vunpack.c.l.b16 %v1616
      %v1956 = vunpack.c.l.b16 %v1617
      %v1957 = vunpack.c.l.b16 %v1618
      %v1958 = vunpack.c.l.b16 %v1619
      %v1959 = vunpack.c.l.b16 %v1620
      %v1960 = vunpack.c.l.b16 %v1621
      %v1961 = vunpack.c.l.b16 %v1622
      %v1962 = vpack.c.b16 %v1951, %v1950
      %v1963 = vpack.c.b16 %v1953, %v1952
      %v1964 = vpack.c.b16 %v1955, %v1954
      %v1965 = vpack.c.b16 %v1957, %v1956
      %v1966 = vpack.c.b16 %v1959, %v1958
      %v1967 = vpack.c.b16 %v1961, %v1960
      %1968 = vrot.lane.b32.xlu0 %v1962, 119
      %v1969 = vpop.permute.xlu0 %1968
      %1970 = vrot.lane.b32.xlu0 %v1963, 119
      %v1971 = vpop.permute.xlu0 %1970
      %1972 = vrot.lane.b32.xlu0 %v1964, 119
      %v1973 = vpop.permute.xlu0 %1972
      %1974 = vrot.lane.b32.xlu0 %v1965, 119
      %v1975 = vpop.permute.xlu0 %1974
      %1976 = vrot.lane.b32.xlu0 %v1966, 119
      %v1977 = vpop.permute.xlu0 %1976
      %1978 = vrot.lane.b32.xlu0 %v1967, 119
      %v1979 = vpop.permute.xlu0 %1978
      %v1998 = vunpack.c.l.b16 %v1644
      %v1999 = vunpack.c.l.b16 %v1645
      %v2000 = vunpack.c.l.b16 %v1646
      %v2001 = vunpack.c.l.b16 %v1647
      %v2002 = vunpack.c.l.b16 %v1648
      %v2003 = vunpack.c.l.b16 %v1649
      %v2004 = vunpack.c.l.b16 %v1650
      %v2005 = vunpack.c.l.b16 %v1651
      %v2006 = vunpack.c.l.b16 %v1652
      %v2007 = vunpack.c.l.b16 %v1653
      %v2008 = vunpack.c.l.b16 %v1654
      %v2009 = vunpack.c.l.b16 %v1655
      %v2010 = vpack.c.b16 %v1999, %v1998
      %v2011 = vpack.c.b16 %v2001, %v2000
      %v2012 = vpack.c.b16 %v2003, %v2002
      %v2013 = vpack.c.b16 %v2005, %v2004
      %v2014 = vpack.c.b16 %v2007, %v2006
      %v2015 = vpack.c.b16 %v2009, %v2008
      %2016 = vrot.lane.b32.xlu0 %v2010, 118
      %v2017 = vpop.permute.xlu0 %2016
      %2018 = vrot.lane.b32.xlu0 %v2011, 118
      %v2019 = vpop.permute.xlu0 %2018
      %2020 = vrot.lane.b32.xlu0 %v2012, 118
      %v2021 = vpop.permute.xlu0 %2020
      %2022 = vrot.lane.b32.xlu0 %v2013, 118
      %v2023 = vpop.permute.xlu0 %2022
      %2024 = vrot.lane.b32.xlu0 %v2014, 118
      %v2025 = vpop.permute.xlu0 %2024
      %2026 = vrot.lane.b32.xlu0 %v2015, 118
      %v2027 = vpop.permute.xlu0 %2026
      %2035 = vset.pattern.permute.xlu0 0
      %2036 = vperm.xlu0 %2035, %v1259
      %v2037 = vpop.permute.xlu0 %2036
      %2040 = vset.pattern.permute.xlu0 0
      %2041 = vperm.xlu0 %2040, %v1260
      %v2042 = vpop.permute.xlu0 %2041
      %2045 = vset.pattern.permute.xlu0 0
      %2046 = vperm.xlu0 %2045, %v1261
      %v2047 = vpop.permute.xlu0 %2046
      %2050 = vset.pattern.permute.xlu0 0
      %2051 = vperm.xlu0 %2050, %v1262
      %v2052 = vpop.permute.xlu0 %2051
      %2055 = vset.pattern.permute.xlu0 0
      %2056 = vperm.xlu0 %2055, %v1263
      %v2057 = vpop.permute.xlu0 %2056
      %2060 = vset.pattern.permute.xlu0 0
      %2061 = vperm.xlu0 %2060, %v1264
      %v2062 = vpop.permute.xlu0 %2061
      %2065 = vset.pattern.permute.xlu0 0
      %2066 = vperm.xlu0 %2065, %v1265
      %v2067 = vpop.permute.xlu0 %2066
      %2070 = vset.pattern.permute.xlu0 0
      %2071 = vperm.xlu0 %2070, %v1266
      %v2072 = vpop.permute.xlu0 %2071
      %2075 = vset.pattern.permute.xlu0 0
      %2076 = vperm.xlu0 %2075, %v1267
      %v2077 = vpop.permute.xlu0 %2076
      %2080 = vset.pattern.permute.xlu0 0
      %2081 = vperm.xlu0 %2080, %v1268
      %v2082 = vpop.permute.xlu0 %2081
      %2085 = vset.pattern.permute.xlu0 0
      %2086 = vperm.xlu0 %2085, %v1269
      %v2087 = vpop.permute.xlu0 %2086
      %2090 = vset.pattern.permute.xlu0 0
      %2091 = vperm.xlu0 %2090, %v1270
      %v2092 = vpop.permute.xlu0 %2091
      %v2142 = vunpack.c.l.b16 %v1211
      %v2143 = vunpack.c.h.b16 %v1211
      %v2144 = vunpack.c.l.b16 %v1212
      %v2145 = vunpack.c.h.b16 %v1212
      %v2146 = vunpack.c.l.b16 %v1213
      %v2147 = vunpack.c.h.b16 %v1213
      %v2148 = vunpack.c.l.b16 %v1214
      %v2149 = vunpack.c.l.b16 %v1215
      %v2150 = vunpack.c.h.b16 %v1215
      %v2151 = vunpack.c.l.b16 %v1216
      %v2152 = vunpack.c.h.b16 %v1216
      %v2153 = vunpack.c.l.b16 %v1217
      %v2154 = vunpack.c.h.b16 %v1217
      %v2155 = vunpack.c.l.b16 %v1218
      %v2156 = vunpack.c.l.b16 %v1219
      %v2157 = vunpack.c.h.b16 %v1219
      %v2158 = vunpack.c.l.b16 %v1220
      %v2159 = vunpack.c.h.b16 %v1220
      %v2160 = vunpack.c.l.b16 %v1221
      %v2161 = vunpack.c.h.b16 %v1221
      %v2162 = vunpack.c.l.b16 %v1222
      %v2163 = vunpack.c.l.b16 %v1223
      %v2164 = vunpack.c.h.b16 %v1223
      %v2165 = vunpack.c.l.b16 %v1224
      %v2166 = vunpack.c.h.b16 %v1224
      %v2167 = vunpack.c.l.b16 %v1225
      %v2168 = vunpack.c.h.b16 %v1225
      %v2169 = vunpack.c.l.b16 %v1226
      %v2170 = vunpack.c.l.b16 %v1227
      %v2171 = vunpack.c.h.b16 %v1227
      %v2172 = vunpack.c.l.b16 %v1228
      %v2173 = vunpack.c.h.b16 %v1228
      %v2174 = vunpack.c.l.b16 %v1229
      %v2175 = vunpack.c.h.b16 %v1229
      %v2176 = vunpack.c.l.b16 %v1230
      %v2177 = vunpack.c.l.b16 %v1231
      %v2178 = vunpack.c.h.b16 %v1231
      %v2179 = vunpack.c.l.b16 %v1232
      %v2180 = vunpack.c.h.b16 %v1232
      %v2181 = vunpack.c.l.b16 %v1233
      %v2182 = vunpack.c.h.b16 %v1233
      %v2183 = vunpack.c.l.b16 %v1234
      %v2184 = vunpack.c.l.b16 %v1235
      %v2185 = vunpack.c.h.b16 %v1235
      %v2186 = vunpack.c.l.b16 %v1236
      %v2187 = vunpack.c.h.b16 %v1236
      %v2188 = vunpack.c.l.b16 %v1237
      %v2189 = vunpack.c.h.b16 %v1237
      %v2190 = vunpack.c.l.b16 %v1238
      %v2191 = vunpack.c.l.b16 %v1239
      %v2192 = vunpack.c.h.b16 %v1239
      %v2193 = vunpack.c.l.b16 %v1240
      %v2194 = vunpack.c.h.b16 %v1240
      %v2195 = vunpack.c.l.b16 %v1241
      %v2196 = vunpack.c.h.b16 %v1241
      %v2197 = vunpack.c.l.b16 %v1242
      %v2198 = vunpack.c.l.b16 %v1243
      %v2199 = vunpack.c.h.b16 %v1243
      %v2200 = vunpack.c.l.b16 %v1244
      %v2201 = vunpack.c.h.b16 %v1244
      %v2202 = vunpack.c.l.b16 %v1245
      %v2203 = vunpack.c.h.b16 %v1245
      %v2204 = vunpack.c.l.b16 %v1246
      %v2205 = vunpack.c.l.b16 %v1247
      %v2206 = vunpack.c.h.b16 %v1247
      %v2207 = vunpack.c.l.b16 %v1248
      %v2208 = vunpack.c.h.b16 %v1248
      %v2209 = vunpack.c.l.b16 %v1249
      %v2210 = vunpack.c.h.b16 %v1249
      %v2211 = vunpack.c.l.b16 %v1250
      %v2212 = vunpack.c.l.b16 %v1251
      %v2213 = vunpack.c.h.b16 %v1251
      %v2214 = vunpack.c.l.b16 %v1252
      %v2215 = vunpack.c.h.b16 %v1252
      %v2216 = vunpack.c.l.b16 %v1253
      %v2217 = vunpack.c.h.b16 %v1253
      %v2218 = vunpack.c.l.b16 %v1254
      %v2219 = vunpack.c.l.b16 %v1255
      %v2220 = vunpack.c.h.b16 %v1255
      %v2221 = vunpack.c.l.b16 %v1256
      %v2222 = vunpack.c.h.b16 %v1256
      %v2223 = vunpack.c.l.b16 %v1257
      %v2224 = vunpack.c.h.b16 %v1257
      %v2225 = vunpack.c.l.b16 %v1258
      %v2226 = vpack.c.b16 %v2149, %v2142
      %v2227 = vpack.c.b16 %v2150, %v2143
      %v2228 = vpack.c.b16 %v2151, %v2144
      %v2229 = vpack.c.b16 %v2152, %v2145
      %v2230 = vpack.c.b16 %v2153, %v2146
      %v2231 = vpack.c.b16 %v2154, %v2147
      %v2232 = vpack.c.b16 %v2155, %v2148
      %v2233 = vpack.c.b16 %v2163, %v2156
      %v2234 = vpack.c.b16 %v2164, %v2157
      %v2235 = vpack.c.b16 %v2165, %v2158
      %v2236 = vpack.c.b16 %v2166, %v2159
      %v2237 = vpack.c.b16 %v2167, %v2160
      %v2238 = vpack.c.b16 %v2168, %v2161
      %v2239 = vpack.c.b16 %v2169, %v2162
      %v2240 = vpack.c.b16 %v2177, %v2170
      %v2241 = vpack.c.b16 %v2178, %v2171
      %v2242 = vpack.c.b16 %v2179, %v2172
      %v2243 = vpack.c.b16 %v2180, %v2173
      %v2244 = vpack.c.b16 %v2181, %v2174
      %v2245 = vpack.c.b16 %v2182, %v2175
      %v2246 = vpack.c.b16 %v2183, %v2176
      %v2247 = vpack.c.b16 %v2191, %v2184
      %v2248 = vpack.c.b16 %v2192, %v2185
      %v2249 = vpack.c.b16 %v2193, %v2186
      %v2250 = vpack.c.b16 %v2194, %v2187
      %v2251 = vpack.c.b16 %v2195, %v2188
      %v2252 = vpack.c.b16 %v2196, %v2189
      %v2253 = vpack.c.b16 %v2197, %v2190
      %v2254 = vpack.c.b16 %v2205, %v2198
      %v2255 = vpack.c.b16 %v2206, %v2199
      %v2256 = vpack.c.b16 %v2207, %v2200
      %v2257 = vpack.c.b16 %v2208, %v2201
      %v2258 = vpack.c.b16 %v2209, %v2202
      %v2259 = vpack.c.b16 %v2210, %v2203
      %v2260 = vpack.c.b16 %v2211, %v2204
      %v2261 = vpack.c.b16 %v2219, %v2212
      %v2262 = vpack.c.b16 %v2220, %v2213
      %v2263 = vpack.c.b16 %v2221, %v2214
      %v2264 = vpack.c.b16 %v2222, %v2215
      %v2265 = vpack.c.b16 %v2223, %v2216
      %v2266 = vpack.c.b16 %v2224, %v2217
      %v2267 = vpack.c.b16 %v2225, %v2218
      %vm2304 = vcmask 785408
      %v2306 = vsel %vm2304, %v2232, 0
      %v2309 = vsel %vm2304, %v2239, 0
      %v2312 = vsel %vm2304, %v2246, 0
      %v2315 = vsel %vm2304, %v2253, 0
      %v2318 = vsel %vm2304, %v2260, 0
      %v2321 = vsel %vm2304, %v2267, 0
      %2323 = vmatpush.bf16.msra.mxu0 %v1725
      %2324 = vmatpush.bf16.msra.mxu0 %v1723
      %2325 = vmatpush.bf16.msra.mxu0 %v1685
      %2326 = vmatpush.bf16.msra.mxu0 %v1684
      %2327 = vmatpush.bf16.msra.mxu0 %v1683
      %2328 = vmatpush.bf16.msra.mxu0 %v1682
      %2329 = vmatpush.bf16.msra.mxu0 %v1681
      %2330 = vmatpush.bf16.msra.mxu0 %v1680
      %2331 = vmatmul.bf16.gmra.mxu0 %v2226
      %v2332 = vpop.f32.mrf.mxu0
      %v2333 = vadd.f32 %v2037, %v2332
      %v2334 = vpop.f32.mrf.mxu0
      %v2335 = vadd.f32 %v2042, %v2334
      %2336 = vmatmul.bf16.gmra.mxu0 %v2233
      %v2337 = vpop.f32.mrf.mxu0
      %v2338 = vadd.f32 %v2047, %v2337
      %v2339 = vpop.f32.mrf.mxu0
      %v2340 = vadd.f32 %v2052, %v2339
      %2341 = vmatmul.bf16.gmra.mxu0 %v2240
      %v2342 = vpop.f32.mrf.mxu0
      %v2343 = vadd.f32 %v2057, %v2342
      %v2344 = vpop.f32.mrf.mxu0
      %v2345 = vadd.f32 %v2062, %v2344
      %2346 = vmatmul.bf16.gmra.mxu0 %v2247
      %v2347 = vpop.f32.mrf.mxu0
      %v2348 = vadd.f32 %v2067, %v2347
      %v2349 = vpop.f32.mrf.mxu0
      %v2350 = vadd.f32 %v2072, %v2349
      %2351 = vmatmul.bf16.gmra.mxu0 %v2254
      %v2352 = vpop.f32.mrf.mxu0
      %v2353 = vadd.f32 %v2077, %v2352
      %v2354 = vpop.f32.mrf.mxu0
      %v2355 = vadd.f32 %v2082, %v2354
      %2356 = vmatmul.bf16.gmra.mxu0 %v2261
      %v2357 = vpop.f32.mrf.mxu0
      %v2358 = vadd.f32 %v2087, %v2357
      %v2359 = vpop.f32.mrf.mxu0
      %v2360 = vadd.f32 %v2092, %v2359
      %2361 = vdwg.mxu0
      %2362 = vmatpush.bf16.msra.mxu0 %v1777
      %2363 = vmatpush.bf16.msra.mxu0 %v1775
      %2364 = vmatpush.bf16.msra.mxu0 %v1773
      %2365 = vmatpush.bf16.msra.mxu0 %v1771
      %2366 = vmatpush.bf16.msra.mxu0 %v1733
      %2367 = vmatpush.bf16.msra.mxu0 %v1731
      %2368 = vmatpush.bf16.msra.mxu0 %v1729
      %2369 = vmatpush.bf16.msra.mxu0 %v1727
      %2370 = vmatmul.bf16.gmra.mxu0 %v2227
      %v2371 = vpop.f32.mrf.mxu0
      %v2372 = vadd.f32 %v2333, %v2371
      %v2373 = vpop.f32.mrf.mxu0
      %v2374 = vadd.f32 %v2335, %v2373
      %2375 = vmatmul.bf16.gmra.mxu0 %v2234
      %v2376 = vpop.f32.mrf.mxu0
      %v2377 = vadd.f32 %v2338, %v2376
      %v2378 = vpop.f32.mrf.mxu0
      %v2379 = vadd.f32 %v2340, %v2378
      %2380 = vmatmul.bf16.gmra.mxu0 %v2241
      %v2381 = vpop.f32.mrf.mxu0
      %v2382 = vadd.f32 %v2343, %v2381
      %v2383 = vpop.f32.mrf.mxu0
      %v2384 = vadd.f32 %v2345, %v2383
      %2385 = vmatmul.bf16.gmra.mxu0 %v2248
      %v2386 = vpop.f32.mrf.mxu0
      %v2387 = vadd.f32 %v2348, %v2386
      %v2388 = vpop.f32.mrf.mxu0
      %v2389 = vadd.f32 %v2350, %v2388
      %2390 = vmatmul.bf16.gmra.mxu0 %v2255
      %v2391 = vpop.f32.mrf.mxu0
      %v2392 = vadd.f32 %v2353, %v2391
      %v2393 = vpop.f32.mrf.mxu0
      %v2394 = vadd.f32 %v2355, %v2393
      %2395 = vmatmul.bf16.gmra.mxu0 %v2262
      %v2396 = vpop.f32.mrf.mxu0
      %v2397 = vadd.f32 %v2358, %v2396
      %v2398 = vpop.f32.mrf.mxu0
      %v2399 = vadd.f32 %v2360, %v2398
      %2400 = vdwg.mxu0
      %2401 = vmatpush.bf16.msra.mxu0 %v1829
      %2402 = vmatpush.bf16.msra.mxu0 %v1827
      %2403 = vmatpush.bf16.msra.mxu0 %v1825
      %2404 = vmatpush.bf16.msra.mxu0 %v1823
      %2405 = vmatpush.bf16.msra.mxu0 %v1821
      %2406 = vmatpush.bf16.msra.mxu0 %v1819
      %2407 = vmatpush.bf16.msra.mxu0 %v1781
      %2408 = vmatpush.bf16.msra.mxu0 %v1779
      %2409 = vmatmul.bf16.gmra.mxu0 %v2228
      %v2410 = vpop.f32.mrf.mxu0
      %v2411 = vadd.f32 %v2372, %v2410
      %v2412 = vpop.f32.mrf.mxu0
      %v2413 = vadd.f32 %v2374, %v2412
      %2414 = vmatmul.bf16.gmra.mxu0 %v2235
      %v2415 = vpop.f32.mrf.mxu0
      %v2416 = vadd.f32 %v2377, %v2415
      %v2417 = vpop.f32.mrf.mxu0
      %v2418 = vadd.f32 %v2379, %v2417
      %2419 = vmatmul.bf16.gmra.mxu0 %v2242
      %v2420 = vpop.f32.mrf.mxu0
      %v2421 = vadd.f32 %v2382, %v2420
      %v2422 = vpop.f32.mrf.mxu0
      %v2423 = vadd.f32 %v2384, %v2422
      %2424 = vmatmul.bf16.gmra.mxu0 %v2249
      %v2425 = vpop.f32.mrf.mxu0
      %v2426 = vadd.f32 %v2387, %v2425
      %v2427 = vpop.f32.mrf.mxu0
      %v2428 = vadd.f32 %v2389, %v2427
      %2429 = vmatmul.bf16.gmra.mxu0 %v2256
      %v2430 = vpop.f32.mrf.mxu0
      %v2431 = vadd.f32 %v2392, %v2430
      %v2432 = vpop.f32.mrf.mxu0
      %v2433 = vadd.f32 %v2394, %v2432
      %2434 = vmatmul.bf16.gmra.mxu0 %v2263
      %v2435 = vpop.f32.mrf.mxu0
      %v2436 = vadd.f32 %v2397, %v2435
      %v2437 = vpop.f32.mrf.mxu0
      %v2438 = vadd.f32 %v2399, %v2437
      %2439 = vdwg.mxu0
      %2440 = vmatpush.bf16.msra.mxu0 %v1875
      %2441 = vmatpush.bf16.msra.mxu0 %v1873
      %2442 = vmatpush.bf16.msra.mxu0 %v1344
      %2443 = vmatpush.bf16.msra.mxu0 %v1343
      %2444 = vmatpush.bf16.msra.mxu0 %v1342
      %2445 = vmatpush.bf16.msra.mxu0 %v1341
      %2446 = vmatpush.bf16.msra.mxu0 %v1340
      %2447 = vmatpush.bf16.msra.mxu0 %v1339
      %2448 = vmatmul.bf16.gmra.mxu0 %v2229
      %v2449 = vpop.f32.mrf.mxu0
      %v2450 = vadd.f32 %v2411, %v2449
      %v2451 = vpop.f32.mrf.mxu0
      %v2452 = vadd.f32 %v2413, %v2451
      %2453 = vmatmul.bf16.gmra.mxu0 %v2236
      %v2454 = vpop.f32.mrf.mxu0
      %v2455 = vadd.f32 %v2416, %v2454
      %v2456 = vpop.f32.mrf.mxu0
      %v2457 = vadd.f32 %v2418, %v2456
      %2458 = vmatmul.bf16.gmra.mxu0 %v2243
      %v2459 = vpop.f32.mrf.mxu0
      %v2460 = vadd.f32 %v2421, %v2459
      %v2461 = vpop.f32.mrf.mxu0
      %v2462 = vadd.f32 %v2423, %v2461
      %2463 = vmatmul.bf16.gmra.mxu0 %v2250
      %v2464 = vpop.f32.mrf.mxu0
      %v2465 = vadd.f32 %v2426, %v2464
      %v2466 = vpop.f32.mrf.mxu0
      %v2467 = vadd.f32 %v2428, %v2466
      %2468 = vmatmul.bf16.gmra.mxu0 %v2257
      %v2469 = vpop.f32.mrf.mxu0
      %v2470 = vadd.f32 %v2431, %v2469
      %v2471 = vpop.f32.mrf.mxu0
      %v2472 = vadd.f32 %v2433, %v2471
      %2473 = vmatmul.bf16.gmra.mxu0 %v2264
      %v2474 = vpop.f32.mrf.mxu0
      %v2475 = vadd.f32 %v2436, %v2474
      %v2476 = vpop.f32.mrf.mxu0
      %v2477 = vadd.f32 %v2438, %v2476
      %2478 = vdwg.mxu0
      %2479 = vmatpush.bf16.msra.mxu0 %v1927
      %2480 = vmatpush.bf16.msra.mxu0 %v1925
      %2481 = vmatpush.bf16.msra.mxu0 %v1923
      %2482 = vmatpush.bf16.msra.mxu0 %v1921
      %2483 = vmatpush.bf16.msra.mxu0 %v1883
      %2484 = vmatpush.bf16.msra.mxu0 %v1881
      %2485 = vmatpush.bf16.msra.mxu0 %v1879
      %2486 = vmatpush.bf16.msra.mxu0 %v1877
      %2487 = vmatmul.bf16.gmra.mxu0 %v2230
      %v2488 = vpop.f32.mrf.mxu0
      %v2489 = vadd.f32 %v2450, %v2488
      %v2490 = vpop.f32.mrf.mxu0
      %v2491 = vadd.f32 %v2452, %v2490
      %2492 = vmatmul.bf16.gmra.mxu0 %v2237
      %v2493 = vpop.f32.mrf.mxu0
      %v2494 = vadd.f32 %v2455, %v2493
      %v2495 = vpop.f32.mrf.mxu0
      %v2496 = vadd.f32 %v2457, %v2495
      %2497 = vmatmul.bf16.gmra.mxu0 %v2244
      %v2498 = vpop.f32.mrf.mxu0
      %v2499 = vadd.f32 %v2460, %v2498
      %v2500 = vpop.f32.mrf.mxu0
      %v2501 = vadd.f32 %v2462, %v2500
      %2502 = vmatmul.bf16.gmra.mxu0 %v2251
      %v2503 = vpop.f32.mrf.mxu0
      %v2504 = vadd.f32 %v2465, %v2503
      %v2505 = vpop.f32.mrf.mxu0
      %v2506 = vadd.f32 %v2467, %v2505
      %2507 = vmatmul.bf16.gmra.mxu0 %v2258
      %v2508 = vpop.f32.mrf.mxu0
      %v2509 = vadd.f32 %v2470, %v2508
      %v2510 = vpop.f32.mrf.mxu0
      %v2511 = vadd.f32 %v2472, %v2510
      %2512 = vmatmul.bf16.gmra.mxu0 %v2265
      %v2513 = vpop.f32.mrf.mxu0
      %v2514 = vadd.f32 %v2475, %v2513
      %v2515 = vpop.f32.mrf.mxu0
      %v2516 = vadd.f32 %v2477, %v2515
      %2517 = vdwg.mxu0
      %2518 = vmatpush.bf16.msra.mxu0 %v1979
      %2519 = vmatpush.bf16.msra.mxu0 %v1977
      %2520 = vmatpush.bf16.msra.mxu0 %v1975
      %2521 = vmatpush.bf16.msra.mxu0 %v1973
      %2522 = vmatpush.bf16.msra.mxu0 %v1971
      %2523 = vmatpush.bf16.msra.mxu0 %v1969
      %2524 = vmatpush.bf16.msra.mxu0 %v1931
      %2525 = vmatpush.bf16.msra.mxu0 %v1929
      %2526 = vmatmul.bf16.gmra.mxu0 %v2231
      %v2527 = vpop.f32.mrf.mxu0
      %v2528 = vadd.f32 %v2489, %v2527
      %v2529 = vpop.f32.mrf.mxu0
      %v2530 = vadd.f32 %v2491, %v2529
      %2531 = vmatmul.bf16.gmra.mxu0 %v2238
      %v2532 = vpop.f32.mrf.mxu0
      %v2533 = vadd.f32 %v2494, %v2532
      %v2534 = vpop.f32.mrf.mxu0
      %v2535 = vadd.f32 %v2496, %v2534
      %2536 = vmatmul.bf16.gmra.mxu0 %v2245
      %v2537 = vpop.f32.mrf.mxu0
      %v2538 = vadd.f32 %v2499, %v2537
      %v2539 = vpop.f32.mrf.mxu0
      %v2540 = vadd.f32 %v2501, %v2539
      %2541 = vmatmul.bf16.gmra.mxu0 %v2252
      %v2542 = vpop.f32.mrf.mxu0
      %v2543 = vadd.f32 %v2504, %v2542
      %v2544 = vpop.f32.mrf.mxu0
      %v2545 = vadd.f32 %v2506, %v2544
      %2546 = vmatmul.bf16.gmra.mxu0 %v2259
      %v2547 = vpop.f32.mrf.mxu0
      %v2548 = vadd.f32 %v2509, %v2547
      %v2549 = vpop.f32.mrf.mxu0
      %v2550 = vadd.f32 %v2511, %v2549
      %2551 = vmatmul.bf16.gmra.mxu0 %v2266
      %v2552 = vpop.f32.mrf.mxu0
      %v2553 = vadd.f32 %v2514, %v2552
      %v2554 = vpop.f32.mrf.mxu0
      %v2555 = vadd.f32 %v2516, %v2554
      %2556 = vdwg.mxu0
      %2557 = vmatpush.bf16.msra.mxu0 0
      %2558 = vmatpush.bf16.msra.mxu0 0
      %2559 = vmatpush.bf16.msra.mxu0 %v2027
      %2560 = vmatpush.bf16.msra.mxu0 %v2025
      %2561 = vmatpush.bf16.msra.mxu0 %v2023
      %2562 = vmatpush.bf16.msra.mxu0 %v2021
      %2563 = vmatpush.bf16.msra.mxu0 %v2019
      %2564 = vmatpush.bf16.msra.mxu0 %v2017
      %2565 = vmatmul.bf16.gmra.mxu0 %v2306
      %v2566 = vpop.f32.mrf.mxu0
      %v2567 = vadd.f32 %v2528, %v2566
      %v2568 = vpop.f32.mrf.mxu0
      %v2569 = vadd.f32 %v2530, %v2568
      %2570 = vmatmul.bf16.gmra.mxu0 %v2309
      %v2571 = vpop.f32.mrf.mxu0
      %v2572 = vadd.f32 %v2533, %v2571
      %v2573 = vpop.f32.mrf.mxu0
      %v2574 = vadd.f32 %v2535, %v2573
      %2575 = vmatmul.bf16.gmra.mxu0 %v2312
      %v2576 = vpop.f32.mrf.mxu0
      %v2577 = vadd.f32 %v2538, %v2576
      %v2578 = vpop.f32.mrf.mxu0
      %v2579 = vadd.f32 %v2540, %v2578
      %2580 = vmatmul.bf16.gmra.mxu0 %v2315
      %v2581 = vpop.f32.mrf.mxu0
      %v2582 = vadd.f32 %v2543, %v2581
      %v2583 = vpop.f32.mrf.mxu0
      %v2584 = vadd.f32 %v2545, %v2583
      %2585 = vmatmul.bf16.gmra.mxu0 %v2318
      %v2586 = vpop.f32.mrf.mxu0
      %v2587 = vadd.f32 %v2548, %v2586
      %v2588 = vpop.f32.mrf.mxu0
      %v2589 = vadd.f32 %v2550, %v2588
      %2590 = vmatmul.bf16.gmra.mxu0 %v2321
      %v2591 = vpop.f32.mrf.mxu0
      %v2592 = vadd.f32 %v2553, %v2591
      %v2593 = vpop.f32.mrf.mxu0
      %v2594 = vadd.f32 %v2555, %v2593
      %2595 = vdwg.mxu0
      %v2596 = vpack.c.bf16 %v2567, %v2567
      %v2597 = vpack.c.bf16 %v2569, %v2569
      %v2598 = vpack.c.bf16 %v2572, %v2572
      %v2599 = vpack.c.bf16 %v2574, %v2574
      %v2600 = vpack.c.bf16 %v2577, %v2577
      %v2601 = vpack.c.bf16 %v2579, %v2579
      %v2602 = vpack.c.bf16 %v2582, %v2582
      %v2603 = vpack.c.bf16 %v2584, %v2584
      %v2604 = vpack.c.bf16 %v2587, %v2587
      %v2605 = vpack.c.bf16 %v2589, %v2589
      %v2606 = vpack.c.bf16 %v2592, %v2592
      %v2607 = vpack.c.bf16 %v2594, %v2594
      %v2620 = vunpack.c.l.b16 %v2596
      %v2621 = vunpack.c.l.b16 %v2597
      %v2622 = vunpack.c.l.b16 %v2598
      %v2623 = vunpack.c.l.b16 %v2599
      %v2624 = vunpack.c.l.b16 %v2600
      %v2625 = vunpack.c.l.b16 %v2601
      %v2626 = vunpack.c.l.b16 %v2602
      %v2627 = vunpack.c.l.b16 %v2603
      %v2628 = vunpack.c.l.b16 %v2604
      %v2629 = vunpack.c.l.b16 %v2605
      %v2630 = vunpack.c.l.b16 %v2606
      %v2631 = vunpack.c.l.b16 %v2607
      %v2632 = vpack.c.b16 %v2621, %v2620
      %v2633 = vpack.c.b16 %v2623, %v2622
      %v2634 = vpack.c.b16 %v2625, %v2624
      %v2635 = vpack.c.b16 %v2627, %v2626
      %v2636 = vpack.c.b16 %v2629, %v2628
      %v2637 = vpack.c.b16 %v2631, %v2630
      %2638 = vrot.lane.b32.xlu0 %v2632, 5
      %v2639 = vpop.permute.xlu0 %2638
      %2640 = vrot.lane.b32.xlu0 %v2633, 5
      %v2641 = vpop.permute.xlu0 %2640
      %2642 = vrot.lane.b32.xlu0 %v2634, 5
      %v2643 = vpop.permute.xlu0 %2642
      %2644 = vrot.lane.b32.xlu0 %v2635, 5
      %v2645 = vpop.permute.xlu0 %2644
      %2646 = vrot.lane.b32.xlu0 %v2636, 5
      %v2647 = vpop.permute.xlu0 %2646
      %2648 = vrot.lane.b32.xlu0 %v2637, 5
      %v2649 = vpop.permute.xlu0 %2648
      %v2651 = vsel %vm1357, 0, %v2639
      %v2653 = vsel %vm1357, 0, %v2641
      %v2655 = vsel %vm1357, 0, %v2643
      %v2657 = vsel %vm1357, 0, %v2645
      %v2659 = vsel %vm1357, 0, %v2647
      %v2661 = vsel %vm1357, 0, %v2649
      %v2662 = vsel %vm1371, %v2651, 0
      %v2664 = vsel %vm1371, %v2653, 0
      %v2666 = vsel %vm1371, %v2655, 0
      %v2668 = vsel %vm1371, %v2657, 0
      %v2670 = vsel %vm1371, %v2659, 0
      %v2672 = vsel %vm1371, %v2661, 0
      %v2674 = vunpack.c.l.bf16 %v2662
      %v2675 = vunpack.c.h.bf16 %v2662
      %v2676 = vunpack.c.l.bf16 %v2664
      %v2677 = vunpack.c.h.bf16 %v2664
      %v2678 = vunpack.c.l.bf16 %v2666
      %v2679 = vunpack.c.h.bf16 %v2666
      %v2680 = vunpack.c.l.bf16 %v2668
      %v2681 = vunpack.c.h.bf16 %v2668
      %v2682 = vunpack.c.l.bf16 %v2670
      %v2683 = vunpack.c.h.bf16 %v2670
      %v2684 = vunpack.c.l.bf16 %v2672
      %v2685 = vunpack.c.h.bf16 %v2672
      %v2686 = vmul.f32 %v2674, %v1400
      %v2687 = vmul.f32 %v2675, %v1400
      %v2688 = vmul.f32 %v2676, %v1400
      %v2689 = vmul.f32 %v2677, %v1400
      %v2690 = vmul.f32 %v2678, %v1400
      %v2691 = vmul.f32 %v2679, %v1400
      %v2692 = vmul.f32 %v2680, %v1400
      %v2693 = vmul.f32 %v2681, %v1400
      %v2694 = vmul.f32 %v2682, %v1400
      %v2695 = vmul.f32 %v2683, %v1400
      %v2696 = vmul.f32 %v2684, %v1400
      %v2697 = vmul.f32 %v2685, %v1400
      %v2698 = vpack.c.bf16 %v2686, %v2686
      %v2699 = vpack.c.bf16 %v2687, %v2687
      %v2700 = vpack.c.bf16 %v2688, %v2688
      %v2701 = vpack.c.bf16 %v2689, %v2689
      %v2702 = vpack.c.bf16 %v2690, %v2690
      %v2703 = vpack.c.bf16 %v2691, %v2691
      %v2704 = vpack.c.bf16 %v2692, %v2692
      %v2705 = vpack.c.bf16 %v2693, %v2693
      %v2706 = vpack.c.bf16 %v2694, %v2694
      %v2707 = vpack.c.bf16 %v2695, %v2695
      %v2708 = vpack.c.bf16 %v2696, %v2696
      %v2709 = vpack.c.bf16 %v2697, %v2697
      %v2710 = vmul.f32 %v2674, %v1432
      %v2711 = vmul.f32 %v2675, %v1432
      %v2712 = vmul.f32 %v2676, %v1432
      %v2713 = vmul.f32 %v2677, %v1432
      %v2714 = vmul.f32 %v2678, %v1432
      %v2715 = vmul.f32 %v2679, %v1432
      %v2716 = vmul.f32 %v2680, %v1432
      %v2717 = vmul.f32 %v2681, %v1432
      %v2718 = vmul.f32 %v2682, %v1432
      %v2719 = vmul.f32 %v2683, %v1432
      %v2720 = vmul.f32 %v2684, %v1432
      %v2721 = vmul.f32 %v2685, %v1432
      %v2722 = vpack.c.bf16 %v2710, %v2710
      %v2723 = vpack.c.bf16 %v2711, %v2711
      %v2724 = vpack.c.bf16 %v2712, %v2712
      %v2725 = vpack.c.bf16 %v2713, %v2713
      %v2726 = vpack.c.bf16 %v2714, %v2714
      %v2727 = vpack.c.bf16 %v2715, %v2715
      %v2728 = vpack.c.bf16 %v2716, %v2716
      %v2729 = vpack.c.bf16 %v2717, %v2717
      %v2730 = vpack.c.bf16 %v2718, %v2718
      %v2731 = vpack.c.bf16 %v2719, %v2719
      %v2732 = vpack.c.bf16 %v2720, %v2720
      %v2733 = vpack.c.bf16 %v2721, %v2721
      %v2734 = vmul.f32 %v2674, %v1465
      %v2735 = vmul.f32 %v2675, %v1465
      %v2736 = vmul.f32 %v2676, %v1465
      %v2737 = vmul.f32 %v2677, %v1465
      %v2738 = vmul.f32 %v2678, %v1465
      %v2739 = vmul.f32 %v2679, %v1465
      %v2740 = vmul.f32 %v2680, %v1465
      %v2741 = vmul.f32 %v2681, %v1465
      %v2742 = vmul.f32 %v2682, %v1465
      %v2743 = vmul.f32 %v2683, %v1465
      %v2744 = vmul.f32 %v2684, %v1465
      %v2745 = vmul.f32 %v2685, %v1465
      %v2746 = vpack.c.bf16 %v2734, %v2734
      %v2747 = vpack.c.bf16 %v2735, %v2735
      %v2748 = vpack.c.bf16 %v2736, %v2736
      %v2749 = vpack.c.bf16 %v2737, %v2737
      %v2750 = vpack.c.bf16 %v2738, %v2738
      %v2751 = vpack.c.bf16 %v2739, %v2739
      %v2752 = vpack.c.bf16 %v2740, %v2740
      %v2753 = vpack.c.bf16 %v2741, %v2741
      %v2754 = vpack.c.bf16 %v2742, %v2742
      %v2755 = vpack.c.bf16 %v2743, %v2743
      %v2756 = vpack.c.bf16 %v2744, %v2744
      %v2757 = vpack.c.bf16 %v2745, %v2745
      %v2758 = vmul.f32 %v2674, %v1498
      %v2759 = vmul.f32 %v2675, %v1498
      %v2760 = vmul.f32 %v2676, %v1498
      %v2761 = vmul.f32 %v2677, %v1498
      %v2762 = vmul.f32 %v2678, %v1498
      %v2763 = vmul.f32 %v2679, %v1498
      %v2764 = vmul.f32 %v2680, %v1498
      %v2765 = vmul.f32 %v2681, %v1498
      %v2766 = vmul.f32 %v2682, %v1498
      %v2767 = vmul.f32 %v2683, %v1498
      %v2768 = vmul.f32 %v2684, %v1498
      %v2769 = vmul.f32 %v2685, %v1498
      %v2770 = vpack.c.bf16 %v2758, %v2758
      %v2771 = vpack.c.bf16 %v2759, %v2759
      %v2772 = vpack.c.bf16 %v2760, %v2760
      %v2773 = vpack.c.bf16 %v2761, %v2761
      %v2774 = vpack.c.bf16 %v2762, %v2762
      %v2775 = vpack.c.bf16 %v2763, %v2763
      %v2776 = vpack.c.bf16 %v2764, %v2764
      %v2777 = vpack.c.bf16 %v2765, %v2765
      %v2778 = vpack.c.bf16 %v2766, %v2766
      %v2779 = vpack.c.bf16 %v2767, %v2767
      %v2780 = vpack.c.bf16 %v2768, %v2768
      %v2781 = vpack.c.bf16 %v2769, %v2769
      %v2782 = vmul.f32 %v2674, %v1531
      %v2783 = vmul.f32 %v2675, %v1531
      %v2784 = vmul.f32 %v2676, %v1531
      %v2785 = vmul.f32 %v2677, %v1531
      %v2786 = vmul.f32 %v2678, %v1531
      %v2787 = vmul.f32 %v2679, %v1531
      %v2788 = vmul.f32 %v2680, %v1531
      %v2789 = vmul.f32 %v2681, %v1531
      %v2790 = vmul.f32 %v2682, %v1531
      %v2791 = vmul.f32 %v2683, %v1531
      %v2792 = vmul.f32 %v2684, %v1531
      %v2793 = vmul.f32 %v2685, %v1531
      %v2794 = vpack.c.bf16 %v2782, %v2782
      %v2795 = vpack.c.bf16 %v2783, %v2783
      %v2796 = vpack.c.bf16 %v2784, %v2784
      %v2797 = vpack.c.bf16 %v2785, %v2785
      %v2798 = vpack.c.bf16 %v2786, %v2786
      %v2799 = vpack.c.bf16 %v2787, %v2787
      %v2800 = vpack.c.bf16 %v2788, %v2788
      %v2801 = vpack.c.bf16 %v2789, %v2789
      %v2802 = vpack.c.bf16 %v2790, %v2790
      %v2803 = vpack.c.bf16 %v2791, %v2791
      %v2804 = vpack.c.bf16 %v2792, %v2792
      %v2805 = vpack.c.bf16 %v2793, %v2793
      %v2806 = vmul.f32 %v2674, %v1564
      %v2807 = vmul.f32 %v2675, %v1564
      %v2808 = vmul.f32 %v2676, %v1564
      %v2809 = vmul.f32 %v2677, %v1564
      %v2810 = vmul.f32 %v2678, %v1564
      %v2811 = vmul.f32 %v2679, %v1564
      %v2812 = vmul.f32 %v2680, %v1564
      %v2813 = vmul.f32 %v2681, %v1564
      %v2814 = vmul.f32 %v2682, %v1564
      %v2815 = vmul.f32 %v2683, %v1564
      %v2816 = vmul.f32 %v2684, %v1564
      %v2817 = vmul.f32 %v2685, %v1564
      %v2818 = vpack.c.bf16 %v2806, %v2806
      %v2819 = vpack.c.bf16 %v2807, %v2807
      %v2820 = vpack.c.bf16 %v2808, %v2808
      %v2821 = vpack.c.bf16 %v2809, %v2809
      %v2822 = vpack.c.bf16 %v2810, %v2810
      %v2823 = vpack.c.bf16 %v2811, %v2811
      %v2824 = vpack.c.bf16 %v2812, %v2812
      %v2825 = vpack.c.bf16 %v2813, %v2813
      %v2826 = vpack.c.bf16 %v2814, %v2814
      %v2827 = vpack.c.bf16 %v2815, %v2815
      %v2828 = vpack.c.bf16 %v2816, %v2816
      %v2829 = vpack.c.bf16 %v2817, %v2817
      %v2830 = vmul.f32 %v2674, %v1597
      %v2831 = vmul.f32 %v2675, %v1597
      %v2832 = vmul.f32 %v2676, %v1597
      %v2833 = vmul.f32 %v2677, %v1597
      %v2834 = vmul.f32 %v2678, %v1597
      %v2835 = vmul.f32 %v2679, %v1597
      %v2836 = vmul.f32 %v2680, %v1597
      %v2837 = vmul.f32 %v2681, %v1597
      %v2838 = vmul.f32 %v2682, %v1597
      %v2839 = vmul.f32 %v2683, %v1597
      %v2840 = vmul.f32 %v2684, %v1597
      %v2841 = vmul.f32 %v2685, %v1597
      %v2842 = vpack.c.bf16 %v2830, %v2830
      %v2843 = vpack.c.bf16 %v2831, %v2831
      %v2844 = vpack.c.bf16 %v2832, %v2832
      %v2845 = vpack.c.bf16 %v2833, %v2833
      %v2846 = vpack.c.bf16 %v2834, %v2834
      %v2847 = vpack.c.bf16 %v2835, %v2835
      %v2848 = vpack.c.bf16 %v2836, %v2836
      %v2849 = vpack.c.bf16 %v2837, %v2837
      %v2850 = vpack.c.bf16 %v2838, %v2838
      %v2851 = vpack.c.bf16 %v2839, %v2839
      %v2852 = vpack.c.bf16 %v2840, %v2840
      %v2853 = vpack.c.bf16 %v2841, %v2841
      %v2854 = vmul.f32 %v2674, %v1630
      %v2855 = vmul.f32 %v2675, %v1630
      %v2856 = vmul.f32 %v2676, %v1630
      %v2857 = vmul.f32 %v2677, %v1630
      %v2858 = vmul.f32 %v2678, %v1630
      %v2859 = vmul.f32 %v2679, %v1630
      %v2860 = vmul.f32 %v2680, %v1630
      %v2861 = vmul.f32 %v2681, %v1630
      %v2862 = vmul.f32 %v2682, %v1630
      %v2863 = vmul.f32 %v2683, %v1630
      %v2864 = vmul.f32 %v2684, %v1630
      %v2865 = vmul.f32 %v2685, %v1630
      %v2866 = vpack.c.bf16 %v2854, %v2854
      %v2867 = vpack.c.bf16 %v2855, %v2855
      %v2868 = vpack.c.bf16 %v2856, %v2856
      %v2869 = vpack.c.bf16 %v2857, %v2857
      %v2870 = vpack.c.bf16 %v2858, %v2858
      %v2871 = vpack.c.bf16 %v2859, %v2859
      %v2872 = vpack.c.bf16 %v2860, %v2860
      %v2873 = vpack.c.bf16 %v2861, %v2861
      %v2874 = vpack.c.bf16 %v2862, %v2862
      %v2875 = vpack.c.bf16 %v2863, %v2863
      %v2876 = vpack.c.bf16 %v2864, %v2864
      %v2877 = vpack.c.bf16 %v2865, %v2865
      %v2890 = vunpack.c.l.b16 %v2698
      %v2891 = vunpack.c.l.b16 %v2699
      %v2892 = vunpack.c.l.b16 %v2700
      %v2893 = vunpack.c.l.b16 %v2701
      %v2894 = vunpack.c.l.b16 %v2702
      %v2895 = vunpack.c.l.b16 %v2703
      %v2896 = vunpack.c.l.b16 %v2704
      %v2897 = vunpack.c.l.b16 %v2705
      %v2898 = vunpack.c.l.b16 %v2706
      %v2899 = vunpack.c.l.b16 %v2707
      %v2900 = vunpack.c.l.b16 %v2708
      %v2901 = vunpack.c.l.b16 %v2709
      %v2902 = vpack.c.b16 %v2891, %v2890
      %v2903 = vpack.c.b16 %v2893, %v2892
      %v2904 = vpack.c.b16 %v2895, %v2894
      %v2905 = vpack.c.b16 %v2897, %v2896
      %v2906 = vpack.c.b16 %v2899, %v2898
      %v2907 = vpack.c.b16 %v2901, %v2900
      %v2926 = vunpack.c.l.b16 %v2722
      %v2927 = vunpack.c.l.b16 %v2723
      %v2928 = vunpack.c.l.b16 %v2724
      %v2929 = vunpack.c.l.b16 %v2725
      %v2930 = vunpack.c.l.b16 %v2726
      %v2931 = vunpack.c.l.b16 %v2727
      %v2932 = vunpack.c.l.b16 %v2728
      %v2933 = vunpack.c.l.b16 %v2729
      %v2934 = vunpack.c.l.b16 %v2730
      %v2935 = vunpack.c.l.b16 %v2731
      %v2936 = vunpack.c.l.b16 %v2732
      %v2937 = vunpack.c.l.b16 %v2733
      %v2938 = vpack.c.b16 %v2927, %v2926
      %v2939 = vpack.c.b16 %v2929, %v2928
      %v2940 = vpack.c.b16 %v2931, %v2930
      %v2941 = vpack.c.b16 %v2933, %v2932
      %v2942 = vpack.c.b16 %v2935, %v2934
      %v2943 = vpack.c.b16 %v2937, %v2936
      %2944 = vrot.lane.b32.xlu0 %v2938, 127
      %v2945 = vpop.permute.xlu0 %2944
      %2946 = vrot.lane.b32.xlu0 %v2939, 127
      %v2947 = vpop.permute.xlu0 %2946
      %2948 = vrot.lane.b32.xlu0 %v2940, 127
      %v2949 = vpop.permute.xlu0 %2948
      %2950 = vrot.lane.b32.xlu0 %v2941, 127
      %v2951 = vpop.permute.xlu0 %2950
      %2952 = vrot.lane.b32.xlu0 %v2942, 127
      %v2953 = vpop.permute.xlu0 %2952
      %2954 = vrot.lane.b32.xlu0 %v2943, 127
      %v2955 = vpop.permute.xlu0 %2954
      %v2974 = vunpack.c.l.b16 %v2746
      %v2975 = vunpack.c.l.b16 %v2747
      %v2976 = vunpack.c.l.b16 %v2748
      %v2977 = vunpack.c.l.b16 %v2749
      %v2978 = vunpack.c.l.b16 %v2750
      %v2979 = vunpack.c.l.b16 %v2751
      %v2980 = vunpack.c.l.b16 %v2752
      %v2981 = vunpack.c.l.b16 %v2753
      %v2982 = vunpack.c.l.b16 %v2754
      %v2983 = vunpack.c.l.b16 %v2755
      %v2984 = vunpack.c.l.b16 %v2756
      %v2985 = vunpack.c.l.b16 %v2757
      %v2986 = vpack.c.b16 %v2975, %v2974
      %v2987 = vpack.c.b16 %v2977, %v2976
      %v2988 = vpack.c.b16 %v2979, %v2978
      %v2989 = vpack.c.b16 %v2981, %v2980
      %v2990 = vpack.c.b16 %v2983, %v2982
      %v2991 = vpack.c.b16 %v2985, %v2984
      %2992 = vrot.lane.b32.xlu0 %v2986, 126
      %v2993 = vpop.permute.xlu0 %2992
      %2994 = vrot.lane.b32.xlu0 %v2987, 126
      %v2995 = vpop.permute.xlu0 %2994
      %2996 = vrot.lane.b32.xlu0 %v2988, 126
      %v2997 = vpop.permute.xlu0 %2996
      %2998 = vrot.lane.b32.xlu0 %v2989, 126
      %v2999 = vpop.permute.xlu0 %2998
      %3000 = vrot.lane.b32.xlu0 %v2990, 126
      %v3001 = vpop.permute.xlu0 %3000
      %3002 = vrot.lane.b32.xlu0 %v2991, 126
      %v3003 = vpop.permute.xlu0 %3002
      %v3022 = vunpack.c.l.b16 %v2770
      %v3023 = vunpack.c.l.b16 %v2771
      %v3024 = vunpack.c.l.b16 %v2772
      %v3025 = vunpack.c.l.b16 %v2773
      %v3026 = vunpack.c.l.b16 %v2774
      %v3027 = vunpack.c.l.b16 %v2775
      %v3028 = vunpack.c.l.b16 %v2776
      %v3029 = vunpack.c.l.b16 %v2777
      %v3030 = vunpack.c.l.b16 %v2778
      %v3031 = vunpack.c.l.b16 %v2779
      %v3032 = vunpack.c.l.b16 %v2780
      %v3033 = vunpack.c.l.b16 %v2781
      %v3034 = vpack.c.b16 %v3023, %v3022
      %v3035 = vpack.c.b16 %v3025, %v3024
      %v3036 = vpack.c.b16 %v3027, %v3026
      %v3037 = vpack.c.b16 %v3029, %v3028
      %v3038 = vpack.c.b16 %v3031, %v3030
      %v3039 = vpack.c.b16 %v3033, %v3032
      %3040 = vrot.lane.b32.xlu0 %v3034, 124
      %v3041 = vpop.permute.xlu0 %3040
      %3042 = vrot.lane.b32.xlu0 %v3035, 124
      %v3043 = vpop.permute.xlu0 %3042
      %3044 = vrot.lane.b32.xlu0 %v3036, 124
      %v3045 = vpop.permute.xlu0 %3044
      %3046 = vrot.lane.b32.xlu0 %v3037, 124
      %v3047 = vpop.permute.xlu0 %3046
      %3048 = vrot.lane.b32.xlu0 %v3038, 124
      %v3049 = vpop.permute.xlu0 %3048
      %3050 = vrot.lane.b32.xlu0 %v3039, 124
      %v3051 = vpop.permute.xlu0 %3050
      %v3076 = vunpack.c.l.b16 %v2794
      %v3077 = vunpack.c.l.b16 %v2795
      %v3078 = vunpack.c.l.b16 %v2796
      %v3079 = vunpack.c.l.b16 %v2797
      %v3080 = vunpack.c.l.b16 %v2798
      %v3081 = vunpack.c.l.b16 %v2799
      %v3082 = vunpack.c.l.b16 %v2800
      %v3083 = vunpack.c.l.b16 %v2801
      %v3084 = vunpack.c.l.b16 %v2802
      %v3085 = vunpack.c.l.b16 %v2803
      %v3086 = vunpack.c.l.b16 %v2804
      %v3087 = vunpack.c.l.b16 %v2805
      %v3088 = vpack.c.b16 %v3077, %v3076
      %v3089 = vpack.c.b16 %v3079, %v3078
      %v3090 = vpack.c.b16 %v3081, %v3080
      %v3091 = vpack.c.b16 %v3083, %v3082
      %v3092 = vpack.c.b16 %v3085, %v3084
      %v3093 = vpack.c.b16 %v3087, %v3086
      %3094 = vrot.lane.b32.xlu0 %v3088, 122
      %v3095 = vpop.permute.xlu0 %3094
      %3096 = vrot.lane.b32.xlu0 %v3089, 122
      %v3097 = vpop.permute.xlu0 %3096
      %3098 = vrot.lane.b32.xlu0 %v3090, 122
      %v3099 = vpop.permute.xlu0 %3098
      %3100 = vrot.lane.b32.xlu0 %v3091, 122
      %v3101 = vpop.permute.xlu0 %3100
      %3102 = vrot.lane.b32.xlu0 %v3092, 122
      %v3103 = vpop.permute.xlu0 %3102
      %3104 = vrot.lane.b32.xlu0 %v3093, 122
      %v3105 = vpop.permute.xlu0 %3104
      %v3124 = vunpack.c.l.b16 %v2818
      %v3125 = vunpack.c.l.b16 %v2819
      %v3126 = vunpack.c.l.b16 %v2820
      %v3127 = vunpack.c.l.b16 %v2821
      %v3128 = vunpack.c.l.b16 %v2822
      %v3129 = vunpack.c.l.b16 %v2823
      %v3130 = vunpack.c.l.b16 %v2824
      %v3131 = vunpack.c.l.b16 %v2825
      %v3132 = vunpack.c.l.b16 %v2826
      %v3133 = vunpack.c.l.b16 %v2827
      %v3134 = vunpack.c.l.b16 %v2828
      %v3135 = vunpack.c.l.b16 %v2829
      %v3136 = vpack.c.b16 %v3125, %v3124
      %v3137 = vpack.c.b16 %v3127, %v3126
      %v3138 = vpack.c.b16 %v3129, %v3128
      %v3139 = vpack.c.b16 %v3131, %v3130
      %v3140 = vpack.c.b16 %v3133, %v3132
      %v3141 = vpack.c.b16 %v3135, %v3134
      %3142 = vrot.lane.b32.xlu0 %v3136, 120
      %v3143 = vpop.permute.xlu0 %3142
      %3144 = vrot.lane.b32.xlu0 %v3137, 120
      %v3145 = vpop.permute.xlu0 %3144
      %3146 = vrot.lane.b32.xlu0 %v3138, 120
      %v3147 = vpop.permute.xlu0 %3146
      %3148 = vrot.lane.b32.xlu0 %v3139, 120
      %v3149 = vpop.permute.xlu0 %3148
      %3150 = vrot.lane.b32.xlu0 %v3140, 120
      %v3151 = vpop.permute.xlu0 %3150
      %3152 = vrot.lane.b32.xlu0 %v3141, 120
      %v3153 = vpop.permute.xlu0 %3152
      %v3172 = vunpack.c.l.b16 %v2842
      %v3173 = vunpack.c.l.b16 %v2843
      %v3174 = vunpack.c.l.b16 %v2844
      %v3175 = vunpack.c.l.b16 %v2845
      %v3176 = vunpack.c.l.b16 %v2846
      %v3177 = vunpack.c.l.b16 %v2847
      %v3178 = vunpack.c.l.b16 %v2848
      %v3179 = vunpack.c.l.b16 %v2849
      %v3180 = vunpack.c.l.b16 %v2850
      %v3181 = vunpack.c.l.b16 %v2851
      %v3182 = vunpack.c.l.b16 %v2852
      %v3183 = vunpack.c.l.b16 %v2853
      %v3184 = vpack.c.b16 %v3173, %v3172
      %v3185 = vpack.c.b16 %v3175, %v3174
      %v3186 = vpack.c.b16 %v3177, %v3176
      %v3187 = vpack.c.b16 %v3179, %v3178
      %v3188 = vpack.c.b16 %v3181, %v3180
      %v3189 = vpack.c.b16 %v3183, %v3182
      %3190 = vrot.lane.b32.xlu0 %v3184, 119
      %v3191 = vpop.permute.xlu0 %3190
      %3192 = vrot.lane.b32.xlu0 %v3185, 119
      %v3193 = vpop.permute.xlu0 %3192
      %3194 = vrot.lane.b32.xlu0 %v3186, 119
      %v3195 = vpop.permute.xlu0 %3194
      %3196 = vrot.lane.b32.xlu0 %v3187, 119
      %v3197 = vpop.permute.xlu0 %3196
      %3198 = vrot.lane.b32.xlu0 %v3188, 119
      %v3199 = vpop.permute.xlu0 %3198
      %3200 = vrot.lane.b32.xlu0 %v3189, 119
      %v3201 = vpop.permute.xlu0 %3200
      %v3220 = vunpack.c.l.b16 %v2866
      %v3221 = vunpack.c.l.b16 %v2867
      %v3222 = vunpack.c.l.b16 %v2868
      %v3223 = vunpack.c.l.b16 %v2869
      %v3224 = vunpack.c.l.b16 %v2870
      %v3225 = vunpack.c.l.b16 %v2871
      %v3226 = vunpack.c.l.b16 %v2872
      %v3227 = vunpack.c.l.b16 %v2873
      %v3228 = vunpack.c.l.b16 %v2874
      %v3229 = vunpack.c.l.b16 %v2875
      %v3230 = vunpack.c.l.b16 %v2876
      %v3231 = vunpack.c.l.b16 %v2877
      %v3232 = vpack.c.b16 %v3221, %v3220
      %v3233 = vpack.c.b16 %v3223, %v3222
      %v3234 = vpack.c.b16 %v3225, %v3224
      %v3235 = vpack.c.b16 %v3227, %v3226
      %v3236 = vpack.c.b16 %v3229, %v3228
      %v3237 = vpack.c.b16 %v3231, %v3230
      %3238 = vrot.lane.b32.xlu0 %v3232, 118
      %v3239 = vpop.permute.xlu0 %3238
      %3240 = vrot.lane.b32.xlu0 %v3233, 118
      %v3241 = vpop.permute.xlu0 %3240
      %3242 = vrot.lane.b32.xlu0 %v3234, 118
      %v3243 = vpop.permute.xlu0 %3242
      %3244 = vrot.lane.b32.xlu0 %v3235, 118
      %v3245 = vpop.permute.xlu0 %3244
      %3246 = vrot.lane.b32.xlu0 %v3236, 118
      %v3247 = vpop.permute.xlu0 %3246
      %3248 = vrot.lane.b32.xlu0 %v3237, 118
      %v3249 = vpop.permute.xlu0 %3248
      %v3304 = vunpack.c.l.b16 %v1036
      %v3305 = vunpack.c.h.b16 %v1036
      %v3306 = vunpack.c.l.b16 %v1037
      %v3307 = vunpack.c.h.b16 %v1037
      %v3308 = vunpack.c.l.b16 %v1038
      %v3309 = vunpack.c.h.b16 %v1038
      %v3310 = vunpack.c.l.b16 %v1039
      %v3311 = vunpack.c.l.b16 %v1040
      %v3312 = vunpack.c.h.b16 %v1040
      %v3313 = vunpack.c.l.b16 %v1041
      %v3314 = vunpack.c.h.b16 %v1041
      %v3315 = vunpack.c.l.b16 %v1042
      %v3316 = vunpack.c.h.b16 %v1042
      %v3317 = vunpack.c.l.b16 %v1043
      %v3318 = vunpack.c.l.b16 %v1044
      %v3319 = vunpack.c.h.b16 %v1044
      %v3320 = vunpack.c.l.b16 %v1045
      %v3321 = vunpack.c.h.b16 %v1045
      %v3322 = vunpack.c.l.b16 %v1046
      %v3323 = vunpack.c.h.b16 %v1046
      %v3324 = vunpack.c.l.b16 %v1047
      %v3325 = vunpack.c.l.b16 %v1048
      %v3326 = vunpack.c.h.b16 %v1048
      %v3327 = vunpack.c.l.b16 %v1049
      %v3328 = vunpack.c.h.b16 %v1049
      %v3329 = vunpack.c.l.b16 %v1050
      %v3330 = vunpack.c.h.b16 %v1050
      %v3331 = vunpack.c.l.b16 %v1051
      %v3332 = vunpack.c.l.b16 %v1052
      %v3333 = vunpack.c.h.b16 %v1052
      %v3334 = vunpack.c.l.b16 %v1053
      %v3335 = vunpack.c.h.b16 %v1053
      %v3336 = vunpack.c.l.b16 %v1054
      %v3337 = vunpack.c.h.b16 %v1054
      %v3338 = vunpack.c.l.b16 %v1055
      %v3339 = vunpack.c.l.b16 %v1056
      %v3340 = vunpack.c.h.b16 %v1056
      %v3341 = vunpack.c.l.b16 %v1057
      %v3342 = vunpack.c.h.b16 %v1057
      %v3343 = vunpack.c.l.b16 %v1058
      %v3344 = vunpack.c.h.b16 %v1058
      %v3345 = vunpack.c.l.b16 %v1059
      %v3346 = vunpack.c.l.b16 %v1060
      %v3347 = vunpack.c.h.b16 %v1060
      %v3348 = vunpack.c.l.b16 %v1061
      %v3349 = vunpack.c.h.b16 %v1061
      %v3350 = vunpack.c.l.b16 %v1062
      %v3351 = vunpack.c.h.b16 %v1062
      %v3352 = vunpack.c.l.b16 %v1063
      %v3353 = vunpack.c.l.b16 %v1064
      %v3354 = vunpack.c.h.b16 %v1064
      %v3355 = vunpack.c.l.b16 %v1065
      %v3356 = vunpack.c.h.b16 %v1065
      %v3357 = vunpack.c.l.b16 %v1066
      %v3358 = vunpack.c.h.b16 %v1066
      %v3359 = vunpack.c.l.b16 %v1067
      %v3360 = vunpack.c.l.b16 %v1068
      %v3361 = vunpack.c.h.b16 %v1068
      %v3362 = vunpack.c.l.b16 %v1069
      %v3363 = vunpack.c.h.b16 %v1069
      %v3364 = vunpack.c.l.b16 %v1070
      %v3365 = vunpack.c.h.b16 %v1070
      %v3366 = vunpack.c.l.b16 %v1071
      %v3367 = vunpack.c.l.b16 %v1072
      %v3368 = vunpack.c.h.b16 %v1072
      %v3369 = vunpack.c.l.b16 %v1073
      %v3370 = vunpack.c.h.b16 %v1073
      %v3371 = vunpack.c.l.b16 %v1074
      %v3372 = vunpack.c.h.b16 %v1074
      %v3373 = vunpack.c.l.b16 %v1075
      %v3374 = vunpack.c.l.b16 %v1076
      %v3375 = vunpack.c.h.b16 %v1076
      %v3376 = vunpack.c.l.b16 %v1077
      %v3377 = vunpack.c.h.b16 %v1077
      %v3378 = vunpack.c.l.b16 %v1078
      %v3379 = vunpack.c.h.b16 %v1078
      %v3380 = vunpack.c.l.b16 %v1079
      %v3381 = vunpack.c.l.b16 %v1080
      %v3382 = vunpack.c.h.b16 %v1080
      %v3383 = vunpack.c.l.b16 %v1081
      %v3384 = vunpack.c.h.b16 %v1081
      %v3385 = vunpack.c.l.b16 %v1082
      %v3386 = vunpack.c.h.b16 %v1082
      %v3387 = vunpack.c.l.b16 %v1083
      %v3388 = vpack.c.b16 %v3311, %v3304
      %v3389 = vpack.c.b16 %v3312, %v3305
      %v3390 = vpack.c.b16 %v3313, %v3306
      %v3391 = vpack.c.b16 %v3314, %v3307
      %v3392 = vpack.c.b16 %v3315, %v3308
      %v3393 = vpack.c.b16 %v3316, %v3309
      %v3394 = vpack.c.b16 %v3317, %v3310
      %v3395 = vpack.c.b16 %v3325, %v3318
      %v3396 = vpack.c.b16 %v3326, %v3319
      %v3397 = vpack.c.b16 %v3327, %v3320
      %v3398 = vpack.c.b16 %v3328, %v3321
      %v3399 = vpack.c.b16 %v3329, %v3322
      %v3400 = vpack.c.b16 %v3330, %v3323
      %v3401 = vpack.c.b16 %v3331, %v3324
      %v3402 = vpack.c.b16 %v3339, %v3332
      %v3403 = vpack.c.b16 %v3340, %v3333
      %v3404 = vpack.c.b16 %v3341, %v3334
      %v3405 = vpack.c.b16 %v3342, %v3335
      %v3406 = vpack.c.b16 %v3343, %v3336
      %v3407 = vpack.c.b16 %v3344, %v3337
      %v3408 = vpack.c.b16 %v3345, %v3338
      %v3409 = vpack.c.b16 %v3353, %v3346
      %v3410 = vpack.c.b16 %v3354, %v3347
      %v3411 = vpack.c.b16 %v3355, %v3348
      %v3412 = vpack.c.b16 %v3356, %v3349
      %v3413 = vpack.c.b16 %v3357, %v3350
      %v3414 = vpack.c.b16 %v3358, %v3351
      %v3415 = vpack.c.b16 %v3359, %v3352
      %v3416 = vpack.c.b16 %v3367, %v3360
      %v3417 = vpack.c.b16 %v3368, %v3361
      %v3418 = vpack.c.b16 %v3369, %v3362
      %v3419 = vpack.c.b16 %v3370, %v3363
      %v3420 = vpack.c.b16 %v3371, %v3364
      %v3421 = vpack.c.b16 %v3372, %v3365
      %v3422 = vpack.c.b16 %v3373, %v3366
      %v3423 = vpack.c.b16 %v3381, %v3374
      %v3424 = vpack.c.b16 %v3382, %v3375
      %v3425 = vpack.c.b16 %v3383, %v3376
      %v3426 = vpack.c.b16 %v3384, %v3377
      %v3427 = vpack.c.b16 %v3385, %v3378
      %v3428 = vpack.c.b16 %v3386, %v3379
      %v3429 = vpack.c.b16 %v3387, %v3380
      %v3467 = vsel %vm2304, %v3394, 0
      %v3470 = vsel %vm2304, %v3401, 0
      %v3473 = vsel %vm2304, %v3408, 0
      %v3476 = vsel %vm2304, %v3415, 0
      %v3479 = vsel %vm2304, %v3422, 0
      %v3482 = vsel %vm2304, %v3429, 0
      %3484 = vmatpush.bf16.msra.mxu0 %v2947
      %3485 = vmatpush.bf16.msra.mxu0 %v2945
      %3486 = vmatpush.bf16.msra.mxu0 %v2907
      %3487 = vmatpush.bf16.msra.mxu0 %v2906
      %3488 = vmatpush.bf16.msra.mxu0 %v2905
      %3489 = vmatpush.bf16.msra.mxu0 %v2904
      %3490 = vmatpush.bf16.msra.mxu0 %v2903
      %3491 = vmatpush.bf16.msra.mxu0 %v2902
      %3492 = vmatmul.bf16.gmra.mxu0 %v3388
      %v3493 = vpop.f32.mrf.mxu0
      %v3494 = vadd.f32 0.0, %v3493
      %v3495 = vpop.f32.mrf.mxu0
      %v3496 = vadd.f32 0.0, %v3495
      %3497 = vmatmul.bf16.gmra.mxu0 %v3395
      %v3498 = vpop.f32.mrf.mxu0
      %v3499 = vadd.f32 0.0, %v3498
      %v3500 = vpop.f32.mrf.mxu0
      %v3501 = vadd.f32 0.0, %v3500
      %3502 = vmatmul.bf16.gmra.mxu0 %v3402
      %v3503 = vpop.f32.mrf.mxu0
      %v3504 = vadd.f32 0.0, %v3503
      %v3505 = vpop.f32.mrf.mxu0
      %v3506 = vadd.f32 0.0, %v3505
      %3507 = vmatmul.bf16.gmra.mxu0 %v3409
      %v3508 = vpop.f32.mrf.mxu0
      %v3509 = vadd.f32 0.0, %v3508
      %v3510 = vpop.f32.mrf.mxu0
      %v3511 = vadd.f32 0.0, %v3510
      %3512 = vmatmul.bf16.gmra.mxu0 %v3416
      %v3513 = vpop.f32.mrf.mxu0
      %v3514 = vadd.f32 0.0, %v3513
      %v3515 = vpop.f32.mrf.mxu0
      %v3516 = vadd.f32 0.0, %v3515
      %3517 = vmatmul.bf16.gmra.mxu0 %v3423
      %v3518 = vpop.f32.mrf.mxu0
      %v3519 = vadd.f32 0.0, %v3518
      %v3520 = vpop.f32.mrf.mxu0
      %v3521 = vadd.f32 0.0, %v3520
      %3522 = vdwg.mxu0
      %3523 = vmatpush.bf16.msra.mxu0 %v2999
      %3524 = vmatpush.bf16.msra.mxu0 %v2997
      %3525 = vmatpush.bf16.msra.mxu0 %v2995
      %3526 = vmatpush.bf16.msra.mxu0 %v2993
      %3527 = vmatpush.bf16.msra.mxu0 %v2955
      %3528 = vmatpush.bf16.msra.mxu0 %v2953
      %3529 = vmatpush.bf16.msra.mxu0 %v2951
      %3530 = vmatpush.bf16.msra.mxu0 %v2949
      %3531 = vmatmul.bf16.gmra.mxu0 %v3389
      %v3532 = vpop.f32.mrf.mxu0
      %v3533 = vadd.f32 %v3494, %v3532
      %v3534 = vpop.f32.mrf.mxu0
      %v3535 = vadd.f32 %v3496, %v3534
      %3536 = vmatmul.bf16.gmra.mxu0 %v3396
      %v3537 = vpop.f32.mrf.mxu0
      %v3538 = vadd.f32 %v3499, %v3537
      %v3539 = vpop.f32.mrf.mxu0
      %v3540 = vadd.f32 %v3501, %v3539
      %3541 = vmatmul.bf16.gmra.mxu0 %v3403
      %v3542 = vpop.f32.mrf.mxu0
      %v3543 = vadd.f32 %v3504, %v3542
      %v3544 = vpop.f32.mrf.mxu0
      %v3545 = vadd.f32 %v3506, %v3544
      %3546 = vmatmul.bf16.gmra.mxu0 %v3410
      %v3547 = vpop.f32.mrf.mxu0
      %v3548 = vadd.f32 %v3509, %v3547
      %v3549 = vpop.f32.mrf.mxu0
      %v3550 = vadd.f32 %v3511, %v3549
      %3551 = vmatmul.bf16.gmra.mxu0 %v3417
      %v3552 = vpop.f32.mrf.mxu0
      %v3553 = vadd.f32 %v3514, %v3552
      %v3554 = vpop.f32.mrf.mxu0
      %v3555 = vadd.f32 %v3516, %v3554
      %3556 = vmatmul.bf16.gmra.mxu0 %v3424
      %v3557 = vpop.f32.mrf.mxu0
      %v3558 = vadd.f32 %v3519, %v3557
      %v3559 = vpop.f32.mrf.mxu0
      %v3560 = vadd.f32 %v3521, %v3559
      %3561 = vdwg.mxu0
      %3562 = vmatpush.bf16.msra.mxu0 %v3051
      %3563 = vmatpush.bf16.msra.mxu0 %v3049
      %3564 = vmatpush.bf16.msra.mxu0 %v3047
      %3565 = vmatpush.bf16.msra.mxu0 %v3045
      %3566 = vmatpush.bf16.msra.mxu0 %v3043
      %3567 = vmatpush.bf16.msra.mxu0 %v3041
      %3568 = vmatpush.bf16.msra.mxu0 %v3003
      %3569 = vmatpush.bf16.msra.mxu0 %v3001
      %3570 = vmatmul.bf16.gmra.mxu0 %v3390
      %v3571 = vpop.f32.mrf.mxu0
      %v3572 = vadd.f32 %v3533, %v3571
      %v3573 = vpop.f32.mrf.mxu0
      %v3574 = vadd.f32 %v3535, %v3573
      %3575 = vmatmul.bf16.gmra.mxu0 %v3397
      %v3576 = vpop.f32.mrf.mxu0
      %v3577 = vadd.f32 %v3538, %v3576
      %v3578 = vpop.f32.mrf.mxu0
      %v3579 = vadd.f32 %v3540, %v3578
      %3580 = vmatmul.bf16.gmra.mxu0 %v3404
      %v3581 = vpop.f32.mrf.mxu0
      %v3582 = vadd.f32 %v3543, %v3581
      %v3583 = vpop.f32.mrf.mxu0
      %v3584 = vadd.f32 %v3545, %v3583
      %3585 = vmatmul.bf16.gmra.mxu0 %v3411
      %v3586 = vpop.f32.mrf.mxu0
      %v3587 = vadd.f32 %v3548, %v3586
      %v3588 = vpop.f32.mrf.mxu0
      %v3589 = vadd.f32 %v3550, %v3588
      %3590 = vmatmul.bf16.gmra.mxu0 %v3418
      %v3591 = vpop.f32.mrf.mxu0
      %v3592 = vadd.f32 %v3553, %v3591
      %v3593 = vpop.f32.mrf.mxu0
      %v3594 = vadd.f32 %v3555, %v3593
      %3595 = vmatmul.bf16.gmra.mxu0 %v3425
      %v3596 = vpop.f32.mrf.mxu0
      %v3597 = vadd.f32 %v3558, %v3596
      %v3598 = vpop.f32.mrf.mxu0
      %v3599 = vadd.f32 %v3560, %v3598
      %3600 = vdwg.mxu0
      %3601 = vmatpush.bf16.msra.mxu0 %v3097
      %3602 = vmatpush.bf16.msra.mxu0 %v3095
      %3603 = vmatpush.bf16.msra.mxu0 %v2637
      %3604 = vmatpush.bf16.msra.mxu0 %v2636
      %3605 = vmatpush.bf16.msra.mxu0 %v2635
      %3606 = vmatpush.bf16.msra.mxu0 %v2634
      %3607 = vmatpush.bf16.msra.mxu0 %v2633
      %3608 = vmatpush.bf16.msra.mxu0 %v2632
      %3609 = vmatmul.bf16.gmra.mxu0 %v3391
      %v3610 = vpop.f32.mrf.mxu0
      %v3611 = vadd.f32 %v3572, %v3610
      %v3612 = vpop.f32.mrf.mxu0
      %v3613 = vadd.f32 %v3574, %v3612
      %3614 = vmatmul.bf16.gmra.mxu0 %v3398
      %v3615 = vpop.f32.mrf.mxu0
      %v3616 = vadd.f32 %v3577, %v3615
      %v3617 = vpop.f32.mrf.mxu0
      %v3618 = vadd.f32 %v3579, %v3617
      %3619 = vmatmul.bf16.gmra.mxu0 %v3405
      %v3620 = vpop.f32.mrf.mxu0
      %v3621 = vadd.f32 %v3582, %v3620
      %v3622 = vpop.f32.mrf.mxu0
      %v3623 = vadd.f32 %v3584, %v3622
      %3624 = vmatmul.bf16.gmra.mxu0 %v3412
      %v3625 = vpop.f32.mrf.mxu0
      %v3626 = vadd.f32 %v3587, %v3625
      %v3627 = vpop.f32.mrf.mxu0
      %v3628 = vadd.f32 %v3589, %v3627
      %3629 = vmatmul.bf16.gmra.mxu0 %v3419
      %v3630 = vpop.f32.mrf.mxu0
      %v3631 = vadd.f32 %v3592, %v3630
      %v3632 = vpop.f32.mrf.mxu0
      %v3633 = vadd.f32 %v3594, %v3632
      %3634 = vmatmul.bf16.gmra.mxu0 %v3426
      %v3635 = vpop.f32.mrf.mxu0
      %v3636 = vadd.f32 %v3597, %v3635
      %v3637 = vpop.f32.mrf.mxu0
      %v3638 = vadd.f32 %v3599, %v3637
      %3639 = vdwg.mxu0
      %3640 = vmatpush.bf16.msra.mxu0 %v3149
      %3641 = vmatpush.bf16.msra.mxu0 %v3147
      %3642 = vmatpush.bf16.msra.mxu0 %v3145
      %3643 = vmatpush.bf16.msra.mxu0 %v3143
      %3644 = vmatpush.bf16.msra.mxu0 %v3105
      %3645 = vmatpush.bf16.msra.mxu0 %v3103
      %3646 = vmatpush.bf16.msra.mxu0 %v3101
      %3647 = vmatpush.bf16.msra.mxu0 %v3099
      %3648 = vmatmul.bf16.gmra.mxu0 %v3392
      %v3649 = vpop.f32.mrf.mxu0
      %v3650 = vadd.f32 %v3611, %v3649
      %v3651 = vpop.f32.mrf.mxu0
      %v3652 = vadd.f32 %v3613, %v3651
      %3653 = vmatmul.bf16.gmra.mxu0 %v3399
      %v3654 = vpop.f32.mrf.mxu0
      %v3655 = vadd.f32 %v3616, %v3654
      %v3656 = vpop.f32.mrf.mxu0
      %v3657 = vadd.f32 %v3618, %v3656
      %3658 = vmatmul.bf16.gmra.mxu0 %v3406
      %v3659 = vpop.f32.mrf.mxu0
      %v3660 = vadd.f32 %v3621, %v3659
      %v3661 = vpop.f32.mrf.mxu0
      %v3662 = vadd.f32 %v3623, %v3661
      %3663 = vmatmul.bf16.gmra.mxu0 %v3413
      %v3664 = vpop.f32.mrf.mxu0
      %v3665 = vadd.f32 %v3626, %v3664
      %v3666 = vpop.f32.mrf.mxu0
      %v3667 = vadd.f32 %v3628, %v3666
      %3668 = vmatmul.bf16.gmra.mxu0 %v3420
      %v3669 = vpop.f32.mrf.mxu0
      %v3670 = vadd.f32 %v3631, %v3669
      %v3671 = vpop.f32.mrf.mxu0
      %v3672 = vadd.f32 %v3633, %v3671
      %3673 = vmatmul.bf16.gmra.mxu0 %v3427
      %v3674 = vpop.f32.mrf.mxu0
      %v3675 = vadd.f32 %v3636, %v3674
      %v3676 = vpop.f32.mrf.mxu0
      %v3677 = vadd.f32 %v3638, %v3676
      %3678 = vdwg.mxu0
      %3679 = vmatpush.bf16.msra.mxu0 %v3201
      %3680 = vmatpush.bf16.msra.mxu0 %v3199
      %3681 = vmatpush.bf16.msra.mxu0 %v3197
      %3682 = vmatpush.bf16.msra.mxu0 %v3195
      %3683 = vmatpush.bf16.msra.mxu0 %v3193
      %3684 = vmatpush.bf16.msra.mxu0 %v3191
      %3685 = vmatpush.bf16.msra.mxu0 %v3153
      %3686 = vmatpush.bf16.msra.mxu0 %v3151
      %3687 = vmatmul.bf16.gmra.mxu0 %v3393
      %v3688 = vpop.f32.mrf.mxu0
      %v3689 = vadd.f32 %v3650, %v3688
      %v3690 = vpop.f32.mrf.mxu0
      %v3691 = vadd.f32 %v3652, %v3690
      %3692 = vmatmul.bf16.gmra.mxu0 %v3400
      %v3693 = vpop.f32.mrf.mxu0
      %v3694 = vadd.f32 %v3655, %v3693
      %v3695 = vpop.f32.mrf.mxu0
      %v3696 = vadd.f32 %v3657, %v3695
      %3697 = vmatmul.bf16.gmra.mxu0 %v3407
      %v3698 = vpop.f32.mrf.mxu0
      %v3699 = vadd.f32 %v3660, %v3698
      %v3700 = vpop.f32.mrf.mxu0
      %v3701 = vadd.f32 %v3662, %v3700
      %3702 = vmatmul.bf16.gmra.mxu0 %v3414
      %v3703 = vpop.f32.mrf.mxu0
      %v3704 = vadd.f32 %v3665, %v3703
      %v3705 = vpop.f32.mrf.mxu0
      %v3706 = vadd.f32 %v3667, %v3705
      %3707 = vmatmul.bf16.gmra.mxu0 %v3421
      %v3708 = vpop.f32.mrf.mxu0
      %v3709 = vadd.f32 %v3670, %v3708
      %v3710 = vpop.f32.mrf.mxu0
      %v3711 = vadd.f32 %v3672, %v3710
      %3712 = vmatmul.bf16.gmra.mxu0 %v3428
      %v3713 = vpop.f32.mrf.mxu0
      %v3714 = vadd.f32 %v3675, %v3713
      %v3715 = vpop.f32.mrf.mxu0
      %v3716 = vadd.f32 %v3677, %v3715
      %3717 = vdwg.mxu0
      %3718 = vmatpush.bf16.msra.mxu0 0
      %3719 = vmatpush.bf16.msra.mxu0 0
      %3720 = vmatpush.bf16.msra.mxu0 %v3249
      %3721 = vmatpush.bf16.msra.mxu0 %v3247
      %3722 = vmatpush.bf16.msra.mxu0 %v3245
      %3723 = vmatpush.bf16.msra.mxu0 %v3243
      %3724 = vmatpush.bf16.msra.mxu0 %v3241
      %3725 = vmatpush.bf16.msra.mxu0 %v3239
      %3726 = vmatmul.bf16.gmra.mxu0 %v3467
      %v3727 = vpop.f32.mrf.mxu0
      %v3728 = vadd.f32 %v3689, %v3727
      %v3729 = vpop.f32.mrf.mxu0
      %v3730 = vadd.f32 %v3691, %v3729
      %3731 = vmatmul.bf16.gmra.mxu0 %v3470
      %v3732 = vpop.f32.mrf.mxu0
      %v3733 = vadd.f32 %v3694, %v3732
      %v3734 = vpop.f32.mrf.mxu0
      %v3735 = vadd.f32 %v3696, %v3734
      %3736 = vmatmul.bf16.gmra.mxu0 %v3473
      %v3737 = vpop.f32.mrf.mxu0
      %v3738 = vadd.f32 %v3699, %v3737
      %v3739 = vpop.f32.mrf.mxu0
      %v3740 = vadd.f32 %v3701, %v3739
      %3741 = vmatmul.bf16.gmra.mxu0 %v3476
      %v3742 = vpop.f32.mrf.mxu0
      %v3743 = vadd.f32 %v3704, %v3742
      %v3744 = vpop.f32.mrf.mxu0
      %v3745 = vadd.f32 %v3706, %v3744
      %3746 = vmatmul.bf16.gmra.mxu0 %v3479
      %v3747 = vpop.f32.mrf.mxu0
      %v3748 = vadd.f32 %v3709, %v3747
      %v3749 = vpop.f32.mrf.mxu0
      %v3750 = vadd.f32 %v3711, %v3749
      %3751 = vmatmul.bf16.gmra.mxu0 %v3482
      %v3752 = vpop.f32.mrf.mxu0
      %v3753 = vadd.f32 %v3714, %v3752
      %v3754 = vpop.f32.mrf.mxu0
      %v3755 = vadd.f32 %v3716, %v3754
      %3756 = vdwg.mxu0
      %vm3757 = vcmp.ge.f32.partialorder %v3728, 0.0
      %vm3758 = vcmp.ge.f32.partialorder %v3730, 0.0
      %vm3759 = vcmp.ge.f32.partialorder %v3733, 0.0
      %vm3760 = vcmp.ge.f32.partialorder %v3735, 0.0
      %vm3761 = vcmp.ge.f32.partialorder %v3738, 0.0
      %vm3762 = vcmp.ge.f32.partialorder %v3740, 0.0
      %vm3763 = vcmp.ge.f32.partialorder %v3743, 0.0
      %vm3764 = vcmp.ge.f32.partialorder %v3745, 0.0
      %vm3765 = vcmp.ge.f32.partialorder %v3748, 0.0
      %vm3766 = vcmp.ge.f32.partialorder %v3750, 0.0
      %vm3767 = vcmp.ge.f32.partialorder %v3753, 0.0
      %vm3768 = vcmp.ge.f32.partialorder %v3755, 0.0
      %v3769 = vmul.f32 %v3728, 0.2
      %v3770 = vmul.f32 %v3730, 0.2
      %v3771 = vmul.f32 %v3733, 0.2
      %v3772 = vmul.f32 %v3735, 0.2
      %v3773 = vmul.f32 %v3738, 0.2
      %v3774 = vmul.f32 %v3740, 0.2
      %v3775 = vmul.f32 %v3743, 0.2
      %v3776 = vmul.f32 %v3745, 0.2
      %v3777 = vmul.f32 %v3748, 0.2
      %v3778 = vmul.f32 %v3750, 0.2
      %v3779 = vmul.f32 %v3753, 0.2
      %v3780 = vmul.f32 %v3755, 0.2
      %v3781 = vsel %vm3757, %v3728, %v3769
      %v3782 = vsel %vm3758, %v3730, %v3770
      %v3783 = vsel %vm3759, %v3733, %v3771
      %v3784 = vsel %vm3760, %v3735, %v3772
      %v3785 = vsel %vm3761, %v3738, %v3773
      %v3786 = vsel %vm3762, %v3740, %v3774
      %v3787 = vsel %vm3763, %v3743, %v3775
      %v3788 = vsel %vm3764, %v3745, %v3776
      %v3789 = vsel %vm3765, %v3748, %v3777
      %v3790 = vsel %vm3766, %v3750, %v3778
      %v3791 = vsel %vm3767, %v3753, %v3779
      %v3792 = vsel %vm3768, %v3755, %v3780
      %v3793 = vpack.c.bf16 %v3781, %v3781
      %v3794 = vpack.c.bf16 %v3782, %v3782
      %v3795 = vpack.c.bf16 %v3783, %v3783
      %v3796 = vpack.c.bf16 %v3784, %v3784
      %v3797 = vpack.c.bf16 %v3785, %v3785
      %v3798 = vpack.c.bf16 %v3786, %v3786
      %v3799 = vpack.c.bf16 %v3787, %v3787
      %v3800 = vpack.c.bf16 %v3788, %v3788
      %v3801 = vpack.c.bf16 %v3789, %v3789
      %v3802 = vpack.c.bf16 %v3790, %v3790
      %v3803 = vpack.c.bf16 %v3791, %v3791
      %v3804 = vpack.c.bf16 %v3792, %v3792
      %v3817 = vunpack.c.l.b16 %v3793
      %v3818 = vunpack.c.l.b16 %v3794
      %v3819 = vunpack.c.l.b16 %v3795
      %v3820 = vunpack.c.l.b16 %v3796
      %v3821 = vunpack.c.l.b16 %v3797
      %v3822 = vunpack.c.l.b16 %v3798
      %v3823 = vunpack.c.l.b16 %v3799
      %v3824 = vunpack.c.l.b16 %v3800
      %v3825 = vunpack.c.l.b16 %v3801
      %v3826 = vunpack.c.l.b16 %v3802
      %v3827 = vunpack.c.l.b16 %v3803
      %v3828 = vunpack.c.l.b16 %v3804
      %v3829 = vpack.c.b16 %v3818, %v3817
      %v3830 = vpack.c.b16 %v3820, %v3819
      %v3831 = vpack.c.b16 %v3822, %v3821
      %v3832 = vpack.c.b16 %v3824, %v3823
      %v3833 = vpack.c.b16 %v3826, %v3825
      %v3834 = vpack.c.b16 %v3828, %v3827
      %3835 = vrot.lane.b32.xlu0 %v3829, 5
      %v3836 = vpop.permute.xlu0 %3835
      %3837 = vrot.lane.b32.xlu0 %v3830, 5
      %v3838 = vpop.permute.xlu0 %3837
      %3839 = vrot.lane.b32.xlu0 %v3831, 5
      %v3840 = vpop.permute.xlu0 %3839
      %3841 = vrot.lane.b32.xlu0 %v3832, 5
      %v3842 = vpop.permute.xlu0 %3841
      %3843 = vrot.lane.b32.xlu0 %v3833, 5
      %v3844 = vpop.permute.xlu0 %3843
      %3845 = vrot.lane.b32.xlu0 %v3834, 5
      %v3846 = vpop.permute.xlu0 %3845
      %v3848 = vsel %vm1357, 0, %v3836
      %v3850 = vsel %vm1357, 0, %v3838
      %v3852 = vsel %vm1357, 0, %v3840
      %v3854 = vsel %vm1357, 0, %v3842
      %v3856 = vsel %vm1357, 0, %v3844
      %v3858 = vsel %vm1357, 0, %v3846
      %v3859 = vsel %vm1371, %v3848, 0
      %v3861 = vsel %vm1371, %v3850, 0
      %v3863 = vsel %vm1371, %v3852, 0
      %v3865 = vsel %vm1371, %v3854, 0
      %v3867 = vsel %vm1371, %v3856, 0
      %v3869 = vsel %vm1371, %v3858, 0
      %v3871 = vunpack.c.l.bf16 %v3859
      %v3872 = vunpack.c.h.bf16 %v3859
      %v3873 = vunpack.c.l.bf16 %v3861
      %v3874 = vunpack.c.h.bf16 %v3861
      %v3875 = vunpack.c.l.bf16 %v3863
      %v3876 = vunpack.c.h.bf16 %v3863
      %v3877 = vunpack.c.l.bf16 %v3865
      %v3878 = vunpack.c.h.bf16 %v3865
      %v3879 = vunpack.c.l.bf16 %v3867
      %v3880 = vunpack.c.h.bf16 %v3867
      %v3881 = vunpack.c.l.bf16 %v3869
      %v3882 = vunpack.c.h.bf16 %v3869
      %v3883 = vmul.f32 %v3871, %v1400
      %v3884 = vmul.f32 %v3872, %v1400
      %v3885 = vmul.f32 %v3873, %v1400
      %v3886 = vmul.f32 %v3874, %v1400
      %v3887 = vmul.f32 %v3875, %v1400
      %v3888 = vmul.f32 %v3876, %v1400
      %v3889 = vmul.f32 %v3877, %v1400
      %v3890 = vmul.f32 %v3878, %v1400
      %v3891 = vmul.f32 %v3879, %v1400
      %v3892 = vmul.f32 %v3880, %v1400
      %v3893 = vmul.f32 %v3881, %v1400
      %v3894 = vmul.f32 %v3882, %v1400
      %v3895 = vpack.c.bf16 %v3883, %v3883
      %v3896 = vpack.c.bf16 %v3884, %v3884
      %v3897 = vpack.c.bf16 %v3885, %v3885
      %v3898 = vpack.c.bf16 %v3886, %v3886
      %v3899 = vpack.c.bf16 %v3887, %v3887
      %v3900 = vpack.c.bf16 %v3888, %v3888
      %v3901 = vpack.c.bf16 %v3889, %v3889
      %v3902 = vpack.c.bf16 %v3890, %v3890
      %v3903 = vpack.c.bf16 %v3891, %v3891
      %v3904 = vpack.c.bf16 %v3892, %v3892
      %v3905 = vpack.c.bf16 %v3893, %v3893
      %v3906 = vpack.c.bf16 %v3894, %v3894
      %v3907 = vmul.f32 %v3871, %v1432
      %v3908 = vmul.f32 %v3872, %v1432
      %v3909 = vmul.f32 %v3873, %v1432
      %v3910 = vmul.f32 %v3874, %v1432
      %v3911 = vmul.f32 %v3875, %v1432
      %v3912 = vmul.f32 %v3876, %v1432
      %v3913 = vmul.f32 %v3877, %v1432
      %v3914 = vmul.f32 %v3878, %v1432
      %v3915 = vmul.f32 %v3879, %v1432
      %v3916 = vmul.f32 %v3880, %v1432
      %v3917 = vmul.f32 %v3881, %v1432
      %v3918 = vmul.f32 %v3882, %v1432
      %v3919 = vpack.c.bf16 %v3907, %v3907
      %v3920 = vpack.c.bf16 %v3908, %v3908
      %v3921 = vpack.c.bf16 %v3909, %v3909
      %v3922 = vpack.c.bf16 %v3910, %v3910
      %v3923 = vpack.c.bf16 %v3911, %v3911
      %v3924 = vpack.c.bf16 %v3912, %v3912
      %v3925 = vpack.c.bf16 %v3913, %v3913
      %v3926 = vpack.c.bf16 %v3914, %v3914
      %v3927 = vpack.c.bf16 %v3915, %v3915
      %v3928 = vpack.c.bf16 %v3916, %v3916
      %v3929 = vpack.c.bf16 %v3917, %v3917
      %v3930 = vpack.c.bf16 %v3918, %v3918
      %v3931 = vmul.f32 %v3871, %v1465
      %v3932 = vmul.f32 %v3872, %v1465
      %v3933 = vmul.f32 %v3873, %v1465
      %v3934 = vmul.f32 %v3874, %v1465
      %v3935 = vmul.f32 %v3875, %v1465
      %v3936 = vmul.f32 %v3876, %v1465
      %v3937 = vmul.f32 %v3877, %v1465
      %v3938 = vmul.f32 %v3878, %v1465
      %v3939 = vmul.f32 %v3879, %v1465
      %v3940 = vmul.f32 %v3880, %v1465
      %v3941 = vmul.f32 %v3881, %v1465
      %v3942 = vmul.f32 %v3882, %v1465
      %v3943 = vpack.c.bf16 %v3931, %v3931
      %v3944 = vpack.c.bf16 %v3932, %v3932
      %v3945 = vpack.c.bf16 %v3933, %v3933
      %v3946 = vpack.c.bf16 %v3934, %v3934
      %v3947 = vpack.c.bf16 %v3935, %v3935
      %v3948 = vpack.c.bf16 %v3936, %v3936
      %v3949 = vpack.c.bf16 %v3937, %v3937
      %v3950 = vpack.c.bf16 %v3938, %v3938
      %v3951 = vpack.c.bf16 %v3939, %v3939
      %v3952 = vpack.c.bf16 %v3940, %v3940
      %v3953 = vpack.c.bf16 %v3941, %v3941
      %v3954 = vpack.c.bf16 %v3942, %v3942
      %v3955 = vmul.f32 %v3871, %v1498
      %v3956 = vmul.f32 %v3872, %v1498
      %v3957 = vmul.f32 %v3873, %v1498
      %v3958 = vmul.f32 %v3874, %v1498
      %v3959 = vmul.f32 %v3875, %v1498
      %v3960 = vmul.f32 %v3876, %v1498
      %v3961 = vmul.f32 %v3877, %v1498
      %v3962 = vmul.f32 %v3878, %v1498
      %v3963 = vmul.f32 %v3879, %v1498
      %v3964 = vmul.f32 %v3880, %v1498
      %v3965 = vmul.f32 %v3881, %v1498
      %v3966 = vmul.f32 %v3882, %v1498
      %v3967 = vpack.c.bf16 %v3955, %v3955
      %v3968 = vpack.c.bf16 %v3956, %v3956
      %v3969 = vpack.c.bf16 %v3957, %v3957
      %v3970 = vpack.c.bf16 %v3958, %v3958
      %v3971 = vpack.c.bf16 %v3959, %v3959
      %v3972 = vpack.c.bf16 %v3960, %v3960
      %v3973 = vpack.c.bf16 %v3961, %v3961
      %v3974 = vpack.c.bf16 %v3962, %v3962
      %v3975 = vpack.c.bf16 %v3963, %v3963
      %v3976 = vpack.c.bf16 %v3964, %v3964
      %v3977 = vpack.c.bf16 %v3965, %v3965
      %v3978 = vpack.c.bf16 %v3966, %v3966
      %v3979 = vmul.f32 %v3871, %v1531
      %v3980 = vmul.f32 %v3872, %v1531
      %v3981 = vmul.f32 %v3873, %v1531
      %v3982 = vmul.f32 %v3874, %v1531
      %v3983 = vmul.f32 %v3875, %v1531
      %v3984 = vmul.f32 %v3876, %v1531
      %v3985 = vmul.f32 %v3877, %v1531
      %v3986 = vmul.f32 %v3878, %v1531
      %v3987 = vmul.f32 %v3879, %v1531
      %v3988 = vmul.f32 %v3880, %v1531
      %v3989 = vmul.f32 %v3881, %v1531
      %v3990 = vmul.f32 %v3882, %v1531
      %v3991 = vpack.c.bf16 %v3979, %v3979
      %v3992 = vpack.c.bf16 %v3980, %v3980
      %v3993 = vpack.c.bf16 %v3981, %v3981
      %v3994 = vpack.c.bf16 %v3982, %v3982
      %v3995 = vpack.c.bf16 %v3983, %v3983
      %v3996 = vpack.c.bf16 %v3984, %v3984
      %v3997 = vpack.c.bf16 %v3985, %v3985
      %v3998 = vpack.c.bf16 %v3986, %v3986
      %v3999 = vpack.c.bf16 %v3987, %v3987
      %v4000 = vpack.c.bf16 %v3988, %v3988
      %v4001 = vpack.c.bf16 %v3989, %v3989
      %v4002 = vpack.c.bf16 %v3990, %v3990
      %v4003 = vmul.f32 %v3871, %v1564
      %v4004 = vmul.f32 %v3872, %v1564
      %v4005 = vmul.f32 %v3873, %v1564
      %v4006 = vmul.f32 %v3874, %v1564
      %v4007 = vmul.f32 %v3875, %v1564
      %v4008 = vmul.f32 %v3876, %v1564
      %v4009 = vmul.f32 %v3877, %v1564
      %v4010 = vmul.f32 %v3878, %v1564
      %v4011 = vmul.f32 %v3879, %v1564
      %v4012 = vmul.f32 %v3880, %v1564
      %v4013 = vmul.f32 %v3881, %v1564
      %v4014 = vmul.f32 %v3882, %v1564
      %v4015 = vpack.c.bf16 %v4003, %v4003
      %v4016 = vpack.c.bf16 %v4004, %v4004
      %v4017 = vpack.c.bf16 %v4005, %v4005
      %v4018 = vpack.c.bf16 %v4006, %v4006
      %v4019 = vpack.c.bf16 %v4007, %v4007
      %v4020 = vpack.c.bf16 %v4008, %v4008
      %v4021 = vpack.c.bf16 %v4009, %v4009
      %v4022 = vpack.c.bf16 %v4010, %v4010
      %v4023 = vpack.c.bf16 %v4011, %v4011
      %v4024 = vpack.c.bf16 %v4012, %v4012
      %v4025 = vpack.c.bf16 %v4013, %v4013
      %v4026 = vpack.c.bf16 %v4014, %v4014
      %v4027 = vmul.f32 %v3871, %v1597
      %v4028 = vmul.f32 %v3872, %v1597
      %v4029 = vmul.f32 %v3873, %v1597
      %v4030 = vmul.f32 %v3874, %v1597
      %v4031 = vmul.f32 %v3875, %v1597
      %v4032 = vmul.f32 %v3876, %v1597
      %v4033 = vmul.f32 %v3877, %v1597
      %v4034 = vmul.f32 %v3878, %v1597
      %v4035 = vmul.f32 %v3879, %v1597
      %v4036 = vmul.f32 %v3880, %v1597
      %v4037 = vmul.f32 %v3881, %v1597
      %v4038 = vmul.f32 %v3882, %v1597
      %v4039 = vpack.c.bf16 %v4027, %v4027
      %v4040 = vpack.c.bf16 %v4028, %v4028
      %v4041 = vpack.c.bf16 %v4029, %v4029
      %v4042 = vpack.c.bf16 %v4030, %v4030
      %v4043 = vpack.c.bf16 %v4031, %v4031
      %v4044 = vpack.c.bf16 %v4032, %v4032
      %v4045 = vpack.c.bf16 %v4033, %v4033
      %v4046 = vpack.c.bf16 %v4034, %v4034
      %v4047 = vpack.c.bf16 %v4035, %v4035
      %v4048 = vpack.c.bf16 %v4036, %v4036
      %v4049 = vpack.c.bf16 %v4037, %v4037
      %v4050 = vpack.c.bf16 %v4038, %v4038
      %v4051 = vmul.f32 %v3871, %v1630
      %v4052 = vmul.f32 %v3872, %v1630
      %v4053 = vmul.f32 %v3873, %v1630
      %v4054 = vmul.f32 %v3874, %v1630
      %v4055 = vmul.f32 %v3875, %v1630
      %v4056 = vmul.f32 %v3876, %v1630
      %v4057 = vmul.f32 %v3877, %v1630
      %v4058 = vmul.f32 %v3878, %v1630
      %v4059 = vmul.f32 %v3879, %v1630
      %v4060 = vmul.f32 %v3880, %v1630
      %v4061 = vmul.f32 %v3881, %v1630
      %v4062 = vmul.f32 %v3882, %v1630
      %v4063 = vpack.c.bf16 %v4051, %v4051
      %v4064 = vpack.c.bf16 %v4052, %v4052
      %v4065 = vpack.c.bf16 %v4053, %v4053
      %v4066 = vpack.c.bf16 %v4054, %v4054
      %v4067 = vpack.c.bf16 %v4055, %v4055
      %v4068 = vpack.c.bf16 %v4056, %v4056
      %v4069 = vpack.c.bf16 %v4057, %v4057
      %v4070 = vpack.c.bf16 %v4058, %v4058
      %v4071 = vpack.c.bf16 %v4059, %v4059
      %v4072 = vpack.c.bf16 %v4060, %v4060
      %v4073 = vpack.c.bf16 %v4061, %v4061
      %v4074 = vpack.c.bf16 %v4062, %v4062
      %v4087 = vunpack.c.l.b16 %v3895
      %v4088 = vunpack.c.l.b16 %v3896
      %v4089 = vunpack.c.l.b16 %v3897
      %v4090 = vunpack.c.l.b16 %v3898
      %v4091 = vunpack.c.l.b16 %v3899
      %v4092 = vunpack.c.l.b16 %v3900
      %v4093 = vunpack.c.l.b16 %v3901
      %v4094 = vunpack.c.l.b16 %v3902
      %v4095 = vunpack.c.l.b16 %v3903
      %v4096 = vunpack.c.l.b16 %v3904
      %v4097 = vunpack.c.l.b16 %v3905
      %v4098 = vunpack.c.l.b16 %v3906
      %v4099 = vpack.c.b16 %v4088, %v4087
      %v4100 = vpack.c.b16 %v4090, %v4089
      %v4101 = vpack.c.b16 %v4092, %v4091
      %v4102 = vpack.c.b16 %v4094, %v4093
      %v4103 = vpack.c.b16 %v4096, %v4095
      %v4104 = vpack.c.b16 %v4098, %v4097
      %v4123 = vunpack.c.l.b16 %v3919
      %v4124 = vunpack.c.l.b16 %v3920
      %v4125 = vunpack.c.l.b16 %v3921
      %v4126 = vunpack.c.l.b16 %v3922
      %v4127 = vunpack.c.l.b16 %v3923
      %v4128 = vunpack.c.l.b16 %v3924
      %v4129 = vunpack.c.l.b16 %v3925
      %v4130 = vunpack.c.l.b16 %v3926
      %v4131 = vunpack.c.l.b16 %v3927
      %v4132 = vunpack.c.l.b16 %v3928
      %v4133 = vunpack.c.l.b16 %v3929
      %v4134 = vunpack.c.l.b16 %v3930
      %v4135 = vpack.c.b16 %v4124, %v4123
      %v4136 = vpack.c.b16 %v4126, %v4125
      %v4137 = vpack.c.b16 %v4128, %v4127
      %v4138 = vpack.c.b16 %v4130, %v4129
      %v4139 = vpack.c.b16 %v4132, %v4131
      %v4140 = vpack.c.b16 %v4134, %v4133
      %4141 = vrot.lane.b32.xlu0 %v4135, 127
      %v4142 = vpop.permute.xlu0 %4141
      %4143 = vrot.lane.b32.xlu0 %v4136, 127
      %v4144 = vpop.permute.xlu0 %4143
      %4145 = vrot.lane.b32.xlu0 %v4137, 127
      %v4146 = vpop.permute.xlu0 %4145
      %4147 = vrot.lane.b32.xlu0 %v4138, 127
      %v4148 = vpop.permute.xlu0 %4147
      %4149 = vrot.lane.b32.xlu0 %v4139, 127
      %v4150 = vpop.permute.xlu0 %4149
      %4151 = vrot.lane.b32.xlu0 %v4140, 127
      %v4152 = vpop.permute.xlu0 %4151
      %v4171 = vunpack.c.l.b16 %v3943
      %v4172 = vunpack.c.l.b16 %v3944
      %v4173 = vunpack.c.l.b16 %v3945
      %v4174 = vunpack.c.l.b16 %v3946
      %v4175 = vunpack.c.l.b16 %v3947
      %v4176 = vunpack.c.l.b16 %v3948
      %v4177 = vunpack.c.l.b16 %v3949
      %v4178 = vunpack.c.l.b16 %v3950
      %v4179 = vunpack.c.l.b16 %v3951
      %v4180 = vunpack.c.l.b16 %v3952
      %v4181 = vunpack.c.l.b16 %v3953
      %v4182 = vunpack.c.l.b16 %v3954
      %v4183 = vpack.c.b16 %v4172, %v4171
      %v4184 = vpack.c.b16 %v4174, %v4173
      %v4185 = vpack.c.b16 %v4176, %v4175
      %v4186 = vpack.c.b16 %v4178, %v4177
      %v4187 = vpack.c.b16 %v4180, %v4179
      %v4188 = vpack.c.b16 %v4182, %v4181
      %4189 = vrot.lane.b32.xlu0 %v4183, 126
      %v4190 = vpop.permute.xlu0 %4189
      %4191 = vrot.lane.b32.xlu0 %v4184, 126
      %v4192 = vpop.permute.xlu0 %4191
      %4193 = vrot.lane.b32.xlu0 %v4185, 126
      %v4194 = vpop.permute.xlu0 %4193
      %4195 = vrot.lane.b32.xlu0 %v4186, 126
      %v4196 = vpop.permute.xlu0 %4195
      %4197 = vrot.lane.b32.xlu0 %v4187, 126
      %v4198 = vpop.permute.xlu0 %4197
      %4199 = vrot.lane.b32.xlu0 %v4188, 126
      %v4200 = vpop.permute.xlu0 %4199
      %v4219 = vunpack.c.l.b16 %v3967
      %v4220 = vunpack.c.l.b16 %v3968
      %v4221 = vunpack.c.l.b16 %v3969
      %v4222 = vunpack.c.l.b16 %v3970
      %v4223 = vunpack.c.l.b16 %v3971
      %v4224 = vunpack.c.l.b16 %v3972
      %v4225 = vunpack.c.l.b16 %v3973
      %v4226 = vunpack.c.l.b16 %v3974
      %v4227 = vunpack.c.l.b16 %v3975
      %v4228 = vunpack.c.l.b16 %v3976
      %v4229 = vunpack.c.l.b16 %v3977
      %v4230 = vunpack.c.l.b16 %v3978
      %v4231 = vpack.c.b16 %v4220, %v4219
      %v4232 = vpack.c.b16 %v4222, %v4221
      %v4233 = vpack.c.b16 %v4224, %v4223
      %v4234 = vpack.c.b16 %v4226, %v4225
      %v4235 = vpack.c.b16 %v4228, %v4227
      %v4236 = vpack.c.b16 %v4230, %v4229
      %4237 = vrot.lane.b32.xlu0 %v4231, 124
      %v4238 = vpop.permute.xlu0 %4237
      %4239 = vrot.lane.b32.xlu0 %v4232, 124
      %v4240 = vpop.permute.xlu0 %4239
      %4241 = vrot.lane.b32.xlu0 %v4233, 124
      %v4242 = vpop.permute.xlu0 %4241
      %4243 = vrot.lane.b32.xlu0 %v4234, 124
      %v4244 = vpop.permute.xlu0 %4243
      %4245 = vrot.lane.b32.xlu0 %v4235, 124
      %v4246 = vpop.permute.xlu0 %4245
      %4247 = vrot.lane.b32.xlu0 %v4236, 124
      %v4248 = vpop.permute.xlu0 %4247
      %v4273 = vunpack.c.l.b16 %v3991
      %v4274 = vunpack.c.l.b16 %v3992
      %v4275 = vunpack.c.l.b16 %v3993
      %v4276 = vunpack.c.l.b16 %v3994
      %v4277 = vunpack.c.l.b16 %v3995
      %v4278 = vunpack.c.l.b16 %v3996
      %v4279 = vunpack.c.l.b16 %v3997
      %v4280 = vunpack.c.l.b16 %v3998
      %v4281 = vunpack.c.l.b16 %v3999
      %v4282 = vunpack.c.l.b16 %v4000
      %v4283 = vunpack.c.l.b16 %v4001
      %v4284 = vunpack.c.l.b16 %v4002
      %v4285 = vpack.c.b16 %v4274, %v4273
      %v4286 = vpack.c.b16 %v4276, %v4275
      %v4287 = vpack.c.b16 %v4278, %v4277
      %v4288 = vpack.c.b16 %v4280, %v4279
      %v4289 = vpack.c.b16 %v4282, %v4281
      %v4290 = vpack.c.b16 %v4284, %v4283
      %4291 = vrot.lane.b32.xlu0 %v4285, 122
      %v4292 = vpop.permute.xlu0 %4291
      %4293 = vrot.lane.b32.xlu0 %v4286, 122
      %v4294 = vpop.permute.xlu0 %4293
      %4295 = vrot.lane.b32.xlu0 %v4287, 122
      %v4296 = vpop.permute.xlu0 %4295
      %4297 = vrot.lane.b32.xlu0 %v4288, 122
      %v4298 = vpop.permute.xlu0 %4297
      %4299 = vrot.lane.b32.xlu0 %v4289, 122
      %v4300 = vpop.permute.xlu0 %4299
      %4301 = vrot.lane.b32.xlu0 %v4290, 122
      %v4302 = vpop.permute.xlu0 %4301
      %v4321 = vunpack.c.l.b16 %v4015
      %v4322 = vunpack.c.l.b16 %v4016
      %v4323 = vunpack.c.l.b16 %v4017
      %v4324 = vunpack.c.l.b16 %v4018
      %v4325 = vunpack.c.l.b16 %v4019
      %v4326 = vunpack.c.l.b16 %v4020
      %v4327 = vunpack.c.l.b16 %v4021
      %v4328 = vunpack.c.l.b16 %v4022
      %v4329 = vunpack.c.l.b16 %v4023
      %v4330 = vunpack.c.l.b16 %v4024
      %v4331 = vunpack.c.l.b16 %v4025
      %v4332 = vunpack.c.l.b16 %v4026
      %v4333 = vpack.c.b16 %v4322, %v4321
      %v4334 = vpack.c.b16 %v4324, %v4323
      %v4335 = vpack.c.b16 %v4326, %v4325
      %v4336 = vpack.c.b16 %v4328, %v4327
      %v4337 = vpack.c.b16 %v4330, %v4329
      %v4338 = vpack.c.b16 %v4332, %v4331
      %4339 = vrot.lane.b32.xlu0 %v4333, 120
      %v4340 = vpop.permute.xlu0 %4339
      %4341 = vrot.lane.b32.xlu0 %v4334, 120
      %v4342 = vpop.permute.xlu0 %4341
      %4343 = vrot.lane.b32.xlu0 %v4335, 120
      %v4344 = vpop.permute.xlu0 %4343
      %4345 = vrot.lane.b32.xlu0 %v4336, 120
      %v4346 = vpop.permute.xlu0 %4345
      %4347 = vrot.lane.b32.xlu0 %v4337, 120
      %v4348 = vpop.permute.xlu0 %4347
      %4349 = vrot.lane.b32.xlu0 %v4338, 120
      %v4350 = vpop.permute.xlu0 %4349
      %v4369 = vunpack.c.l.b16 %v4039
      %v4370 = vunpack.c.l.b16 %v4040
      %v4371 = vunpack.c.l.b16 %v4041
      %v4372 = vunpack.c.l.b16 %v4042
      %v4373 = vunpack.c.l.b16 %v4043
      %v4374 = vunpack.c.l.b16 %v4044
      %v4375 = vunpack.c.l.b16 %v4045
      %v4376 = vunpack.c.l.b16 %v4046
      %v4377 = vunpack.c.l.b16 %v4047
      %v4378 = vunpack.c.l.b16 %v4048
      %v4379 = vunpack.c.l.b16 %v4049
      %v4380 = vunpack.c.l.b16 %v4050
      %v4381 = vpack.c.b16 %v4370, %v4369
      %v4382 = vpack.c.b16 %v4372, %v4371
      %v4383 = vpack.c.b16 %v4374, %v4373
      %v4384 = vpack.c.b16 %v4376, %v4375
      %v4385 = vpack.c.b16 %v4378, %v4377
      %v4386 = vpack.c.b16 %v4380, %v4379
      %4387 = vrot.lane.b32.xlu0 %v4381, 119
      %v4388 = vpop.permute.xlu0 %4387
      %4389 = vrot.lane.b32.xlu0 %v4382, 119
      %v4390 = vpop.permute.xlu0 %4389
      %4391 = vrot.lane.b32.xlu0 %v4383, 119
      %v4392 = vpop.permute.xlu0 %4391
      %4393 = vrot.lane.b32.xlu0 %v4384, 119
      %v4394 = vpop.permute.xlu0 %4393
      %4395 = vrot.lane.b32.xlu0 %v4385, 119
      %v4396 = vpop.permute.xlu0 %4395
      %4397 = vrot.lane.b32.xlu0 %v4386, 119
      %v4398 = vpop.permute.xlu0 %4397
      %v4417 = vunpack.c.l.b16 %v4063
      %v4418 = vunpack.c.l.b16 %v4064
      %v4419 = vunpack.c.l.b16 %v4065
      %v4420 = vunpack.c.l.b16 %v4066
      %v4421 = vunpack.c.l.b16 %v4067
      %v4422 = vunpack.c.l.b16 %v4068
      %v4423 = vunpack.c.l.b16 %v4069
      %v4424 = vunpack.c.l.b16 %v4070
      %v4425 = vunpack.c.l.b16 %v4071
      %v4426 = vunpack.c.l.b16 %v4072
      %v4427 = vunpack.c.l.b16 %v4073
      %v4428 = vunpack.c.l.b16 %v4074
      %v4429 = vpack.c.b16 %v4418, %v4417
      %v4430 = vpack.c.b16 %v4420, %v4419
      %v4431 = vpack.c.b16 %v4422, %v4421
      %v4432 = vpack.c.b16 %v4424, %v4423
      %v4433 = vpack.c.b16 %v4426, %v4425
      %v4434 = vpack.c.b16 %v4428, %v4427
      %4435 = vrot.lane.b32.xlu0 %v4429, 118
      %v4436 = vpop.permute.xlu0 %4435
      %4437 = vrot.lane.b32.xlu0 %v4430, 118
      %v4438 = vpop.permute.xlu0 %4437
      %4439 = vrot.lane.b32.xlu0 %v4431, 118
      %v4440 = vpop.permute.xlu0 %4439
      %4441 = vrot.lane.b32.xlu0 %v4432, 118
      %v4442 = vpop.permute.xlu0 %4441
      %4443 = vrot.lane.b32.xlu0 %v4433, 118
      %v4444 = vpop.permute.xlu0 %4443
      %4445 = vrot.lane.b32.xlu0 %v4434, 118
      %v4446 = vpop.permute.xlu0 %4445
      %v4501 = vunpack.c.l.b16 %v1084
      %v4502 = vunpack.c.h.b16 %v1084
      %v4503 = vunpack.c.l.b16 %v1085
      %v4504 = vunpack.c.h.b16 %v1085
      %v4505 = vunpack.c.l.b16 %v1086
      %v4506 = vunpack.c.h.b16 %v1086
      %v4507 = vunpack.c.l.b16 %v1087
      %v4508 = vunpack.c.l.b16 %v1088
      %v4509 = vunpack.c.h.b16 %v1088
      %v4510 = vunpack.c.l.b16 %v1089
      %v4511 = vunpack.c.h.b16 %v1089
      %v4512 = vunpack.c.l.b16 %v1090
      %v4513 = vunpack.c.h.b16 %v1090
      %v4514 = vunpack.c.l.b16 %v1091
      %v4515 = vunpack.c.l.b16 %v1092
      %v4516 = vunpack.c.h.b16 %v1092
      %v4517 = vunpack.c.l.b16 %v1093
      %v4518 = vunpack.c.h.b16 %v1093
      %v4519 = vunpack.c.l.b16 %v1094
      %v4520 = vunpack.c.h.b16 %v1094
      %v4521 = vunpack.c.l.b16 %v1095
      %v4522 = vunpack.c.l.b16 %v1096
      %v4523 = vunpack.c.h.b16 %v1096
      %v4524 = vunpack.c.l.b16 %v1097
      %v4525 = vunpack.c.h.b16 %v1097
      %v4526 = vunpack.c.l.b16 %v1098
      %v4527 = vunpack.c.h.b16 %v1098
      %v4528 = vunpack.c.l.b16 %v1099
      %v4529 = vunpack.c.l.b16 %v1100
      %v4530 = vunpack.c.h.b16 %v1100
      %v4531 = vunpack.c.l.b16 %v1101
      %v4532 = vunpack.c.h.b16 %v1101
      %v4533 = vunpack.c.l.b16 %v1102
      %v4534 = vunpack.c.h.b16 %v1102
      %v4535 = vunpack.c.l.b16 %v1103
      %v4536 = vunpack.c.l.b16 %v1104
      %v4537 = vunpack.c.h.b16 %v1104
      %v4538 = vunpack.c.l.b16 %v1105
      %v4539 = vunpack.c.h.b16 %v1105
      %v4540 = vunpack.c.l.b16 %v1106
      %v4541 = vunpack.c.h.b16 %v1106
      %v4542 = vunpack.c.l.b16 %v1107
      %v4543 = vunpack.c.l.b16 %v1108
      %v4544 = vunpack.c.h.b16 %v1108
      %v4545 = vunpack.c.l.b16 %v1109
      %v4546 = vunpack.c.h.b16 %v1109
      %v4547 = vunpack.c.l.b16 %v1110
      %v4548 = vunpack.c.h.b16 %v1110
      %v4549 = vunpack.c.l.b16 %v1111
      %v4550 = vunpack.c.l.b16 %v1112
      %v4551 = vunpack.c.h.b16 %v1112
      %v4552 = vunpack.c.l.b16 %v1113
      %v4553 = vunpack.c.h.b16 %v1113
      %v4554 = vunpack.c.l.b16 %v1114
      %v4555 = vunpack.c.h.b16 %v1114
      %v4556 = vunpack.c.l.b16 %v1115
      %v4557 = vunpack.c.l.b16 %v1116
      %v4558 = vunpack.c.h.b16 %v1116
      %v4559 = vunpack.c.l.b16 %v1117
      %v4560 = vunpack.c.h.b16 %v1117
      %v4561 = vunpack.c.l.b16 %v1118
      %v4562 = vunpack.c.h.b16 %v1118
      %v4563 = vunpack.c.l.b16 %v1119
      %v4564 = vunpack.c.l.b16 %v1120
      %v4565 = vunpack.c.h.b16 %v1120
      %v4566 = vunpack.c.l.b16 %v1121
      %v4567 = vunpack.c.h.b16 %v1121
      %v4568 = vunpack.c.l.b16 %v1122
      %v4569 = vunpack.c.h.b16 %v1122
      %v4570 = vunpack.c.l.b16 %v1123
      %v4571 = vunpack.c.l.b16 %v1124
      %v4572 = vunpack.c.h.b16 %v1124
      %v4573 = vunpack.c.l.b16 %v1125
      %v4574 = vunpack.c.h.b16 %v1125
      %v4575 = vunpack.c.l.b16 %v1126
      %v4576 = vunpack.c.h.b16 %v1126
      %v4577 = vunpack.c.l.b16 %v1127
      %v4578 = vunpack.c.l.b16 %v1128
      %v4579 = vunpack.c.h.b16 %v1128
      %v4580 = vunpack.c.l.b16 %v1129
      %v4581 = vunpack.c.h.b16 %v1129
      %v4582 = vunpack.c.l.b16 %v1130
      %v4583 = vunpack.c.h.b16 %v1130
      %v4584 = vunpack.c.l.b16 %v1131
      %v4585 = vpack.c.b16 %v4508, %v4501
      %v4586 = vpack.c.b16 %v4509, %v4502
      %v4587 = vpack.c.b16 %v4510, %v4503
      %v4588 = vpack.c.b16 %v4511, %v4504
      %v4589 = vpack.c.b16 %v4512, %v4505
      %v4590 = vpack.c.b16 %v4513, %v4506
      %v4591 = vpack.c.b16 %v4514, %v4507
      %v4592 = vpack.c.b16 %v4522, %v4515
      %v4593 = vpack.c.b16 %v4523, %v4516
      %v4594 = vpack.c.b16 %v4524, %v4517
      %v4595 = vpack.c.b16 %v4525, %v4518
      %v4596 = vpack.c.b16 %v4526, %v4519
      %v4597 = vpack.c.b16 %v4527, %v4520
      %v4598 = vpack.c.b16 %v4528, %v4521
      %v4599 = vpack.c.b16 %v4536, %v4529
      %v4600 = vpack.c.b16 %v4537, %v4530
      %v4601 = vpack.c.b16 %v4538, %v4531
      %v4602 = vpack.c.b16 %v4539, %v4532
      %v4603 = vpack.c.b16 %v4540, %v4533
      %v4604 = vpack.c.b16 %v4541, %v4534
      %v4605 = vpack.c.b16 %v4542, %v4535
      %v4606 = vpack.c.b16 %v4550, %v4543
      %v4607 = vpack.c.b16 %v4551, %v4544
      %v4608 = vpack.c.b16 %v4552, %v4545
      %v4609 = vpack.c.b16 %v4553, %v4546
      %v4610 = vpack.c.b16 %v4554, %v4547
      %v4611 = vpack.c.b16 %v4555, %v4548
      %v4612 = vpack.c.b16 %v4556, %v4549
      %v4613 = vpack.c.b16 %v4564, %v4557
      %v4614 = vpack.c.b16 %v4565, %v4558
      %v4615 = vpack.c.b16 %v4566, %v4559
      %v4616 = vpack.c.b16 %v4567, %v4560
      %v4617 = vpack.c.b16 %v4568, %v4561
      %v4618 = vpack.c.b16 %v4569, %v4562
      %v4619 = vpack.c.b16 %v4570, %v4563
      %v4620 = vpack.c.b16 %v4578, %v4571
      %v4621 = vpack.c.b16 %v4579, %v4572
      %v4622 = vpack.c.b16 %v4580, %v4573
      %v4623 = vpack.c.b16 %v4581, %v4574
      %v4624 = vpack.c.b16 %v4582, %v4575
      %v4625 = vpack.c.b16 %v4583, %v4576
      %v4626 = vpack.c.b16 %v4584, %v4577
      %v4664 = vsel %vm2304, %v4591, 0
      %v4667 = vsel %vm2304, %v4598, 0
      %v4670 = vsel %vm2304, %v4605, 0
      %v4673 = vsel %vm2304, %v4612, 0
      %v4676 = vsel %vm2304, %v4619, 0
      %v4679 = vsel %vm2304, %v4626, 0
      %4681 = vmatpush.bf16.msra.mxu0 %v4144
      %4682 = vmatpush.bf16.msra.mxu0 %v4142
      %4683 = vmatpush.bf16.msra.mxu0 %v4104
      %4684 = vmatpush.bf16.msra.mxu0 %v4103
      %4685 = vmatpush.bf16.msra.mxu0 %v4102
      %4686 = vmatpush.bf16.msra.mxu0 %v4101
      %4687 = vmatpush.bf16.msra.mxu0 %v4100
      %4688 = vmatpush.bf16.msra.mxu0 %v4099
      %4689 = vmatmul.bf16.gmra.mxu0 %v4585
      %v4690 = vpop.f32.mrf.mxu0
      %v4691 = vadd.f32 0.0, %v4690
      %v4692 = vpop.f32.mrf.mxu0
      %v4693 = vadd.f32 0.0, %v4692
      %4694 = vmatmul.bf16.gmra.mxu0 %v4592
      %v4695 = vpop.f32.mrf.mxu0
      %v4696 = vadd.f32 0.0, %v4695
      %v4697 = vpop.f32.mrf.mxu0
      %v4698 = vadd.f32 0.0, %v4697
      %4699 = vmatmul.bf16.gmra.mxu0 %v4599
      %v4700 = vpop.f32.mrf.mxu0
      %v4701 = vadd.f32 0.0, %v4700
      %v4702 = vpop.f32.mrf.mxu0
      %v4703 = vadd.f32 0.0, %v4702
      %4704 = vmatmul.bf16.gmra.mxu0 %v4606
      %v4705 = vpop.f32.mrf.mxu0
      %v4706 = vadd.f32 0.0, %v4705
      %v4707 = vpop.f32.mrf.mxu0
      %v4708 = vadd.f32 0.0, %v4707
      %4709 = vmatmul.bf16.gmra.mxu0 %v4613
      %v4710 = vpop.f32.mrf.mxu0
      %v4711 = vadd.f32 0.0, %v4710
      %v4712 = vpop.f32.mrf.mxu0
      %v4713 = vadd.f32 0.0, %v4712
      %4714 = vmatmul.bf16.gmra.mxu0 %v4620
      %v4715 = vpop.f32.mrf.mxu0
      %v4716 = vadd.f32 0.0, %v4715
      %v4717 = vpop.f32.mrf.mxu0
      %v4718 = vadd.f32 0.0, %v4717
      %4719 = vdwg.mxu0
      %4720 = vmatpush.bf16.msra.mxu0 %v4196
      %4721 = vmatpush.bf16.msra.mxu0 %v4194
      %4722 = vmatpush.bf16.msra.mxu0 %v4192
      %4723 = vmatpush.bf16.msra.mxu0 %v4190
      %4724 = vmatpush.bf16.msra.mxu0 %v4152
      %4725 = vmatpush.bf16.msra.mxu0 %v4150
      %4726 = vmatpush.bf16.msra.mxu0 %v4148
      %4727 = vmatpush.bf16.msra.mxu0 %v4146
      %4728 = vmatmul.bf16.gmra.mxu0 %v4586
      %v4729 = vpop.f32.mrf.mxu0
      %v4730 = vadd.f32 %v4691, %v4729
      %v4731 = vpop.f32.mrf.mxu0
      %v4732 = vadd.f32 %v4693, %v4731
      %4733 = vmatmul.bf16.gmra.mxu0 %v4593
      %v4734 = vpop.f32.mrf.mxu0
      %v4735 = vadd.f32 %v4696, %v4734
      %v4736 = vpop.f32.mrf.mxu0
      %v4737 = vadd.f32 %v4698, %v4736
      %4738 = vmatmul.bf16.gmra.mxu0 %v4600
      %v4739 = vpop.f32.mrf.mxu0
      %v4740 = vadd.f32 %v4701, %v4739
      %v4741 = vpop.f32.mrf.mxu0
      %v4742 = vadd.f32 %v4703, %v4741
      %4743 = vmatmul.bf16.gmra.mxu0 %v4607
      %v4744 = vpop.f32.mrf.mxu0
      %v4745 = vadd.f32 %v4706, %v4744
      %v4746 = vpop.f32.mrf.mxu0
      %v4747 = vadd.f32 %v4708, %v4746
      %4748 = vmatmul.bf16.gmra.mxu0 %v4614
      %v4749 = vpop.f32.mrf.mxu0
      %v4750 = vadd.f32 %v4711, %v4749
      %v4751 = vpop.f32.mrf.mxu0
      %v4752 = vadd.f32 %v4713, %v4751
      %4753 = vmatmul.bf16.gmra.mxu0 %v4621
      %v4754 = vpop.f32.mrf.mxu0
      %v4755 = vadd.f32 %v4716, %v4754
      %v4756 = vpop.f32.mrf.mxu0
      %v4757 = vadd.f32 %v4718, %v4756
      %4758 = vdwg.mxu0
      %4759 = vmatpush.bf16.msra.mxu0 %v4248
      %4760 = vmatpush.bf16.msra.mxu0 %v4246
      %4761 = vmatpush.bf16.msra.mxu0 %v4244
      %4762 = vmatpush.bf16.msra.mxu0 %v4242
      %4763 = vmatpush.bf16.msra.mxu0 %v4240
      %4764 = vmatpush.bf16.msra.mxu0 %v4238
      %4765 = vmatpush.bf16.msra.mxu0 %v4200
      %4766 = vmatpush.bf16.msra.mxu0 %v4198
      %4767 = vmatmul.bf16.gmra.mxu0 %v4587
      %v4768 = vpop.f32.mrf.mxu0
      %v4769 = vadd.f32 %v4730, %v4768
      %v4770 = vpop.f32.mrf.mxu0
      %v4771 = vadd.f32 %v4732, %v4770
      %4772 = vmatmul.bf16.gmra.mxu0 %v4594
      %v4773 = vpop.f32.mrf.mxu0
      %v4774 = vadd.f32 %v4735, %v4773
      %v4775 = vpop.f32.mrf.mxu0
      %v4776 = vadd.f32 %v4737, %v4775
      %4777 = vmatmul.bf16.gmra.mxu0 %v4601
      %v4778 = vpop.f32.mrf.mxu0
      %v4779 = vadd.f32 %v4740, %v4778
      %v4780 = vpop.f32.mrf.mxu0
      %v4781 = vadd.f32 %v4742, %v4780
      %4782 = vmatmul.bf16.gmra.mxu0 %v4608
      %v4783 = vpop.f32.mrf.mxu0
      %v4784 = vadd.f32 %v4745, %v4783
      %v4785 = vpop.f32.mrf.mxu0
      %v4786 = vadd.f32 %v4747, %v4785
      %4787 = vmatmul.bf16.gmra.mxu0 %v4615
      %v4788 = vpop.f32.mrf.mxu0
      %v4789 = vadd.f32 %v4750, %v4788
      %v4790 = vpop.f32.mrf.mxu0
      %v4791 = vadd.f32 %v4752, %v4790
      %4792 = vmatmul.bf16.gmra.mxu0 %v4622
      %v4793 = vpop.f32.mrf.mxu0
      %v4794 = vadd.f32 %v4755, %v4793
      %v4795 = vpop.f32.mrf.mxu0
      %v4796 = vadd.f32 %v4757, %v4795
      %4797 = vdwg.mxu0
      %4798 = vmatpush.bf16.msra.mxu0 %v4294
      %4799 = vmatpush.bf16.msra.mxu0 %v4292
      %4800 = vmatpush.bf16.msra.mxu0 %v3834
      %4801 = vmatpush.bf16.msra.mxu0 %v3833
      %4802 = vmatpush.bf16.msra.mxu0 %v3832
      %4803 = vmatpush.bf16.msra.mxu0 %v3831
      %4804 = vmatpush.bf16.msra.mxu0 %v3830
      %4805 = vmatpush.bf16.msra.mxu0 %v3829
      %4806 = vmatmul.bf16.gmra.mxu0 %v4588
      %v4807 = vpop.f32.mrf.mxu0
      %v4808 = vadd.f32 %v4769, %v4807
      %v4809 = vpop.f32.mrf.mxu0
      %v4810 = vadd.f32 %v4771, %v4809
      %4811 = vmatmul.bf16.gmra.mxu0 %v4595
      %v4812 = vpop.f32.mrf.mxu0
      %v4813 = vadd.f32 %v4774, %v4812
      %v4814 = vpop.f32.mrf.mxu0
      %v4815 = vadd.f32 %v4776, %v4814
      %4816 = vmatmul.bf16.gmra.mxu0 %v4602
      %v4817 = vpop.f32.mrf.mxu0
      %v4818 = vadd.f32 %v4779, %v4817
      %v4819 = vpop.f32.mrf.mxu0
      %v4820 = vadd.f32 %v4781, %v4819
      %4821 = vmatmul.bf16.gmra.mxu0 %v4609
      %v4822 = vpop.f32.mrf.mxu0
      %v4823 = vadd.f32 %v4784, %v4822
      %v4824 = vpop.f32.mrf.mxu0
      %v4825 = vadd.f32 %v4786, %v4824
      %4826 = vmatmul.bf16.gmra.mxu0 %v4616
      %v4827 = vpop.f32.mrf.mxu0
      %v4828 = vadd.f32 %v4789, %v4827
      %v4829 = vpop.f32.mrf.mxu0
      %v4830 = vadd.f32 %v4791, %v4829
      %4831 = vmatmul.bf16.gmra.mxu0 %v4623
      %v4832 = vpop.f32.mrf.mxu0
      %v4833 = vadd.f32 %v4794, %v4832
      %v4834 = vpop.f32.mrf.mxu0
      %v4835 = vadd.f32 %v4796, %v4834
      %4836 = vdwg.mxu0
      %4837 = vmatpush.bf16.msra.mxu0 %v4346
      %4838 = vmatpush.bf16.msra.mxu0 %v4344
      %4839 = vmatpush.bf16.msra.mxu0 %v4342
      %4840 = vmatpush.bf16.msra.mxu0 %v4340
      %4841 = vmatpush.bf16.msra.mxu0 %v4302
      %4842 = vmatpush.bf16.msra.mxu0 %v4300
      %4843 = vmatpush.bf16.msra.mxu0 %v4298
      %4844 = vmatpush.bf16.msra.mxu0 %v4296
      %4845 = vmatmul.bf16.gmra.mxu0 %v4589
      %v4846 = vpop.f32.mrf.mxu0
      %v4847 = vadd.f32 %v4808, %v4846
      %v4848 = vpop.f32.mrf.mxu0
      %v4849 = vadd.f32 %v4810, %v4848
      %4850 = vmatmul.bf16.gmra.mxu0 %v4596
      %v4851 = vpop.f32.mrf.mxu0
      %v4852 = vadd.f32 %v4813, %v4851
      %v4853 = vpop.f32.mrf.mxu0
      %v4854 = vadd.f32 %v4815, %v4853
      %4855 = vmatmul.bf16.gmra.mxu0 %v4603
      %v4856 = vpop.f32.mrf.mxu0
      %v4857 = vadd.f32 %v4818, %v4856
      %v4858 = vpop.f32.mrf.mxu0
      %v4859 = vadd.f32 %v4820, %v4858
      %4860 = vmatmul.bf16.gmra.mxu0 %v4610
      %v4861 = vpop.f32.mrf.mxu0
      %v4862 = vadd.f32 %v4823, %v4861
      %v4863 = vpop.f32.mrf.mxu0
      %v4864 = vadd.f32 %v4825, %v4863
      %4865 = vmatmul.bf16.gmra.mxu0 %v4617
      %v4866 = vpop.f32.mrf.mxu0
      %v4867 = vadd.f32 %v4828, %v4866
      %v4868 = vpop.f32.mrf.mxu0
      %v4869 = vadd.f32 %v4830, %v4868
      %4870 = vmatmul.bf16.gmra.mxu0 %v4624
      %v4871 = vpop.f32.mrf.mxu0
      %v4872 = vadd.f32 %v4833, %v4871
      %v4873 = vpop.f32.mrf.mxu0
      %v4874 = vadd.f32 %v4835, %v4873
      %4875 = vdwg.mxu0
      %4876 = vmatpush.bf16.msra.mxu0 %v4398
      %4877 = vmatpush.bf16.msra.mxu0 %v4396
      %4878 = vmatpush.bf16.msra.mxu0 %v4394
      %4879 = vmatpush.bf16.msra.mxu0 %v4392
      %4880 = vmatpush.bf16.msra.mxu0 %v4390
      %4881 = vmatpush.bf16.msra.mxu0 %v4388
      %4882 = vmatpush.bf16.msra.mxu0 %v4350
      %4883 = vmatpush.bf16.msra.mxu0 %v4348
      %4884 = vmatmul.bf16.gmra.mxu0 %v4590
      %v4885 = vpop.f32.mrf.mxu0
      %v4886 = vadd.f32 %v4847, %v4885
      %v4887 = vpop.f32.mrf.mxu0
      %v4888 = vadd.f32 %v4849, %v4887
      %4889 = vmatmul.bf16.gmra.mxu0 %v4597
      %v4890 = vpop.f32.mrf.mxu0
      %v4891 = vadd.f32 %v4852, %v4890
      %v4892 = vpop.f32.mrf.mxu0
      %v4893 = vadd.f32 %v4854, %v4892
      %4894 = vmatmul.bf16.gmra.mxu0 %v4604
      %v4895 = vpop.f32.mrf.mxu0
      %v4896 = vadd.f32 %v4857, %v4895
      %v4897 = vpop.f32.mrf.mxu0
      %v4898 = vadd.f32 %v4859, %v4897
      %4899 = vmatmul.bf16.gmra.mxu0 %v4611
      %v4900 = vpop.f32.mrf.mxu0
      %v4901 = vadd.f32 %v4862, %v4900
      %v4902 = vpop.f32.mrf.mxu0
      %v4903 = vadd.f32 %v4864, %v4902
      %4904 = vmatmul.bf16.gmra.mxu0 %v4618
      %v4905 = vpop.f32.mrf.mxu0
      %v4906 = vadd.f32 %v4867, %v4905
      %v4907 = vpop.f32.mrf.mxu0
      %v4908 = vadd.f32 %v4869, %v4907
      %4909 = vmatmul.bf16.gmra.mxu0 %v4625
      %v4910 = vpop.f32.mrf.mxu0
      %v4911 = vadd.f32 %v4872, %v4910
      %v4912 = vpop.f32.mrf.mxu0
      %v4913 = vadd.f32 %v4874, %v4912
      %4914 = vdwg.mxu0
      %4915 = vmatpush.bf16.msra.mxu0 0
      %4916 = vmatpush.bf16.msra.mxu0 0
      %4917 = vmatpush.bf16.msra.mxu0 %v4446
      %4918 = vmatpush.bf16.msra.mxu0 %v4444
      %4919 = vmatpush.bf16.msra.mxu0 %v4442
      %4920 = vmatpush.bf16.msra.mxu0 %v4440
      %4921 = vmatpush.bf16.msra.mxu0 %v4438
      %4922 = vmatpush.bf16.msra.mxu0 %v4436
      %4923 = vmatmul.bf16.gmra.mxu0 %v4664
      %v4924 = vpop.f32.mrf.mxu0
      %v4925 = vadd.f32 %v4886, %v4924
      %v4926 = vpop.f32.mrf.mxu0
      %v4927 = vadd.f32 %v4888, %v4926
      %4928 = vmatmul.bf16.gmra.mxu0 %v4667
      %v4929 = vpop.f32.mrf.mxu0
      %v4930 = vadd.f32 %v4891, %v4929
      %v4931 = vpop.f32.mrf.mxu0
      %v4932 = vadd.f32 %v4893, %v4931
      %4933 = vmatmul.bf16.gmra.mxu0 %v4670
      %v4934 = vpop.f32.mrf.mxu0
      %v4935 = vadd.f32 %v4896, %v4934
      %v4936 = vpop.f32.mrf.mxu0
      %v4937 = vadd.f32 %v4898, %v4936
      %4938 = vmatmul.bf16.gmra.mxu0 %v4673
      %v4939 = vpop.f32.mrf.mxu0
      %v4940 = vadd.f32 %v4901, %v4939
      %v4941 = vpop.f32.mrf.mxu0
      %v4942 = vadd.f32 %v4903, %v4941
      %4943 = vmatmul.bf16.gmra.mxu0 %v4676
      %v4944 = vpop.f32.mrf.mxu0
      %v4945 = vadd.f32 %v4906, %v4944
      %v4946 = vpop.f32.mrf.mxu0
      %v4947 = vadd.f32 %v4908, %v4946
      %4948 = vmatmul.bf16.gmra.mxu0 %v4679
      %v4949 = vpop.f32.mrf.mxu0
      %v4950 = vadd.f32 %v4911, %v4949
      %v4951 = vpop.f32.mrf.mxu0
      %v4952 = vadd.f32 %v4913, %v4951
      %4953 = vdwg.mxu0
      %vm4954 = vcmp.ge.f32.partialorder %v4925, 0.0
      %vm4955 = vcmp.ge.f32.partialorder %v4927, 0.0
      %vm4956 = vcmp.ge.f32.partialorder %v4930, 0.0
      %vm4957 = vcmp.ge.f32.partialorder %v4932, 0.0
      %vm4958 = vcmp.ge.f32.partialorder %v4935, 0.0
      %vm4959 = vcmp.ge.f32.partialorder %v4937, 0.0
      %vm4960 = vcmp.ge.f32.partialorder %v4940, 0.0
      %vm4961 = vcmp.ge.f32.partialorder %v4942, 0.0
      %vm4962 = vcmp.ge.f32.partialorder %v4945, 0.0
      %vm4963 = vcmp.ge.f32.partialorder %v4947, 0.0
      %vm4964 = vcmp.ge.f32.partialorder %v4950, 0.0
      %vm4965 = vcmp.ge.f32.partialorder %v4952, 0.0
      %v4966 = vmul.f32 %v4925, 0.2
      %v4967 = vmul.f32 %v4927, 0.2
      %v4968 = vmul.f32 %v4930, 0.2
      %v4969 = vmul.f32 %v4932, 0.2
      %v4970 = vmul.f32 %v4935, 0.2
      %v4971 = vmul.f32 %v4937, 0.2
      %v4972 = vmul.f32 %v4940, 0.2
      %v4973 = vmul.f32 %v4942, 0.2
      %v4974 = vmul.f32 %v4945, 0.2
      %v4975 = vmul.f32 %v4947, 0.2
      %v4976 = vmul.f32 %v4950, 0.2
      %v4977 = vmul.f32 %v4952, 0.2
      %v4978 = vsel %vm4954, %v4925, %v4966
      %v4979 = vsel %vm4955, %v4927, %v4967
      %v4980 = vsel %vm4956, %v4930, %v4968
      %v4981 = vsel %vm4957, %v4932, %v4969
      %v4982 = vsel %vm4958, %v4935, %v4970
      %v4983 = vsel %vm4959, %v4937, %v4971
      %v4984 = vsel %vm4960, %v4940, %v4972
      %v4985 = vsel %vm4961, %v4942, %v4973
      %v4986 = vsel %vm4962, %v4945, %v4974
      %v4987 = vsel %vm4963, %v4947, %v4975
      %v4988 = vsel %vm4964, %v4950, %v4976
      %v4989 = vsel %vm4965, %v4952, %v4977
      %v4990 = vpack.c.bf16 %v4979, %v4978
      %v4991 = vpack.c.bf16 %v4981, %v4980
      %v4992 = vpack.c.bf16 %v4983, %v4982
      %v4993 = vpack.c.bf16 %v4985, %v4984
      %v4994 = vpack.c.bf16 %v4987, %v4986
      %v4995 = vpack.c.bf16 %v4989, %v4988
      %v4998 = vunpack.c.l.b16 %v1201
      %v4999 = vunpack.c.l.b16 %v1202
      %v5000 = vpack.c.b16 %v4999, %v4998
      %vm5002 = vcmask 130048
      %v5004 = vsel %vm5002, %v4990, 0
      %v5007 = vsel %vm5002, %v4991, 0
      %v5010 = vsel %vm5002, %v4992, 0
      %v5013 = vsel %vm5002, %v4993, 0
      %v5016 = vsel %vm5002, %v4994, 0
      %v5019 = vsel %vm5002, %v4995, 0
      %5021 = vmatpush.bf16.msra.mxu0 0
      %5022 = vmatpush.bf16.msra.mxu0 0
      %5023 = vmatpush.bf16.msra.mxu0 0
      %5024 = vmatpush.bf16.msra.mxu0 0
      %5025 = vmatpush.bf16.msra.mxu0 0
      %5026 = vmatpush.bf16.msra.mxu0 0
      %5027 = vmatpush.bf16.msra.mxu0 0
      %5028 = vmatpush.bf16.msra.mxu0 %v5000
      %5029 = vmatmul.bf16.gmra.mxu0 %v5004
      %v5030 = vpop.f32.mrf.mxu0
      %v5031 = vadd.f32 0.0, %v5030
      %v5032 = vpop.f32.mrf.mxu0
      %v5033 = vadd.f32 0.0, %v5032
      %5034 = vmatmul.bf16.gmra.mxu0 %v5007
      %v5035 = vpop.f32.mrf.mxu0
      %v5036 = vadd.f32 0.0, %v5035
      %v5037 = vpop.f32.mrf.mxu0
      %v5038 = vadd.f32 0.0, %v5037
      %5039 = vmatmul.bf16.gmra.mxu0 %v5010
      %v5040 = vpop.f32.mrf.mxu0
      %v5041 = vadd.f32 0.0, %v5040
      %v5042 = vpop.f32.mrf.mxu0
      %v5043 = vadd.f32 0.0, %v5042
      %5044 = vmatmul.bf16.gmra.mxu0 %v5013
      %v5045 = vpop.f32.mrf.mxu0
      %v5046 = vadd.f32 0.0, %v5045
      %v5047 = vpop.f32.mrf.mxu0
      %v5048 = vadd.f32 0.0, %v5047
      %5049 = vmatmul.bf16.gmra.mxu0 %v5016
      %v5050 = vpop.f32.mrf.mxu0
      %v5051 = vadd.f32 0.0, %v5050
      %v5052 = vpop.f32.mrf.mxu0
      %v5053 = vadd.f32 0.0, %v5052
      %5054 = vmatmul.bf16.gmra.mxu0 %v5019
      %v5055 = vpop.f32.mrf.mxu0
      %v5056 = vadd.f32 0.0, %v5055
      %v5057 = vpop.f32.mrf.mxu0
      %v5058 = vadd.f32 0.0, %v5057
      %5059 = vdwg.mxu0
      %v5060 = vpack.c.bf16 %v5031, %v5031
      %v5061 = vpack.c.bf16 %v5033, %v5033
      %v5062 = vpack.c.bf16 %v5036, %v5036
      %v5063 = vpack.c.bf16 %v5038, %v5038
      %v5064 = vpack.c.bf16 %v5041, %v5041
      %v5065 = vpack.c.bf16 %v5043, %v5043
      %v5066 = vpack.c.bf16 %v5046, %v5046
      %v5067 = vpack.c.bf16 %v5048, %v5048
      %v5068 = vpack.c.bf16 %v5051, %v5051
      %v5069 = vpack.c.bf16 %v5053, %v5053
      %v5070 = vpack.c.bf16 %v5056, %v5056
      %v5071 = vpack.c.bf16 %v5058, %v5058
      %v5084 = vunpack.c.l.b16 %v5060
      %v5085 = vunpack.c.l.b16 %v5061
      %v5086 = vunpack.c.l.b16 %v5062
      %v5087 = vunpack.c.l.b16 %v5063
      %v5088 = vunpack.c.l.b16 %v5064
      %v5089 = vunpack.c.l.b16 %v5065
      %v5090 = vunpack.c.l.b16 %v5066
      %v5091 = vunpack.c.l.b16 %v5067
      %v5092 = vunpack.c.l.b16 %v5068
      %v5093 = vunpack.c.l.b16 %v5069
      %v5094 = vunpack.c.l.b16 %v5070
      %v5095 = vunpack.c.l.b16 %v5071
      %v5096 = vpack.c.b16 %v5085, %v5084
      %v5097 = vpack.c.b16 %v5087, %v5086
      %v5098 = vpack.c.b16 %v5089, %v5088
      %v5099 = vpack.c.b16 %v5091, %v5090
      %v5100 = vpack.c.b16 %v5093, %v5092
      %v5101 = vpack.c.b16 %v5095, %v5094
      %5102 = vrot.lane.b32.xlu0 %v5096, 9
      %v5103 = vpop.permute.xlu0 %5102
      %5104 = vrot.lane.b32.xlu0 %v5097, 9
      %v5105 = vpop.permute.xlu0 %5104
      %5106 = vrot.lane.b32.xlu0 %v5098, 9
      %v5107 = vpop.permute.xlu0 %5106
      %5108 = vrot.lane.b32.xlu0 %v5099, 9
      %v5109 = vpop.permute.xlu0 %5108
      %5110 = vrot.lane.b32.xlu0 %v5100, 9
      %v5111 = vpop.permute.xlu0 %5110
      %5112 = vrot.lane.b32.xlu0 %v5101, 9
      %v5113 = vpop.permute.xlu0 %5112
      %vm5114 = vcmask 72704
      %v5116 = vsel %vm5114, 0, %v5103
      %v5118 = vsel %vm5114, 0, %v5105
      %v5120 = vsel %vm5114, 0, %v5107
      %v5122 = vsel %vm5114, 0, %v5109
      %v5124 = vsel %vm5114, 0, %v5111
      %v5126 = vsel %vm5114, 0, %v5113
      %vm5127 = vcmask 596992
      %v5128 = vsel %vm5127, %v5116, 0
      %v5130 = vsel %vm5127, %v5118, 0
      %v5132 = vsel %vm5127, %v5120, 0
      %v5134 = vsel %vm5127, %v5122, 0
      %v5136 = vsel %vm5127, %v5124, 0
      %v5138 = vsel %vm5127, %v5126, 0
      %v5141 = vpack.i.b16 %v1185, %v1185
      %v5143 = vperm.slane %v5141, 0
      %v5144 = vunpack.c.l.bf16 %v5128
      %v5145 = vunpack.c.h.bf16 %v5128
      %v5146 = vunpack.c.l.bf16 %v5130
      %v5147 = vunpack.c.h.bf16 %v5130
      %v5148 = vunpack.c.l.bf16 %v5132
      %v5149 = vunpack.c.h.bf16 %v5132
      %v5150 = vunpack.c.l.bf16 %v5134
      %v5151 = vunpack.c.h.bf16 %v5134
      %v5152 = vunpack.c.l.bf16 %v5136
      %v5153 = vunpack.c.h.bf16 %v5136
      %v5154 = vunpack.c.l.bf16 %v5138
      %v5155 = vunpack.c.h.bf16 %v5138
      %v5156 = vunpack.c.l.bf16 %v5143
      %v5157 = vmul.f32 %v5144, %v5156
      %v5158 = vmul.f32 %v5145, %v5156
      %v5159 = vmul.f32 %v5146, %v5156
      %v5160 = vmul.f32 %v5147, %v5156
      %v5161 = vmul.f32 %v5148, %v5156
      %v5162 = vmul.f32 %v5149, %v5156
      %v5163 = vmul.f32 %v5150, %v5156
      %v5164 = vmul.f32 %v5151, %v5156
      %v5165 = vmul.f32 %v5152, %v5156
      %v5166 = vmul.f32 %v5153, %v5156
      %v5167 = vmul.f32 %v5154, %v5156
      %v5168 = vmul.f32 %v5155, %v5156
      %v5169 = vpack.c.bf16 %v5157, %v5157
      %v5170 = vpack.c.bf16 %v5158, %v5158
      %v5171 = vpack.c.bf16 %v5159, %v5159
      %v5172 = vpack.c.bf16 %v5160, %v5160
      %v5173 = vpack.c.bf16 %v5161, %v5161
      %v5174 = vpack.c.bf16 %v5162, %v5162
      %v5175 = vpack.c.bf16 %v5163, %v5163
      %v5176 = vpack.c.bf16 %v5164, %v5164
      %v5177 = vpack.c.bf16 %v5165, %v5165
      %v5178 = vpack.c.bf16 %v5166, %v5166
      %v5179 = vpack.c.bf16 %v5167, %v5167
      %v5180 = vpack.c.bf16 %v5168, %v5168
      %v5182 = vpack.i.b16 %v1186, %v1186
      %v5184 = vperm.slane %v5182, 0
      %v5185 = vunpack.c.l.bf16 %v5184
      %5187 = vrot.lane.b32.xlu0 %v5185, 1
      %v5188 = vpop.permute.xlu0 %5187
      %v5190 = vmul.f32 %v5144, %v5188
      %v5191 = vmul.f32 %v5145, %v5188
      %v5192 = vmul.f32 %v5146, %v5188
      %v5193 = vmul.f32 %v5147, %v5188
      %v5194 = vmul.f32 %v5148, %v5188
      %v5195 = vmul.f32 %v5149, %v5188
      %v5196 = vmul.f32 %v5150, %v5188
      %v5197 = vmul.f32 %v5151, %v5188
      %v5198 = vmul.f32 %v5152, %v5188
      %v5199 = vmul.f32 %v5153, %v5188
      %v5200 = vmul.f32 %v5154, %v5188
      %v5201 = vmul.f32 %v5155, %v5188
      %v5202 = vpack.c.bf16 %v5190, %v5190
      %v5203 = vpack.c.bf16 %v5191, %v5191
      %v5204 = vpack.c.bf16 %v5192, %v5192
      %v5205 = vpack.c.bf16 %v5193, %v5193
      %v5206 = vpack.c.bf16 %v5194, %v5194
      %v5207 = vpack.c.bf16 %v5195, %v5195
      %v5208 = vpack.c.bf16 %v5196, %v5196
      %v5209 = vpack.c.bf16 %v5197, %v5197
      %v5210 = vpack.c.bf16 %v5198, %v5198
      %v5211 = vpack.c.bf16 %v5199, %v5199
      %v5212 = vpack.c.bf16 %v5200, %v5200
      %v5213 = vpack.c.bf16 %v5201, %v5201
      %v5215 = vpack.i.b16 %v1187, %v1187
      %v5217 = vperm.slane %v5215, 0
      %v5218 = vunpack.c.l.bf16 %v5217
      %5220 = vrot.lane.b32.xlu0 %v5218, 2
      %v5221 = vpop.permute.xlu0 %5220
      %v5223 = vmul.f32 %v5144, %v5221
      %v5224 = vmul.f32 %v5145, %v5221
      %v5225 = vmul.f32 %v5146, %v5221
      %v5226 = vmul.f32 %v5147, %v5221
      %v5227 = vmul.f32 %v5148, %v5221
      %v5228 = vmul.f32 %v5149, %v5221
      %v5229 = vmul.f32 %v5150, %v5221
      %v5230 = vmul.f32 %v5151, %v5221
      %v5231 = vmul.f32 %v5152, %v5221
      %v5232 = vmul.f32 %v5153, %v5221
      %v5233 = vmul.f32 %v5154, %v5221
      %v5234 = vmul.f32 %v5155, %v5221
      %v5235 = vpack.c.bf16 %v5223, %v5223
      %v5236 = vpack.c.bf16 %v5224, %v5224
      %v5237 = vpack.c.bf16 %v5225, %v5225
      %v5238 = vpack.c.bf16 %v5226, %v5226
      %v5239 = vpack.c.bf16 %v5227, %v5227
      %v5240 = vpack.c.bf16 %v5228, %v5228
      %v5241 = vpack.c.bf16 %v5229, %v5229
      %v5242 = vpack.c.bf16 %v5230, %v5230
      %v5243 = vpack.c.bf16 %v5231, %v5231
      %v5244 = vpack.c.bf16 %v5232, %v5232
      %v5245 = vpack.c.bf16 %v5233, %v5233
      %v5246 = vpack.c.bf16 %v5234, %v5234
      %v5248 = vpack.i.b16 %v1188, %v1188
      %v5250 = vperm.slane %v5248, 0
      %v5251 = vunpack.c.l.bf16 %v5250
      %5253 = vrot.lane.b32.xlu0 %v5251, 8
      %v5254 = vpop.permute.xlu0 %5253
      %v5256 = vmul.f32 %v5144, %v5254
      %v5257 = vmul.f32 %v5145, %v5254
      %v5258 = vmul.f32 %v5146, %v5254
      %v5259 = vmul.f32 %v5147, %v5254
      %v5260 = vmul.f32 %v5148, %v5254
      %v5261 = vmul.f32 %v5149, %v5254
      %v5262 = vmul.f32 %v5150, %v5254
      %v5263 = vmul.f32 %v5151, %v5254
      %v5264 = vmul.f32 %v5152, %v5254
      %v5265 = vmul.f32 %v5153, %v5254
      %v5266 = vmul.f32 %v5154, %v5254
      %v5267 = vmul.f32 %v5155, %v5254
      %v5268 = vpack.c.bf16 %v5256, %v5256
      %v5269 = vpack.c.bf16 %v5257, %v5257
      %v5270 = vpack.c.bf16 %v5258, %v5258
      %v5271 = vpack.c.bf16 %v5259, %v5259
      %v5272 = vpack.c.bf16 %v5260, %v5260
      %v5273 = vpack.c.bf16 %v5261, %v5261
      %v5274 = vpack.c.bf16 %v5262, %v5262
      %v5275 = vpack.c.bf16 %v5263, %v5263
      %v5276 = vpack.c.bf16 %v5264, %v5264
      %v5277 = vpack.c.bf16 %v5265, %v5265
      %v5278 = vpack.c.bf16 %v5266, %v5266
      %v5279 = vpack.c.bf16 %v5267, %v5267
      %v5281 = vpack.i.b16 %v1189, %v1189
      %v5283 = vperm.slane %v5281, 0
      %v5284 = vunpack.c.l.bf16 %v5283
      %5286 = vrot.lane.b32.xlu0 %v5284, 10
      %v5287 = vpop.permute.xlu0 %5286
      %v5289 = vmul.f32 %v5144, %v5287
      %v5290 = vmul.f32 %v5145, %v5287
      %v5291 = vmul.f32 %v5146, %v5287
      %v5292 = vmul.f32 %v5147, %v5287
      %v5293 = vmul.f32 %v5148, %v5287
      %v5294 = vmul.f32 %v5149, %v5287
      %v5295 = vmul.f32 %v5150, %v5287
      %v5296 = vmul.f32 %v5151, %v5287
      %v5297 = vmul.f32 %v5152, %v5287
      %v5298 = vmul.f32 %v5153, %v5287
      %v5299 = vmul.f32 %v5154, %v5287
      %v5300 = vmul.f32 %v5155, %v5287
      %v5301 = vpack.c.bf16 %v5289, %v5289
      %v5302 = vpack.c.bf16 %v5290, %v5290
      %v5303 = vpack.c.bf16 %v5291, %v5291
      %v5304 = vpack.c.bf16 %v5292, %v5292
      %v5305 = vpack.c.bf16 %v5293, %v5293
      %v5306 = vpack.c.bf16 %v5294, %v5294
      %v5307 = vpack.c.bf16 %v5295, %v5295
      %v5308 = vpack.c.bf16 %v5296, %v5296
      %v5309 = vpack.c.bf16 %v5297, %v5297
      %v5310 = vpack.c.bf16 %v5298, %v5298
      %v5311 = vpack.c.bf16 %v5299, %v5299
      %v5312 = vpack.c.bf16 %v5300, %v5300
      %v5314 = vpack.i.b16 %v1190, %v1190
      %v5316 = vperm.slane %v5314, 0
      %v5317 = vunpack.c.l.bf16 %v5316
      %5319 = vrot.lane.b32.xlu0 %v5317, 16
      %v5320 = vpop.permute.xlu0 %5319
      %v5322 = vmul.f32 %v5144, %v5320
      %v5323 = vmul.f32 %v5145, %v5320
      %v5324 = vmul.f32 %v5146, %v5320
      %v5325 = vmul.f32 %v5147, %v5320
      %v5326 = vmul.f32 %v5148, %v5320
      %v5327 = vmul.f32 %v5149, %v5320
      %v5328 = vmul.f32 %v5150, %v5320
      %v5329 = vmul.f32 %v5151, %v5320
      %v5330 = vmul.f32 %v5152, %v5320
      %v5331 = vmul.f32 %v5153, %v5320
      %v5332 = vmul.f32 %v5154, %v5320
      %v5333 = vmul.f32 %v5155, %v5320
      %v5334 = vpack.c.bf16 %v5322, %v5322
      %v5335 = vpack.c.bf16 %v5323, %v5323
      %v5336 = vpack.c.bf16 %v5324, %v5324
      %v5337 = vpack.c.bf16 %v5325, %v5325
      %v5338 = vpack.c.bf16 %v5326, %v5326
      %v5339 = vpack.c.bf16 %v5327, %v5327
      %v5340 = vpack.c.bf16 %v5328, %v5328
      %v5341 = vpack.c.bf16 %v5329, %v5329
      %v5342 = vpack.c.bf16 %v5330, %v5330
      %v5343 = vpack.c.bf16 %v5331, %v5331
      %v5344 = vpack.c.bf16 %v5332, %v5332
      %v5345 = vpack.c.bf16 %v5333, %v5333
      %v5347 = vpack.i.b16 %v1191, %v1191
      %v5349 = vperm.slane %v5347, 0
      %v5350 = vunpack.c.l.bf16 %v5349
      %5352 = vrot.lane.b32.xlu0 %v5350, 17
      %v5353 = vpop.permute.xlu0 %5352
      %v5355 = vmul.f32 %v5144, %v5353
      %v5356 = vmul.f32 %v5145, %v5353
      %v5357 = vmul.f32 %v5146, %v5353
      %v5358 = vmul.f32 %v5147, %v5353
      %v5359 = vmul.f32 %v5148, %v5353
      %v5360 = vmul.f32 %v5149, %v5353
      %v5361 = vmul.f32 %v5150, %v5353
      %v5362 = vmul.f32 %v5151, %v5353
      %v5363 = vmul.f32 %v5152, %v5353
      %v5364 = vmul.f32 %v5153, %v5353
      %v5365 = vmul.f32 %v5154, %v5353
      %v5366 = vmul.f32 %v5155, %v5353
      %v5367 = vpack.c.bf16 %v5355, %v5355
      %v5368 = vpack.c.bf16 %v5356, %v5356
      %v5369 = vpack.c.bf16 %v5357, %v5357
      %v5370 = vpack.c.bf16 %v5358, %v5358
      %v5371 = vpack.c.bf16 %v5359, %v5359
      %v5372 = vpack.c.bf16 %v5360, %v5360
      %v5373 = vpack.c.bf16 %v5361, %v5361
      %v5374 = vpack.c.bf16 %v5362, %v5362
      %v5375 = vpack.c.bf16 %v5363, %v5363
      %v5376 = vpack.c.bf16 %v5364, %v5364
      %v5377 = vpack.c.bf16 %v5365, %v5365
      %v5378 = vpack.c.bf16 %v5366, %v5366
      %v5380 = vpack.i.b16 %v1192, %v1192
      %v5382 = vperm.slane %v5380, 0
      %v5383 = vunpack.c.l.bf16 %v5382
      %5385 = vrot.lane.b32.xlu0 %v5383, 18
      %v5386 = vpop.permute.xlu0 %5385
      %v5388 = vmul.f32 %v5144, %v5386
      %v5389 = vmul.f32 %v5145, %v5386
      %v5390 = vmul.f32 %v5146, %v5386
      %v5391 = vmul.f32 %v5147, %v5386
      %v5392 = vmul.f32 %v5148, %v5386
      %v5393 = vmul.f32 %v5149, %v5386
      %v5394 = vmul.f32 %v5150, %v5386
      %v5395 = vmul.f32 %v5151, %v5386
      %v5396 = vmul.f32 %v5152, %v5386
      %v5397 = vmul.f32 %v5153, %v5386
      %v5398 = vmul.f32 %v5154, %v5386
      %v5399 = vmul.f32 %v5155, %v5386
      %v5400 = vpack.c.bf16 %v5388, %v5388
      %v5401 = vpack.c.bf16 %v5389, %v5389
      %v5402 = vpack.c.bf16 %v5390, %v5390
      %v5403 = vpack.c.bf16 %v5391, %v5391
      %v5404 = vpack.c.bf16 %v5392, %v5392
      %v5405 = vpack.c.bf16 %v5393, %v5393
      %v5406 = vpack.c.bf16 %v5394, %v5394
      %v5407 = vpack.c.bf16 %v5395, %v5395
      %v5408 = vpack.c.bf16 %v5396, %v5396
      %v5409 = vpack.c.bf16 %v5397, %v5397
      %v5410 = vpack.c.bf16 %v5398, %v5398
      %v5411 = vpack.c.bf16 %v5399, %v5399
      %v5424 = vunpack.c.l.b16 %v5169
      %v5425 = vunpack.c.l.b16 %v5170
      %v5426 = vunpack.c.l.b16 %v5171
      %v5427 = vunpack.c.l.b16 %v5172
      %v5428 = vunpack.c.l.b16 %v5173
      %v5429 = vunpack.c.l.b16 %v5174
      %v5430 = vunpack.c.l.b16 %v5175
      %v5431 = vunpack.c.l.b16 %v5176
      %v5432 = vunpack.c.l.b16 %v5177
      %v5433 = vunpack.c.l.b16 %v5178
      %v5434 = vunpack.c.l.b16 %v5179
      %v5435 = vunpack.c.l.b16 %v5180
      %v5436 = vpack.c.b16 %v5425, %v5424
      %v5437 = vpack.c.b16 %v5427, %v5426
      %v5438 = vpack.c.b16 %v5429, %v5428
      %v5439 = vpack.c.b16 %v5431, %v5430
      %v5440 = vpack.c.b16 %v5433, %v5432
      %v5441 = vpack.c.b16 %v5435, %v5434
      %v5460 = vunpack.c.l.b16 %v5202
      %v5461 = vunpack.c.l.b16 %v5203
      %v5462 = vunpack.c.l.b16 %v5204
      %v5463 = vunpack.c.l.b16 %v5205
      %v5464 = vunpack.c.l.b16 %v5206
      %v5465 = vunpack.c.l.b16 %v5207
      %v5466 = vunpack.c.l.b16 %v5208
      %v5467 = vunpack.c.l.b16 %v5209
      %v5468 = vunpack.c.l.b16 %v5210
      %v5469 = vunpack.c.l.b16 %v5211
      %v5470 = vunpack.c.l.b16 %v5212
      %v5471 = vunpack.c.l.b16 %v5213
      %v5472 = vpack.c.b16 %v5461, %v5460
      %v5473 = vpack.c.b16 %v5463, %v5462
      %v5474 = vpack.c.b16 %v5465, %v5464
      %v5475 = vpack.c.b16 %v5467, %v5466
      %v5476 = vpack.c.b16 %v5469, %v5468
      %v5477 = vpack.c.b16 %v5471, %v5470
      %5478 = vrot.lane.b32.xlu0 %v5472, 127
      %v5479 = vpop.permute.xlu0 %5478
      %5480 = vrot.lane.b32.xlu0 %v5473, 127
      %v5481 = vpop.permute.xlu0 %5480
      %5482 = vrot.lane.b32.xlu0 %v5474, 127
      %v5483 = vpop.permute.xlu0 %5482
      %5484 = vrot.lane.b32.xlu0 %v5475, 127
      %v5485 = vpop.permute.xlu0 %5484
      %5486 = vrot.lane.b32.xlu0 %v5476, 127
      %v5487 = vpop.permute.xlu0 %5486
      %5488 = vrot.lane.b32.xlu0 %v5477, 127
      %v5489 = vpop.permute.xlu0 %5488
      %v5508 = vunpack.c.l.b16 %v5235
      %v5509 = vunpack.c.l.b16 %v5236
      %v5510 = vunpack.c.l.b16 %v5237
      %v5511 = vunpack.c.l.b16 %v5238
      %v5512 = vunpack.c.l.b16 %v5239
      %v5513 = vunpack.c.l.b16 %v5240
      %v5514 = vunpack.c.l.b16 %v5241
      %v5515 = vunpack.c.l.b16 %v5242
      %v5516 = vunpack.c.l.b16 %v5243
      %v5517 = vunpack.c.l.b16 %v5244
      %v5518 = vunpack.c.l.b16 %v5245
      %v5519 = vunpack.c.l.b16 %v5246
      %v5520 = vpack.c.b16 %v5509, %v5508
      %v5521 = vpack.c.b16 %v5511, %v5510
      %v5522 = vpack.c.b16 %v5513, %v5512
      %v5523 = vpack.c.b16 %v5515, %v5514
      %v5524 = vpack.c.b16 %v5517, %v5516
      %v5525 = vpack.c.b16 %v5519, %v5518
      %5526 = vrot.lane.b32.xlu0 %v5520, 126
      %v5527 = vpop.permute.xlu0 %5526
      %5528 = vrot.lane.b32.xlu0 %v5521, 126
      %v5529 = vpop.permute.xlu0 %5528
      %5530 = vrot.lane.b32.xlu0 %v5522, 126
      %v5531 = vpop.permute.xlu0 %5530
      %5532 = vrot.lane.b32.xlu0 %v5523, 126
      %v5533 = vpop.permute.xlu0 %5532
      %5534 = vrot.lane.b32.xlu0 %v5524, 126
      %v5535 = vpop.permute.xlu0 %5534
      %5536 = vrot.lane.b32.xlu0 %v5525, 126
      %v5537 = vpop.permute.xlu0 %5536
      %v5556 = vunpack.c.l.b16 %v5268
      %v5557 = vunpack.c.l.b16 %v5269
      %v5558 = vunpack.c.l.b16 %v5270
      %v5559 = vunpack.c.l.b16 %v5271
      %v5560 = vunpack.c.l.b16 %v5272
      %v5561 = vunpack.c.l.b16 %v5273
      %v5562 = vunpack.c.l.b16 %v5274
      %v5563 = vunpack.c.l.b16 %v5275
      %v5564 = vunpack.c.l.b16 %v5276
      %v5565 = vunpack.c.l.b16 %v5277
      %v5566 = vunpack.c.l.b16 %v5278
      %v5567 = vunpack.c.l.b16 %v5279
      %v5568 = vpack.c.b16 %v5557, %v5556
      %v5569 = vpack.c.b16 %v5559, %v5558
      %v5570 = vpack.c.b16 %v5561, %v5560
      %v5571 = vpack.c.b16 %v5563, %v5562
      %v5572 = vpack.c.b16 %v5565, %v5564
      %v5573 = vpack.c.b16 %v5567, %v5566
      %5574 = vrot.lane.b32.xlu0 %v5568, 120
      %v5575 = vpop.permute.xlu0 %5574
      %5576 = vrot.lane.b32.xlu0 %v5569, 120
      %v5577 = vpop.permute.xlu0 %5576
      %5578 = vrot.lane.b32.xlu0 %v5570, 120
      %v5579 = vpop.permute.xlu0 %5578
      %5580 = vrot.lane.b32.xlu0 %v5571, 120
      %v5581 = vpop.permute.xlu0 %5580
      %5582 = vrot.lane.b32.xlu0 %v5572, 120
      %v5583 = vpop.permute.xlu0 %5582
      %5584 = vrot.lane.b32.xlu0 %v5573, 120
      %v5585 = vpop.permute.xlu0 %5584
      %v5610 = vunpack.c.l.b16 %v5301
      %v5611 = vunpack.c.l.b16 %v5302
      %v5612 = vunpack.c.l.b16 %v5303
      %v5613 = vunpack.c.l.b16 %v5304
      %v5614 = vunpack.c.l.b16 %v5305
      %v5615 = vunpack.c.l.b16 %v5306
      %v5616 = vunpack.c.l.b16 %v5307
      %v5617 = vunpack.c.l.b16 %v5308
      %v5618 = vunpack.c.l.b16 %v5309
      %v5619 = vunpack.c.l.b16 %v5310
      %v5620 = vunpack.c.l.b16 %v5311
      %v5621 = vunpack.c.l.b16 %v5312
      %v5622 = vpack.c.b16 %v5611, %v5610
      %v5623 = vpack.c.b16 %v5613, %v5612
      %v5624 = vpack.c.b16 %v5615, %v5614
      %v5625 = vpack.c.b16 %v5617, %v5616
      %v5626 = vpack.c.b16 %v5619, %v5618
      %v5627 = vpack.c.b16 %v5621, %v5620
      %5628 = vrot.lane.b32.xlu0 %v5622, 118
      %v5629 = vpop.permute.xlu0 %5628
      %5630 = vrot.lane.b32.xlu0 %v5623, 118
      %v5631 = vpop.permute.xlu0 %5630
      %5632 = vrot.lane.b32.xlu0 %v5624, 118
      %v5633 = vpop.permute.xlu0 %5632
      %5634 = vrot.lane.b32.xlu0 %v5625, 118
      %v5635 = vpop.permute.xlu0 %5634
      %5636 = vrot.lane.b32.xlu0 %v5626, 118
      %v5637 = vpop.permute.xlu0 %5636
      %5638 = vrot.lane.b32.xlu0 %v5627, 118
      %v5639 = vpop.permute.xlu0 %5638
      %v5658 = vunpack.c.l.b16 %v5334
      %v5659 = vunpack.c.l.b16 %v5335
      %v5660 = vunpack.c.l.b16 %v5336
      %v5661 = vunpack.c.l.b16 %v5337
      %v5662 = vunpack.c.l.b16 %v5338
      %v5663 = vunpack.c.l.b16 %v5339
      %v5664 = vunpack.c.l.b16 %v5340
      %v5665 = vunpack.c.l.b16 %v5341
      %v5666 = vunpack.c.l.b16 %v5342
      %v5667 = vunpack.c.l.b16 %v5343
      %v5668 = vunpack.c.l.b16 %v5344
      %v5669 = vunpack.c.l.b16 %v5345
      %v5670 = vpack.c.b16 %v5659, %v5658
      %v5671 = vpack.c.b16 %v5661, %v5660
      %v5672 = vpack.c.b16 %v5663, %v5662
      %v5673 = vpack.c.b16 %v5665, %v5664
      %v5674 = vpack.c.b16 %v5667, %v5666
      %v5675 = vpack.c.b16 %v5669, %v5668
      %5676 = vrot.lane.b32.xlu0 %v5670, 112
      %v5677 = vpop.permute.xlu0 %5676
      %5678 = vrot.lane.b32.xlu0 %v5671, 112
      %v5679 = vpop.permute.xlu0 %5678
      %5680 = vrot.lane.b32.xlu0 %v5672, 112
      %v5681 = vpop.permute.xlu0 %5680
      %5682 = vrot.lane.b32.xlu0 %v5673, 112
      %v5683 = vpop.permute.xlu0 %5682
      %5684 = vrot.lane.b32.xlu0 %v5674, 112
      %v5685 = vpop.permute.xlu0 %5684
      %5686 = vrot.lane.b32.xlu0 %v5675, 112
      %v5687 = vpop.permute.xlu0 %5686
      %v5706 = vunpack.c.l.b16 %v5367
      %v5707 = vunpack.c.l.b16 %v5368
      %v5708 = vunpack.c.l.b16 %v5369
      %v5709 = vunpack.c.l.b16 %v5370
      %v5710 = vunpack.c.l.b16 %v5371
      %v5711 = vunpack.c.l.b16 %v5372
      %v5712 = vunpack.c.l.b16 %v5373
      %v5713 = vunpack.c.l.b16 %v5374
      %v5714 = vunpack.c.l.b16 %v5375
      %v5715 = vunpack.c.l.b16 %v5376
      %v5716 = vunpack.c.l.b16 %v5377
      %v5717 = vunpack.c.l.b16 %v5378
      %v5718 = vpack.c.b16 %v5707, %v5706
      %v5719 = vpack.c.b16 %v5709, %v5708
      %v5720 = vpack.c.b16 %v5711, %v5710
      %v5721 = vpack.c.b16 %v5713, %v5712
      %v5722 = vpack.c.b16 %v5715, %v5714
      %v5723 = vpack.c.b16 %v5717, %v5716
      %5724 = vrot.lane.b32.xlu0 %v5718, 111
      %v5725 = vpop.permute.xlu0 %5724
      %5726 = vrot.lane.b32.xlu0 %v5719, 111
      %v5727 = vpop.permute.xlu0 %5726
      %5728 = vrot.lane.b32.xlu0 %v5720, 111
      %v5729 = vpop.permute.xlu0 %5728
      %5730 = vrot.lane.b32.xlu0 %v5721, 111
      %v5731 = vpop.permute.xlu0 %5730
      %5732 = vrot.lane.b32.xlu0 %v5722, 111
      %v5733 = vpop.permute.xlu0 %5732
      %5734 = vrot.lane.b32.xlu0 %v5723, 111
      %v5735 = vpop.permute.xlu0 %5734
      %v5754 = vunpack.c.l.b16 %v5400
      %v5755 = vunpack.c.l.b16 %v5401
      %v5756 = vunpack.c.l.b16 %v5402
      %v5757 = vunpack.c.l.b16 %v5403
      %v5758 = vunpack.c.l.b16 %v5404
      %v5759 = vunpack.c.l.b16 %v5405
      %v5760 = vunpack.c.l.b16 %v5406
      %v5761 = vunpack.c.l.b16 %v5407
      %v5762 = vunpack.c.l.b16 %v5408
      %v5763 = vunpack.c.l.b16 %v5409
      %v5764 = vunpack.c.l.b16 %v5410
      %v5765 = vunpack.c.l.b16 %v5411
      %v5766 = vpack.c.b16 %v5755, %v5754
      %v5767 = vpack.c.b16 %v5757, %v5756
      %v5768 = vpack.c.b16 %v5759, %v5758
      %v5769 = vpack.c.b16 %v5761, %v5760
      %v5770 = vpack.c.b16 %v5763, %v5762
      %v5771 = vpack.c.b16 %v5765, %v5764
      %5772 = vrot.lane.b32.xlu0 %v5766, 110
      %v5773 = vpop.permute.xlu0 %5772
      %5774 = vrot.lane.b32.xlu0 %v5767, 110
      %v5775 = vpop.permute.xlu0 %5774
      %5776 = vrot.lane.b32.xlu0 %v5768, 110
      %v5777 = vpop.permute.xlu0 %5776
      %5778 = vrot.lane.b32.xlu0 %v5769, 110
      %v5779 = vpop.permute.xlu0 %5778
      %5780 = vrot.lane.b32.xlu0 %v5770, 110
      %v5781 = vpop.permute.xlu0 %5780
      %5782 = vrot.lane.b32.xlu0 %v5771, 110
      %v5783 = vpop.permute.xlu0 %5782
      %v5814 = vunpack.c.l.b16 %v1132
      %v5815 = vunpack.c.h.b16 %v1132
      %v5816 = vunpack.c.l.b16 %v1133
      %v5817 = vunpack.c.h.b16 %v1133
      %v5818 = vunpack.c.l.b16 %v1134
      %v5819 = vunpack.c.h.b16 %v1134
      %v5820 = vunpack.c.l.b16 %v1135
      %v5821 = vunpack.c.l.b16 %v1136
      %v5822 = vunpack.c.h.b16 %v1136
      %v5823 = vunpack.c.l.b16 %v1137
      %v5824 = vunpack.c.h.b16 %v1137
      %v5825 = vunpack.c.l.b16 %v1138
      %v5826 = vunpack.c.h.b16 %v1138
      %v5827 = vunpack.c.l.b16 %v1139
      %v5828 = vunpack.c.l.b16 %v1140
      %v5829 = vunpack.c.h.b16 %v1140
      %v5830 = vunpack.c.l.b16 %v1141
      %v5831 = vunpack.c.h.b16 %v1141
      %v5832 = vunpack.c.l.b16 %v1142
      %v5833 = vunpack.c.h.b16 %v1142
      %v5834 = vunpack.c.l.b16 %v1143
      %v5835 = vunpack.c.l.b16 %v1144
      %v5836 = vunpack.c.h.b16 %v1144
      %v5837 = vunpack.c.l.b16 %v1145
      %v5838 = vunpack.c.h.b16 %v1145
      %v5839 = vunpack.c.l.b16 %v1146
      %v5840 = vunpack.c.h.b16 %v1146
      %v5841 = vunpack.c.l.b16 %v1147
      %v5842 = vunpack.c.l.b16 %v1148
      %v5843 = vunpack.c.h.b16 %v1148
      %v5844 = vunpack.c.l.b16 %v1149
      %v5845 = vunpack.c.h.b16 %v1149
      %v5846 = vunpack.c.l.b16 %v1150
      %v5847 = vunpack.c.h.b16 %v1150
      %v5848 = vunpack.c.l.b16 %v1151
      %v5849 = vunpack.c.l.b16 %v1152
      %v5850 = vunpack.c.h.b16 %v1152
      %v5851 = vunpack.c.l.b16 %v1153
      %v5852 = vunpack.c.h.b16 %v1153
      %v5853 = vunpack.c.l.b16 %v1154
      %v5854 = vunpack.c.h.b16 %v1154
      %v5855 = vunpack.c.l.b16 %v1155
      %v5856 = vpack.c.b16 %v5821, %v5814
      %v5857 = vpack.c.b16 %v5822, %v5815
      %v5858 = vpack.c.b16 %v5823, %v5816
      %v5859 = vpack.c.b16 %v5824, %v5817
      %v5860 = vpack.c.b16 %v5825, %v5818
      %v5861 = vpack.c.b16 %v5826, %v5819
      %v5862 = vpack.c.b16 %v5827, %v5820
      %v5863 = vpack.c.b16 %v5835, %v5828
      %v5864 = vpack.c.b16 %v5836, %v5829
      %v5865 = vpack.c.b16 %v5837, %v5830
      %v5866 = vpack.c.b16 %v5838, %v5831
      %v5867 = vpack.c.b16 %v5839, %v5832
      %v5868 = vpack.c.b16 %v5840, %v5833
      %v5869 = vpack.c.b16 %v5841, %v5834
      %v5870 = vpack.c.b16 %v5849, %v5842
      %v5871 = vpack.c.b16 %v5850, %v5843
      %v5872 = vpack.c.b16 %v5851, %v5844
      %v5873 = vpack.c.b16 %v5852, %v5845
      %v5874 = vpack.c.b16 %v5853, %v5846
      %v5875 = vpack.c.b16 %v5854, %v5847
      %v5876 = vpack.c.b16 %v5855, %v5848
      %v5896 = vsel %vm2304, %v5862, 0
      %v5899 = vsel %vm2304, %v5869, 0
      %v5902 = vsel %vm2304, %v5876, 0
      %5904 = vmatpush.bf16.msra.mxu0 %v5481
      %5905 = vmatpush.bf16.msra.mxu0 %v5479
      %5906 = vmatpush.bf16.msra.mxu0 %v5441
      %5907 = vmatpush.bf16.msra.mxu0 %v5440
      %5908 = vmatpush.bf16.msra.mxu0 %v5439
      %5909 = vmatpush.bf16.msra.mxu0 %v5438
      %5910 = vmatpush.bf16.msra.mxu0 %v5437
      %5911 = vmatpush.bf16.msra.mxu0 %v5436
      %5912 = vmatmul.bf16.gmra.mxu0 %v5856
      %v5913 = vpop.f32.mrf.mxu0
      %v5914 = vadd.f32 0.0, %v5913
      %v5915 = vpop.f32.mrf.mxu0
      %v5916 = vadd.f32 0.0, %v5915
      %5917 = vmatmul.bf16.gmra.mxu0 %v5863
      %v5918 = vpop.f32.mrf.mxu0
      %v5919 = vadd.f32 0.0, %v5918
      %v5920 = vpop.f32.mrf.mxu0
      %v5921 = vadd.f32 0.0, %v5920
      %5922 = vmatmul.bf16.gmra.mxu0 %v5870
      %v5923 = vpop.f32.mrf.mxu0
      %v5924 = vadd.f32 0.0, %v5923
      %v5925 = vpop.f32.mrf.mxu0
      %v5926 = vadd.f32 0.0, %v5925
      %5927 = vdwg.mxu0
      %5928 = vmatpush.bf16.msra.mxu0 %v5533
      %5929 = vmatpush.bf16.msra.mxu0 %v5531
      %5930 = vmatpush.bf16.msra.mxu0 %v5529
      %5931 = vmatpush.bf16.msra.mxu0 %v5527
      %5932 = vmatpush.bf16.msra.mxu0 %v5489
      %5933 = vmatpush.bf16.msra.mxu0 %v5487
      %5934 = vmatpush.bf16.msra.mxu0 %v5485
      %5935 = vmatpush.bf16.msra.mxu0 %v5483
      %5936 = vmatmul.bf16.gmra.mxu0 %v5857
      %v5937 = vpop.f32.mrf.mxu0
      %v5938 = vadd.f32 %v5914, %v5937
      %v5939 = vpop.f32.mrf.mxu0
      %v5940 = vadd.f32 %v5916, %v5939
      %5941 = vmatmul.bf16.gmra.mxu0 %v5864
      %v5942 = vpop.f32.mrf.mxu0
      %v5943 = vadd.f32 %v5919, %v5942
      %v5944 = vpop.f32.mrf.mxu0
      %v5945 = vadd.f32 %v5921, %v5944
      %5946 = vmatmul.bf16.gmra.mxu0 %v5871
      %v5947 = vpop.f32.mrf.mxu0
      %v5948 = vadd.f32 %v5924, %v5947
      %v5949 = vpop.f32.mrf.mxu0
      %v5950 = vadd.f32 %v5926, %v5949
      %5951 = vdwg.mxu0
      %5952 = vmatpush.bf16.msra.mxu0 %v5585
      %5953 = vmatpush.bf16.msra.mxu0 %v5583
      %5954 = vmatpush.bf16.msra.mxu0 %v5581
      %5955 = vmatpush.bf16.msra.mxu0 %v5579
      %5956 = vmatpush.bf16.msra.mxu0 %v5577
      %5957 = vmatpush.bf16.msra.mxu0 %v5575
      %5958 = vmatpush.bf16.msra.mxu0 %v5537
      %5959 = vmatpush.bf16.msra.mxu0 %v5535
      %5960 = vmatmul.bf16.gmra.mxu0 %v5858
      %v5961 = vpop.f32.mrf.mxu0
      %v5962 = vadd.f32 %v5938, %v5961
      %v5963 = vpop.f32.mrf.mxu0
      %v5964 = vadd.f32 %v5940, %v5963
      %5965 = vmatmul.bf16.gmra.mxu0 %v5865
      %v5966 = vpop.f32.mrf.mxu0
      %v5967 = vadd.f32 %v5943, %v5966
      %v5968 = vpop.f32.mrf.mxu0
      %v5969 = vadd.f32 %v5945, %v5968
      %5970 = vmatmul.bf16.gmra.mxu0 %v5872
      %v5971 = vpop.f32.mrf.mxu0
      %v5972 = vadd.f32 %v5948, %v5971
      %v5973 = vpop.f32.mrf.mxu0
      %v5974 = vadd.f32 %v5950, %v5973
      %5975 = vdwg.mxu0
      %5976 = vmatpush.bf16.msra.mxu0 %v5631
      %5977 = vmatpush.bf16.msra.mxu0 %v5629
      %5978 = vmatpush.bf16.msra.mxu0 %v5101
      %5979 = vmatpush.bf16.msra.mxu0 %v5100
      %5980 = vmatpush.bf16.msra.mxu0 %v5099
      %5981 = vmatpush.bf16.msra.mxu0 %v5098
      %5982 = vmatpush.bf16.msra.mxu0 %v5097
      %5983 = vmatpush.bf16.msra.mxu0 %v5096
      %5984 = vmatmul.bf16.gmra.mxu0 %v5859
      %v5985 = vpop.f32.mrf.mxu0
      %v5986 = vadd.f32 %v5962, %v5985
      %v5987 = vpop.f32.mrf.mxu0
      %v5988 = vadd.f32 %v5964, %v5987
      %5989 = vmatmul.bf16.gmra.mxu0 %v5866
      %v5990 = vpop.f32.mrf.mxu0
      %v5991 = vadd.f32 %v5967, %v5990
      %v5992 = vpop.f32.mrf.mxu0
      %v5993 = vadd.f32 %v5969, %v5992
      %5994 = vmatmul.bf16.gmra.mxu0 %v5873
      %v5995 = vpop.f32.mrf.mxu0
      %v5996 = vadd.f32 %v5972, %v5995
      %v5997 = vpop.f32.mrf.mxu0
      %v5998 = vadd.f32 %v5974, %v5997
      %5999 = vdwg.mxu0
      %6000 = vmatpush.bf16.msra.mxu0 %v5683
      %6001 = vmatpush.bf16.msra.mxu0 %v5681
      %6002 = vmatpush.bf16.msra.mxu0 %v5679
      %6003 = vmatpush.bf16.msra.mxu0 %v5677
      %6004 = vmatpush.bf16.msra.mxu0 %v5639
      %6005 = vmatpush.bf16.msra.mxu0 %v5637
      %6006 = vmatpush.bf16.msra.mxu0 %v5635
      %6007 = vmatpush.bf16.msra.mxu0 %v5633
      %6008 = vmatmul.bf16.gmra.mxu0 %v5860
      %v6009 = vpop.f32.mrf.mxu0
      %v6010 = vadd.f32 %v5986, %v6009
      %v6011 = vpop.f32.mrf.mxu0
      %v6012 = vadd.f32 %v5988, %v6011
      %6013 = vmatmul.bf16.gmra.mxu0 %v5867
      %v6014 = vpop.f32.mrf.mxu0
      %v6015 = vadd.f32 %v5991, %v6014
      %v6016 = vpop.f32.mrf.mxu0
      %v6017 = vadd.f32 %v5993, %v6016
      %6018 = vmatmul.bf16.gmra.mxu0 %v5874
      %v6019 = vpop.f32.mrf.mxu0
      %v6020 = vadd.f32 %v5996, %v6019
      %v6021 = vpop.f32.mrf.mxu0
      %v6022 = vadd.f32 %v5998, %v6021
      %6023 = vdwg.mxu0
      %6024 = vmatpush.bf16.msra.mxu0 %v5735
      %6025 = vmatpush.bf16.msra.mxu0 %v5733
      %6026 = vmatpush.bf16.msra.mxu0 %v5731
      %6027 = vmatpush.bf16.msra.mxu0 %v5729
      %6028 = vmatpush.bf16.msra.mxu0 %v5727
      %6029 = vmatpush.bf16.msra.mxu0 %v5725
      %6030 = vmatpush.bf16.msra.mxu0 %v5687
      %6031 = vmatpush.bf16.msra.mxu0 %v5685
      %6032 = vmatmul.bf16.gmra.mxu0 %v5861
      %v6033 = vpop.f32.mrf.mxu0
      %v6034 = vadd.f32 %v6010, %v6033
      %v6035 = vpop.f32.mrf.mxu0
      %v6036 = vadd.f32 %v6012, %v6035
      %6037 = vmatmul.bf16.gmra.mxu0 %v5868
      %v6038 = vpop.f32.mrf.mxu0
      %v6039 = vadd.f32 %v6015, %v6038
      %v6040 = vpop.f32.mrf.mxu0
      %v6041 = vadd.f32 %v6017, %v6040
      %6042 = vmatmul.bf16.gmra.mxu0 %v5875
      %v6043 = vpop.f32.mrf.mxu0
      %v6044 = vadd.f32 %v6020, %v6043
      %v6045 = vpop.f32.mrf.mxu0
      %v6046 = vadd.f32 %v6022, %v6045
      %6047 = vdwg.mxu0
      %6048 = vmatpush.bf16.msra.mxu0 0
      %6049 = vmatpush.bf16.msra.mxu0 0
      %6050 = vmatpush.bf16.msra.mxu0 %v5783
      %6051 = vmatpush.bf16.msra.mxu0 %v5781
      %6052 = vmatpush.bf16.msra.mxu0 %v5779
      %6053 = vmatpush.bf16.msra.mxu0 %v5777
      %6054 = vmatpush.bf16.msra.mxu0 %v5775
      %6055 = vmatpush.bf16.msra.mxu0 %v5773
      %6056 = vmatmul.bf16.gmra.mxu0 %v5896
      %v6057 = vpop.f32.mrf.mxu0
      %v6058 = vadd.f32 %v6034, %v6057
      %v6059 = vpop.f32.mrf.mxu0
      %v6060 = vadd.f32 %v6036, %v6059
      %6061 = vmatmul.bf16.gmra.mxu0 %v5899
      %v6062 = vpop.f32.mrf.mxu0
      %v6063 = vadd.f32 %v6039, %v6062
      %v6064 = vpop.f32.mrf.mxu0
      %v6065 = vadd.f32 %v6041, %v6064
      %6066 = vmatmul.bf16.gmra.mxu0 %v5902
      %v6067 = vpop.f32.mrf.mxu0
      %v6068 = vadd.f32 %v6044, %v6067
      %v6069 = vpop.f32.mrf.mxu0
      %v6070 = vadd.f32 %v6046, %v6069
      %6071 = vdwg.mxu0
      %vm6072 = vcmp.ge.f32.partialorder %v6058, 0.0
      %vm6073 = vcmp.ge.f32.partialorder %v6060, 0.0
      %vm6074 = vcmp.ge.f32.partialorder %v6063, 0.0
      %vm6075 = vcmp.ge.f32.partialorder %v6065, 0.0
      %vm6076 = vcmp.ge.f32.partialorder %v6068, 0.0
      %vm6077 = vcmp.ge.f32.partialorder %v6070, 0.0
      %v6078 = vmul.f32 %v6058, 0.2
      %v6079 = vmul.f32 %v6060, 0.2
      %v6080 = vmul.f32 %v6063, 0.2
      %v6081 = vmul.f32 %v6065, 0.2
      %v6082 = vmul.f32 %v6068, 0.2
      %v6083 = vmul.f32 %v6070, 0.2
      %v6084 = vsel %vm6072, %v6058, %v6078
      %v6085 = vsel %vm6073, %v6060, %v6079
      %v6086 = vsel %vm6074, %v6063, %v6080
      %v6087 = vsel %vm6075, %v6065, %v6081
      %v6088 = vsel %vm6076, %v6068, %v6082
      %v6089 = vsel %vm6077, %v6070, %v6083
      %v6090 = vpack.c.bf16 %v6084, %v6084
      %v6091 = vpack.c.bf16 %v6085, %v6085
      %v6092 = vpack.c.bf16 %v6086, %v6086
      %v6093 = vpack.c.bf16 %v6087, %v6087
      %v6094 = vpack.c.bf16 %v6088, %v6088
      %v6095 = vpack.c.bf16 %v6089, %v6089
      %v6102 = vunpack.c.l.b16 %v6090
      %v6103 = vunpack.c.l.b16 %v6091
      %v6104 = vunpack.c.l.b16 %v6092
      %v6105 = vunpack.c.l.b16 %v6093
      %v6106 = vunpack.c.l.b16 %v6094
      %v6107 = vunpack.c.l.b16 %v6095
      %v6108 = vpack.c.b16 %v6103, %v6102
      %v6109 = vpack.c.b16 %v6105, %v6104
      %v6110 = vpack.c.b16 %v6107, %v6106
      %6111 = vrot.lane.b32.xlu0 %v6108, 9
      %v6112 = vpop.permute.xlu0 %6111
      %6113 = vrot.lane.b32.xlu0 %v6109, 9
      %v6114 = vpop.permute.xlu0 %6113
      %6115 = vrot.lane.b32.xlu0 %v6110, 9
      %v6116 = vpop.permute.xlu0 %6115
      %v6118 = vsel %vm5114, 0, %v6112
      %v6120 = vsel %vm5114, 0, %v6114
      %v6122 = vsel %vm5114, 0, %v6116
      %v6123 = vsel %vm5127, %v6118, 0
      %v6125 = vsel %vm5127, %v6120, 0
      %v6127 = vsel %vm5127, %v6122, 0
      %v6129 = vunpack.c.l.bf16 %v6123
      %v6130 = vunpack.c.h.bf16 %v6123
      %v6131 = vunpack.c.l.bf16 %v6125
      %v6132 = vunpack.c.h.bf16 %v6125
      %v6133 = vunpack.c.l.bf16 %v6127
      %v6134 = vunpack.c.h.bf16 %v6127
      %v6135 = vmul.f32 %v6129, %v5156
      %v6136 = vmul.f32 %v6130, %v5156
      %v6137 = vmul.f32 %v6131, %v5156
      %v6138 = vmul.f32 %v6132, %v5156
      %v6139 = vmul.f32 %v6133, %v5156
      %v6140 = vmul.f32 %v6134, %v5156
      %v6141 = vpack.c.bf16 %v6135, %v6135
      %v6142 = vpack.c.bf16 %v6136, %v6136
      %v6143 = vpack.c.bf16 %v6137, %v6137
      %v6144 = vpack.c.bf16 %v6138, %v6138
      %v6145 = vpack.c.bf16 %v6139, %v6139
      %v6146 = vpack.c.bf16 %v6140, %v6140
      %v6147 = vmul.f32 %v6129, %v5188
      %v6148 = vmul.f32 %v6130, %v5188
      %v6149 = vmul.f32 %v6131, %v5188
      %v6150 = vmul.f32 %v6132, %v5188
      %v6151 = vmul.f32 %v6133, %v5188
      %v6152 = vmul.f32 %v6134, %v5188
      %v6153 = vpack.c.bf16 %v6147, %v6147
      %v6154 = vpack.c.bf16 %v6148, %v6148
      %v6155 = vpack.c.bf16 %v6149, %v6149
      %v6156 = vpack.c.bf16 %v6150, %v6150
      %v6157 = vpack.c.bf16 %v6151, %v6151
      %v6158 = vpack.c.bf16 %v6152, %v6152
      %v6159 = vmul.f32 %v6129, %v5221
      %v6160 = vmul.f32 %v6130, %v5221
      %v6161 = vmul.f32 %v6131, %v5221
      %v6162 = vmul.f32 %v6132, %v5221
      %v6163 = vmul.f32 %v6133, %v5221
      %v6164 = vmul.f32 %v6134, %v5221
      %v6165 = vpack.c.bf16 %v6159, %v6159
      %v6166 = vpack.c.bf16 %v6160, %v6160
      %v6167 = vpack.c.bf16 %v6161, %v6161
      %v6168 = vpack.c.bf16 %v6162, %v6162
      %v6169 = vpack.c.bf16 %v6163, %v6163
      %v6170 = vpack.c.bf16 %v6164, %v6164
      %v6171 = vmul.f32 %v6129, %v5254
      %v6172 = vmul.f32 %v6130, %v5254
      %v6173 = vmul.f32 %v6131, %v5254
      %v6174 = vmul.f32 %v6132, %v5254
      %v6175 = vmul.f32 %v6133, %v5254
      %v6176 = vmul.f32 %v6134, %v5254
      %v6177 = vpack.c.bf16 %v6171, %v6171
      %v6178 = vpack.c.bf16 %v6172, %v6172
      %v6179 = vpack.c.bf16 %v6173, %v6173
      %v6180 = vpack.c.bf16 %v6174, %v6174
      %v6181 = vpack.c.bf16 %v6175, %v6175
      %v6182 = vpack.c.bf16 %v6176, %v6176
      %v6183 = vmul.f32 %v6129, %v5287
      %v6184 = vmul.f32 %v6130, %v5287
      %v6185 = vmul.f32 %v6131, %v5287
      %v6186 = vmul.f32 %v6132, %v5287
      %v6187 = vmul.f32 %v6133, %v5287
      %v6188 = vmul.f32 %v6134, %v5287
      %v6189 = vpack.c.bf16 %v6183, %v6183
      %v6190 = vpack.c.bf16 %v6184, %v6184
      %v6191 = vpack.c.bf16 %v6185, %v6185
      %v6192 = vpack.c.bf16 %v6186, %v6186
      %v6193 = vpack.c.bf16 %v6187, %v6187
      %v6194 = vpack.c.bf16 %v6188, %v6188
      %v6195 = vmul.f32 %v6129, %v5320
      %v6196 = vmul.f32 %v6130, %v5320
      %v6197 = vmul.f32 %v6131, %v5320
      %v6198 = vmul.f32 %v6132, %v5320
      %v6199 = vmul.f32 %v6133, %v5320
      %v6200 = vmul.f32 %v6134, %v5320
      %v6201 = vpack.c.bf16 %v6195, %v6195
      %v6202 = vpack.c.bf16 %v6196, %v6196
      %v6203 = vpack.c.bf16 %v6197, %v6197
      %v6204 = vpack.c.bf16 %v6198, %v6198
      %v6205 = vpack.c.bf16 %v6199, %v6199
      %v6206 = vpack.c.bf16 %v6200, %v6200
      %v6207 = vmul.f32 %v6129, %v5353
      %v6208 = vmul.f32 %v6130, %v5353
      %v6209 = vmul.f32 %v6131, %v5353
      %v6210 = vmul.f32 %v6132, %v5353
      %v6211 = vmul.f32 %v6133, %v5353
      %v6212 = vmul.f32 %v6134, %v5353
      %v6213 = vpack.c.bf16 %v6207, %v6207
      %v6214 = vpack.c.bf16 %v6208, %v6208
      %v6215 = vpack.c.bf16 %v6209, %v6209
      %v6216 = vpack.c.bf16 %v6210, %v6210
      %v6217 = vpack.c.bf16 %v6211, %v6211
      %v6218 = vpack.c.bf16 %v6212, %v6212
      %v6219 = vmul.f32 %v6129, %v5386
      %v6220 = vmul.f32 %v6130, %v5386
      %v6221 = vmul.f32 %v6131, %v5386
      %v6222 = vmul.f32 %v6132, %v5386
      %v6223 = vmul.f32 %v6133, %v5386
      %v6224 = vmul.f32 %v6134, %v5386
      %v6225 = vpack.c.bf16 %v6219, %v6219
      %v6226 = vpack.c.bf16 %v6220, %v6220
      %v6227 = vpack.c.bf16 %v6221, %v6221
      %v6228 = vpack.c.bf16 %v6222, %v6222
      %v6229 = vpack.c.bf16 %v6223, %v6223
      %v6230 = vpack.c.bf16 %v6224, %v6224
      %v6237 = vunpack.c.l.b16 %v6141
      %v6238 = vunpack.c.l.b16 %v6142
      %v6239 = vunpack.c.l.b16 %v6143
      %v6240 = vunpack.c.l.b16 %v6144
      %v6241 = vunpack.c.l.b16 %v6145
      %v6242 = vunpack.c.l.b16 %v6146
      %v6243 = vpack.c.b16 %v6238, %v6237
      %v6244 = vpack.c.b16 %v6240, %v6239
      %v6245 = vpack.c.b16 %v6242, %v6241
      %v6255 = vunpack.c.l.b16 %v6153
      %v6256 = vunpack.c.l.b16 %v6154
      %v6257 = vunpack.c.l.b16 %v6155
      %v6258 = vunpack.c.l.b16 %v6156
      %v6259 = vunpack.c.l.b16 %v6157
      %v6260 = vunpack.c.l.b16 %v6158
      %v6261 = vpack.c.b16 %v6256, %v6255
      %v6262 = vpack.c.b16 %v6258, %v6257
      %v6263 = vpack.c.b16 %v6260, %v6259
      %6264 = vrot.lane.b32.xlu0 %v6261, 127
      %v6265 = vpop.permute.xlu0 %6264
      %6266 = vrot.lane.b32.xlu0 %v6262, 127
      %v6267 = vpop.permute.xlu0 %6266
      %6268 = vrot.lane.b32.xlu0 %v6263, 127
      %v6269 = vpop.permute.xlu0 %6268
      %v6279 = vunpack.c.l.b16 %v6165
      %v6280 = vunpack.c.l.b16 %v6166
      %v6281 = vunpack.c.l.b16 %v6167
      %v6282 = vunpack.c.l.b16 %v6168
      %v6283 = vunpack.c.l.b16 %v6169
      %v6284 = vunpack.c.l.b16 %v6170
      %v6285 = vpack.c.b16 %v6280, %v6279
      %v6286 = vpack.c.b16 %v6282, %v6281
      %v6287 = vpack.c.b16 %v6284, %v6283
      %6288 = vrot.lane.b32.xlu0 %v6285, 126
      %v6289 = vpop.permute.xlu0 %6288
      %6290 = vrot.lane.b32.xlu0 %v6286, 126
      %v6291 = vpop.permute.xlu0 %6290
      %6292 = vrot.lane.b32.xlu0 %v6287, 126
      %v6293 = vpop.permute.xlu0 %6292
      %v6303 = vunpack.c.l.b16 %v6177
      %v6304 = vunpack.c.l.b16 %v6178
      %v6305 = vunpack.c.l.b16 %v6179
      %v6306 = vunpack.c.l.b16 %v6180
      %v6307 = vunpack.c.l.b16 %v6181
      %v6308 = vunpack.c.l.b16 %v6182
      %v6309 = vpack.c.b16 %v6304, %v6303
      %v6310 = vpack.c.b16 %v6306, %v6305
      %v6311 = vpack.c.b16 %v6308, %v6307
      %6312 = vrot.lane.b32.xlu0 %v6309, 120
      %v6313 = vpop.permute.xlu0 %6312
      %6314 = vrot.lane.b32.xlu0 %v6310, 120
      %v6315 = vpop.permute.xlu0 %6314
      %6316 = vrot.lane.b32.xlu0 %v6311, 120
      %v6317 = vpop.permute.xlu0 %6316
      %v6330 = vunpack.c.l.b16 %v6189
      %v6331 = vunpack.c.l.b16 %v6190
      %v6332 = vunpack.c.l.b16 %v6191
      %v6333 = vunpack.c.l.b16 %v6192
      %v6334 = vunpack.c.l.b16 %v6193
      %v6335 = vunpack.c.l.b16 %v6194
      %v6336 = vpack.c.b16 %v6331, %v6330
      %v6337 = vpack.c.b16 %v6333, %v6332
      %v6338 = vpack.c.b16 %v6335, %v6334
      %6339 = vrot.lane.b32.xlu0 %v6336, 118
      %v6340 = vpop.permute.xlu0 %6339
      %6341 = vrot.lane.b32.xlu0 %v6337, 118
      %v6342 = vpop.permute.xlu0 %6341
      %6343 = vrot.lane.b32.xlu0 %v6338, 118
      %v6344 = vpop.permute.xlu0 %6343
      %v6354 = vunpack.c.l.b16 %v6201
      %v6355 = vunpack.c.l.b16 %v6202
      %v6356 = vunpack.c.l.b16 %v6203
      %v6357 = vunpack.c.l.b16 %v6204
      %v6358 = vunpack.c.l.b16 %v6205
      %v6359 = vunpack.c.l.b16 %v6206
      %v6360 = vpack.c.b16 %v6355, %v6354
      %v6361 = vpack.c.b16 %v6357, %v6356
      %v6362 = vpack.c.b16 %v6359, %v6358
      %6363 = vrot.lane.b32.xlu0 %v6360, 112
      %v6364 = vpop.permute.xlu0 %6363
      %6365 = vrot.lane.b32.xlu0 %v6361, 112
      %v6366 = vpop.permute.xlu0 %6365
      %6367 = vrot.lane.b32.xlu0 %v6362, 112
      %v6368 = vpop.permute.xlu0 %6367
      %v6378 = vunpack.c.l.b16 %v6213
      %v6379 = vunpack.c.l.b16 %v6214
      %v6380 = vunpack.c.l.b16 %v6215
      %v6381 = vunpack.c.l.b16 %v6216
      %v6382 = vunpack.c.l.b16 %v6217
      %v6383 = vunpack.c.l.b16 %v6218
      %v6384 = vpack.c.b16 %v6379, %v6378
      %v6385 = vpack.c.b16 %v6381, %v6380
      %v6386 = vpack.c.b16 %v6383, %v6382
      %6387 = vrot.lane.b32.xlu0 %v6384, 111
      %v6388 = vpop.permute.xlu0 %6387
      %6389 = vrot.lane.b32.xlu0 %v6385, 111
      %v6390 = vpop.permute.xlu0 %6389
      %6391 = vrot.lane.b32.xlu0 %v6386, 111
      %v6392 = vpop.permute.xlu0 %6391
      %v6402 = vunpack.c.l.b16 %v6225
      %v6403 = vunpack.c.l.b16 %v6226
      %v6404 = vunpack.c.l.b16 %v6227
      %v6405 = vunpack.c.l.b16 %v6228
      %v6406 = vunpack.c.l.b16 %v6229
      %v6407 = vunpack.c.l.b16 %v6230
      %v6408 = vpack.c.b16 %v6403, %v6402
      %v6409 = vpack.c.b16 %v6405, %v6404
      %v6410 = vpack.c.b16 %v6407, %v6406
      %6411 = vrot.lane.b32.xlu0 %v6408, 110
      %v6412 = vpop.permute.xlu0 %6411
      %6413 = vrot.lane.b32.xlu0 %v6409, 110
      %v6414 = vpop.permute.xlu0 %6413
      %6415 = vrot.lane.b32.xlu0 %v6410, 110
      %v6416 = vpop.permute.xlu0 %6415
      %v6432 = vunpack.c.l.b16 %v1156
      %v6433 = vunpack.c.h.b16 %v1156
      %v6434 = vunpack.c.l.b16 %v1157
      %v6435 = vunpack.c.h.b16 %v1157
      %v6436 = vunpack.c.l.b16 %v1158
      %v6437 = vunpack.c.h.b16 %v1158
      %v6438 = vunpack.c.l.b16 %v1159
      %v6439 = vunpack.c.h.b16 %v1159
      %v6440 = vunpack.c.l.b16 %v1160
      %v6441 = vunpack.c.h.b16 %v1160
      %v6442 = vunpack.c.l.b16 %v1161
      %v6443 = vunpack.c.h.b16 %v1161
      %v6444 = vunpack.c.l.b16 %v1162
      %v6445 = vunpack.c.h.b16 %v1162
      %v6446 = vunpack.c.l.b16 %v1163
      %v6447 = vunpack.c.h.b16 %v1163
      %v6448 = vunpack.c.l.b16 %v1164
      %v6449 = vunpack.c.h.b16 %v1164
      %v6450 = vunpack.c.l.b16 %v1165
      %v6451 = vunpack.c.h.b16 %v1165
      %v6452 = vunpack.c.l.b16 %v1166
      %v6453 = vunpack.c.h.b16 %v1166
      %v6454 = vunpack.c.l.b16 %v1167
      %v6455 = vunpack.c.h.b16 %v1167
      %v6456 = vpack.c.b16 %v6436, %v6432
      %v6457 = vpack.c.b16 %v6437, %v6433
      %v6458 = vpack.c.b16 %v6438, %v6434
      %v6459 = vpack.c.b16 %v6439, %v6435
      %v6460 = vpack.c.b16 %v6444, %v6440
      %v6461 = vpack.c.b16 %v6445, %v6441
      %v6462 = vpack.c.b16 %v6446, %v6442
      %v6463 = vpack.c.b16 %v6447, %v6443
      %v6464 = vpack.c.b16 %v6452, %v6448
      %v6465 = vpack.c.b16 %v6453, %v6449
      %v6466 = vpack.c.b16 %v6454, %v6450
      %v6467 = vpack.c.b16 %v6455, %v6451
      %vm6477 = vcmask 392192
      %v6479 = vsel %vm6477, %v6459, 0
      %v6482 = vsel %vm6477, %v6463, 0
      %v6485 = vsel %vm6477, %v6467, 0
      %6487 = vmatpush.bf16.msra.mxu0 %v6291
      %6488 = vmatpush.bf16.msra.mxu0 %v6289
      %6489 = vmatpush.bf16.msra.mxu0 %v6269
      %6490 = vmatpush.bf16.msra.mxu0 %v6267
      %6491 = vmatpush.bf16.msra.mxu0 %v6265
      %6492 = vmatpush.bf16.msra.mxu0 %v6245
      %6493 = vmatpush.bf16.msra.mxu0 %v6244
      %6494 = vmatpush.bf16.msra.mxu0 %v6243
      %6495 = vmatmul.bf16.gmra.mxu0 %v6456
      %v6496 = vpop.f32.mrf.mxu0
      %v6497 = vadd.f32 0.0, %v6496
      %v6498 = vpop.f32.mrf.mxu0
      %v6499 = vadd.f32 0.0, %v6498
      %6500 = vmatmul.bf16.gmra.mxu0 %v6460
      %v6501 = vpop.f32.mrf.mxu0
      %v6502 = vadd.f32 0.0, %v6501
      %v6503 = vpop.f32.mrf.mxu0
      %v6504 = vadd.f32 0.0, %v6503
      %6505 = vmatmul.bf16.gmra.mxu0 %v6464
      %v6506 = vpop.f32.mrf.mxu0
      %v6507 = vadd.f32 0.0, %v6506
      %v6508 = vpop.f32.mrf.mxu0
      %v6509 = vadd.f32 0.0, %v6508
      %6510 = vdwg.mxu0
      %6511 = vmatpush.bf16.msra.mxu0 %v6340
      %6512 = vmatpush.bf16.msra.mxu0 %v6110
      %6513 = vmatpush.bf16.msra.mxu0 %v6109
      %6514 = vmatpush.bf16.msra.mxu0 %v6108
      %6515 = vmatpush.bf16.msra.mxu0 %v6317
      %6516 = vmatpush.bf16.msra.mxu0 %v6315
      %6517 = vmatpush.bf16.msra.mxu0 %v6313
      %6518 = vmatpush.bf16.msra.mxu0 %v6293
      %6519 = vmatmul.bf16.gmra.mxu0 %v6457
      %v6520 = vpop.f32.mrf.mxu0
      %v6521 = vadd.f32 %v6497, %v6520
      %v6522 = vpop.f32.mrf.mxu0
      %v6523 = vadd.f32 %v6499, %v6522
      %6524 = vmatmul.bf16.gmra.mxu0 %v6461
      %v6525 = vpop.f32.mrf.mxu0
      %v6526 = vadd.f32 %v6502, %v6525
      %v6527 = vpop.f32.mrf.mxu0
      %v6528 = vadd.f32 %v6504, %v6527
      %6529 = vmatmul.bf16.gmra.mxu0 %v6465
      %v6530 = vpop.f32.mrf.mxu0
      %v6531 = vadd.f32 %v6507, %v6530
      %v6532 = vpop.f32.mrf.mxu0
      %v6533 = vadd.f32 %v6509, %v6532
      %6534 = vdwg.mxu0
      %6535 = vmatpush.bf16.msra.mxu0 %v6392
      %6536 = vmatpush.bf16.msra.mxu0 %v6390
      %6537 = vmatpush.bf16.msra.mxu0 %v6388
      %6538 = vmatpush.bf16.msra.mxu0 %v6368
      %6539 = vmatpush.bf16.msra.mxu0 %v6366
      %6540 = vmatpush.bf16.msra.mxu0 %v6364
      %6541 = vmatpush.bf16.msra.mxu0 %v6344
      %6542 = vmatpush.bf16.msra.mxu0 %v6342
      %6543 = vmatmul.bf16.gmra.mxu0 %v6458
      %v6544 = vpop.f32.mrf.mxu0
      %v6545 = vadd.f32 %v6521, %v6544
      %v6546 = vpop.f32.mrf.mxu0
      %v6547 = vadd.f32 %v6523, %v6546
      %6548 = vmatmul.bf16.gmra.mxu0 %v6462
      %v6549 = vpop.f32.mrf.mxu0
      %v6550 = vadd.f32 %v6526, %v6549
      %v6551 = vpop.f32.mrf.mxu0
      %v6552 = vadd.f32 %v6528, %v6551
      %6553 = vmatmul.bf16.gmra.mxu0 %v6466
      %v6554 = vpop.f32.mrf.mxu0
      %v6555 = vadd.f32 %v6531, %v6554
      %v6556 = vpop.f32.mrf.mxu0
      %v6557 = vadd.f32 %v6533, %v6556
      %6558 = vdwg.mxu0
      %6559 = vmatpush.bf16.msra.mxu0 0
      %6560 = vmatpush.bf16.msra.mxu0 0
      %6561 = vmatpush.bf16.msra.mxu0 0
      %6562 = vmatpush.bf16.msra.mxu0 0
      %6563 = vmatpush.bf16.msra.mxu0 0
      %6564 = vmatpush.bf16.msra.mxu0 %v6416
      %6565 = vmatpush.bf16.msra.mxu0 %v6414
      %6566 = vmatpush.bf16.msra.mxu0 %v6412
      %6567 = vmatmul.bf16.gmra.mxu0 %v6479
      %v6568 = vpop.f32.mrf.mxu0
      %v6569 = vadd.f32 %v6545, %v6568
      %v6570 = vpop.f32.mrf.mxu0
      %v6571 = vadd.f32 %v6547, %v6570
      %6572 = vmatmul.bf16.gmra.mxu0 %v6482
      %v6573 = vpop.f32.mrf.mxu0
      %v6574 = vadd.f32 %v6550, %v6573
      %v6575 = vpop.f32.mrf.mxu0
      %v6576 = vadd.f32 %v6552, %v6575
      %6577 = vmatmul.bf16.gmra.mxu0 %v6485
      %v6578 = vpop.f32.mrf.mxu0
      %v6579 = vadd.f32 %v6555, %v6578
      %v6580 = vpop.f32.mrf.mxu0
      %v6581 = vadd.f32 %v6557, %v6580
      %6582 = vdwg.mxu0
      %vm6583 = vcmp.ge.f32.partialorder %v6569, 0.0
      %vm6584 = vcmp.ge.f32.partialorder %v6571, 0.0
      %vm6585 = vcmp.ge.f32.partialorder %v6574, 0.0
      %vm6586 = vcmp.ge.f32.partialorder %v6576, 0.0
      %vm6587 = vcmp.ge.f32.partialorder %v6579, 0.0
      %vm6588 = vcmp.ge.f32.partialorder %v6581, 0.0
      %v6589 = vmul.f32 %v6569, 0.2
      %v6590 = vmul.f32 %v6571, 0.2
      %v6591 = vmul.f32 %v6574, 0.2
      %v6592 = vmul.f32 %v6576, 0.2
      %v6593 = vmul.f32 %v6579, 0.2
      %v6594 = vmul.f32 %v6581, 0.2
      %v6595 = vsel %vm6583, %v6569, %v6589
      %v6596 = vsel %vm6584, %v6571, %v6590
      %v6597 = vsel %vm6585, %v6574, %v6591
      %v6598 = vsel %vm6586, %v6576, %v6592
      %v6599 = vsel %vm6587, %v6579, %v6593
      %v6600 = vsel %vm6588, %v6581, %v6594
      %v6601 = vpack.c.bf16 %v6596, %v6595
      %v6602 = vpack.c.bf16 %v6598, %v6597
      %v6603 = vpack.c.bf16 %v6600, %v6599
      %v6612 = vunpack.c.l.b16 %v1203
      %v6613 = vunpack.c.h.b16 %v1203
      %v6614 = vunpack.c.l.b16 %v1204
      %v6615 = vunpack.c.h.b16 %v1204
      %v6616 = vunpack.c.l.b16 %v1205
      %v6617 = vunpack.c.h.b16 %v1205
      %v6618 = vunpack.c.l.b16 %v1206
      %v6619 = vunpack.c.h.b16 %v1206
      %v6620 = vunpack.c.l.b16 %v1207
      %v6621 = vunpack.c.h.b16 %v1207
      %v6622 = vunpack.c.l.b16 %v1208
      %v6623 = vunpack.c.h.b16 %v1208
      %v6624 = vunpack.c.l.b16 %v1209
      %v6625 = vunpack.c.h.b16 %v1209
      %v6626 = vunpack.c.l.b16 %v1210
      %v6627 = vunpack.c.h.b16 %v1210
      %v6628 = vpack.c.b16 %v6614, %v6612
      %v6629 = vpack.c.b16 %v6615, %v6613
      %v6630 = vpack.c.b16 %v6618, %v6616
      %v6631 = vpack.c.b16 %v6619, %v6617
      %v6632 = vpack.c.b16 %v6622, %v6620
      %v6633 = vpack.c.b16 %v6623, %v6621
      %v6634 = vpack.c.b16 %v6626, %v6624
      %v6635 = vpack.c.b16 %v6627, %v6625
      %vm6644 = vcmask 523264
      %v6646 = vsel %vm6644, %v6601, 0
      %v6649 = vsel %vm6644, %v6602, 0
      %v6652 = vsel %vm6644, %v6603, 0
      %6654 = vmatpush.bf16.msra.mxu0 0
      %6655 = vmatpush.bf16.msra.mxu0 0
      %6656 = vmatpush.bf16.msra.mxu0 0
      %6657 = vmatpush.bf16.msra.mxu0 0
      %6658 = vmatpush.bf16.msra.mxu0 %v6634
      %6659 = vmatpush.bf16.msra.mxu0 %v6632
      %6660 = vmatpush.bf16.msra.mxu0 %v6630
      %6661 = vmatpush.bf16.msra.mxu0 %v6628
      %6662 = vmatmul.bf16.gmra.mxu0 %v6646
      %v6663 = vpop.f32.mrf.mxu0
      %v6664 = vadd.f32 0.0, %v6663
      %v6665 = vpop.f32.mrf.mxu0
      %v6666 = vadd.f32 0.0, %v6665
      %6667 = vmatmul.bf16.gmra.mxu0 %v6649
      %v6668 = vpop.f32.mrf.mxu0
      %v6669 = vadd.f32 0.0, %v6668
      %v6670 = vpop.f32.mrf.mxu0
      %v6671 = vadd.f32 0.0, %v6670
      %6672 = vmatmul.bf16.gmra.mxu0 %v6652
      %v6673 = vpop.f32.mrf.mxu0
      %v6674 = vadd.f32 0.0, %v6673
      %v6675 = vpop.f32.mrf.mxu0
      %v6676 = vadd.f32 0.0, %v6675
      %6677 = vdwg.mxu0
      %6678 = vmatpush.bf16.msra.mxu0 0
      %6679 = vmatpush.bf16.msra.mxu0 0
      %6680 = vmatpush.bf16.msra.mxu0 0
      %6681 = vmatpush.bf16.msra.mxu0 0
      %6682 = vmatpush.bf16.msra.mxu0 %v6635
      %6683 = vmatpush.bf16.msra.mxu0 %v6633
      %6684 = vmatpush.bf16.msra.mxu0 %v6631
      %6685 = vmatpush.bf16.msra.mxu0 %v6629
      %6686 = vmatmul.bf16.gmra.mxu0 %v6646
      %v6687 = vpop.f32.mrf.mxu0
      %v6688 = vadd.f32 0.0, %v6687
      %v6689 = vpop.f32.mrf.mxu0
      %v6690 = vadd.f32 0.0, %v6689
      %6691 = vmatmul.bf16.gmra.mxu0 %v6649
      %v6692 = vpop.f32.mrf.mxu0
      %v6693 = vadd.f32 0.0, %v6692
      %v6694 = vpop.f32.mrf.mxu0
      %v6695 = vadd.f32 0.0, %v6694
      %6696 = vmatmul.bf16.gmra.mxu0 %v6652
      %v6697 = vpop.f32.mrf.mxu0
      %v6698 = vadd.f32 0.0, %v6697
      %v6699 = vpop.f32.mrf.mxu0
      %v6700 = vadd.f32 0.0, %v6699
      %6701 = vdwg.mxu0
      %v6702 = vpack.c.bf16 %v6688, %v6664
      %v6703 = vpack.c.bf16 %v6690, %v6666
      %v6704 = vpack.c.bf16 %v6693, %v6669
      %v6705 = vpack.c.bf16 %v6695, %v6671
      %v6706 = vpack.c.bf16 %v6698, %v6674
      %v6707 = vpack.c.bf16 %v6700, %v6676
      %v6714 = vunpack.c.l.b16 %v6702
      %v6715 = vunpack.c.h.b16 %v6702
      %v6716 = vunpack.c.l.b16 %v6703
      %v6717 = vunpack.c.h.b16 %v6703
      %v6718 = vunpack.c.l.b16 %v6704
      %v6719 = vunpack.c.h.b16 %v6704
      %v6720 = vunpack.c.l.b16 %v6705
      %v6721 = vunpack.c.h.b16 %v6705
      %v6722 = vunpack.c.l.b16 %v6706
      %v6723 = vunpack.c.h.b16 %v6706
      %v6724 = vunpack.c.l.b16 %v6707
      %v6725 = vunpack.c.h.b16 %v6707
      %v6726 = vpack.c.b16 %v6716, %v6714
      %v6727 = vpack.c.b16 %v6717, %v6715
      %v6728 = vpack.c.b16 %v6720, %v6718
      %v6729 = vpack.c.b16 %v6721, %v6719
      %v6730 = vpack.c.b16 %v6724, %v6722
      %v6731 = vpack.c.b16 %v6725, %v6723
      %6732 = vrot.lane.b32.xlu0 %v6726, 17
      %v6733 = vpop.permute.xlu0 %6732
      %6734 = vrot.lane.b32.xlu0 %v6727, 17
      %v6735 = vpop.permute.xlu0 %6734
      %6736 = vrot.lane.b32.xlu0 %v6728, 17
      %v6737 = vpop.permute.xlu0 %6736
      %6738 = vrot.lane.b32.xlu0 %v6729, 17
      %v6739 = vpop.permute.xlu0 %6738
      %6740 = vrot.lane.b32.xlu0 %v6730, 17
      %v6741 = vpop.permute.xlu0 %6740
      %6742 = vrot.lane.b32.xlu0 %v6731, 17
      %v6743 = vpop.permute.xlu0 %6742
      %vm6744 = vcmask 138240
      %v6745 = vsel %vm6744, %v6733, %v6735
      %v6746 = vsel %vm6744, %v6737, %v6739
      %v6747 = vsel %vm6744, %v6741, %v6743
      %vm6751 = vcmask 138240
      %v6753 = vsel %vm6751, 0, %v6733
      %v6756 = vsel %vm6751, 0, %v6737
      %v6759 = vsel %vm6751, 0, %v6741
      %v6762 = vsel %vm6751, %v6735, 0
      %v6765 = vsel %vm6751, %v6739, 0
      %v6768 = vsel %vm6751, %v6743, 0
      %6771 = vst [vmem:[#allocation1] ss:$9 sm:$0xff] %v1193
      %v6772 = vld [vmem:[#allocation1] sm:$0xff]
      %v6773 = vld [vmem:[#allocation1 + $0x9] sm:$0xff]
      %v6774 = vpack.i.b16 %v6772, %v6772
      %v6776 = vperm.slane %v6774, 0
      %v6777 = vpack.i.b16 %v6773, %v6773
      %v6779 = vperm.slane %v6777, 0
      %v6780 = vunpack.c.l.bf16 %v6753
      %v6781 = vunpack.c.l.bf16 %v6745
      %v6782 = vunpack.c.h.bf16 %v6753
      %v6783 = vunpack.c.h.bf16 %v6745
      %v6784 = vunpack.c.l.bf16 %v6756
      %v6785 = vunpack.c.l.bf16 %v6746
      %v6786 = vunpack.c.h.bf16 %v6756
      %v6787 = vunpack.c.h.bf16 %v6746
      %v6788 = vunpack.c.l.bf16 %v6759
      %v6789 = vunpack.c.l.bf16 %v6747
      %v6790 = vunpack.c.h.bf16 %v6759
      %v6791 = vunpack.c.h.bf16 %v6747
      %v6792 = vunpack.c.l.bf16 %v6776
      %v6793 = vunpack.c.l.bf16 %v6779
      %v6794 = vmul.f32 %v6780, %v6792
      %v6795 = vmul.f32 %v6781, %v6793
      %v6796 = vmul.f32 %v6782, %v6792
      %v6797 = vmul.f32 %v6783, %v6793
      %v6798 = vmul.f32 %v6784, %v6792
      %v6799 = vmul.f32 %v6785, %v6793
      %v6800 = vmul.f32 %v6786, %v6792
      %v6801 = vmul.f32 %v6787, %v6793
      %v6802 = vmul.f32 %v6788, %v6792
      %v6803 = vmul.f32 %v6789, %v6793
      %v6804 = vmul.f32 %v6790, %v6792
      %v6805 = vmul.f32 %v6791, %v6793
      %v6806 = vpack.c.bf16 %v6795, %v6794
      %v6807 = vpack.c.bf16 %v6797, %v6796
      %v6808 = vpack.c.bf16 %v6799, %v6798
      %v6809 = vpack.c.bf16 %v6801, %v6800
      %v6810 = vpack.c.bf16 %v6803, %v6802
      %v6811 = vpack.c.bf16 %v6805, %v6804
      %6813 = vst [vmem:[#allocation1] ss:$9 sm:$0xff] %v1194
      %v6814 = vld [vmem:[#allocation1] sm:$0xff]
      %v6815 = vld [vmem:[#allocation1 + $0x9] sm:$0xff]
      %v6816 = vpack.i.b16 %v6814, %v6814
      %v6818 = vperm.slane %v6816, 0
      %v6819 = vpack.i.b16 %v6815, %v6815
      %v6821 = vperm.slane %v6819, 0
      %v6822 = vunpack.c.l.bf16 %v6762
      %v6823 = vunpack.c.h.bf16 %v6762
      %v6824 = vunpack.c.l.bf16 %v6765
      %v6825 = vunpack.c.h.bf16 %v6765
      %v6826 = vunpack.c.l.bf16 %v6768
      %v6827 = vunpack.c.h.bf16 %v6768
      %v6828 = vunpack.c.l.bf16 %v6818
      %v6829 = vunpack.c.l.bf16 %v6821
      %6832 = vrot.lane.b32.xlu0 %v6828, 1
      %v6833 = vpop.permute.xlu0 %6832
      %6834 = vrot.lane.b32.xlu0 %v6829, 1
      %v6835 = vpop.permute.xlu0 %6834
      %vm6836 = vcmask 7168
      %v6837 = vsel %vm6836, %v6833, %v6835
      %v6841 = vmul.f32 %v6780, %v6833
      %v6842 = vmul.f32 %v6781, %v6837
      %v6843 = vmul.f32 %v6822, %v6835
      %v6844 = vmul.f32 %v6782, %v6833
      %v6845 = vmul.f32 %v6783, %v6837
      %v6846 = vmul.f32 %v6823, %v6835
      %v6847 = vmul.f32 %v6784, %v6833
      %v6848 = vmul.f32 %v6785, %v6837
      %v6849 = vmul.f32 %v6824, %v6835
      %v6850 = vmul.f32 %v6786, %v6833
      %v6851 = vmul.f32 %v6787, %v6837
      %v6852 = vmul.f32 %v6825, %v6835
      %v6853 = vmul.f32 %v6788, %v6833
      %v6854 = vmul.f32 %v6789, %v6837
      %v6855 = vmul.f32 %v6826, %v6835
      %v6856 = vmul.f32 %v6790, %v6833
      %v6857 = vmul.f32 %v6791, %v6837
      %v6858 = vmul.f32 %v6827, %v6835
      %v6859 = vpack.c.bf16 %v6842, %v6841
      %v6860 = vpack.c.bf16 %v6843, %v6843
      %v6861 = vpack.c.bf16 %v6845, %v6844
      %v6862 = vpack.c.bf16 %v6846, %v6846
      %v6863 = vpack.c.bf16 %v6848, %v6847
      %v6864 = vpack.c.bf16 %v6849, %v6849
      %v6865 = vpack.c.bf16 %v6851, %v6850
      %v6866 = vpack.c.bf16 %v6852, %v6852
      %v6867 = vpack.c.bf16 %v6854, %v6853
      %v6868 = vpack.c.bf16 %v6855, %v6855
      %v6869 = vpack.c.bf16 %v6857, %v6856
      %v6870 = vpack.c.bf16 %v6858, %v6858
      %6872 = vst [vmem:[#allocation1] ss:$9 sm:$0xff] %v1195
      %v6873 = vld [vmem:[#allocation1] sm:$0xff]
      %v6874 = vld [vmem:[#allocation1 + $0x9] sm:$0xff]
      %v6875 = vpack.i.b16 %v6873, %v6873
      %v6877 = vperm.slane %v6875, 0
      %v6878 = vpack.i.b16 %v6874, %v6874
      %v6880 = vperm.slane %v6878, 0
      %v6881 = vunpack.c.l.bf16 %v6877
      %v6882 = vunpack.c.l.bf16 %v6880
      %6885 = vrot.lane.b32.xlu0 %v6881, 2
      %v6886 = vpop.permute.xlu0 %6885
      %6887 = vrot.lane.b32.xlu0 %v6882, 2
      %v6888 = vpop.permute.xlu0 %6887
      %vm6889 = vcmask 15360
      %v6890 = vsel %vm6889, %v6886, %v6888
      %v6894 = vmul.f32 %v6780, %v6886
      %v6895 = vmul.f32 %v6781, %v6890
      %v6896 = vmul.f32 %v6822, %v6888
      %v6897 = vmul.f32 %v6782, %v6886
      %v6898 = vmul.f32 %v6783, %v6890
      %v6899 = vmul.f32 %v6823, %v6888
      %v6900 = vmul.f32 %v6784, %v6886
      %v6901 = vmul.f32 %v6785, %v6890
      %v6902 = vmul.f32 %v6824, %v6888
      %v6903 = vmul.f32 %v6786, %v6886
      %v6904 = vmul.f32 %v6787, %v6890
      %v6905 = vmul.f32 %v6825, %v6888
      %v6906 = vmul.f32 %v6788, %v6886
      %v6907 = vmul.f32 %v6789, %v6890
      %v6908 = vmul.f32 %v6826, %v6888
      %v6909 = vmul.f32 %v6790, %v6886
      %v6910 = vmul.f32 %v6791, %v6890
      %v6911 = vmul.f32 %v6827, %v6888
      %v6912 = vpack.c.bf16 %v6895, %v6894
      %v6913 = vpack.c.bf16 %v6896, %v6896
      %v6914 = vpack.c.bf16 %v6898, %v6897
      %v6915 = vpack.c.bf16 %v6899, %v6899
      %v6916 = vpack.c.bf16 %v6901, %v6900
      %v6917 = vpack.c.bf16 %v6902, %v6902
      %v6918 = vpack.c.bf16 %v6904, %v6903
      %v6919 = vpack.c.bf16 %v6905, %v6905
      %v6920 = vpack.c.bf16 %v6907, %v6906
      %v6921 = vpack.c.bf16 %v6908, %v6908
      %v6922 = vpack.c.bf16 %v6910, %v6909
      %v6923 = vpack.c.bf16 %v6911, %v6911
      %6925 = vst [vmem:[#allocation1] ss:$9 sm:$0xff] %v1196
      %v6926 = vld [vmem:[#allocation1] sm:$0xff]
      %v6927 = vld [vmem:[#allocation1 + $0x9] sm:$0xff]
      %v6928 = vpack.i.b16 %v6926, %v6926
      %v6930 = vperm.slane %v6928, 0
      %v6931 = vpack.i.b16 %v6927, %v6927
      %v6933 = vperm.slane %v6931, 0
      %v6934 = vunpack.c.l.bf16 %v6930
      %v6935 = vunpack.c.l.bf16 %v6933
      %6938 = vrot.lane.b32.xlu0 %v6934, 16
      %v6939 = vpop.permute.xlu0 %6938
      %6940 = vrot.lane.b32.xlu0 %v6935, 16
      %v6941 = vpop.permute.xlu0 %6940
      %v6942 = vsel %vm5002, %v6939, %v6941
      %v6946 = vmul.f32 %v6780, %v6939
      %v6947 = vmul.f32 %v6781, %v6942
      %v6948 = vmul.f32 %v6822, %v6941
      %v6949 = vmul.f32 %v6782, %v6939
      %v6950 = vmul.f32 %v6783, %v6942
      %v6951 = vmul.f32 %v6823, %v6941
      %v6952 = vmul.f32 %v6784, %v6939
      %v6953 = vmul.f32 %v6785, %v6942
      %v6954 = vmul.f32 %v6824, %v6941
      %v6955 = vmul.f32 %v6786, %v6939
      %v6956 = vmul.f32 %v6787, %v6942
      %v6957 = vmul.f32 %v6825, %v6941
      %v6958 = vmul.f32 %v6788, %v6939
      %v6959 = vmul.f32 %v6789, %v6942
      %v6960 = vmul.f32 %v6826, %v6941
      %v6961 = vmul.f32 %v6790, %v6939
      %v6962 = vmul.f32 %v6791, %v6942
      %v6963 = vmul.f32 %v6827, %v6941
      %v6964 = vpack.c.bf16 %v6947, %v6946
      %v6965 = vpack.c.bf16 %v6948, %v6948
      %v6966 = vpack.c.bf16 %v6950, %v6949
      %v6967 = vpack.c.bf16 %v6951, %v6951
      %v6968 = vpack.c.bf16 %v6953, %v6952
      %v6969 = vpack.c.bf16 %v6954, %v6954
      %v6970 = vpack.c.bf16 %v6956, %v6955
      %v6971 = vpack.c.bf16 %v6957, %v6957
      %v6972 = vpack.c.bf16 %v6959, %v6958
      %v6973 = vpack.c.bf16 %v6960, %v6960
      %v6974 = vpack.c.bf16 %v6962, %v6961
      %v6975 = vpack.c.bf16 %v6963, %v6963
      %6977 = vst [vmem:[#allocation1] ss:$9 sm:$0xff] %v1197
      %v6978 = vld [vmem:[#allocation1] sm:$0xff]
      %v6979 = vld [vmem:[#allocation1 + $0x9] sm:$0xff]
      %v6980 = vpack.i.b16 %v6978, %v6978
      %v6982 = vperm.slane %v6980, 0
      %v6983 = vpack.i.b16 %v6979, %v6979
      %v6985 = vperm.slane %v6983, 0
      %v6986 = vunpack.c.l.bf16 %v6982
      %v6987 = vunpack.c.l.bf16 %v6985
      %6990 = vrot.lane.b32.xlu0 %v6986, 18
      %v6991 = vpop.permute.xlu0 %6990
      %6992 = vrot.lane.b32.xlu0 %v6987, 18
      %v6993 = vpop.permute.xlu0 %6992
      %vm6994 = vcmask 146432
      %v6995 = vsel %vm6994, %v6991, %v6993
      %v6999 = vmul.f32 %v6780, %v6991
      %v7000 = vmul.f32 %v6781, %v6995
      %v7001 = vmul.f32 %v6822, %v6993
      %v7002 = vmul.f32 %v6782, %v6991
      %v7003 = vmul.f32 %v6783, %v6995
      %v7004 = vmul.f32 %v6823, %v6993
      %v7005 = vmul.f32 %v6784, %v6991
      %v7006 = vmul.f32 %v6785, %v6995
      %v7007 = vmul.f32 %v6824, %v6993
      %v7008 = vmul.f32 %v6786, %v6991
      %v7009 = vmul.f32 %v6787, %v6995
      %v7010 = vmul.f32 %v6825, %v6993
      %v7011 = vmul.f32 %v6788, %v6991
      %v7012 = vmul.f32 %v6789, %v6995
      %v7013 = vmul.f32 %v6826, %v6993
      %v7014 = vmul.f32 %v6790, %v6991
      %v7015 = vmul.f32 %v6791, %v6995
      %v7016 = vmul.f32 %v6827, %v6993
      %v7017 = vpack.c.bf16 %v7000, %v6999
      %v7018 = vpack.c.bf16 %v7001, %v7001
      %v7019 = vpack.c.bf16 %v7003, %v7002
      %v7020 = vpack.c.bf16 %v7004, %v7004
      %v7021 = vpack.c.bf16 %v7006, %v7005
      %v7022 = vpack.c.bf16 %v7007, %v7007
      %v7023 = vpack.c.bf16 %v7009, %v7008
      %v7024 = vpack.c.bf16 %v7010, %v7010
      %v7025 = vpack.c.bf16 %v7012, %v7011
      %v7026 = vpack.c.bf16 %v7013, %v7013
      %v7027 = vpack.c.bf16 %v7015, %v7014
      %v7028 = vpack.c.bf16 %v7016, %v7016
      %7030 = vst [vmem:[#allocation1] ss:$9 sm:$0xff] %v1198
      %v7031 = vld [vmem:[#allocation1] sm:$0xff]
      %v7032 = vld [vmem:[#allocation1 + $0x9] sm:$0xff]
      %v7033 = vpack.i.b16 %v7031, %v7031
      %v7035 = vperm.slane %v7033, 0
      %v7036 = vpack.i.b16 %v7032, %v7032
      %v7038 = vperm.slane %v7036, 0
      %v7039 = vunpack.c.l.bf16 %v7035
      %v7040 = vunpack.c.l.bf16 %v7038
      %7043 = vrot.lane.b32.xlu0 %v7039, 32
      %v7044 = vpop.permute.xlu0 %7043
      %7045 = vrot.lane.b32.xlu0 %v7040, 32
      %v7046 = vpop.permute.xlu0 %7045
      %vm7047 = vcmask 261120
      %v7048 = vsel %vm7047, %v7044, %v7046
      %v7052 = vmul.f32 %v6780, %v7044
      %v7053 = vmul.f32 %v6781, %v7048
      %v7054 = vmul.f32 %v6822, %v7046
      %v7055 = vmul.f32 %v6782, %v7044
      %v7056 = vmul.f32 %v6783, %v7048
      %v7057 = vmul.f32 %v6823, %v7046
      %v7058 = vmul.f32 %v6784, %v7044
      %v7059 = vmul.f32 %v6785, %v7048
      %v7060 = vmul.f32 %v6824, %v7046
      %v7061 = vmul.f32 %v6786, %v7044
      %v7062 = vmul.f32 %v6787, %v7048
      %v7063 = vmul.f32 %v6825, %v7046
      %v7064 = vmul.f32 %v6788, %v7044
      %v7065 = vmul.f32 %v6789, %v7048
      %v7066 = vmul.f32 %v6826, %v7046
      %v7067 = vmul.f32 %v6790, %v7044
      %v7068 = vmul.f32 %v6791, %v7048
      %v7069 = vmul.f32 %v6827, %v7046
      %v7070 = vpack.c.bf16 %v7053, %v7052
      %v7071 = vpack.c.bf16 %v7054, %v7054
      %v7072 = vpack.c.bf16 %v7056, %v7055
      %v7073 = vpack.c.bf16 %v7057, %v7057
      %v7074 = vpack.c.bf16 %v7059, %v7058
      %v7075 = vpack.c.bf16 %v7060, %v7060
      %v7076 = vpack.c.bf16 %v7062, %v7061
      %v7077 = vpack.c.bf16 %v7063, %v7063
      %v7078 = vpack.c.bf16 %v7065, %v7064
      %v7079 = vpack.c.bf16 %v7066, %v7066
      %v7080 = vpack.c.bf16 %v7068, %v7067
      %v7081 = vpack.c.bf16 %v7069, %v7069
      %7083 = vst [vmem:[#allocation1] ss:$9 sm:$0xff] %v1199
      %v7084 = vld [vmem:[#allocation1] sm:$0xff]
      %v7085 = vld [vmem:[#allocation1 + $0x9] sm:$0xff]
      %v7086 = vpack.i.b16 %v7084, %v7084
      %v7088 = vperm.slane %v7086, 0
      %v7089 = vpack.i.b16 %v7085, %v7085
      %v7091 = vperm.slane %v7089, 0
      %v7092 = vunpack.c.l.bf16 %v7088
      %v7093 = vunpack.c.l.bf16 %v7091
      %7096 = vrot.lane.b32.xlu0 %v7092, 33
      %v7097 = vpop.permute.xlu0 %7096
      %7098 = vrot.lane.b32.xlu0 %v7093, 33
      %v7099 = vpop.permute.xlu0 %7098
      %vm7100 = vcmask 269312
      %v7101 = vsel %vm7100, %v7097, %v7099
      %v7105 = vmul.f32 %v6780, %v7097
      %v7106 = vmul.f32 %v6781, %v7101
      %v7107 = vmul.f32 %v6822, %v7099
      %v7108 = vmul.f32 %v6782, %v7097
      %v7109 = vmul.f32 %v6783, %v7101
      %v7110 = vmul.f32 %v6823, %v7099
      %v7111 = vmul.f32 %v6784, %v7097
      %v7112 = vmul.f32 %v6785, %v7101
      %v7113 = vmul.f32 %v6824, %v7099
      %v7114 = vmul.f32 %v6786, %v7097
      %v7115 = vmul.f32 %v6787, %v7101
      %v7116 = vmul.f32 %v6825, %v7099
      %v7117 = vmul.f32 %v6788, %v7097
      %v7118 = vmul.f32 %v6789, %v7101
      %v7119 = vmul.f32 %v6826, %v7099
      %v7120 = vmul.f32 %v6790, %v7097
      %v7121 = vmul.f32 %v6791, %v7101
      %v7122 = vmul.f32 %v6827, %v7099
      %v7123 = vpack.c.bf16 %v7106, %v7105
      %v7124 = vpack.c.bf16 %v7107, %v7107
      %v7125 = vpack.c.bf16 %v7109, %v7108
      %v7126 = vpack.c.bf16 %v7110, %v7110
      %v7127 = vpack.c.bf16 %v7112, %v7111
      %v7128 = vpack.c.bf16 %v7113, %v7113
      %v7129 = vpack.c.bf16 %v7115, %v7114
      %v7130 = vpack.c.bf16 %v7116, %v7116
      %v7131 = vpack.c.bf16 %v7118, %v7117
      %v7132 = vpack.c.bf16 %v7119, %v7119
      %v7133 = vpack.c.bf16 %v7121, %v7120
      %v7134 = vpack.c.bf16 %v7122, %v7122
      %7136 = vst [vmem:[#allocation1] ss:$9 sm:$0xff] %v1200
      %v7137 = vld [vmem:[#allocation1] sm:$0xff]
      %v7138 = vld [vmem:[#allocation1 + $0x9] sm:$0xff]
      %v7139 = vpack.i.b16 %v7137, %v7137
      %v7141 = vperm.slane %v7139, 0
      %v7142 = vpack.i.b16 %v7138, %v7138
      %v7144 = vperm.slane %v7142, 0
      %v7145 = vunpack.c.l.bf16 %v7141
      %v7146 = vunpack.c.l.bf16 %v7144
      %7149 = vrot.lane.b32.xlu0 %v7145, 34
      %v7150 = vpop.permute.xlu0 %7149
      %7151 = vrot.lane.b32.xlu0 %v7146, 34
      %v7152 = vpop.permute.xlu0 %7151
      %vm7153 = vcmask 277504
      %v7154 = vsel %vm7153, %v7150, %v7152
      %v7158 = vmul.f32 %v6780, %v7150
      %v7159 = vmul.f32 %v6781, %v7154
      %v7160 = vmul.f32 %v6822, %v7152
      %v7161 = vmul.f32 %v6782, %v7150
      %v7162 = vmul.f32 %v6783, %v7154
      %v7163 = vmul.f32 %v6823, %v7152
      %v7164 = vmul.f32 %v6784, %v7150
      %v7165 = vmul.f32 %v6785, %v7154
      %v7166 = vmul.f32 %v6824, %v7152
      %v7167 = vmul.f32 %v6786, %v7150
      %v7168 = vmul.f32 %v6787, %v7154
      %v7169 = vmul.f32 %v6825, %v7152
      %v7170 = vmul.f32 %v6788, %v7150
      %v7171 = vmul.f32 %v6789, %v7154
      %v7172 = vmul.f32 %v6826, %v7152
      %v7173 = vmul.f32 %v6790, %v7150
      %v7174 = vmul.f32 %v6791, %v7154
      %v7175 = vmul.f32 %v6827, %v7152
      %v7176 = vpack.c.bf16 %v7159, %v7158
      %v7177 = vpack.c.bf16 %v7160, %v7160
      %v7178 = vpack.c.bf16 %v7162, %v7161
      %v7179 = vpack.c.bf16 %v7163, %v7163
      %v7180 = vpack.c.bf16 %v7165, %v7164
      %v7181 = vpack.c.bf16 %v7166, %v7166
      %v7182 = vpack.c.bf16 %v7168, %v7167
      %v7183 = vpack.c.bf16 %v7169, %v7169
      %v7184 = vpack.c.bf16 %v7171, %v7170
      %v7185 = vpack.c.bf16 %v7172, %v7172
      %v7186 = vpack.c.bf16 %v7174, %v7173
      %v7187 = vpack.c.bf16 %v7175, %v7175
      %v7194 = vunpack.c.l.b16 %v6806
      %v7195 = vunpack.c.h.b16 %v6806
      %v7196 = vunpack.c.l.b16 %v6807
      %v7197 = vunpack.c.h.b16 %v6807
      %v7198 = vunpack.c.l.b16 %v6808
      %v7199 = vunpack.c.h.b16 %v6808
      %v7200 = vunpack.c.l.b16 %v6809
      %v7201 = vunpack.c.h.b16 %v6809
      %v7202 = vunpack.c.l.b16 %v6810
      %v7203 = vunpack.c.h.b16 %v6810
      %v7204 = vunpack.c.l.b16 %v6811
      %v7205 = vunpack.c.h.b16 %v6811
      %v7206 = vpack.c.b16 %v7196, %v7194
      %v7207 = vpack.c.b16 %v7197, %v7195
      %v7208 = vpack.c.b16 %v7200, %v7198
      %v7209 = vpack.c.b16 %v7201, %v7199
      %v7210 = vpack.c.b16 %v7204, %v7202
      %v7211 = vpack.c.b16 %v7205, %v7203
      %v7230 = vunpack.c.l.b16 %v6859
      %v7231 = vunpack.c.h.b16 %v6859
      %v7232 = vunpack.c.l.b16 %v6860
      %v7233 = vunpack.c.l.b16 %v6861
      %v7234 = vunpack.c.h.b16 %v6861
      %v7235 = vunpack.c.l.b16 %v6862
      %v7236 = vunpack.c.l.b16 %v6863
      %v7237 = vunpack.c.h.b16 %v6863
      %v7238 = vunpack.c.l.b16 %v6864
      %v7239 = vunpack.c.l.b16 %v6865
      %v7240 = vunpack.c.h.b16 %v6865
      %v7241 = vunpack.c.l.b16 %v6866
      %v7242 = vunpack.c.l.b16 %v6867
      %v7243 = vunpack.c.h.b16 %v6867
      %v7244 = vunpack.c.l.b16 %v6868
      %v7245 = vunpack.c.l.b16 %v6869
      %v7246 = vunpack.c.h.b16 %v6869
      %v7247 = vunpack.c.l.b16 %v6870
      %v7248 = vpack.c.b16 %v7233, %v7230
      %v7249 = vpack.c.b16 %v7234, %v7231
      %v7250 = vpack.c.b16 %v7235, %v7232
      %v7251 = vpack.c.b16 %v7239, %v7236
      %v7252 = vpack.c.b16 %v7240, %v7237
      %v7253 = vpack.c.b16 %v7241, %v7238
      %v7254 = vpack.c.b16 %v7245, %v7242
      %v7255 = vpack.c.b16 %v7246, %v7243
      %v7256 = vpack.c.b16 %v7247, %v7244
      %7257 = vrot.lane.b32.xlu0 %v7248, 127
      %v7258 = vpop.permute.xlu0 %7257
      %7259 = vrot.lane.b32.xlu0 %v7249, 127
      %v7260 = vpop.permute.xlu0 %7259
      %7261 = vrot.lane.b32.xlu0 %v7250, 127
      %v7262 = vpop.permute.xlu0 %7261
      %7263 = vrot.lane.b32.xlu0 %v7251, 127
      %v7264 = vpop.permute.xlu0 %7263
      %7265 = vrot.lane.b32.xlu0 %v7252, 127
      %v7266 = vpop.permute.xlu0 %7265
      %7267 = vrot.lane.b32.xlu0 %v7253, 127
      %v7268 = vpop.permute.xlu0 %7267
      %7269 = vrot.lane.b32.xlu0 %v7254, 127
      %v7270 = vpop.permute.xlu0 %7269
      %7271 = vrot.lane.b32.xlu0 %v7255, 127
      %v7272 = vpop.permute.xlu0 %7271
      %7273 = vrot.lane.b32.xlu0 %v7256, 127
      %v7274 = vpop.permute.xlu0 %7273
      %vm7275 = vcmask 1039360
      %v7276 = vsel %vm7275, %v7258, %v7260
      %v7277 = vsel %vm7275, %v7260, %v7262
      %v7278 = vsel %vm7275, %v7264, %v7266
      %v7279 = vsel %vm7275, %v7266, %v7268
      %v7280 = vsel %vm7275, %v7270, %v7272
      %v7281 = vsel %vm7275, %v7272, %v7274
      %v7300 = vunpack.c.l.b16 %v6912
      %v7301 = vunpack.c.h.b16 %v6912
      %v7302 = vunpack.c.l.b16 %v6913
      %v7303 = vunpack.c.l.b16 %v6914
      %v7304 = vunpack.c.h.b16 %v6914
      %v7305 = vunpack.c.l.b16 %v6915
      %v7306 = vunpack.c.l.b16 %v6916
      %v7307 = vunpack.c.h.b16 %v6916
      %v7308 = vunpack.c.l.b16 %v6917
      %v7309 = vunpack.c.l.b16 %v6918
      %v7310 = vunpack.c.h.b16 %v6918
      %v7311 = vunpack.c.l.b16 %v6919
      %v7312 = vunpack.c.l.b16 %v6920
      %v7313 = vunpack.c.h.b16 %v6920
      %v7314 = vunpack.c.l.b16 %v6921
      %v7315 = vunpack.c.l.b16 %v6922
      %v7316 = vunpack.c.h.b16 %v6922
      %v7317 = vunpack.c.l.b16 %v6923
      %v7318 = vpack.c.b16 %v7303, %v7300
      %v7319 = vpack.c.b16 %v7304, %v7301
      %v7320 = vpack.c.b16 %v7305, %v7302
      %v7321 = vpack.c.b16 %v7309, %v7306
      %v7322 = vpack.c.b16 %v7310, %v7307
      %v7323 = vpack.c.b16 %v7311, %v7308
      %v7324 = vpack.c.b16 %v7315, %v7312
      %v7325 = vpack.c.b16 %v7316, %v7313
      %v7326 = vpack.c.b16 %v7317, %v7314
      %7327 = vrot.lane.b32.xlu0 %v7318, 126
      %v7328 = vpop.permute.xlu0 %7327
      %7329 = vrot.lane.b32.xlu0 %v7319, 126
      %v7330 = vpop.permute.xlu0 %7329
      %7331 = vrot.lane.b32.xlu0 %v7320, 126
      %v7332 = vpop.permute.xlu0 %7331
      %7333 = vrot.lane.b32.xlu0 %v7321, 126
      %v7334 = vpop.permute.xlu0 %7333
      %7335 = vrot.lane.b32.xlu0 %v7322, 126
      %v7336 = vpop.permute.xlu0 %7335
      %7337 = vrot.lane.b32.xlu0 %v7323, 126
      %v7338 = vpop.permute.xlu0 %7337
      %7339 = vrot.lane.b32.xlu0 %v7324, 126
      %v7340 = vpop.permute.xlu0 %7339
      %7341 = vrot.lane.b32.xlu0 %v7325, 126
      %v7342 = vpop.permute.xlu0 %7341
      %7343 = vrot.lane.b32.xlu0 %v7326, 126
      %v7344 = vpop.permute.xlu0 %7343
      %vm7345 = vcmask 1031168
      %v7346 = vsel %vm7345, %v7328, %v7330
      %v7347 = vsel %vm7345, %v7330, %v7332
      %v7348 = vsel %vm7345, %v7334, %v7336
      %v7349 = vsel %vm7345, %v7336, %v7338
      %v7350 = vsel %vm7345, %v7340, %v7342
      %v7351 = vsel %vm7345, %v7342, %v7344
      %v7370 = vunpack.c.l.b16 %v6964
      %v7371 = vunpack.c.h.b16 %v6964
      %v7372 = vunpack.c.l.b16 %v6965
      %v7373 = vunpack.c.l.b16 %v6966
      %v7374 = vunpack.c.h.b16 %v6966
      %v7375 = vunpack.c.l.b16 %v6967
      %v7376 = vunpack.c.l.b16 %v6968
      %v7377 = vunpack.c.h.b16 %v6968
      %v7378 = vunpack.c.l.b16 %v6969
      %v7379 = vunpack.c.l.b16 %v6970
      %v7380 = vunpack.c.h.b16 %v6970
      %v7381 = vunpack.c.l.b16 %v6971
      %v7382 = vunpack.c.l.b16 %v6972
      %v7383 = vunpack.c.h.b16 %v6972
      %v7384 = vunpack.c.l.b16 %v6973
      %v7385 = vunpack.c.l.b16 %v6974
      %v7386 = vunpack.c.h.b16 %v6974
      %v7387 = vunpack.c.l.b16 %v6975
      %v7388 = vpack.c.b16 %v7373, %v7370
      %v7389 = vpack.c.b16 %v7374, %v7371
      %v7390 = vpack.c.b16 %v7375, %v7372
      %v7391 = vpack.c.b16 %v7379, %v7376
      %v7392 = vpack.c.b16 %v7380, %v7377
      %v7393 = vpack.c.b16 %v7381, %v7378
      %v7394 = vpack.c.b16 %v7385, %v7382
      %v7395 = vpack.c.b16 %v7386, %v7383
      %v7396 = vpack.c.b16 %v7387, %v7384
      %7397 = vrot.lane.b32.xlu0 %v7388, 112
      %v7398 = vpop.permute.xlu0 %7397
      %7399 = vrot.lane.b32.xlu0 %v7389, 112
      %v7400 = vpop.permute.xlu0 %7399
      %7401 = vrot.lane.b32.xlu0 %v7390, 112
      %v7402 = vpop.permute.xlu0 %7401
      %7403 = vrot.lane.b32.xlu0 %v7391, 112
      %v7404 = vpop.permute.xlu0 %7403
      %7405 = vrot.lane.b32.xlu0 %v7392, 112
      %v7406 = vpop.permute.xlu0 %7405
      %7407 = vrot.lane.b32.xlu0 %v7393, 112
      %v7408 = vpop.permute.xlu0 %7407
      %7409 = vrot.lane.b32.xlu0 %v7394, 112
      %v7410 = vpop.permute.xlu0 %7409
      %7411 = vrot.lane.b32.xlu0 %v7395, 112
      %v7412 = vpop.permute.xlu0 %7411
      %7413 = vrot.lane.b32.xlu0 %v7396, 112
      %v7414 = vpop.permute.xlu0 %7413
      %vm7415 = vcmask 916480
      %v7416 = vsel %vm7415, %v7398, %v7400
      %v7417 = vsel %vm7415, %v7400, %v7402
      %v7418 = vsel %vm7415, %v7404, %v7406
      %v7419 = vsel %vm7415, %v7406, %v7408
      %v7420 = vsel %vm7415, %v7410, %v7412
      %v7421 = vsel %vm7415, %v7412, %v7414
      %v7446 = vunpack.c.l.b16 %v7017
      %v7447 = vunpack.c.h.b16 %v7017
      %v7448 = vunpack.c.l.b16 %v7018
      %v7449 = vunpack.c.l.b16 %v7019
      %v7450 = vunpack.c.h.b16 %v7019
      %v7451 = vunpack.c.l.b16 %v7020
      %v7452 = vunpack.c.l.b16 %v7021
      %v7453 = vunpack.c.h.b16 %v7021
      %v7454 = vunpack.c.l.b16 %v7022
      %v7455 = vunpack.c.l.b16 %v7023
      %v7456 = vunpack.c.h.b16 %v7023
      %v7457 = vunpack.c.l.b16 %v7024
      %v7458 = vunpack.c.l.b16 %v7025
      %v7459 = vunpack.c.h.b16 %v7025
      %v7460 = vunpack.c.l.b16 %v7026
      %v7461 = vunpack.c.l.b16 %v7027
      %v7462 = vunpack.c.h.b16 %v7027
      %v7463 = vunpack.c.l.b16 %v7028
      %v7464 = vpack.c.b16 %v7449, %v7446
      %v7465 = vpack.c.b16 %v7450, %v7447
      %v7466 = vpack.c.b16 %v7451, %v7448
      %v7467 = vpack.c.b16 %v7455, %v7452
      %v7468 = vpack.c.b16 %v7456, %v7453
      %v7469 = vpack.c.b16 %v7457, %v7454
      %v7470 = vpack.c.b16 %v7461, %v7458
      %v7471 = vpack.c.b16 %v7462, %v7459
      %v7472 = vpack.c.b16 %v7463, %v7460
      %7473 = vrot.lane.b32.xlu0 %v7464, 110
      %v7474 = vpop.permute.xlu0 %7473
      %7475 = vrot.lane.b32.xlu0 %v7465, 110
      %v7476 = vpop.permute.xlu0 %7475
      %7477 = vrot.lane.b32.xlu0 %v7466, 110
      %v7478 = vpop.permute.xlu0 %7477
      %7479 = vrot.lane.b32.xlu0 %v7467, 110
      %v7480 = vpop.permute.xlu0 %7479
      %7481 = vrot.lane.b32.xlu0 %v7468, 110
      %v7482 = vpop.permute.xlu0 %7481
      %7483 = vrot.lane.b32.xlu0 %v7469, 110
      %v7484 = vpop.permute.xlu0 %7483
      %7485 = vrot.lane.b32.xlu0 %v7470, 110
      %v7486 = vpop.permute.xlu0 %7485
      %7487 = vrot.lane.b32.xlu0 %v7471, 110
      %v7488 = vpop.permute.xlu0 %7487
      %7489 = vrot.lane.b32.xlu0 %v7472, 110
      %v7490 = vpop.permute.xlu0 %7489
      %vm7491 = vcmask 900096
      %v7492 = vsel %vm7491, %v7474, %v7476
      %v7493 = vsel %vm7491, %v7476, %v7478
      %v7494 = vsel %vm7491, %v7480, %v7482
      %v7495 = vsel %vm7491, %v7482, %v7484
      %v7496 = vsel %vm7491, %v7486, %v7488
      %v7497 = vsel %vm7491, %v7488, %v7490
      %v7516 = vunpack.c.l.b16 %v7070
      %v7517 = vunpack.c.h.b16 %v7070
      %v7518 = vunpack.c.l.b16 %v7071
      %v7519 = vunpack.c.l.b16 %v7072
      %v7520 = vunpack.c.h.b16 %v7072
      %v7521 = vunpack.c.l.b16 %v7073
      %v7522 = vunpack.c.l.b16 %v7074
      %v7523 = vunpack.c.h.b16 %v7074
      %v7524 = vunpack.c.l.b16 %v7075
      %v7525 = vunpack.c.l.b16 %v7076
      %v7526 = vunpack.c.h.b16 %v7076
      %v7527 = vunpack.c.l.b16 %v7077
      %v7528 = vunpack.c.l.b16 %v7078
      %v7529 = vunpack.c.h.b16 %v7078
      %v7530 = vunpack.c.l.b16 %v7079
      %v7531 = vunpack.c.l.b16 %v7080
      %v7532 = vunpack.c.h.b16 %v7080
      %v7533 = vunpack.c.l.b16 %v7081
      %v7534 = vpack.c.b16 %v7519, %v7516
      %v7535 = vpack.c.b16 %v7520, %v7517
      %v7536 = vpack.c.b16 %v7521, %v7518
      %v7537 = vpack.c.b16 %v7525, %v7522
      %v7538 = vpack.c.b16 %v7526, %v7523
      %v7539 = vpack.c.b16 %v7527, %v7524
      %v7540 = vpack.c.b16 %v7531, %v7528
      %v7541 = vpack.c.b16 %v7532, %v7529
      %v7542 = vpack.c.b16 %v7533, %v7530
      %7543 = vrot.lane.b32.xlu0 %v7534, 96
      %v7544 = vpop.permute.xlu0 %7543
      %7545 = vrot.lane.b32.xlu0 %v7535, 96
      %v7546 = vpop.permute.xlu0 %7545
      %7547 = vrot.lane.b32.xlu0 %v7536, 96
      %v7548 = vpop.permute.xlu0 %7547
      %7549 = vrot.lane.b32.xlu0 %v7537, 96
      %v7550 = vpop.permute.xlu0 %7549
      %7551 = vrot.lane.b32.xlu0 %v7538, 96
      %v7552 = vpop.permute.xlu0 %7551
      %7553 = vrot.lane.b32.xlu0 %v7539, 96
      %v7554 = vpop.permute.xlu0 %7553
      %7555 = vrot.lane.b32.xlu0 %v7540, 96
      %v7556 = vpop.permute.xlu0 %7555
      %7557 = vrot.lane.b32.xlu0 %v7541, 96
      %v7558 = vpop.permute.xlu0 %7557
      %7559 = vrot.lane.b32.xlu0 %v7542, 96
      %v7560 = vpop.permute.xlu0 %7559
      %vm7561 = vcmask 785408
      %v7562 = vsel %vm7561, %v7544, %v7546
      %v7563 = vsel %vm7561, %v7546, %v7548
      %v7564 = vsel %vm7561, %v7550, %v7552
      %v7565 = vsel %vm7561, %v7552, %v7554
      %v7566 = vsel %vm7561, %v7556, %v7558
      %v7567 = vsel %vm7561, %v7558, %v7560
      %v7586 = vunpack.c.l.b16 %v7123
      %v7587 = vunpack.c.h.b16 %v7123
      %v7588 = vunpack.c.l.b16 %v7124
      %v7589 = vunpack.c.l.b16 %v7125
      %v7590 = vunpack.c.h.b16 %v7125
      %v7591 = vunpack.c.l.b16 %v7126
      %v7592 = vunpack.c.l.b16 %v7127
      %v7593 = vunpack.c.h.b16 %v7127
      %v7594 = vunpack.c.l.b16 %v7128
      %v7595 = vunpack.c.l.b16 %v7129
      %v7596 = vunpack.c.h.b16 %v7129
      %v7597 = vunpack.c.l.b16 %v7130
      %v7598 = vunpack.c.l.b16 %v7131
      %v7599 = vunpack.c.h.b16 %v7131
      %v7600 = vunpack.c.l.b16 %v7132
      %v7601 = vunpack.c.l.b16 %v7133
      %v7602 = vunpack.c.h.b16 %v7133
      %v7603 = vunpack.c.l.b16 %v7134
      %v7604 = vpack.c.b16 %v7589, %v7586
      %v7605 = vpack.c.b16 %v7590, %v7587
      %v7606 = vpack.c.b16 %v7591, %v7588
      %v7607 = vpack.c.b16 %v7595, %v7592
      %v7608 = vpack.c.b16 %v7596, %v7593
      %v7609 = vpack.c.b16 %v7597, %v7594
      %v7610 = vpack.c.b16 %v7601, %v7598
      %v7611 = vpack.c.b16 %v7602, %v7599
      %v7612 = vpack.c.b16 %v7603, %v7600
      %7613 = vrot.lane.b32.xlu0 %v7604, 95
      %v7614 = vpop.permute.xlu0 %7613
      %7615 = vrot.lane.b32.xlu0 %v7605, 95
      %v7616 = vpop.permute.xlu0 %7615
      %7617 = vrot.lane.b32.xlu0 %v7606, 95
      %v7618 = vpop.permute.xlu0 %7617
      %7619 = vrot.lane.b32.xlu0 %v7607, 95
      %v7620 = vpop.permute.xlu0 %7619
      %7621 = vrot.lane.b32.xlu0 %v7608, 95
      %v7622 = vpop.permute.xlu0 %7621
      %7623 = vrot.lane.b32.xlu0 %v7609, 95
      %v7624 = vpop.permute.xlu0 %7623
      %7625 = vrot.lane.b32.xlu0 %v7610, 95
      %v7626 = vpop.permute.xlu0 %7625
      %7627 = vrot.lane.b32.xlu0 %v7611, 95
      %v7628 = vpop.permute.xlu0 %7627
      %7629 = vrot.lane.b32.xlu0 %v7612, 95
      %v7630 = vpop.permute.xlu0 %7629
      %vm7631 = vcmask 777216
      %v7632 = vsel %vm7631, %v7614, %v7616
      %v7633 = vsel %vm7631, %v7616, %v7618
      %v7634 = vsel %vm7631, %v7620, %v7622
      %v7635 = vsel %vm7631, %v7622, %v7624
      %v7636 = vsel %vm7631, %v7626, %v7628
      %v7637 = vsel %vm7631, %v7628, %v7630
      %v7656 = vunpack.c.l.b16 %v7176
      %v7657 = vunpack.c.h.b16 %v7176
      %v7658 = vunpack.c.l.b16 %v7177
      %v7659 = vunpack.c.l.b16 %v7178
      %v7660 = vunpack.c.h.b16 %v7178
      %v7661 = vunpack.c.l.b16 %v7179
      %v7662 = vunpack.c.l.b16 %v7180
      %v7663 = vunpack.c.h.b16 %v7180
      %v7664 = vunpack.c.l.b16 %v7181
      %v7665 = vunpack.c.l.b16 %v7182
      %v7666 = vunpack.c.h.b16 %v7182
      %v7667 = vunpack.c.l.b16 %v7183
      %v7668 = vunpack.c.l.b16 %v7184
      %v7669 = vunpack.c.h.b16 %v7184
      %v7670 = vunpack.c.l.b16 %v7185
      %v7671 = vunpack.c.l.b16 %v7186
      %v7672 = vunpack.c.h.b16 %v7186
      %v7673 = vunpack.c.l.b16 %v7187
      %v7674 = vpack.c.b16 %v7659, %v7656
      %v7675 = vpack.c.b16 %v7660, %v7657
      %v7676 = vpack.c.b16 %v7661, %v7658
      %v7677 = vpack.c.b16 %v7665, %v7662
      %v7678 = vpack.c.b16 %v7666, %v7663
      %v7679 = vpack.c.b16 %v7667, %v7664
      %v7680 = vpack.c.b16 %v7671, %v7668
      %v7681 = vpack.c.b16 %v7672, %v7669
      %v7682 = vpack.c.b16 %v7673, %v7670
      %7683 = vrot.lane.b32.xlu0 %v7674, 94
      %v7684 = vpop.permute.xlu0 %7683
      %7685 = vrot.lane.b32.xlu0 %v7675, 94
      %v7686 = vpop.permute.xlu0 %7685
      %7687 = vrot.lane.b32.xlu0 %v7676, 94
      %v7688 = vpop.permute.xlu0 %7687
      %7689 = vrot.lane.b32.xlu0 %v7677, 94
      %v7690 = vpop.permute.xlu0 %7689
      %7691 = vrot.lane.b32.xlu0 %v7678, 94
      %v7692 = vpop.permute.xlu0 %7691
      %7693 = vrot.lane.b32.xlu0 %v7679, 94
      %v7694 = vpop.permute.xlu0 %7693
      %7695 = vrot.lane.b32.xlu0 %v7680, 94
      %v7696 = vpop.permute.xlu0 %7695
      %7697 = vrot.lane.b32.xlu0 %v7681, 94
      %v7698 = vpop.permute.xlu0 %7697
      %7699 = vrot.lane.b32.xlu0 %v7682, 94
      %v7700 = vpop.permute.xlu0 %7699
      %vm7701 = vcmask 769024
      %v7702 = vsel %vm7701, %v7684, %v7686
      %v7703 = vsel %vm7701, %v7686, %v7688
      %v7704 = vsel %vm7701, %v7690, %v7692
      %v7705 = vsel %vm7701, %v7692, %v7694
      %v7706 = vsel %vm7701, %v7696, %v7698
      %v7707 = vsel %vm7701, %v7698, %v7700
      %v7720 = vunpack.c.l.b16 %v1168
      %v7721 = vunpack.c.h.b16 %v1168
      %v7722 = vunpack.c.l.b16 %v1169
      %v7723 = vunpack.c.h.b16 %v1169
      %v7724 = vunpack.c.l.b16 %v1170
      %v7725 = vunpack.c.h.b16 %v1170
      %v7726 = vunpack.c.l.b16 %v1171
      %v7727 = vunpack.c.h.b16 %v1171
      %v7728 = vunpack.c.l.b16 %v1172
      %v7729 = vunpack.c.h.b16 %v1172
      %v7730 = vunpack.c.l.b16 %v1173
      %v7731 = vunpack.c.h.b16 %v1173
      %v7732 = vpack.c.b16 %v7724, %v7720
      %v7733 = vpack.c.b16 %v7725, %v7721
      %v7734 = vpack.c.b16 %v7726, %v7722
      %v7735 = vpack.c.b16 %v7727, %v7723
      %v7736 = vpack.c.b16 %v7728, %v7728
      %v7737 = vpack.c.b16 %v7729, %v7729
      %v7738 = vpack.c.b16 %v7730, %v7730
      %v7739 = vpack.c.b16 %v7731, %v7731
      %v7747 = vsel %vm6477, %v7735, 0
      %v7750 = vsel %vm6477, %v7739, 0
      %7752 = vmatpush.bf16.msra.mxu0 %v7348
      %7753 = vmatpush.bf16.msra.mxu0 %v7346
      %7754 = vmatpush.bf16.msra.mxu0 %v7280
      %7755 = vmatpush.bf16.msra.mxu0 %v7278
      %7756 = vmatpush.bf16.msra.mxu0 %v7276
      %7757 = vmatpush.bf16.msra.mxu0 %v7210
      %7758 = vmatpush.bf16.msra.mxu0 %v7208
      %7759 = vmatpush.bf16.msra.mxu0 %v7206
      %7760 = vmatmul.bf16.gmra.mxu0 %v7732
      %v7761 = vpop.f32.mrf.mxu0
      %v7762 = vadd.f32 0.0, %v7761
      %v7763 = vpop.f32.mrf.mxu0
      %v7764 = vadd.f32 0.0, %v7763
      %7765 = vmatmul.bf16.gmra.mxu0 %v7736
      %v7766 = vpop.f32.mrf.mxu0
      %v7767 = vadd.f32 0.0, %v7766
      %v7768 = vpop.f32.mrf.mxu0
      %7769 = vdwg.mxu0
      %7770 = vmatpush.bf16.msra.mxu0 %v7492
      %7771 = vmatpush.bf16.msra.mxu0 %v6730
      %7772 = vmatpush.bf16.msra.mxu0 %v6728
      %7773 = vmatpush.bf16.msra.mxu0 %v6726
      %7774 = vmatpush.bf16.msra.mxu0 %v7420
      %7775 = vmatpush.bf16.msra.mxu0 %v7418
      %7776 = vmatpush.bf16.msra.mxu0 %v7416
      %7777 = vmatpush.bf16.msra.mxu0 %v7350
      %7778 = vmatmul.bf16.gmra.mxu0 %v7733
      %v7779 = vpop.f32.mrf.mxu0
      %v7780 = vadd.f32 %v7762, %v7779
      %v7781 = vpop.f32.mrf.mxu0
      %v7782 = vadd.f32 %v7764, %v7781
      %7783 = vmatmul.bf16.gmra.mxu0 %v7737
      %v7784 = vpop.f32.mrf.mxu0
      %v7785 = vadd.f32 %v7767, %v7784
      %v7786 = vpop.f32.mrf.mxu0
      %7787 = vdwg.mxu0
      %7788 = vmatpush.bf16.msra.mxu0 %v7636
      %7789 = vmatpush.bf16.msra.mxu0 %v7634
      %7790 = vmatpush.bf16.msra.mxu0 %v7632
      %7791 = vmatpush.bf16.msra.mxu0 %v7566
      %7792 = vmatpush.bf16.msra.mxu0 %v7564
      %7793 = vmatpush.bf16.msra.mxu0 %v7562
      %7794 = vmatpush.bf16.msra.mxu0 %v7496
      %7795 = vmatpush.bf16.msra.mxu0 %v7494
      %7796 = vmatmul.bf16.gmra.mxu0 %v7734
      %v7797 = vpop.f32.mrf.mxu0
      %v7798 = vadd.f32 %v7780, %v7797
      %v7799 = vpop.f32.mrf.mxu0
      %v7800 = vadd.f32 %v7782, %v7799
      %7801 = vmatmul.bf16.gmra.mxu0 %v7738
      %v7802 = vpop.f32.mrf.mxu0
      %v7803 = vadd.f32 %v7785, %v7802
      %v7804 = vpop.f32.mrf.mxu0
      %7805 = vdwg.mxu0
      %7806 = vmatpush.bf16.msra.mxu0 0
      %7807 = vmatpush.bf16.msra.mxu0 0
      %7808 = vmatpush.bf16.msra.mxu0 0
      %7809 = vmatpush.bf16.msra.mxu0 0
      %7810 = vmatpush.bf16.msra.mxu0 0
      %7811 = vmatpush.bf16.msra.mxu0 %v7706
      %7812 = vmatpush.bf16.msra.mxu0 %v7704
      %7813 = vmatpush.bf16.msra.mxu0 %v7702
      %7814 = vmatmul.bf16.gmra.mxu0 %v7747
      %v7815 = vpop.f32.mrf.mxu0
      %v7816 = vadd.f32 %v7798, %v7815
      %v7817 = vpop.f32.mrf.mxu0
      %v7818 = vadd.f32 %v7800, %v7817
      %7819 = vmatmul.bf16.gmra.mxu0 %v7750
      %v7820 = vpop.f32.mrf.mxu0
      %v7821 = vadd.f32 %v7803, %v7820
      %v7822 = vpop.f32.mrf.mxu0
      %7823 = vdwg.mxu0
      %7824 = vmatpush.bf16.msra.mxu0 %v7349
      %7825 = vmatpush.bf16.msra.mxu0 %v7347
      %7826 = vmatpush.bf16.msra.mxu0 %v7281
      %7827 = vmatpush.bf16.msra.mxu0 %v7279
      %7828 = vmatpush.bf16.msra.mxu0 %v7277
      %7829 = vmatpush.bf16.msra.mxu0 %v7211
      %7830 = vmatpush.bf16.msra.mxu0 %v7209
      %7831 = vmatpush.bf16.msra.mxu0 %v7207
      %7832 = vmatmul.bf16.gmra.mxu0 %v7732
      %v7833 = vpop.f32.mrf.mxu0
      %v7834 = vadd.f32 0.0, %v7833
      %v7835 = vpop.f32.mrf.mxu0
      %v7836 = vadd.f32 0.0, %v7835
      %7837 = vmatmul.bf16.gmra.mxu0 %v7736
      %v7838 = vpop.f32.mrf.mxu0
      %v7839 = vadd.f32 0.0, %v7838
      %v7840 = vpop.f32.mrf.mxu0
      %7841 = vdwg.mxu0
      %7842 = vmatpush.bf16.msra.mxu0 %v7493
      %7843 = vmatpush.bf16.msra.mxu0 %v6731
      %7844 = vmatpush.bf16.msra.mxu0 %v6729
      %7845 = vmatpush.bf16.msra.mxu0 %v6727
      %7846 = vmatpush.bf16.msra.mxu0 %v7421
      %7847 = vmatpush.bf16.msra.mxu0 %v7419
      %7848 = vmatpush.bf16.msra.mxu0 %v7417
      %7849 = vmatpush.bf16.msra.mxu0 %v7351
      %7850 = vmatmul.bf16.gmra.mxu0 %v7733
      %v7851 = vpop.f32.mrf.mxu0
      %v7852 = vadd.f32 %v7834, %v7851
      %v7853 = vpop.f32.mrf.mxu0
      %v7854 = vadd.f32 %v7836, %v7853
      %7855 = vmatmul.bf16.gmra.mxu0 %v7737
      %v7856 = vpop.f32.mrf.mxu0
      %v7857 = vadd.f32 %v7839, %v7856
      %v7858 = vpop.f32.mrf.mxu0
      %7859 = vdwg.mxu0
      %7860 = vmatpush.bf16.msra.mxu0 %v7637
      %7861 = vmatpush.bf16.msra.mxu0 %v7635
      %7862 = vmatpush.bf16.msra.mxu0 %v7633
      %7863 = vmatpush.bf16.msra.mxu0 %v7567
      %7864 = vmatpush.bf16.msra.mxu0 %v7565
      %7865 = vmatpush.bf16.msra.mxu0 %v7563
      %7866 = vmatpush.bf16.msra.mxu0 %v7497
      %7867 = vmatpush.bf16.msra.mxu0 %v7495
      %7868 = vmatmul.bf16.gmra.mxu0 %v7734
      %v7869 = vpop.f32.mrf.mxu0
      %v7870 = vadd.f32 %v7852, %v7869
      %v7871 = vpop.f32.mrf.mxu0
      %v7872 = vadd.f32 %v7854, %v7871
      %7873 = vmatmul.bf16.gmra.mxu0 %v7738
      %v7874 = vpop.f32.mrf.mxu0
      %v7875 = vadd.f32 %v7857, %v7874
      %v7876 = vpop.f32.mrf.mxu0
      %7877 = vdwg.mxu0
      %7878 = vmatpush.bf16.msra.mxu0 0
      %7879 = vmatpush.bf16.msra.mxu0 0
      %7880 = vmatpush.bf16.msra.mxu0 0
      %7881 = vmatpush.bf16.msra.mxu0 0
      %7882 = vmatpush.bf16.msra.mxu0 0
      %7883 = vmatpush.bf16.msra.mxu0 %v7707
      %7884 = vmatpush.bf16.msra.mxu0 %v7705
      %7885 = vmatpush.bf16.msra.mxu0 %v7703
      %7886 = vmatmul.bf16.gmra.mxu0 %v7747
      %v7887 = vpop.f32.mrf.mxu0
      %v7888 = vadd.f32 %v7870, %v7887
      %v7889 = vpop.f32.mrf.mxu0
      %v7890 = vadd.f32 %v7872, %v7889
      %7891 = vmatmul.bf16.gmra.mxu0 %v7750
      %v7892 = vpop.f32.mrf.mxu0
      %v7893 = vadd.f32 %v7875, %v7892
      %v7894 = vpop.f32.mrf.mxu0
      %7895 = vdwg.mxu0
      %vm7896 = vcmp.ge.f32.partialorder %v7816, 0.0
      %vm7897 = vcmp.ge.f32.partialorder %v7888, 0.0
      %vm7898 = vcmp.ge.f32.partialorder %v7818, 0.0
      %vm7899 = vcmp.ge.f32.partialorder %v7890, 0.0
      %vm7900 = vcmp.ge.f32.partialorder %v7821, 0.0
      %vm7901 = vcmp.ge.f32.partialorder %v7893, 0.0
      %v7902 = vmul.f32 %v7816, 0.2
      %v7903 = vmul.f32 %v7888, 0.2
      %v7904 = vmul.f32 %v7818, 0.2
      %v7905 = vmul.f32 %v7890, 0.2
      %v7906 = vmul.f32 %v7821, 0.2
      %v7907 = vmul.f32 %v7893, 0.2
      %v7908 = vsel %vm7896, %v7816, %v7902
      %v7909 = vsel %vm7897, %v7888, %v7903
      %v7910 = vsel %vm7898, %v7818, %v7904
      %v7911 = vsel %vm7899, %v7890, %v7905
      %v7912 = vsel %vm7900, %v7821, %v7906
      %v7913 = vsel %vm7901, %v7893, %v7907
      %v7914 = vpack.c.bf16 %v7909, %v7908
      %v7915 = vpack.c.bf16 %v7911, %v7910
      %v7916 = vpack.c.bf16 %v7913, %v7912
      %v7920 = vunpack.c.l.b16 %v7914
      %v7921 = vunpack.c.h.b16 %v7914
      %v7922 = vunpack.c.l.b16 %v7915
      %v7923 = vunpack.c.h.b16 %v7915
      %v7924 = vunpack.c.l.b16 %v7916
      %v7925 = vunpack.c.h.b16 %v7916
      %v7926 = vpack.c.b16 %v7922, %v7920
      %v7927 = vpack.c.b16 %v7923, %v7921
      %v7928 = vpack.c.b16 %v7924, %v7924
      %v7929 = vpack.c.b16 %v7925, %v7925
      %7930 = vrot.lane.b32.xlu0 %v7926, 17
      %v7931 = vpop.permute.xlu0 %7930
      %7932 = vrot.lane.b32.xlu0 %v7927, 17
      %v7933 = vpop.permute.xlu0 %7932
      %7934 = vrot.lane.b32.xlu0 %v7928, 17
      %v7935 = vpop.permute.xlu0 %7934
      %7936 = vrot.lane.b32.xlu0 %v7929, 17
      %v7937 = vpop.permute.xlu0 %7936
      %v7938 = vsel %vm6744, %v7931, %v7933
      %v7939 = vsel %vm6744, %v7935, %v7937
      %v7943 = vsel %vm6751, 0, %v7931
      %v7946 = vsel %vm6751, 0, %v7935
      %v7949 = vsel %vm6751, %v7933, 0
      %v7952 = vsel %vm6751, %v7937, 0
      %7954 = vst [vmem:[#allocation1] ss:$9 sm:$0xff] %v1193
      %v7955 = vld [vmem:[#allocation1] sm:$0xff]
      %v7956 = vld [vmem:[#allocation1 + $0x9] sm:$0xff]
      %v7957 = vpack.i.b16 %v7955, %v7955
      %v7959 = vperm.slane %v7957, 0
      %v7960 = vpack.i.b16 %v7956, %v7956
      %v7962 = vperm.slane %v7960, 0
      %v7963 = vunpack.c.l.bf16 %v7943
      %v7964 = vunpack.c.l.bf16 %v7938
      %v7965 = vunpack.c.h.bf16 %v7943
      %v7966 = vunpack.c.h.bf16 %v7938
      %v7967 = vunpack.c.l.bf16 %v7946
      %v7968 = vunpack.c.l.bf16 %v7939
      %v7969 = vunpack.c.l.bf16 %v7959
      %v7970 = vunpack.c.l.bf16 %v7962
      %v7971 = vmul.f32 %v7963, %v7969
      %v7972 = vmul.f32 %v7964, %v7970
      %v7973 = vmul.f32 %v7965, %v7969
      %v7974 = vmul.f32 %v7966, %v7970
      %v7975 = vmul.f32 %v7967, %v7969
      %v7976 = vmul.f32 %v7968, %v7970
      %v7977 = vpack.c.bf16 %v7972, %v7971
      %v7978 = vpack.c.bf16 %v7974, %v7973
      %v7979 = vpack.c.bf16 %v7976, %v7975
      %7980 = vst [vmem:[#allocation1] ss:$9 sm:$0xff] %v1194
      %v7981 = vld [vmem:[#allocation1] sm:$0xff]
      %v7982 = vld [vmem:[#allocation1 + $0x9] sm:$0xff]
      %v7983 = vpack.i.b16 %v7981, %v7981
      %v7985 = vperm.slane %v7983, 0
      %v7986 = vpack.i.b16 %v7982, %v7982
      %v7988 = vperm.slane %v7986, 0
      %v7989 = vunpack.c.l.bf16 %v7949
      %v7990 = vunpack.c.h.bf16 %v7949
      %v7991 = vunpack.c.l.bf16 %v7952
      %v7992 = vunpack.c.l.bf16 %v7985
      %v7993 = vunpack.c.l.bf16 %v7988
      %7996 = vrot.lane.b32.xlu0 %v7992, 1
      %v7997 = vpop.permute.xlu0 %7996
      %7998 = vrot.lane.b32.xlu0 %v7993, 1
      %v7999 = vpop.permute.xlu0 %7998
      %v8000 = vsel %vm6836, %v7997, %v7999
      %v8004 = vmul.f32 %v7963, %v7997
      %v8005 = vmul.f32 %v7964, %v8000
      %v8006 = vmul.f32 %v7989, %v7999
      %v8007 = vmul.f32 %v7965, %v7997
      %v8008 = vmul.f32 %v7966, %v8000
      %v8009 = vmul.f32 %v7990, %v7999
      %v8010 = vmul.f32 %v7967, %v7997
      %v8011 = vmul.f32 %v7968, %v8000
      %v8012 = vmul.f32 %v7991, %v7999
      %v8013 = vpack.c.bf16 %v8005, %v8004
      %v8014 = vpack.c.bf16 %v8006, %v8006
      %v8015 = vpack.c.bf16 %v8008, %v8007
      %v8016 = vpack.c.bf16 %v8009, %v8009
      %v8017 = vpack.c.bf16 %v8011, %v8010
      %v8018 = vpack.c.bf16 %v8012, %v8012
      %8019 = vst [vmem:[#allocation1] ss:$9 sm:$0xff] %v1195
      %v8020 = vld [vmem:[#allocation1] sm:$0xff]
      %v8021 = vld [vmem:[#allocation1 + $0x9] sm:$0xff]
      %v8022 = vpack.i.b16 %v8020, %v8020
      %v8024 = vperm.slane %v8022, 0
      %v8025 = vpack.i.b16 %v8021, %v8021
      %v8027 = vperm.slane %v8025, 0
      %v8028 = vunpack.c.l.bf16 %v8024
      %v8029 = vunpack.c.l.bf16 %v8027
      %8032 = vrot.lane.b32.xlu0 %v8028, 2
      %v8033 = vpop.permute.xlu0 %8032
      %8034 = vrot.lane.b32.xlu0 %v8029, 2
      %v8035 = vpop.permute.xlu0 %8034
      %v8036 = vsel %vm6889, %v8033, %v8035
      %v8040 = vmul.f32 %v7963, %v8033
      %v8041 = vmul.f32 %v7964, %v8036
      %v8042 = vmul.f32 %v7989, %v8035
      %v8043 = vmul.f32 %v7965, %v8033
      %v8044 = vmul.f32 %v7966, %v8036
      %v8045 = vmul.f32 %v7990, %v8035
      %v8046 = vmul.f32 %v7967, %v8033
      %v8047 = vmul.f32 %v7968, %v8036
      %v8048 = vmul.f32 %v7991, %v8035
      %v8049 = vpack.c.bf16 %v8041, %v8040
      %v8050 = vpack.c.bf16 %v8042, %v8042
      %v8051 = vpack.c.bf16 %v8044, %v8043
      %v8052 = vpack.c.bf16 %v8045, %v8045
      %v8053 = vpack.c.bf16 %v8047, %v8046
      %v8054 = vpack.c.bf16 %v8048, %v8048
      %8055 = vst [vmem:[#allocation1] ss:$9 sm:$0xff] %v1196
      %v8056 = vld [vmem:[#allocation1] sm:$0xff]
      %v8057 = vld [vmem:[#allocation1 + $0x9] sm:$0xff]
      %v8058 = vpack.i.b16 %v8056, %v8056
      %v8060 = vperm.slane %v8058, 0
      %v8061 = vpack.i.b16 %v8057, %v8057
      %v8063 = vperm.slane %v8061, 0
      %v8064 = vunpack.c.l.bf16 %v8060
      %v8065 = vunpack.c.l.bf16 %v8063
      %8068 = vrot.lane.b32.xlu0 %v8064, 16
      %v8069 = vpop.permute.xlu0 %8068
      %8070 = vrot.lane.b32.xlu0 %v8065, 16
      %v8071 = vpop.permute.xlu0 %8070
      %v8072 = vsel %vm5002, %v8069, %v8071
      %v8076 = vmul.f32 %v7963, %v8069
      %v8077 = vmul.f32 %v7964, %v8072
      %v8078 = vmul.f32 %v7989, %v8071
      %v8079 = vmul.f32 %v7965, %v8069
      %v8080 = vmul.f32 %v7966, %v8072
      %v8081 = vmul.f32 %v7990, %v8071
      %v8082 = vmul.f32 %v7967, %v8069
      %v8083 = vmul.f32 %v7968, %v8072
      %v8084 = vmul.f32 %v7991, %v8071
      %v8085 = vpack.c.bf16 %v8077, %v8076
      %v8086 = vpack.c.bf16 %v8078, %v8078
      %v8087 = vpack.c.bf16 %v8080, %v8079
      %v8088 = vpack.c.bf16 %v8081, %v8081
      %v8089 = vpack.c.bf16 %v8083, %v8082
      %v8090 = vpack.c.bf16 %v8084, %v8084
      %8091 = vst [vmem:[#allocation1] ss:$9 sm:$0xff] %v1197
      %v8092 = vld [vmem:[#allocation1] sm:$0xff]
      %v8093 = vld [vmem:[#allocation1 + $0x9] sm:$0xff]
      %v8094 = vpack.i.b16 %v8092, %v8092
      %v8096 = vperm.slane %v8094, 0
      %v8097 = vpack.i.b16 %v8093, %v8093
      %v8099 = vperm.slane %v8097, 0
      %v8100 = vunpack.c.l.bf16 %v8096
      %v8101 = vunpack.c.l.bf16 %v8099
      %8104 = vrot.lane.b32.xlu0 %v8100, 18
      %v8105 = vpop.permute.xlu0 %8104
      %8106 = vrot.lane.b32.xlu0 %v8101, 18
      %v8107 = vpop.permute.xlu0 %8106
      %v8108 = vsel %vm6994, %v8105, %v8107
      %v8112 = vmul.f32 %v7963, %v8105
      %v8113 = vmul.f32 %v7964, %v8108
      %v8114 = vmul.f32 %v7989, %v8107
      %v8115 = vmul.f32 %v7965, %v8105
      %v8116 = vmul.f32 %v7966, %v8108
      %v8117 = vmul.f32 %v7990, %v8107
      %v8118 = vmul.f32 %v7967, %v8105
      %v8119 = vmul.f32 %v7968, %v8108
      %v8120 = vmul.f32 %v7991, %v8107
      %v8121 = vpack.c.bf16 %v8113, %v8112
      %v8122 = vpack.c.bf16 %v8114, %v8114
      %v8123 = vpack.c.bf16 %v8116, %v8115
      %v8124 = vpack.c.bf16 %v8117, %v8117
      %v8125 = vpack.c.bf16 %v8119, %v8118
      %v8126 = vpack.c.bf16 %v8120, %v8120
      %8127 = vst [vmem:[#allocation1] ss:$9 sm:$0xff] %v1198
      %v8128 = vld [vmem:[#allocation1] sm:$0xff]
      %v8129 = vld [vmem:[#allocation1 + $0x9] sm:$0xff]
      %v8130 = vpack.i.b16 %v8128, %v8128
      %v8132 = vperm.slane %v8130, 0
      %v8133 = vpack.i.b16 %v8129, %v8129
      %v8135 = vperm.slane %v8133, 0
      %v8136 = vunpack.c.l.bf16 %v8132
      %v8137 = vunpack.c.l.bf16 %v8135
      %8140 = vrot.lane.b32.xlu0 %v8136, 32
      %v8141 = vpop.permute.xlu0 %8140
      %8142 = vrot.lane.b32.xlu0 %v8137, 32
      %v8143 = vpop.permute.xlu0 %8142
      %v8144 = vsel %vm7047, %v8141, %v8143
      %v8148 = vmul.f32 %v7963, %v8141
      %v8149 = vmul.f32 %v7964, %v8144
      %v8150 = vmul.f32 %v7989, %v8143
      %v8151 = vmul.f32 %v7965, %v8141
      %v8152 = vmul.f32 %v7966, %v8144
      %v8153 = vmul.f32 %v7990, %v8143
      %v8154 = vmul.f32 %v7967, %v8141
      %v8155 = vmul.f32 %v7968, %v8144
      %v8156 = vmul.f32 %v7991, %v8143
      %v8157 = vpack.c.bf16 %v8149, %v8148
      %v8158 = vpack.c.bf16 %v8150, %v8150
      %v8159 = vpack.c.bf16 %v8152, %v8151
      %v8160 = vpack.c.bf16 %v8153, %v8153
      %v8161 = vpack.c.bf16 %v8155, %v8154
      %v8162 = vpack.c.bf16 %v8156, %v8156
      %8163 = vst [vmem:[#allocation1] ss:$9 sm:$0xff] %v1199
      %v8164 = vld [vmem:[#allocation1] sm:$0xff]
      %v8165 = vld [vmem:[#allocation1 + $0x9] sm:$0xff]
      %v8166 = vpack.i.b16 %v8164, %v8164
      %v8168 = vperm.slane %v8166, 0
      %v8169 = vpack.i.b16 %v8165, %v8165
      %v8171 = vperm.slane %v8169, 0
      %v8172 = vunpack.c.l.bf16 %v8168
      %v8173 = vunpack.c.l.bf16 %v8171
      %8176 = vrot.lane.b32.xlu0 %v8172, 33
      %v8177 = vpop.permute.xlu0 %8176
      %8178 = vrot.lane.b32.xlu0 %v8173, 33
      %v8179 = vpop.permute.xlu0 %8178
      %v8180 = vsel %vm7100, %v8177, %v8179
      %v8184 = vmul.f32 %v7963, %v8177
      %v8185 = vmul.f32 %v7964, %v8180
      %v8186 = vmul.f32 %v7989, %v8179
      %v8187 = vmul.f32 %v7965, %v8177
      %v8188 = vmul.f32 %v7966, %v8180
      %v8189 = vmul.f32 %v7990, %v8179
      %v8190 = vmul.f32 %v7967, %v8177
      %v8191 = vmul.f32 %v7968, %v8180
      %v8192 = vmul.f32 %v7991, %v8179
      %v8193 = vpack.c.bf16 %v8185, %v8184
      %v8194 = vpack.c.bf16 %v8186, %v8186
      %v8195 = vpack.c.bf16 %v8188, %v8187
      %v8196 = vpack.c.bf16 %v8189, %v8189
      %v8197 = vpack.c.bf16 %v8191, %v8190
      %v8198 = vpack.c.bf16 %v8192, %v8192
      %8199 = vst [vmem:[#allocation1] ss:$9 sm:$0xff] %v1200
      %v8200 = vld [vmem:[#allocation1] sm:$0xff]
      %v8201 = vld [vmem:[#allocation1 + $0x9] sm:$0xff]
      %v8202 = vpack.i.b16 %v8200, %v8200
      %v8204 = vperm.slane %v8202, 0
      %v8205 = vpack.i.b16 %v8201, %v8201
      %v8207 = vperm.slane %v8205, 0
      %v8208 = vunpack.c.l.bf16 %v8204
      %v8209 = vunpack.c.l.bf16 %v8207
      %8212 = vrot.lane.b32.xlu0 %v8208, 34
      %v8213 = vpop.permute.xlu0 %8212
      %8214 = vrot.lane.b32.xlu0 %v8209, 34
      %v8215 = vpop.permute.xlu0 %8214
      %v8216 = vsel %vm7153, %v8213, %v8215
      %v8220 = vmul.f32 %v7963, %v8213
      %v8221 = vmul.f32 %v7964, %v8216
      %v8222 = vmul.f32 %v7989, %v8215
      %v8223 = vmul.f32 %v7965, %v8213
      %v8224 = vmul.f32 %v7966, %v8216
      %v8225 = vmul.f32 %v7990, %v8215
      %v8226 = vmul.f32 %v7967, %v8213
      %v8227 = vmul.f32 %v7968, %v8216
      %v8228 = vmul.f32 %v7991, %v8215
      %v8229 = vpack.c.bf16 %v8221, %v8220
      %v8230 = vpack.c.bf16 %v8222, %v8222
      %v8231 = vpack.c.bf16 %v8224, %v8223
      %v8232 = vpack.c.bf16 %v8225, %v8225
      %v8233 = vpack.c.bf16 %v8227, %v8226
      %v8234 = vpack.c.bf16 %v8228, %v8228
      %v8238 = vunpack.c.l.b16 %v7977
      %v8239 = vunpack.c.h.b16 %v7977
      %v8240 = vunpack.c.l.b16 %v7978
      %v8241 = vunpack.c.h.b16 %v7978
      %v8242 = vunpack.c.l.b16 %v7979
      %v8243 = vunpack.c.h.b16 %v7979
      %v8244 = vpack.c.b16 %v8240, %v8238
      %v8245 = vpack.c.b16 %v8241, %v8239
      %v8246 = vpack.c.b16 %v8242, %v8242
      %v8247 = vpack.c.b16 %v8243, %v8243
      %v8256 = vunpack.c.l.b16 %v8013
      %v8257 = vunpack.c.h.b16 %v8013
      %v8258 = vunpack.c.l.b16 %v8014
      %v8259 = vunpack.c.l.b16 %v8015
      %v8260 = vunpack.c.h.b16 %v8015
      %v8261 = vunpack.c.l.b16 %v8016
      %v8262 = vunpack.c.l.b16 %v8017
      %v8263 = vunpack.c.h.b16 %v8017
      %v8264 = vunpack.c.l.b16 %v8018
      %v8265 = vpack.c.b16 %v8256, %v8256
      %v8266 = vpack.c.b16 %v8257, %v8257
      %v8267 = vpack.c.b16 %v8258, %v8258
      %v8268 = vpack.c.b16 %v8262, %v8259
      %v8269 = vpack.c.b16 %v8263, %v8260
      %v8270 = vpack.c.b16 %v8264, %v8261
      %8271 = vrot.lane.b32.xlu0 %v8265, 127
      %v8272 = vpop.permute.xlu0 %8271
      %8273 = vrot.lane.b32.xlu0 %v8266, 127
      %v8274 = vpop.permute.xlu0 %8273
      %8275 = vrot.lane.b32.xlu0 %v8267, 127
      %v8276 = vpop.permute.xlu0 %8275
      %8277 = vrot.lane.b32.xlu0 %v8268, 127
      %v8278 = vpop.permute.xlu0 %8277
      %8279 = vrot.lane.b32.xlu0 %v8269, 127
      %v8280 = vpop.permute.xlu0 %8279
      %8281 = vrot.lane.b32.xlu0 %v8270, 127
      %v8282 = vpop.permute.xlu0 %8281
      %v8283 = vsel %vm7275, %v8272, %v8274
      %v8284 = vsel %vm7275, %v8274, %v8276
      %v8285 = vsel %vm7275, %v8278, %v8280
      %v8286 = vsel %vm7275, %v8280, %v8282
      %v8295 = vunpack.c.l.b16 %v8049
      %v8296 = vunpack.c.h.b16 %v8049
      %v8297 = vunpack.c.l.b16 %v8050
      %v8298 = vunpack.c.l.b16 %v8051
      %v8299 = vunpack.c.h.b16 %v8051
      %v8300 = vunpack.c.l.b16 %v8052
      %v8301 = vunpack.c.l.b16 %v8053
      %v8302 = vunpack.c.h.b16 %v8053
      %v8303 = vunpack.c.l.b16 %v8054
      %v8304 = vpack.c.b16 %v8298, %v8295
      %v8305 = vpack.c.b16 %v8299, %v8296
      %v8306 = vpack.c.b16 %v8300, %v8297
      %v8307 = vpack.c.b16 %v8301, %v8301
      %v8308 = vpack.c.b16 %v8302, %v8302
      %v8309 = vpack.c.b16 %v8303, %v8303
      %8310 = vrot.lane.b32.xlu0 %v8304, 126
      %v8311 = vpop.permute.xlu0 %8310
      %8312 = vrot.lane.b32.xlu0 %v8305, 126
      %v8313 = vpop.permute.xlu0 %8312
      %8314 = vrot.lane.b32.xlu0 %v8306, 126
      %v8315 = vpop.permute.xlu0 %8314
      %8316 = vrot.lane.b32.xlu0 %v8307, 126
      %v8317 = vpop.permute.xlu0 %8316
      %8318 = vrot.lane.b32.xlu0 %v8308, 126
      %v8319 = vpop.permute.xlu0 %8318
      %8320 = vrot.lane.b32.xlu0 %v8309, 126
      %v8321 = vpop.permute.xlu0 %8320
      %v8322 = vsel %vm7345, %v8311, %v8313
      %v8323 = vsel %vm7345, %v8313, %v8315
      %v8324 = vsel %vm7345, %v8317, %v8319
      %v8325 = vsel %vm7345, %v8319, %v8321
      %v8334 = vunpack.c.l.b16 %v8085
      %v8335 = vunpack.c.h.b16 %v8085
      %v8336 = vunpack.c.l.b16 %v8086
      %v8337 = vunpack.c.l.b16 %v8087
      %v8338 = vunpack.c.h.b16 %v8087
      %v8339 = vunpack.c.l.b16 %v8088
      %v8340 = vunpack.c.l.b16 %v8089
      %v8341 = vunpack.c.h.b16 %v8089
      %v8342 = vunpack.c.l.b16 %v8090
      %v8343 = vpack.c.b16 %v8334, %v8334
      %v8344 = vpack.c.b16 %v8335, %v8335
      %v8345 = vpack.c.b16 %v8336, %v8336
      %v8346 = vpack.c.b16 %v8340, %v8337
      %v8347 = vpack.c.b16 %v8341, %v8338
      %v8348 = vpack.c.b16 %v8342, %v8339
      %8349 = vrot.lane.b32.xlu0 %v8343, 112
      %v8350 = vpop.permute.xlu0 %8349
      %8351 = vrot.lane.b32.xlu0 %v8344, 112
      %v8352 = vpop.permute.xlu0 %8351
      %8353 = vrot.lane.b32.xlu0 %v8345, 112
      %v8354 = vpop.permute.xlu0 %8353
      %8355 = vrot.lane.b32.xlu0 %v8346, 112
      %v8356 = vpop.permute.xlu0 %8355
      %8357 = vrot.lane.b32.xlu0 %v8347, 112
      %v8358 = vpop.permute.xlu0 %8357
      %8359 = vrot.lane.b32.xlu0 %v8348, 112
      %v8360 = vpop.permute.xlu0 %8359
      %v8361 = vsel %vm7415, %v8350, %v8352
      %v8362 = vsel %vm7415, %v8352, %v8354
      %v8363 = vsel %vm7415, %v8356, %v8358
      %v8364 = vsel %vm7415, %v8358, %v8360
      %v8375 = vunpack.c.l.b16 %v8121
      %v8376 = vunpack.c.h.b16 %v8121
      %v8377 = vunpack.c.l.b16 %v8122
      %v8378 = vunpack.c.l.b16 %v8123
      %v8379 = vunpack.c.h.b16 %v8123
      %v8380 = vunpack.c.l.b16 %v8124
      %v8381 = vunpack.c.l.b16 %v8125
      %v8382 = vunpack.c.h.b16 %v8125
      %v8383 = vunpack.c.l.b16 %v8126
      %v8384 = vpack.c.b16 %v8375, %v8375
      %v8385 = vpack.c.b16 %v8376, %v8376
      %v8386 = vpack.c.b16 %v8377, %v8377
      %v8387 = vpack.c.b16 %v8381, %v8378
      %v8388 = vpack.c.b16 %v8382, %v8379
      %v8389 = vpack.c.b16 %v8383, %v8380
      %8390 = vrot.lane.b32.xlu0 %v8384, 110
      %v8391 = vpop.permute.xlu0 %8390
      %8392 = vrot.lane.b32.xlu0 %v8385, 110
      %v8393 = vpop.permute.xlu0 %8392
      %8394 = vrot.lane.b32.xlu0 %v8386, 110
      %v8395 = vpop.permute.xlu0 %8394
      %8396 = vrot.lane.b32.xlu0 %v8387, 110
      %v8397 = vpop.permute.xlu0 %8396
      %8398 = vrot.lane.b32.xlu0 %v8388, 110
      %v8399 = vpop.permute.xlu0 %8398
      %8400 = vrot.lane.b32.xlu0 %v8389, 110
      %v8401 = vpop.permute.xlu0 %8400
      %v8402 = vsel %vm7491, %v8391, %v8393
      %v8403 = vsel %vm7491, %v8393, %v8395
      %v8404 = vsel %vm7491, %v8397, %v8399
      %v8405 = vsel %vm7491, %v8399, %v8401
      %v8414 = vunpack.c.l.b16 %v8157
      %v8415 = vunpack.c.h.b16 %v8157
      %v8416 = vunpack.c.l.b16 %v8158
      %v8417 = vunpack.c.l.b16 %v8159
      %v8418 = vunpack.c.h.b16 %v8159
      %v8419 = vunpack.c.l.b16 %v8160
      %v8420 = vunpack.c.l.b16 %v8161
      %v8421 = vunpack.c.h.b16 %v8161
      %v8422 = vunpack.c.l.b16 %v8162
      %v8423 = vpack.c.b16 %v8417, %v8414
      %v8424 = vpack.c.b16 %v8418, %v8415
      %v8425 = vpack.c.b16 %v8419, %v8416
      %v8426 = vpack.c.b16 %v8420, %v8420
      %v8427 = vpack.c.b16 %v8421, %v8421
      %v8428 = vpack.c.b16 %v8422, %v8422
      %8429 = vrot.lane.b32.xlu0 %v8423, 96
      %v8430 = vpop.permute.xlu0 %8429
      %8431 = vrot.lane.b32.xlu0 %v8424, 96
      %v8432 = vpop.permute.xlu0 %8431
      %8433 = vrot.lane.b32.xlu0 %v8425, 96
      %v8434 = vpop.permute.xlu0 %8433
      %8435 = vrot.lane.b32.xlu0 %v8426, 96
      %v8436 = vpop.permute.xlu0 %8435
      %8437 = vrot.lane.b32.xlu0 %v8427, 96
      %v8438 = vpop.permute.xlu0 %8437
      %8439 = vrot.lane.b32.xlu0 %v8428, 96
      %v8440 = vpop.permute.xlu0 %8439
      %v8441 = vsel %vm7561, %v8430, %v8432
      %v8442 = vsel %vm7561, %v8432, %v8434
      %v8443 = vsel %vm7561, %v8436, %v8438
      %v8444 = vsel %vm7561, %v8438, %v8440
      %v8453 = vunpack.c.l.b16 %v8193
      %v8454 = vunpack.c.h.b16 %v8193
      %v8455 = vunpack.c.l.b16 %v8194
      %v8456 = vunpack.c.l.b16 %v8195
      %v8457 = vunpack.c.h.b16 %v8195
      %v8458 = vunpack.c.l.b16 %v8196
      %v8459 = vunpack.c.l.b16 %v8197
      %v8460 = vunpack.c.h.b16 %v8197
      %v8461 = vunpack.c.l.b16 %v8198
      %v8462 = vpack.c.b16 %v8453, %v8453
      %v8463 = vpack.c.b16 %v8454, %v8454
      %v8464 = vpack.c.b16 %v8455, %v8455
      %v8465 = vpack.c.b16 %v8459, %v8456
      %v8466 = vpack.c.b16 %v8460, %v8457
      %v8467 = vpack.c.b16 %v8461, %v8458
      %8468 = vrot.lane.b32.xlu0 %v8462, 95
      %v8469 = vpop.permute.xlu0 %8468
      %8470 = vrot.lane.b32.xlu0 %v8463, 95
      %v8471 = vpop.permute.xlu0 %8470
      %8472 = vrot.lane.b32.xlu0 %v8464, 95
      %v8473 = vpop.permute.xlu0 %8472
      %8474 = vrot.lane.b32.xlu0 %v8465, 95
      %v8475 = vpop.permute.xlu0 %8474
      %8476 = vrot.lane.b32.xlu0 %v8466, 95
      %v8477 = vpop.permute.xlu0 %8476
      %8478 = vrot.lane.b32.xlu0 %v8467, 95
      %v8479 = vpop.permute.xlu0 %8478
      %v8480 = vsel %vm7631, %v8469, %v8471
      %v8481 = vsel %vm7631, %v8471, %v8473
      %v8482 = vsel %vm7631, %v8475, %v8477
      %v8483 = vsel %vm7631, %v8477, %v8479
      %v8492 = vunpack.c.l.b16 %v8229
      %v8493 = vunpack.c.h.b16 %v8229
      %v8494 = vunpack.c.l.b16 %v8230
      %v8495 = vunpack.c.l.b16 %v8231
      %v8496 = vunpack.c.h.b16 %v8231
      %v8497 = vunpack.c.l.b16 %v8232
      %v8498 = vunpack.c.l.b16 %v8233
      %v8499 = vunpack.c.h.b16 %v8233
      %v8500 = vunpack.c.l.b16 %v8234
      %v8501 = vpack.c.b16 %v8495, %v8492
      %v8502 = vpack.c.b16 %v8496, %v8493
      %v8503 = vpack.c.b16 %v8497, %v8494
      %v8504 = vpack.c.b16 %v8498, %v8498
      %v8505 = vpack.c.b16 %v8499, %v8499
      %v8506 = vpack.c.b16 %v8500, %v8500
      %8507 = vrot.lane.b32.xlu0 %v8501, 94
      %v8508 = vpop.permute.xlu0 %8507
      %8509 = vrot.lane.b32.xlu0 %v8502, 94
      %v8510 = vpop.permute.xlu0 %8509
      %8511 = vrot.lane.b32.xlu0 %v8503, 94
      %v8512 = vpop.permute.xlu0 %8511
      %8513 = vrot.lane.b32.xlu0 %v8504, 94
      %v8514 = vpop.permute.xlu0 %8513
      %8515 = vrot.lane.b32.xlu0 %v8505, 94
      %v8516 = vpop.permute.xlu0 %8515
      %8517 = vrot.lane.b32.xlu0 %v8506, 94
      %v8518 = vpop.permute.xlu0 %8517
      %v8519 = vsel %vm7701, %v8508, %v8510
      %v8520 = vsel %vm7701, %v8510, %v8512
      %v8521 = vsel %vm7701, %v8514, %v8516
      %v8522 = vsel %vm7701, %v8516, %v8518
      %vm8525 = vcmask 1043456
      %v8528 = vsel %vm8525, %v8246, %v8283
      %v8532 = vsel %vm8525, %v8247, %v8284
      %v8536 = vsel %vm8525, %v8324, %v8361
      %v8540 = vsel %vm8525, %v8325, %v8362
      %v8544 = vsel %vm8525, %v7928, %v8402
      %v8548 = vsel %vm8525, %v7929, %v8403
      %v8552 = vsel %vm8525, %v8443, %v8480
      %v8556 = vsel %vm8525, %v8444, %v8481
      %v8561 = vunpack.c.l.b16 %v1174
      %v8562 = vunpack.c.h.b16 %v1174
      %v8563 = vunpack.c.l.b16 %v1175
      %v8564 = vunpack.c.h.b16 %v1175
      %v8565 = vunpack.c.l.b16 %v1176
      %v8566 = vunpack.c.h.b16 %v1176
      %v8567 = vpack.c.b16 %v8563, %v8561
      %v8568 = vpack.c.b16 %v8564, %v8562
      %v8569 = vpack.c.b16 %v8565, %v8565
      %v8570 = vpack.c.b16 %v8566, %v8566
      %vm8573 = vcmask 719872
      %v8575 = vsel %vm8573, %v8568, 0
      %v8578 = vsel %vm8573, %v8570, 0
      %v8581 = vsel %vm8525, %v8521, 0
      %v8584 = vsel %vm8525, %v8522, 0
      %8586 = vmatpush.bf16.msra.mxu0 %v8544
      %8587 = vmatpush.bf16.msra.mxu0 %v7926
      %8588 = vmatpush.bf16.msra.mxu0 %v8363
      %8589 = vmatpush.bf16.msra.mxu0 %v8536
      %8590 = vmatpush.bf16.msra.mxu0 %v8322
      %8591 = vmatpush.bf16.msra.mxu0 %v8285
      %8592 = vmatpush.bf16.msra.mxu0 %v8528
      %8593 = vmatpush.bf16.msra.mxu0 %v8244
      %8594 = vmatmul.bf16.gmra.mxu0 %v8567
      %v8595 = vpop.f32.mrf.mxu0
      %v8596 = vadd.f32 0.0, %v8595
      %v8597 = vpop.f32.mrf.mxu0
      %v8598 = vadd.f32 0.0, %v8597
      %8599 = vmatmul.bf16.gmra.mxu0 %v8569
      %v8600 = vpop.f32.mrf.mxu0
      %v8601 = vadd.f32 0.0, %v8600
      %v8602 = vpop.f32.mrf.mxu0
      %8603 = vdwg.mxu0
      %8604 = vmatpush.bf16.msra.mxu0 0
      %8605 = vmatpush.bf16.msra.mxu0 0
      %8606 = vmatpush.bf16.msra.mxu0 %v8581
      %8607 = vmatpush.bf16.msra.mxu0 %v8519
      %8608 = vmatpush.bf16.msra.mxu0 %v8482
      %8609 = vmatpush.bf16.msra.mxu0 %v8552
      %8610 = vmatpush.bf16.msra.mxu0 %v8441
      %8611 = vmatpush.bf16.msra.mxu0 %v8404
      %8612 = vmatmul.bf16.gmra.mxu0 %v8575
      %v8613 = vpop.f32.mrf.mxu0
      %v8614 = vadd.f32 %v8596, %v8613
      %v8615 = vpop.f32.mrf.mxu0
      %v8616 = vadd.f32 %v8598, %v8615
      %8617 = vmatmul.bf16.gmra.mxu0 %v8578
      %v8618 = vpop.f32.mrf.mxu0
      %v8619 = vadd.f32 %v8601, %v8618
      %v8620 = vpop.f32.mrf.mxu0
      %8621 = vdwg.mxu0
      %8622 = vmatpush.bf16.msra.mxu0 %v8548
      %8623 = vmatpush.bf16.msra.mxu0 %v7927
      %8624 = vmatpush.bf16.msra.mxu0 %v8364
      %8625 = vmatpush.bf16.msra.mxu0 %v8540
      %8626 = vmatpush.bf16.msra.mxu0 %v8323
      %8627 = vmatpush.bf16.msra.mxu0 %v8286
      %8628 = vmatpush.bf16.msra.mxu0 %v8532
      %8629 = vmatpush.bf16.msra.mxu0 %v8245
      %8630 = vmatmul.bf16.gmra.mxu0 %v8567
      %v8631 = vpop.f32.mrf.mxu0
      %v8632 = vadd.f32 0.0, %v8631
      %v8633 = vpop.f32.mrf.mxu0
      %v8634 = vadd.f32 0.0, %v8633
      %8635 = vmatmul.bf16.gmra.mxu0 %v8569
      %v8636 = vpop.f32.mrf.mxu0
      %v8637 = vadd.f32 0.0, %v8636
      %v8638 = vpop.f32.mrf.mxu0
      %8639 = vdwg.mxu0
      %8640 = vmatpush.bf16.msra.mxu0 0
      %8641 = vmatpush.bf16.msra.mxu0 0
      %8642 = vmatpush.bf16.msra.mxu0 %v8584
      %8643 = vmatpush.bf16.msra.mxu0 %v8520
      %8644 = vmatpush.bf16.msra.mxu0 %v8483
      %8645 = vmatpush.bf16.msra.mxu0 %v8556
      %8646 = vmatpush.bf16.msra.mxu0 %v8442
      %8647 = vmatpush.bf16.msra.mxu0 %v8405
      %8648 = vmatmul.bf16.gmra.mxu0 %v8575
      %v8649 = vpop.f32.mrf.mxu0
      %v8650 = vadd.f32 %v8632, %v8649
      %v8651 = vpop.f32.mrf.mxu0
      %v8652 = vadd.f32 %v8634, %v8651
      %8653 = vmatmul.bf16.gmra.mxu0 %v8578
      %v8654 = vpop.f32.mrf.mxu0
      %v8655 = vadd.f32 %v8637, %v8654
      %v8656 = vpop.f32.mrf.mxu0
      %8657 = vdwg.mxu0
      %vm8658 = vcmp.ge.f32.partialorder %v8614, 0.0
      %vm8659 = vcmp.ge.f32.partialorder %v8650, 0.0
      %vm8660 = vcmp.ge.f32.partialorder %v8616, 0.0
      %vm8661 = vcmp.ge.f32.partialorder %v8652, 0.0
      %vm8662 = vcmp.ge.f32.partialorder %v8619, 0.0
      %vm8663 = vcmp.ge.f32.partialorder %v8655, 0.0
      %v8664 = vmul.f32 %v8614, 0.2
      %v8665 = vmul.f32 %v8650, 0.2
      %v8666 = vmul.f32 %v8616, 0.2
      %v8667 = vmul.f32 %v8652, 0.2
      %v8668 = vmul.f32 %v8619, 0.2
      %v8669 = vmul.f32 %v8655, 0.2
      %v8670 = vsel %vm8658, %v8614, %v8664
      %v8671 = vsel %vm8659, %v8650, %v8665
      %v8672 = vsel %vm8660, %v8616, %v8666
      %v8673 = vsel %vm8661, %v8652, %v8667
      %v8674 = vsel %vm8662, %v8619, %v8668
      %v8675 = vsel %vm8663, %v8655, %v8669
      %v8676 = vpack.c.bf16 %v8671, %v8670
      %v8677 = vpack.c.bf16 %v8673, %v8672
      %v8678 = vpack.c.bf16 %v8675, %v8674
      %v8680 = vunpack.c.l.b16 %v8676
      %v8681 = vunpack.c.h.b16 %v8676
      %v8682 = vpack.c.b16 %v8680, %v8680
      %v8683 = vpack.c.b16 %v8681, %v8681
      %v8687 = vunpack.c.l.b16 %v8677
      %v8688 = vunpack.c.h.b16 %v8677
      %v8689 = vpack.c.b16 %v8687, %v8687
      %v8690 = vpack.c.b16 %v8688, %v8688
      %v8694 = vunpack.c.l.b16 %v8678
      %v8695 = vunpack.c.h.b16 %v8678
      %v8696 = vpack.c.b16 %v8694, %v8694
      %v8697 = vpack.c.b16 %v8695, %v8695
      %v8796 = vunpack.c.l.b16 %v940
      %v8797 = vunpack.c.l.b16 %v941
      %v8798 = vunpack.c.l.b16 %v942
      %v8799 = vunpack.c.l.b16 %v943
      %v8800 = vunpack.c.l.b16 %v944
      %v8801 = vunpack.c.l.b16 %v945
      %v8802 = vunpack.c.l.b16 %v946
      %v8803 = vunpack.c.l.b16 %v947
      %v8804 = vunpack.c.l.b16 %v948
      %v8805 = vunpack.c.l.b16 %v949
      %v8806 = vunpack.c.l.b16 %v950
      %v8807 = vunpack.c.l.b16 %v951
      %v8808 = vunpack.c.l.b16 %v952
      %v8809 = vunpack.c.l.b16 %v953
      %v8810 = vunpack.c.l.b16 %v954
      %v8811 = vunpack.c.l.b16 %v955
      %v8812 = vunpack.c.l.b16 %v956
      %v8813 = vunpack.c.l.b16 %v957
      %v8814 = vunpack.c.l.b16 %v958
      %v8815 = vunpack.c.l.b16 %v959
      %v8816 = vunpack.c.l.b16 %v960
      %v8817 = vunpack.c.l.b16 %v961
      %v8818 = vunpack.c.l.b16 %v962
      %v8819 = vunpack.c.l.b16 %v963
      %v8820 = vunpack.c.l.b16 %v964
      %v8821 = vunpack.c.l.b16 %v965
      %v8822 = vunpack.c.l.b16 %v966
      %v8823 = vunpack.c.l.b16 %v967
      %v8824 = vunpack.c.l.b16 %v968
      %v8825 = vunpack.c.l.b16 %v969
      %v8826 = vunpack.c.l.b16 %v970
      %v8827 = vunpack.c.l.b16 %v971
      %v8828 = vunpack.c.l.b16 %v972
      %v8829 = vunpack.c.l.b16 %v973
      %v8830 = vunpack.c.l.b16 %v974
      %v8831 = vunpack.c.l.b16 %v975
      %v8832 = vunpack.c.l.b16 %v976
      %v8833 = vunpack.c.l.b16 %v977
      %v8834 = vunpack.c.l.b16 %v978
      %v8835 = vunpack.c.l.b16 %v979
      %v8836 = vunpack.c.l.b16 %v980
      %v8837 = vunpack.c.l.b16 %v981
      %v8838 = vunpack.c.l.b16 %v982
      %v8839 = vunpack.c.l.b16 %v983
      %v8840 = vunpack.c.l.b16 %v984
      %v8841 = vunpack.c.l.b16 %v985
      %v8842 = vunpack.c.l.b16 %v986
      %v8843 = vunpack.c.l.b16 %v987
      %v8844 = vunpack.c.l.b16 %v988
      %v8845 = vunpack.c.l.b16 %v989
      %v8846 = vunpack.c.l.b16 %v990
      %v8847 = vunpack.c.l.b16 %v991
      %v8848 = vunpack.c.l.b16 %v992
      %v8849 = vunpack.c.l.b16 %v993
      %v8850 = vunpack.c.l.b16 %v994
      %v8851 = vunpack.c.l.b16 %v995
      %v8852 = vunpack.c.l.b16 %v996
      %v8853 = vunpack.c.l.b16 %v997
      %v8854 = vunpack.c.l.b16 %v998
      %v8855 = vunpack.c.l.b16 %v999
      %v8856 = vunpack.c.l.b16 %v1000
      %v8857 = vunpack.c.l.b16 %v1001
      %v8858 = vunpack.c.l.b16 %v1002
      %v8859 = vunpack.c.l.b16 %v1003
      %v8860 = vunpack.c.l.b16 %v1004
      %v8861 = vunpack.c.l.b16 %v1005
      %v8862 = vunpack.c.l.b16 %v1006
      %v8863 = vunpack.c.l.b16 %v1007
      %v8864 = vunpack.c.l.b16 %v1008
      %v8865 = vunpack.c.l.b16 %v1009
      %v8866 = vunpack.c.l.b16 %v1010
      %v8867 = vunpack.c.l.b16 %v1011
      %v8868 = vunpack.c.l.b16 %v1012
      %v8869 = vunpack.c.l.b16 %v1013
      %v8870 = vunpack.c.l.b16 %v1014
      %v8871 = vunpack.c.l.b16 %v1015
      %v8872 = vunpack.c.l.b16 %v1016
      %v8873 = vunpack.c.l.b16 %v1017
      %v8874 = vunpack.c.l.b16 %v1018
      %v8875 = vunpack.c.l.b16 %v1019
      %v8876 = vunpack.c.l.b16 %v1020
      %v8877 = vunpack.c.l.b16 %v1021
      %v8878 = vunpack.c.l.b16 %v1022
      %v8879 = vunpack.c.l.b16 %v1023
      %v8880 = vunpack.c.l.b16 %v1024
      %v8881 = vunpack.c.l.b16 %v1025
      %v8882 = vunpack.c.l.b16 %v1026
      %v8883 = vunpack.c.l.b16 %v1027
      %v8884 = vunpack.c.l.b16 %v1028
      %v8885 = vunpack.c.l.b16 %v1029
      %v8886 = vunpack.c.l.b16 %v1030
      %v8887 = vunpack.c.l.b16 %v1031
      %v8888 = vunpack.c.l.b16 %v1032
      %v8889 = vunpack.c.l.b16 %v1033
      %v8890 = vunpack.c.l.b16 %v1034
      %v8891 = vunpack.c.l.b16 %v1035
      %v8892 = vpack.c.b16 %v8797, %v8796
      %v8893 = vpack.c.b16 %v8799, %v8798
      %v8894 = vpack.c.b16 %v8801, %v8800
      %v8895 = vpack.c.b16 %v8803, %v8802
      %v8896 = vpack.c.b16 %v8805, %v8804
      %v8897 = vpack.c.b16 %v8807, %v8806
      %v8898 = vpack.c.b16 %v8809, %v8808
      %v8899 = vpack.c.b16 %v8811, %v8810
      %v8900 = vpack.c.b16 %v8813, %v8812
      %v8901 = vpack.c.b16 %v8815, %v8814
      %v8902 = vpack.c.b16 %v8817, %v8816
      %v8903 = vpack.c.b16 %v8819, %v8818
      %v8904 = vpack.c.b16 %v8821, %v8820
      %v8905 = vpack.c.b16 %v8823, %v8822
      %v8906 = vpack.c.b16 %v8825, %v8824
      %v8907 = vpack.c.b16 %v8827, %v8826
      %v8908 = vpack.c.b16 %v8829, %v8828
      %v8909 = vpack.c.b16 %v8831, %v8830
      %v8910 = vpack.c.b16 %v8833, %v8832
      %v8911 = vpack.c.b16 %v8835, %v8834
      %v8912 = vpack.c.b16 %v8837, %v8836
      %v8913 = vpack.c.b16 %v8839, %v8838
      %v8914 = vpack.c.b16 %v8841, %v8840
      %v8915 = vpack.c.b16 %v8843, %v8842
      %v8916 = vpack.c.b16 %v8845, %v8844
      %v8917 = vpack.c.b16 %v8847, %v8846
      %v8918 = vpack.c.b16 %v8849, %v8848
      %v8919 = vpack.c.b16 %v8851, %v8850
      %v8920 = vpack.c.b16 %v8853, %v8852
      %v8921 = vpack.c.b16 %v8855, %v8854
      %v8922 = vpack.c.b16 %v8857, %v8856
      %v8923 = vpack.c.b16 %v8859, %v8858
      %v8924 = vpack.c.b16 %v8861, %v8860
      %v8925 = vpack.c.b16 %v8863, %v8862
      %v8926 = vpack.c.b16 %v8865, %v8864
      %v8927 = vpack.c.b16 %v8867, %v8866
      %v8928 = vpack.c.b16 %v8869, %v8868
      %v8929 = vpack.c.b16 %v8871, %v8870
      %v8930 = vpack.c.b16 %v8873, %v8872
      %v8931 = vpack.c.b16 %v8875, %v8874
      %v8932 = vpack.c.b16 %v8877, %v8876
      %v8933 = vpack.c.b16 %v8879, %v8878
      %v8934 = vpack.c.b16 %v8881, %v8880
      %v8935 = vpack.c.b16 %v8883, %v8882
      %v8936 = vpack.c.b16 %v8885, %v8884
      %v8937 = vpack.c.b16 %v8887, %v8886
      %v8938 = vpack.c.b16 %v8889, %v8888
      %v8939 = vpack.c.b16 %v8891, %v8890
      %8988 = vmatpush.bf16.msra.mxu0 %v8899
      %8989 = vmatpush.bf16.msra.mxu0 %v8898
      %8990 = vmatpush.bf16.msra.mxu0 %v8897
      %8991 = vmatpush.bf16.msra.mxu0 %v8896
      %8992 = vmatpush.bf16.msra.mxu0 %v8895
      %8993 = vmatpush.bf16.msra.mxu0 %v8894
      %8994 = vmatpush.bf16.msra.mxu0 %v8893
      %8995 = vmatpush.bf16.msra.mxu0 %v8892
      %8996 = vmatmul.bf16.gmra.mxu0 %v8682
      %v8997 = vpop.f32.mrf.mxu0
      %v8998 = vadd.f32 0.0, %v8997
      %v8999 = vpop.f32.mrf.mxu0
      %9000 = vdwg.mxu0
      %9001 = vmatpush.bf16.msra.mxu0 %v8907
      %9002 = vmatpush.bf16.msra.mxu0 %v8906
      %9003 = vmatpush.bf16.msra.mxu0 %v8905
      %9004 = vmatpush.bf16.msra.mxu0 %v8904
      %9005 = vmatpush.bf16.msra.mxu0 %v8903
      %9006 = vmatpush.bf16.msra.mxu0 %v8902
      %9007 = vmatpush.bf16.msra.mxu0 %v8901
      %9008 = vmatpush.bf16.msra.mxu0 %v8900
      %9009 = vmatmul.bf16.gmra.mxu0 %v8683
      %v9010 = vpop.f32.mrf.mxu0
      %v9011 = vadd.f32 %v8998, %v9010
      %v9012 = vpop.f32.mrf.mxu0
      %9013 = vdwg.mxu0
      %9014 = vmatpush.bf16.msra.mxu0 %v8915
      %9015 = vmatpush.bf16.msra.mxu0 %v8914
      %9016 = vmatpush.bf16.msra.mxu0 %v8913
      %9017 = vmatpush.bf16.msra.mxu0 %v8912
      %9018 = vmatpush.bf16.msra.mxu0 %v8911
      %9019 = vmatpush.bf16.msra.mxu0 %v8910
      %9020 = vmatpush.bf16.msra.mxu0 %v8909
      %9021 = vmatpush.bf16.msra.mxu0 %v8908
      %9022 = vmatmul.bf16.gmra.mxu0 %v8689
      %v9023 = vpop.f32.mrf.mxu0
      %v9024 = vadd.f32 %v9011, %v9023
      %v9025 = vpop.f32.mrf.mxu0
      %9026 = vdwg.mxu0
      %9027 = vmatpush.bf16.msra.mxu0 %v8923
      %9028 = vmatpush.bf16.msra.mxu0 %v8922
      %9029 = vmatpush.bf16.msra.mxu0 %v8921
      %9030 = vmatpush.bf16.msra.mxu0 %v8920
      %9031 = vmatpush.bf16.msra.mxu0 %v8919
      %9032 = vmatpush.bf16.msra.mxu0 %v8918
      %9033 = vmatpush.bf16.msra.mxu0 %v8917
      %9034 = vmatpush.bf16.msra.mxu0 %v8916
      %9035 = vmatmul.bf16.gmra.mxu0 %v8690
      %v9036 = vpop.f32.mrf.mxu0
      %v9037 = vadd.f32 %v9024, %v9036
      %v9038 = vpop.f32.mrf.mxu0
      %9039 = vdwg.mxu0
      %9040 = vmatpush.bf16.msra.mxu0 %v8931
      %9041 = vmatpush.bf16.msra.mxu0 %v8930
      %9042 = vmatpush.bf16.msra.mxu0 %v8929
      %9043 = vmatpush.bf16.msra.mxu0 %v8928
      %9044 = vmatpush.bf16.msra.mxu0 %v8927
      %9045 = vmatpush.bf16.msra.mxu0 %v8926
      %9046 = vmatpush.bf16.msra.mxu0 %v8925
      %9047 = vmatpush.bf16.msra.mxu0 %v8924
      %9048 = vmatmul.bf16.gmra.mxu0 %v8696
      %v9049 = vpop.f32.mrf.mxu0
      %v9050 = vadd.f32 %v9037, %v9049
      %v9051 = vpop.f32.mrf.mxu0
      %9052 = vdwg.mxu0
      %9053 = vmatpush.bf16.msra.mxu0 %v8939
      %9054 = vmatpush.bf16.msra.mxu0 %v8938
      %9055 = vmatpush.bf16.msra.mxu0 %v8937
      %9056 = vmatpush.bf16.msra.mxu0 %v8936
      %9057 = vmatpush.bf16.msra.mxu0 %v8935
      %9058 = vmatpush.bf16.msra.mxu0 %v8934
      %9059 = vmatpush.bf16.msra.mxu0 %v8933
      %9060 = vmatpush.bf16.msra.mxu0 %v8932
      %9061 = vmatmul.bf16.gmra.mxu0 %v8697
      %v9062 = vpop.f32.mrf.mxu0
      %v9063 = vadd.f32 %v9050, %v9062
      %v9064 = vpop.f32.mrf.mxu0
      %9065 = vdwg.mxu0
      %v9066 = vpack.c.bf16 %v9063, %v9063
      %9068 = vset.pattern.permute.xlu0 0
      %9069 = vperm.xlu0 %9068, %v1279
      %v9070 = vpop.permute.xlu0 %9069
      %9073 = vset.pattern.permute.xlu0 0
      %9074 = vperm.xlu0 %9073, %v1280
      %v9075 = vpop.permute.xlu0 %9074
      %9078 = vset.pattern.permute.xlu0 0
      %9079 = vperm.xlu0 %9078, %v1281
      %v9080 = vpop.permute.xlu0 %9079
      %9083 = vset.pattern.permute.xlu0 0
      %9084 = vperm.xlu0 %9083, %v1282
      %v9085 = vpop.permute.xlu0 %9084
      %9088 = vset.pattern.permute.xlu0 0
      %9089 = vperm.xlu0 %9088, %v1283
      %v9090 = vpop.permute.xlu0 %9089
      %9093 = vset.pattern.permute.xlu0 0
      %9094 = vperm.xlu0 %9093, %v1284
      %v9095 = vpop.permute.xlu0 %9094
      %9098 = vset.pattern.permute.xlu0 0
      %9099 = vperm.xlu0 %9098, %v1285
      %v9100 = vpop.permute.xlu0 %9099
      %9103 = vset.pattern.permute.xlu0 0
      %9104 = vperm.xlu0 %9103, %v1286
      %v9105 = vpop.permute.xlu0 %9104
      %v9115 = vunpack.c.l.b16 %v1271
      %v9116 = vunpack.c.l.b16 %v1272
      %v9117 = vunpack.c.l.b16 %v1273
      %v9118 = vunpack.c.l.b16 %v1274
      %v9119 = vunpack.c.l.b16 %v1275
      %v9120 = vunpack.c.l.b16 %v1276
      %v9121 = vunpack.c.l.b16 %v1277
      %v9122 = vunpack.c.l.b16 %v1278
      %v9123 = vpack.c.b16 %v9116, %v9115
      %v9124 = vpack.c.b16 %v9118, %v9117
      %v9125 = vpack.c.b16 %v9120, %v9119
      %v9126 = vpack.c.b16 %v9122, %v9121
      %vm9127 = vcmask 64512
      %v9129 = vsel %vm9127, %v9123, 0
      %v9132 = vsel %vm9127, %v9124, 0
      %v9135 = vsel %vm9127, %v9125, 0
      %v9138 = vsel %vm9127, %v9126, 0
      %v9141 = vsel %vm8525, %v9066, 0
      %9143 = vmatpush.bf16.msra.mxu0 0
      %9144 = vmatpush.bf16.msra.mxu0 0
      %9145 = vmatpush.bf16.msra.mxu0 0
      %9146 = vmatpush.bf16.msra.mxu0 0
      %9147 = vmatpush.bf16.msra.mxu0 0
      %9148 = vmatpush.bf16.msra.mxu0 0
      %9149 = vmatpush.bf16.msra.mxu0 0
      %9150 = vmatpush.bf16.msra.mxu0 %v9141
      %9151 = vmatmul.bf16.gmra.mxu0 %v9129
      %v9152 = vpop.f32.mrf.mxu0
      %v9153 = vadd.f32 %v9070, %v9152
      %v9154 = vpop.f32.mrf.mxu0
      %v9155 = vadd.f32 %v9075, %v9154
      %9156 = vmatmul.bf16.gmra.mxu0 %v9132
      %v9157 = vpop.f32.mrf.mxu0
      %v9158 = vadd.f32 %v9080, %v9157
      %v9159 = vpop.f32.mrf.mxu0
      %v9160 = vadd.f32 %v9085, %v9159
      %9161 = vmatmul.bf16.gmra.mxu0 %v9135
      %v9162 = vpop.f32.mrf.mxu0
      %v9163 = vadd.f32 %v9090, %v9162
      %v9164 = vpop.f32.mrf.mxu0
      %v9165 = vadd.f32 %v9095, %v9164
      %9166 = vmatmul.bf16.gmra.mxu0 %v9138
      %v9167 = vpop.f32.mrf.mxu0
      %v9168 = vadd.f32 %v9100, %v9167
      %v9169 = vpop.f32.mrf.mxu0
      %v9170 = vadd.f32 %v9105, %v9169
      %9171 = vdwg.mxu0
      %vm9172 = vcmp.ge.f32.partialorder %v9153, 0.0
      %vm9173 = vcmp.ge.f32.partialorder %v9155, 0.0
      %vm9174 = vcmp.ge.f32.partialorder %v9158, 0.0
      %vm9175 = vcmp.ge.f32.partialorder %v9160, 0.0
      %vm9176 = vcmp.ge.f32.partialorder %v9163, 0.0
      %vm9177 = vcmp.ge.f32.partialorder %v9165, 0.0
      %vm9178 = vcmp.ge.f32.partialorder %v9168, 0.0
      %vm9179 = vcmp.ge.f32.partialorder %v9170, 0.0
      %v9180 = vmul.f32 %v9153, 0.01
      %v9181 = vmul.f32 %v9155, 0.01
      %v9182 = vmul.f32 %v9158, 0.01
      %v9183 = vmul.f32 %v9160, 0.01
      %v9184 = vmul.f32 %v9163, 0.01
      %v9185 = vmul.f32 %v9165, 0.01
      %v9186 = vmul.f32 %v9168, 0.01
      %v9187 = vmul.f32 %v9170, 0.01
      %v9188 = vsel %vm9172, %v9153, %v9180
      %v9189 = vsel %vm9173, %v9155, %v9181
      %v9190 = vsel %vm9174, %v9158, %v9182
      %v9191 = vsel %vm9175, %v9160, %v9183
      %v9192 = vsel %vm9176, %v9163, %v9184
      %v9193 = vsel %vm9177, %v9165, %v9185
      %v9194 = vsel %vm9178, %v9168, %v9186
      %v9195 = vsel %vm9179, %v9170, %v9187
      %v9196 = vpack.c.bf16 %v9189, %v9188
      %v9197 = vpack.c.bf16 %v9191, %v9190
      %v9198 = vpack.c.bf16 %v9193, %v9192
      %v9199 = vpack.c.bf16 %v9195, %v9194
      %9201 = vset.pattern.permute.xlu0 0
      %9202 = vperm.xlu0 %9201, %v1288
      %v9203 = vpop.permute.xlu0 %9202
      %v9205 = vperm.slane %v9203, 0
      %v9207 = vsel %vm6644, %v1287, 0
      %9209 = vmatpush.bf16.msra.mxu0 0
      %9210 = vmatpush.bf16.msra.mxu0 0
      %9211 = vmatpush.bf16.msra.mxu0 0
      %9212 = vmatpush.bf16.msra.mxu0 0
      %9213 = vmatpush.bf16.msra.mxu0 %v9199
      %9214 = vmatpush.bf16.msra.mxu0 %v9198
      %9215 = vmatpush.bf16.msra.mxu0 %v9197
      %9216 = vmatpush.bf16.msra.mxu0 %v9196
      %9217 = vmatmul.bf16.gmra.mxu0 %v9207
      %v9218 = vpop.f32.mrf.mxu0
      %v9219 = vadd.f32 %v9205, %v9218
      %v9220 = vpop.f32.mrf.mxu0
      %9221 = vdwg.mxu0
      %v9230 = vunpack.c.l.b16 %v1297
      %v9231 = vunpack.c.l.b16 %v1298
      %v9232 = vunpack.c.l.b16 %v1299
      %v9233 = vunpack.c.l.b16 %v1300
      %v9234 = vunpack.c.l.b16 %v1301
      %v9235 = vunpack.c.l.b16 %v1302
      %v9236 = vunpack.c.l.b16 %v1303
      %v9237 = vunpack.c.l.b16 %v1304
      %v9238 = vpack.c.b16 %v9231, %v9230
      %v9239 = vpack.c.b16 %v9233, %v9232
      %v9240 = vpack.c.b16 %v9235, %v9234
      %v9241 = vpack.c.b16 %v9237, %v9236
      %v9244 = vunpack.c.l.b16 %v938
      %v9245 = vunpack.c.l.b16 %v939
      %v9246 = vpack.c.b16 %v9245, %v9244
      %vm9247 = vcmask 121856
      %v9249 = vsel %vm9247, %v9238, 0
      %v9252 = vsel %vm9247, %v9239, 0
      %v9255 = vsel %vm9247, %v9240, 0
      %v9258 = vsel %vm9247, %v9241, 0
      %vm9260 = vcmask 1046528
      %vm9261 = vcmask 1047552
      %v9262 = vsel %vm9260, 4294967295, 65535
      %v9263 = vsel %vm9261, %v9262, 0
      %v9265 = vand.u32 %v9246, %v9263
      %9267 = vmatpush.bf16.msra.mxu0 0
      %9268 = vmatpush.bf16.msra.mxu0 0
      %9269 = vmatpush.bf16.msra.mxu0 0
      %9270 = vmatpush.bf16.msra.mxu0 0
      %9271 = vmatpush.bf16.msra.mxu0 0
      %9272 = vmatpush.bf16.msra.mxu0 0
      %9273 = vmatpush.bf16.msra.mxu0 0
      %9274 = vmatpush.bf16.msra.mxu0 %v9265
      %9275 = vmatmul.bf16.gmra.mxu0 %v9249
      %v9276 = vpop.f32.mrf.mxu0
      %v9277 = vadd.f32 0.0, %v9276
      %v9278 = vpop.f32.mrf.mxu0
      %v9279 = vadd.f32 0.0, %v9278
      %9280 = vmatmul.bf16.gmra.mxu0 %v9252
      %v9281 = vpop.f32.mrf.mxu0
      %v9282 = vadd.f32 0.0, %v9281
      %v9283 = vpop.f32.mrf.mxu0
      %v9284 = vadd.f32 0.0, %v9283
      %9285 = vmatmul.bf16.gmra.mxu0 %v9255
      %v9286 = vpop.f32.mrf.mxu0
      %v9287 = vadd.f32 0.0, %v9286
      %v9288 = vpop.f32.mrf.mxu0
      %v9289 = vadd.f32 0.0, %v9288
      %9290 = vmatmul.bf16.gmra.mxu0 %v9258
      %v9291 = vpop.f32.mrf.mxu0
      %v9292 = vadd.f32 0.0, %v9291
      %v9293 = vpop.f32.mrf.mxu0
      %v9294 = vadd.f32 0.0, %v9293
      %9295 = vdwg.mxu0
      %v9304 = vunpack.c.l.b16 %v1289
      %v9305 = vunpack.c.l.b16 %v1290
      %v9306 = vunpack.c.l.b16 %v1291
      %v9307 = vunpack.c.l.b16 %v1292
      %v9308 = vunpack.c.l.b16 %v1293
      %v9309 = vunpack.c.l.b16 %v1294
      %v9310 = vunpack.c.l.b16 %v1295
      %v9311 = vunpack.c.l.b16 %v1296
      %v9312 = vpack.c.b16 %v9305, %v9304
      %v9313 = vpack.c.b16 %v9307, %v9306
      %v9314 = vpack.c.b16 %v9309, %v9308
      %v9315 = vpack.c.b16 %v9311, %v9310
      %v9317 = vsel %vm9127, %v9312, 0
      %v9320 = vsel %vm9127, %v9313, 0
      %v9323 = vsel %vm9127, %v9314, 0
      %v9326 = vsel %vm9127, %v9315, 0
      %9328 = vmatpush.bf16.msra.mxu0 0
      %9329 = vmatpush.bf16.msra.mxu0 0
      %9330 = vmatpush.bf16.msra.mxu0 0
      %9331 = vmatpush.bf16.msra.mxu0 0
      %9332 = vmatpush.bf16.msra.mxu0 0
      %9333 = vmatpush.bf16.msra.mxu0 0
      %9334 = vmatpush.bf16.msra.mxu0 0
      %9335 = vmatpush.bf16.msra.mxu0 %v9141
      %9336 = vmatmul.bf16.gmra.mxu0 %v9317
      %v9337 = vpop.f32.mrf.mxu0
      %v9338 = vadd.f32 %v9277, %v9337
      %v9339 = vpop.f32.mrf.mxu0
      %v9340 = vadd.f32 %v9279, %v9339
      %9341 = vmatmul.bf16.gmra.mxu0 %v9320
      %v9342 = vpop.f32.mrf.mxu0
      %v9343 = vadd.f32 %v9282, %v9342
      %v9344 = vpop.f32.mrf.mxu0
      %v9345 = vadd.f32 %v9284, %v9344
      %9346 = vmatmul.bf16.gmra.mxu0 %v9323
      %v9347 = vpop.f32.mrf.mxu0
      %v9348 = vadd.f32 %v9287, %v9347
      %v9349 = vpop.f32.mrf.mxu0
      %v9350 = vadd.f32 %v9289, %v9349
      %9351 = vmatmul.bf16.gmra.mxu0 %v9326
      %v9352 = vpop.f32.mrf.mxu0
      %v9353 = vadd.f32 %v9292, %v9352
      %v9354 = vpop.f32.mrf.mxu0
      %v9355 = vadd.f32 %v9294, %v9354
      %9356 = vdwg.mxu0
      %9358 = vset.pattern.permute.xlu0 0
      %9359 = vperm.xlu0 %9358, %v1305
      %v9360 = vpop.permute.xlu0 %9359
      %9363 = vset.pattern.permute.xlu0 0
      %9364 = vperm.xlu0 %9363, %v1306
      %v9365 = vpop.permute.xlu0 %9364
      %9368 = vset.pattern.permute.xlu0 0
      %9369 = vperm.xlu0 %9368, %v1307
      %v9370 = vpop.permute.xlu0 %9369
      %9373 = vset.pattern.permute.xlu0 0
      %9374 = vperm.xlu0 %9373, %v1308
      %v9375 = vpop.permute.xlu0 %9374
      %9378 = vset.pattern.permute.xlu0 0
      %9379 = vperm.xlu0 %9378, %v1309
      %v9380 = vpop.permute.xlu0 %9379
      %9383 = vset.pattern.permute.xlu0 0
      %9384 = vperm.xlu0 %9383, %v1310
      %v9385 = vpop.permute.xlu0 %9384
      %9388 = vset.pattern.permute.xlu0 0
      %9389 = vperm.xlu0 %9388, %v1311
      %v9390 = vpop.permute.xlu0 %9389
      %9393 = vset.pattern.permute.xlu0 0
      %9394 = vperm.xlu0 %9393, %v1312
      %v9395 = vpop.permute.xlu0 %9394
      %v9397 = vadd.f32 %v9338, %v9360
      %v9398 = vadd.f32 %v9340, %v9365
      %v9399 = vadd.f32 %v9343, %v9370
      %v9400 = vadd.f32 %v9345, %v9375
      %v9401 = vadd.f32 %v9348, %v9380
      %v9402 = vadd.f32 %v9350, %v9385
      %v9403 = vadd.f32 %v9353, %v9390
      %v9404 = vadd.f32 %v9355, %v9395
      %vm9405 = vcmp.ge.f32.partialorder %v9397, 0.0
      %vm9406 = vcmp.ge.f32.partialorder %v9398, 0.0
      %vm9407 = vcmp.ge.f32.partialorder %v9399, 0.0
      %vm9408 = vcmp.ge.f32.partialorder %v9400, 0.0
      %vm9409 = vcmp.ge.f32.partialorder %v9401, 0.0
      %vm9410 = vcmp.ge.f32.partialorder %v9402, 0.0
      %vm9411 = vcmp.ge.f32.partialorder %v9403, 0.0
      %vm9412 = vcmp.ge.f32.partialorder %v9404, 0.0
      %v9413 = vmul.f32 %v9397, 0.01
      %v9414 = vmul.f32 %v9398, 0.01
      %v9415 = vmul.f32 %v9399, 0.01
      %v9416 = vmul.f32 %v9400, 0.01
      %v9417 = vmul.f32 %v9401, 0.01
      %v9418 = vmul.f32 %v9402, 0.01
      %v9419 = vmul.f32 %v9403, 0.01
      %v9420 = vmul.f32 %v9404, 0.01
      %v9421 = vsel %vm9405, %v9397, %v9413
      %v9422 = vsel %vm9406, %v9398, %v9414
      %v9423 = vsel %vm9407, %v9399, %v9415
      %v9424 = vsel %vm9408, %v9400, %v9416
      %v9425 = vsel %vm9409, %v9401, %v9417
      %v9426 = vsel %vm9410, %v9402, %v9418
      %v9427 = vsel %vm9411, %v9403, %v9419
      %v9428 = vsel %vm9412, %v9404, %v9420
      %v9429 = vpack.c.bf16 %v9422, %v9421
      %v9430 = vpack.c.bf16 %v9424, %v9423
      %v9431 = vpack.c.bf16 %v9426, %v9425
      %v9432 = vpack.c.bf16 %v9428, %v9427
      %9434 = vset.pattern.permute.xlu0 0
      %9435 = vperm.xlu0 %9434, %v1314
      %v9436 = vpop.permute.xlu0 %9435
      %v9439 = vsel %vm6644, %v1313, 0
      %9441 = vmatpush.bf16.msra.mxu0 0
      %9442 = vmatpush.bf16.msra.mxu0 0
      %9443 = vmatpush.bf16.msra.mxu0 0
      %9444 = vmatpush.bf16.msra.mxu0 0
      %9445 = vmatpush.bf16.msra.mxu0 %v9432
      %9446 = vmatpush.bf16.msra.mxu0 %v9431
      %9447 = vmatpush.bf16.msra.mxu0 %v9430
      %9448 = vmatpush.bf16.msra.mxu0 %v9429
      %9449 = vmatmul.bf16.gmra.mxu0 %v9439
      %v9450 = vpop.f32.mrf.mxu0
      %v9451 = vadd.f32 %v9436, %v9450
      %v9452 = vpop.f32.mrf.mxu0
      %9453 = vdwg.mxu0
      %v9455 = vrot.slane %v9451, 7
      %vm9457 = vcmask 1040384
      %v9458 = vsel %vm9457, %v9219, %v9455
      %v9459 = vsel %vm8525, %v9458, 0.0
      %9460 = vst [vmem:[%s924] sm:$0xff] %v9459
      %p9461 = scmp.lt.s32.totalorder %s38, 1
      %s9462 = scalar_select %p9461, %s38, 1
      %s9463 = smul.addr %s9462, 8
      %s9464 = scalar_lea.vmem %s25, %s9463
      // Predicated region
      $region121: #{forward.1} parent=119 // pred_check
        %p9465 = pneg %p626
      $region122: #{forward.1} parent=119 // pred_check_branch
        %9467 = sbr.rel (%p9465) target = $region124
      $region123: #{forward.1} parent=119 // pred_region
        _
      $region124: #{forward.1} parent=119 // pred_fallthru
        _
    $region120: #{forward.1} parent=5 // pred_fallthru
      _
    %p9468 = scmp.le.s32.totalorder 2, %s33
    // Predicated region
    $region125: #{forward.1} parent=5 // pred_check
      %p9469 = pneg %p9468
    $region126: #{forward.1} parent=5 // pred_check_branch
      %9471 = sbr.rel (%p9469) target = $region128
    $region127: #{forward.1} parent=5 // pred_region
      %s9472 = ssub.s32 %s33, 2
      // Predicated region
      $region129: #{forward.1} parent=127 // pred_check
        %p9473 = pneg %p632
      $region130: #{forward.1} parent=127 // pred_check_branch
        %9475 = sbr.rel (%p9473) target = $region132
      $region131: #{forward.1} parent=127 // pred_region
        %p9476 = scmp.lt.s32.totalorder %s39, 1
        %s9477 = scalar_select %p9476, %s39, 1
        %s9478 = smul.addr %s9477, 8
        %s9479 = scalar_lea.vmem %s25, %s9478
      $region132: #{forward.1} parent=127 // pred_fallthru
        _
    $region128: #{forward.1} parent=5 // pred_fallthru
      _
  $region6: #{forward.1} parent=0 // loop_footer
    %s37 = sadd.s32 1, %s33
  $region7: #{forward.1} parent=0 // loop_footer_branch
    %32 = sbr.rel target = $region3
  $region8: #{forward.1} parent=0 // loop_exit
    _

</llo_original>
